<compile_context>
chip_gen: v5e
topology: v5e:2x2
jax: 0.10.0
libtpu: 0.0.40
codegen_flags: <defaults>
</compile_context>

<pallas_src>
import functools

import jax
import jax.numpy as jnp
import numpy as np
from jax.experimental import pallas as pl
from jax.experimental.pallas import tpu as pltpu

LANES = 128


def basic_block_kernel(xp_ref, w1_ref, w2_ref, b1_ref, b2_ref, out_ref, mid_ref):
    """One batch element of the BasicBlock forward pass.

    xp_ref : (H+2, W+2, Cp)  bf16  zero-padded input (spatial halo + channel pad)
    w1_ref : (9, Cp, Cp)     bf16  conv1 taps (BN1 scale folded in), tap = dy*3+dx
    w2_ref : (9, Cp, Cp)     bf16  conv2 taps (BN2 scale folded in)
    b1_ref : (1, Cp)         f32   BN1 folded bias
    b2_ref : (1, Cp)         f32   BN2 folded bias
    out_ref: (H, W, Cp)      f32
    mid_ref: (H+2, W+2, Cp)  bf16  VMEM scratch holding the padded conv1 output
    """
    Hp, Wp, Cp = xp_ref.shape
    H, W, _ = out_ref.shape
    SH = 8 if H % 8 == 0 else H          # row-slab height (accumulator tiling)

    # ---- zero only the 1-pixel halo of the intermediate (interior is fully
    #      overwritten below); megacore-safe because it runs every step -------
    zrow = jnp.zeros((1, Wp, Cp), mid_ref.dtype)
    zcol = jnp.zeros((Hp, 1, Cp), mid_ref.dtype)
    mid_ref[0:1, :, :] = zrow
    mid_ref[H + 1:H + 2, :, :] = zrow
    mid_ref[:, 0:1, :] = zcol
    mid_ref[:, W + 1:W + 2, :] = zcol

    b1 = b1_ref[...]                      # hoisted (don't re-broadcast in loops)
    b2 = b2_ref[...]

    # ---- conv1 (3x3, stride 1, pad 1) + folded-BN1 bias + ReLU --------------
    for r0 in range(0, H, SH):
        acc = jnp.zeros((SH * W, Cp), jnp.float32)
        for dy in range(3):
            for dx in range(3):
                patch = xp_ref[r0 + dy:r0 + dy + SH, dx:dx + W, :]
                acc = acc + jnp.dot(patch.reshape(SH * W, Cp),
                                    w1_ref[dy * 3 + dx],
                                    preferred_element_type=jnp.float32)
        out1 = jnp.maximum(acc + b1, 0.0)
        mid_ref[r0 + 1:r0 + 1 + SH, 1:W + 1, :] = (
            out1.reshape(SH, W, Cp).astype(mid_ref.dtype))

    # ---- conv2 + folded-BN2 bias + identity skip + ReLU ---------------------
    for r0 in range(0, H, SH):
        acc = jnp.zeros((SH * W, Cp), jnp.float32)
        for dy in range(3):
            for dx in range(3):
                patch = mid_ref[r0 + dy:r0 + dy + SH, dx:dx + W, :]
                acc = acc + jnp.dot(patch.reshape(SH * W, Cp),
                                    w2_ref[dy * 3 + dx],
                                    preferred_element_type=jnp.float32)
        identity = xp_ref[r0 + 1:r0 + 1 + SH, 1:W + 1, :]
        res = jnp.maximum(
            acc + b2 + identity.reshape(SH * W, Cp).astype(jnp.float32), 0.0)
        out_ref[r0:r0 + SH, :, :] = res.reshape(SH, W, Cp).astype(out_ref.dtype)


def _fold_bn(bn, eps):
    gamma, beta, mean, var = bn
    scale = gamma / jnp.sqrt(var + eps)
    bias = beta - mean * scale
    return scale, bias


@functools.partial(jax.jit, static_argnames=("eps",))
def basic_block_pallas(x_nchw, w1_oihw, w2_oihw, bn1, bn2, eps=1e-5):
    N, C, H, W = x_nchw.shape
    Cout = w1_oihw.shape[0]
    assert Cout == C, "no-downsample skip requires inplanes == planes"
    assert W % 8 == 0, "W must be a multiple of 8 for free in-kernel reshapes"
    Cp = ((C + LANES - 1) // LANES) * LANES      # lane-dense channel padding

    s1, b1 = _fold_bn(bn1, eps)
    s2, b2 = _fold_bn(bn2, eps)

    def prep_w(w_oihw, scale):
        # OIHW -> (ky, kx, Cin, Cout), fold the BN scale into output channels,
        # zero-pad both channel dims to Cp, cast to bf16 for the MXU.
        w = jnp.transpose(w_oihw, (2, 3, 1, 0)) * scale[None, None, None, :]
        w = jnp.pad(w, ((0, 0), (0, 0), (0, Cp - C), (0, Cp - C)))
        return w.reshape(9, Cp, Cp).astype(jnp.bfloat16)

    w1_taps = prep_w(w1_oihw, s1)
    w2_taps = prep_w(w2_oihw, s2)
    b1_p = jnp.pad(b1, (0, Cp - C)).reshape(1, Cp).astype(jnp.float32)
    b2_p = jnp.pad(b2, (0, Cp - C)).reshape(1, Cp).astype(jnp.float32)

    # NCHW -> NHWC, spatial halo pad (conv padding=1), channel pad, bf16 cast.
    # Under jit this fuses with the unavoidable layout transpose into a single
    # pass over the input.
    x_nhwc = jnp.transpose(x_nchw, (0, 2, 3, 1))
    x_pad = jnp.pad(x_nhwc, ((0, 0), (1, 1), (1, 1), (0, Cp - C)))
    x_pad = x_pad.astype(jnp.bfloat16)

    out_nhwc = pl.pallas_call(
        basic_block_kernel,
        out_shape=jax.ShapeDtypeStruct((N, H, W, Cp), x_nchw.dtype),
        grid_spec=pltpu.PrefetchScalarGridSpec(
            num_scalar_prefetch=0,
            grid=(N,),
            in_specs=[
                pl.BlockSpec((None, H + 2, W + 2, Cp), lambda n: (n, 0, 0, 0)),
                pl.BlockSpec((9, Cp, Cp), lambda n: (0, 0, 0)),   # grid-invariant
                pl.BlockSpec((9, Cp, Cp), lambda n: (0, 0, 0)),   # grid-invariant
                pl.BlockSpec((1, Cp), lambda n: (0, 0)),
                pl.BlockSpec((1, Cp), lambda n: (0, 0)),
            ],
            out_specs=pl.BlockSpec((None, H, W, Cp), lambda n: (n, 0, 0, 0)),
            scratch_shapes=[pltpu.VMEM((H + 2, W + 2, Cp), jnp.bfloat16)],
        ),
        compiler_params=pltpu.CompilerParams(
            dimension_semantics=("parallel",)),   # batch elems are independent
    )(x_pad, w1_taps, w2_taps, b1_p, b2_p)

    out_nhwc = out_nhwc[..., :C]                  # drop channel padding
    return jnp.transpose(out_nhwc, (0, 3, 1, 2))  # back to NCHW


def basic_block_reference(x, w1, w2, bn1, bn2, eps=1e-5):
    """Pure-JAX (XLA, f32) reference matching the PyTorch forward in eval mode."""
    def conv(a, w):
        return jax.lax.conv_general_dilated(
            a, w, window_strides=(1, 1), padding=((1, 1), (1, 1)),
            dimension_numbers=('NCHW', 'OIHW', 'NCHW'))

    def bn(a, p):
        g, b, m, v = p
        s = g / jnp.sqrt(v + eps)
        return a * s[None, :, None, None] + (b - m * s)[None, :, None, None]

    out = conv(x, w1)
    out = jax.nn.relu(bn(out, bn1))
    out = conv(out, w2)
    out = bn(out, bn2)
    out = out + x          # identity skip (no downsample)
    return jax.nn.relu(out)


if __name__ == "__main__":
    N, C, H, W = 2, 4, 16, 16          # inplanes = planes = 4, stride = 1
    planes = C

    key = jax.random.PRNGKey(0)
    ks = jax.random.split(key, 11)

    x = jax.random.normal(ks[0], (N, C, H, W), jnp.float32)

    # conv weights (PyTorch OIHW, bias=False)
    w1 = jax.random.normal(ks[1], (planes, C, 3, 3), jnp.float32) * 0.2
    w2 = jax.random.normal(ks[2], (planes, planes, 3, 3), jnp.float32) * 0.2

    # BatchNorm params: (gamma, beta, running_mean, running_var)
    bn1 = (jax.random.uniform(ks[3], (planes,), minval=0.5, maxval=1.5),
           jax.random.normal(ks[4], (planes,)) * 0.1,
           jax.random.normal(ks[5], (planes,)) * 0.1,
           jax.random.uniform(ks[6], (planes,), minval=0.5, maxval=1.5))
    bn2 = (jax.random.uniform(ks[7], (planes,), minval=0.5, maxval=1.5),
           jax.random.normal(ks[8], (planes,)) * 0.1,
           jax.random.normal(ks[9], (planes,)) * 0.1,
           jax.random.uniform(ks[10], (planes,), minval=0.5, maxval=1.5))

    out = basic_block_pallas(x, w1, w2, bn1, bn2)
    out = jax.block_until_ready(out)

    ref = basic_block_reference(x, w1, w2, bn1, bn2)
    ref = jax.block_until_ready(ref)

    # bf16 MXU inputs (f32 accumulate / epilogue) -> loosened tolerance.
    np.testing.assert_allclose(np.asarray(out), np.asarray(ref),
                               rtol=2e-2, atol=2e-2)
    print("KERNEL_OK")
</pallas_src>

<mosaic_0001>
module attributes {stable_mosaic.version = 11 : i64} {
  func.func @basic_block_kernel(%arg0: i32, %arg1: memref<1x18x18x128xbf16, #tpu.memory_space<vmem>>, %arg2: memref<9x128x128xbf16, #tpu.memory_space<vmem>>, %arg3: memref<9x128x128xbf16, #tpu.memory_space<vmem>>, %arg4: memref<1x128xf32, #tpu.memory_space<vmem>>, %arg5: memref<1x128xf32, #tpu.memory_space<vmem>>, %arg6: memref<1x16x16x128xf32, #tpu.memory_space<vmem>>, %arg7: memref<18x18x128xbf16, #tpu.memory_space<vmem>>) attributes {dimension_semantics = [#tpu.dimension_semantics<parallel>], iteration_bounds = array<i64: 2>, scalar_prefetch = 0 : i64, scratch_operands = 1 : i64, tpu.core_type = #tpu.core_type<tc>, window_params = [{transform_indices = @transform_0, window_bounds = array<i64: 1, 18, 18, 128>}, {pipeline_mode = #tpu.pipeline_mode<synchronous>, transform_indices = @transform_1, window_bounds = array<i64: 9, 128, 128>}, {pipeline_mode = #tpu.pipeline_mode<synchronous>, transform_indices = @transform_2, window_bounds = array<i64: 9, 128, 128>}, {pipeline_mode = #tpu.pipeline_mode<synchronous>, transform_indices = @transform_3, window_bounds = array<i64: 1, 128>}, {pipeline_mode = #tpu.pipeline_mode<synchronous>, transform_indices = @transform_4, window_bounds = array<i64: 1, 128>}, {transform_indices = @transform_5, window_bounds = array<i64: 1, 16, 16, 128>}]} {
    %cst = arith.constant 0.000000e+00 : bf16
    %0 = vector.broadcast %cst : bf16 to vector<1x18x128xbf16>
    %cst_0 = arith.constant 0.000000e+00 : bf16
    %1 = vector.broadcast %cst_0 : bf16 to vector<18x1x128xbf16>
    %c0 = arith.constant 0 : index
    %c0_1 = arith.constant 0 : index
    %c0_2 = arith.constant 0 : index
    %2 = vector.load %arg7[%c0, %c0_1, %c0_2] : memref<18x18x128xbf16, #tpu.memory_space<vmem>>, vector<1x18x128xbf16>
    tpu.vector_store %arg7[%c0, %c0_1, %c0_2], %0 {strides = array<i32>} : memref<18x18x128xbf16, #tpu.memory_space<vmem>>, vector<1x18x128xbf16>,
    %c17 = arith.constant 17 : index
    %c0_3 = arith.constant 0 : index
    %c0_4 = arith.constant 0 : index
    %3 = vector.load %arg7[%c17, %c0_3, %c0_4] : memref<18x18x128xbf16, #tpu.memory_space<vmem>>, vector<1x18x128xbf16>
    tpu.vector_store %arg7[%c17, %c0_3, %c0_4], %0 {strides = array<i32>} : memref<18x18x128xbf16, #tpu.memory_space<vmem>>, vector<1x18x128xbf16>,
    %c0_5 = arith.constant 0 : index
    %c0_6 = arith.constant 0 : index
    %c0_7 = arith.constant 0 : index
    %4 = vector.load %arg7[%c0_5, %c0_6, %c0_7] : memref<18x18x128xbf16, #tpu.memory_space<vmem>>, vector<18x1x128xbf16>
    tpu.vector_store %arg7[%c0_5, %c0_6, %c0_7], %1 {strides = array<i32>} : memref<18x18x128xbf16, #tpu.memory_space<vmem>>, vector<18x1x128xbf16>,
    %c0_8 = arith.constant 0 : index
    %c17_9 = arith.constant 17 : index
    %c0_10 = arith.constant 0 : index
    %5 = vector.load %arg7[%c0_8, %c17_9, %c0_10] : memref<18x18x128xbf16, #tpu.memory_space<vmem>>, vector<18x1x128xbf16>
    tpu.vector_store %arg7[%c0_8, %c17_9, %c0_10], %1 {strides = array<i32>} : memref<18x18x128xbf16, #tpu.memory_space<vmem>>, vector<18x1x128xbf16>,
    %c0_11 = arith.constant 0 : index
    %c0_12 = arith.constant 0 : index
    %6 = vector.load %arg4[%c0_11, %c0_12] : memref<1x128xf32, #tpu.memory_space<vmem>>, vector<1x128xf32>
    %c0_13 = arith.constant 0 : index
    %c0_14 = arith.constant 0 : index
    %7 = vector.load %arg5[%c0_13, %c0_14] : memref<1x128xf32, #tpu.memory_space<vmem>>, vector<1x128xf32>
    %cst_15 = arith.constant 0.000000e+00 : f32
    %8 = vector.broadcast %cst_15 : f32 to vector<128x128xf32>
    %c0_16 = arith.constant 0 : index
    %c0_17 = arith.constant 0 : index
    %c0_18 = arith.constant 0 : index
    %c0_19 = arith.constant 0 : index
    %9 = vector.load %arg1[%c0_16, %c0_17, %c0_18, %c0_19] : memref<1x18x18x128xbf16, #tpu.memory_space<vmem>>, vector<1x8x16x128xbf16>
    %10 = vector.shape_cast %9 : vector<1x8x16x128xbf16> to vector<8x16x128xbf16>
    %11 = vector.shape_cast %10 : vector<8x16x128xbf16> to vector<128x128xbf16>
    %c0_20 = arith.constant 0 : index
    %c0_21 = arith.constant 0 : index
    %c0_22 = arith.constant 0 : index
    %12 = vector.load %arg2[%c0_20, %c0_21, %c0_22] : memref<9x128x128xbf16, #tpu.memory_space<vmem>>, vector<1x128x128xbf16>
    %13 = vector.shape_cast %12 : vector<1x128x128xbf16> to vector<128x128xbf16>
    %cst_23 = arith.constant dense<0.000000e+00> : vector<128x128xf32>
    %14 = tpu.matmul %11, %13, %cst_23 {dimension_numbers = #tpu.dot_dimension_numbers<[1], [0], [0], [1], [0, 0, 1, 1], [], []>} : vector<128x128xbf16>, vector<128x128xbf16>, vector<128x128xf32> -> vector<128x128xf32>
    %15 = arith.addf %8, %14 : vector<128x128xf32>
    %c0_24 = arith.constant 0 : index
    %c0_25 = arith.constant 0 : index
    %c1 = arith.constant 1 : index
    %c0_26 = arith.constant 0 : index
    %16 = vector.load %arg1[%c0_24, %c0_25, %c1, %c0_26] : memref<1x18x18x128xbf16, #tpu.memory_space<vmem>>, vector<1x8x16x128xbf16>
    %17 = vector.shape_cast %16 : vector<1x8x16x128xbf16> to vector<8x16x128xbf16>
    %18 = vector.shape_cast %17 : vector<8x16x128xbf16> to vector<128x128xbf16>
    %c1_27 = arith.constant 1 : index
    %c0_28 = arith.constant 0 : index
    %c0_29 = arith.constant 0 : index
    %19 = vector.load %arg2[%c1_27, %c0_28, %c0_29] : memref<9x128x128xbf16, #tpu.memory_space<vmem>>, vector<1x128x128xbf16>
    %20 = vector.shape_cast %19 : vector<1x128x128xbf16> to vector<128x128xbf16>
    %cst_30 = arith.constant dense<0.000000e+00> : vector<128x128xf32>
    %21 = tpu.matmul %18, %20, %cst_30 {dimension_numbers = #tpu.dot_dimension_numbers<[1], [0], [0], [1], [0, 0, 1, 1], [], []>} : vector<128x128xbf16>, vector<128x128xbf16>, vector<128x128xf32> -> vector<128x128xf32>
    %22 = arith.addf %15, %21 : vector<128x128xf32>
    %c0_31 = arith.constant 0 : index
    %c0_32 = arith.constant 0 : index
    %c2 = arith.constant 2 : index
    %c0_33 = arith.constant 0 : index
    %23 = vector.load %arg1[%c0_31, %c0_32, %c2, %c0_33] : memref<1x18x18x128xbf16, #tpu.memory_space<vmem>>, vector<1x8x16x128xbf16>
    %24 = vector.shape_cast %23 : vector<1x8x16x128xbf16> to vector<8x16x128xbf16>
    %25 = vector.shape_cast %24 : vector<8x16x128xbf16> to vector<128x128xbf16>
    %c2_34 = arith.constant 2 : index
    %c0_35 = arith.constant 0 : index
    %c0_36 = arith.constant 0 : index
    %26 = vector.load %arg2[%c2_34, %c0_35, %c0_36] : memref<9x128x128xbf16, #tpu.memory_space<vmem>>, vector<1x128x128xbf16>
    %27 = vector.shape_cast %26 : vector<1x128x128xbf16> to vector<128x128xbf16>
    %cst_37 = arith.constant dense<0.000000e+00> : vector<128x128xf32>
    %28 = tpu.matmul %25, %27, %cst_37 {dimension_numbers = #tpu.dot_dimension_numbers<[1], [0], [0], [1], [0, 0, 1, 1], [], []>} : vector<128x128xbf16>, vector<128x128xbf16>, vector<128x128xf32> -> vector<128x128xf32>
    %29 = arith.addf %22, %28 : vector<128x128xf32>
    %c0_38 = arith.constant 0 : index
    %c1_39 = arith.constant 1 : index
    %c0_40 = arith.constant 0 : index
    %c0_41 = arith.constant 0 : index
    %30 = vector.load %arg1[%c0_38, %c1_39, %c0_40, %c0_41] : memref<1x18x18x128xbf16, #tpu.memory_space<vmem>>, vector<1x8x16x128xbf16>
    %31 = vector.shape_cast %30 : vector<1x8x16x128xbf16> to vector<8x16x128xbf16>
    %32 = vector.shape_cast %31 : vector<8x16x128xbf16> to vector<128x128xbf16>
    %c3 = arith.constant 3 : index
    %c0_42 = arith.constant 0 : index
    %c0_43 = arith.constant 0 : index
    %33 = vector.load %arg2[%c3, %c0_42, %c0_43] : memref<9x128x128xbf16, #tpu.memory_space<vmem>>, vector<1x128x128xbf16>
    %34 = vector.shape_cast %33 : vector<1x128x128xbf16> to vector<128x128xbf16>
    %cst_44 = arith.constant dense<0.000000e+00> : vector<128x128xf32>
    %35 = tpu.matmul %32, %34, %cst_44 {dimension_numbers = #tpu.dot_dimension_numbers<[1], [0], [0], [1], [0, 0, 1, 1], [], []>} : vector<128x128xbf16>, vector<128x128xbf16>, vector<128x128xf32> -> vector<128x128xf32>
    %36 = arith.addf %29, %35 : vector<128x128xf32>
    %c0_45 = arith.constant 0 : index
    %c1_46 = arith.constant 1 : index
    %c1_47 = arith.constant 1 : index
    %c0_48 = arith.constant 0 : index
    %37 = vector.load %arg1[%c0_45, %c1_46, %c1_47, %c0_48] : memref<1x18x18x128xbf16, #tpu.memory_space<vmem>>, vector<1x8x16x128xbf16>
    %38 = vector.shape_cast %37 : vector<1x8x16x128xbf16> to vector<8x16x128xbf16>
    %39 = vector.shape_cast %38 : vector<8x16x128xbf16> to vector<128x128xbf16>
    %c4 = arith.constant 4 : index
    %c0_49 = arith.constant 0 : index
    %c0_50 = arith.constant 0 : index
    %40 = vector.load %arg2[%c4, %c0_49, %c0_50] : memref<9x128x128xbf16, #tpu.memory_space<vmem>>, vector<1x128x128xbf16>
    %41 = vector.shape_cast %40 : vector<1x128x128xbf16> to vector<128x128xbf16>
    %cst_51 = arith.constant dense<0.000000e+00> : vector<128x128xf32>
    %42 = tpu.matmul %39, %41, %cst_51 {dimension_numbers = #tpu.dot_dimension_numbers<[1], [0], [0], [1], [0, 0, 1, 1], [], []>} : vector<128x128xbf16>, vector<128x128xbf16>, vector<128x128xf32> -> vector<128x128xf32>
    %43 = arith.addf %36, %42 : vector<128x128xf32>
    %c0_52 = arith.constant 0 : index
    %c1_53 = arith.constant 1 : index
    %c2_54 = arith.constant 2 : index
    %c0_55 = arith.constant 0 : index
    %44 = vector.load %arg1[%c0_52, %c1_53, %c2_54, %c0_55] : memref<1x18x18x128xbf16, #tpu.memory_space<vmem>>, vector<1x8x16x128xbf16>
    %45 = vector.shape_cast %44 : vector<1x8x16x128xbf16> to vector<8x16x128xbf16>
    %46 = vector.shape_cast %45 : vector<8x16x128xbf16> to vector<128x128xbf16>
    %c5 = arith.constant 5 : index
    %c0_56 = arith.constant 0 : index
    %c0_57 = arith.constant 0 : index
    %47 = vector.load %arg2[%c5, %c0_56, %c0_57] : memref<9x128x128xbf16, #tpu.memory_space<vmem>>, vector<1x128x128xbf16>
    %48 = vector.shape_cast %47 : vector<1x128x128xbf16> to vector<128x128xbf16>
    %cst_58 = arith.constant dense<0.000000e+00> : vector<128x128xf32>
    %49 = tpu.matmul %46, %48, %cst_58 {dimension_numbers = #tpu.dot_dimension_numbers<[1], [0], [0], [1], [0, 0, 1, 1], [], []>} : vector<128x128xbf16>, vector<128x128xbf16>, vector<128x128xf32> -> vector<128x128xf32>
    %50 = arith.addf %43, %49 : vector<128x128xf32>
    %c0_59 = arith.constant 0 : index
    %c2_60 = arith.constant 2 : index
    %c0_61 = arith.constant 0 : index
    %c0_62 = arith.constant 0 : index
    %51 = vector.load %arg1[%c0_59, %c2_60, %c0_61, %c0_62] : memref<1x18x18x128xbf16, #tpu.memory_space<vmem>>, vector<1x8x16x128xbf16>
    %52 = vector.shape_cast %51 : vector<1x8x16x128xbf16> to vector<8x16x128xbf16>
    %53 = vector.shape_cast %52 : vector<8x16x128xbf16> to vector<128x128xbf16>
    %c6 = arith.constant 6 : index
    %c0_63 = arith.constant 0 : index
    %c0_64 = arith.constant 0 : index
    %54 = vector.load %arg2[%c6, %c0_63, %c0_64] : memref<9x128x128xbf16, #tpu.memory_space<vmem>>, vector<1x128x128xbf16>
    %55 = vector.shape_cast %54 : vector<1x128x128xbf16> to vector<128x128xbf16>
    %cst_65 = arith.constant dense<0.000000e+00> : vector<128x128xf32>
    %56 = tpu.matmul %53, %55, %cst_65 {dimension_numbers = #tpu.dot_dimension_numbers<[1], [0], [0], [1], [0, 0, 1, 1], [], []>} : vector<128x128xbf16>, vector<128x128xbf16>, vector<128x128xf32> -> vector<128x128xf32>
    %57 = arith.addf %50, %56 : vector<128x128xf32>
    %c0_66 = arith.constant 0 : index
    %c2_67 = arith.constant 2 : index
    %c1_68 = arith.constant 1 : index
    %c0_69 = arith.constant 0 : index
    %58 = vector.load %arg1[%c0_66, %c2_67, %c1_68, %c0_69] : memref<1x18x18x128xbf16, #tpu.memory_space<vmem>>, vector<1x8x16x128xbf16>
    %59 = vector.shape_cast %58 : vector<1x8x16x128xbf16> to vector<8x16x128xbf16>
    %60 = vector.shape_cast %59 : vector<8x16x128xbf16> to vector<128x128xbf16>
    %c7 = arith.constant 7 : index
    %c0_70 = arith.constant 0 : index
    %c0_71 = arith.constant 0 : index
    %61 = vector.load %arg2[%c7, %c0_70, %c0_71] : memref<9x128x128xbf16, #tpu.memory_space<vmem>>, vector<1x128x128xbf16>
    %62 = vector.shape_cast %61 : vector<1x128x128xbf16> to vector<128x128xbf16>
    %cst_72 = arith.constant dense<0.000000e+00> : vector<128x128xf32>
    %63 = tpu.matmul %60, %62, %cst_72 {dimension_numbers = #tpu.dot_dimension_numbers<[1], [0], [0], [1], [0, 0, 1, 1], [], []>} : vector<128x128xbf16>, vector<128x128xbf16>, vector<128x128xf32> -> vector<128x128xf32>
    %64 = arith.addf %57, %63 : vector<128x128xf32>
    %c0_73 = arith.constant 0 : index
    %c2_74 = arith.constant 2 : index
    %c2_75 = arith.constant 2 : index
    %c0_76 = arith.constant 0 : index
    %65 = vector.load %arg1[%c0_73, %c2_74, %c2_75, %c0_76] : memref<1x18x18x128xbf16, #tpu.memory_space<vmem>>, vector<1x8x16x128xbf16>
    %66 = vector.shape_cast %65 : vector<1x8x16x128xbf16> to vector<8x16x128xbf16>
    %67 = vector.shape_cast %66 : vector<8x16x128xbf16> to vector<128x128xbf16>
    %c8 = arith.constant 8 : index
    %c0_77 = arith.constant 0 : index
    %c0_78 = arith.constant 0 : index
    %68 = vector.load %arg2[%c8, %c0_77, %c0_78] : memref<9x128x128xbf16, #tpu.memory_space<vmem>>, vector<1x128x128xbf16>
    %69 = vector.shape_cast %68 : vector<1x128x128xbf16> to vector<128x128xbf16>
    %cst_79 = arith.constant dense<0.000000e+00> : vector<128x128xf32>
    %70 = tpu.matmul %67, %69, %cst_79 {dimension_numbers = #tpu.dot_dimension_numbers<[1], [0], [0], [1], [0, 0, 1, 1], [], []>} : vector<128x128xbf16>, vector<128x128xbf16>, vector<128x128xf32> -> vector<128x128xf32>
    %71 = arith.addf %64, %70 : vector<128x128xf32>
    %72 = vector.broadcast %6 : vector<1x128xf32> to vector<128x128xf32>
    %73 = arith.addf %71, %72 : vector<128x128xf32>
    %cst_80 = arith.constant 0.000000e+00 : f32
    %74 = vector.broadcast %cst_80 : f32 to vector<128x128xf32>
    %75 = arith.maximumf %73, %74 : vector<128x128xf32>
    %76 = vector.shape_cast %75 : vector<128x128xf32> to vector<8x16x128xf32>
    %77 = arith.truncf %76 : vector<8x16x128xf32> to vector<8x16x128xbf16>
    %c1_81 = arith.constant 1 : index
    %c1_82 = arith.constant 1 : index
    %c0_83 = arith.constant 0 : index
    %78 = vector.load %arg7[%c1_81, %c1_82, %c0_83] : memref<18x18x128xbf16, #tpu.memory_space<vmem>>, vector<8x16x128xbf16>
    tpu.vector_store %arg7[%c1_81, %c1_82, %c0_83], %77 {strides = array<i32>} : memref<18x18x128xbf16, #tpu.memory_space<vmem>>, vector<8x16x128xbf16>,
    %cst_84 = arith.constant 0.000000e+00 : f32
    %79 = vector.broadcast %cst_84 : f32 to vector<128x128xf32>
    %c0_85 = arith.constant 0 : index
    %c8_86 = arith.constant 8 : index
    %c0_87 = arith.constant 0 : index
    %c0_88 = arith.constant 0 : index
    %80 = vector.load %arg1[%c0_85, %c8_86, %c0_87, %c0_88] : memref<1x18x18x128xbf16, #tpu.memory_space<vmem>>, vector<1x8x16x128xbf16>
    %81 = vector.shape_cast %80 : vector<1x8x16x128xbf16> to vector<8x16x128xbf16>
    %82 = vector.shape_cast %81 : vector<8x16x128xbf16> to vector<128x128xbf16>
    %c0_89 = arith.constant 0 : index
    %c0_90 = arith.constant 0 : index
    %c0_91 = arith.constant 0 : index
    %83 = vector.load %arg2[%c0_89, %c0_90, %c0_91] : memref<9x128x128xbf16, #tpu.memory_space<vmem>>, vector<1x128x128xbf16>
    %84 = vector.shape_cast %83 : vector<1x128x128xbf16> to vector<128x128xbf16>
    %cst_92 = arith.constant dense<0.000000e+00> : vector<128x128xf32>
    %85 = tpu.matmul %82, %84, %cst_92 {dimension_numbers = #tpu.dot_dimension_numbers<[1], [0], [0], [1], [0, 0, 1, 1], [], []>} : vector<128x128xbf16>, vector<128x128xbf16>, vector<128x128xf32> -> vector<128x128xf32>
    %86 = arith.addf %79, %85 : vector<128x128xf32>
    %c0_93 = arith.constant 0 : index
    %c8_94 = arith.constant 8 : index
    %c1_95 = arith.constant 1 : index
    %c0_96 = arith.constant 0 : index
    %87 = vector.load %arg1[%c0_93, %c8_94, %c1_95, %c0_96] : memref<1x18x18x128xbf16, #tpu.memory_space<vmem>>, vector<1x8x16x128xbf16>
    %88 = vector.shape_cast %87 : vector<1x8x16x128xbf16> to vector<8x16x128xbf16>
    %89 = vector.shape_cast %88 : vector<8x16x128xbf16> to vector<128x128xbf16>
    %c1_97 = arith.constant 1 : index
    %c0_98 = arith.constant 0 : index
    %c0_99 = arith.constant 0 : index
    %90 = vector.load %arg2[%c1_97, %c0_98, %c0_99] : memref<9x128x128xbf16, #tpu.memory_space<vmem>>, vector<1x128x128xbf16>
    %91 = vector.shape_cast %90 : vector<1x128x128xbf16> to vector<128x128xbf16>
    %cst_100 = arith.constant dense<0.000000e+00> : vector<128x128xf32>
    %92 = tpu.matmul %89, %91, %cst_100 {dimension_numbers = #tpu.dot_dimension_numbers<[1], [0], [0], [1], [0, 0, 1, 1], [], []>} : vector<128x128xbf16>, vector<128x128xbf16>, vector<128x128xf32> -> vector<128x128xf32>
    %93 = arith.addf %86, %92 : vector<128x128xf32>
    %c0_101 = arith.constant 0 : index
    %c8_102 = arith.constant 8 : index
    %c2_103 = arith.constant 2 : index
    %c0_104 = arith.constant 0 : index
    %94 = vector.load %arg1[%c0_101, %c8_102, %c2_103, %c0_104] : memref<1x18x18x128xbf16, #tpu.memory_space<vmem>>, vector<1x8x16x128xbf16>
    %95 = vector.shape_cast %94 : vector<1x8x16x128xbf16> to vector<8x16x128xbf16>
    %96 = vector.shape_cast %95 : vector<8x16x128xbf16> to vector<128x128xbf16>
    %c2_105 = arith.constant 2 : index
    %c0_106 = arith.constant 0 : index
    %c0_107 = arith.constant 0 : index
    %97 = vector.load %arg2[%c2_105, %c0_106, %c0_107] : memref<9x128x128xbf16, #tpu.memory_space<vmem>>, vector<1x128x128xbf16>
    %98 = vector.shape_cast %97 : vector<1x128x128xbf16> to vector<128x128xbf16>
    %cst_108 = arith.constant dense<0.000000e+00> : vector<128x128xf32>
    %99 = tpu.matmul %96, %98, %cst_108 {dimension_numbers = #tpu.dot_dimension_numbers<[1], [0], [0], [1], [0, 0, 1, 1], [], []>} : vector<128x128xbf16>, vector<128x128xbf16>, vector<128x128xf32> -> vector<128x128xf32>
    %100 = arith.addf %93, %99 : vector<128x128xf32>
    %c0_109 = arith.constant 0 : index
    %c9 = arith.constant 9 : index
    %c0_110 = arith.constant 0 : index
    %c0_111 = arith.constant 0 : index
    %101 = vector.load %arg1[%c0_109, %c9, %c0_110, %c0_111] : memref<1x18x18x128xbf16, #tpu.memory_space<vmem>>, vector<1x8x16x128xbf16>
    %102 = vector.shape_cast %101 : vector<1x8x16x128xbf16> to vector<8x16x128xbf16>
    %103 = vector.shape_cast %102 : vector<8x16x128xbf16> to vector<128x128xbf16>
    %c3_112 = arith.constant 3 : index
    %c0_113 = arith.constant 0 : index
    %c0_114 = arith.constant 0 : index
    %104 = vector.load %arg2[%c3_112, %c0_113, %c0_114] : memref<9x128x128xbf16, #tpu.memory_space<vmem>>, vector<1x128x128xbf16>
    %105 = vector.shape_cast %104 : vector<1x128x128xbf16> to vector<128x128xbf16>
    %cst_115 = arith.constant dense<0.000000e+00> : vector<128x128xf32>
    %106 = tpu.matmul %103, %105, %cst_115 {dimension_numbers = #tpu.dot_dimension_numbers<[1], [0], [0], [1], [0, 0, 1, 1], [], []>} : vector<128x128xbf16>, vector<128x128xbf16>, vector<128x128xf32> -> vector<128x128xf32>
    %107 = arith.addf %100, %106 : vector<128x128xf32>
    %c0_116 = arith.constant 0 : index
    %c9_117 = arith.constant 9 : index
    %c1_118 = arith.constant 1 : index
    %c0_119 = arith.constant 0 : index
    %108 = vector.load %arg1[%c0_116, %c9_117, %c1_118, %c0_119] : memref<1x18x18x128xbf16, #tpu.memory_space<vmem>>, vector<1x8x16x128xbf16>
    %109 = vector.shape_cast %108 : vector<1x8x16x128xbf16> to vector<8x16x128xbf16>
    %110 = vector.shape_cast %109 : vector<8x16x128xbf16> to vector<128x128xbf16>
    %c4_120 = arith.constant 4 : index
    %c0_121 = arith.constant 0 : index
    %c0_122 = arith.constant 0 : index
    %111 = vector.load %arg2[%c4_120, %c0_121, %c0_122] : memref<9x128x128xbf16, #tpu.memory_space<vmem>>, vector<1x128x128xbf16>
    %112 = vector.shape_cast %111 : vector<1x128x128xbf16> to vector<128x128xbf16>
    %cst_123 = arith.constant dense<0.000000e+00> : vector<128x128xf32>
    %113 = tpu.matmul %110, %112, %cst_123 {dimension_numbers = #tpu.dot_dimension_numbers<[1], [0], [0], [1], [0, 0, 1, 1], [], []>} : vector<128x128xbf16>, vector<128x128xbf16>, vector<128x128xf32> -> vector<128x128xf32>
    %114 = arith.addf %107, %113 : vector<128x128xf32>
    %c0_124 = arith.constant 0 : index
    %c9_125 = arith.constant 9 : index
    %c2_126 = arith.constant 2 : index
    %c0_127 = arith.constant 0 : index
    %115 = vector.load %arg1[%c0_124, %c9_125, %c2_126, %c0_127] : memref<1x18x18x128xbf16, #tpu.memory_space<vmem>>, vector<1x8x16x128xbf16>
    %116 = vector.shape_cast %115 : vector<1x8x16x128xbf16> to vector<8x16x128xbf16>
    %117 = vector.shape_cast %116 : vector<8x16x128xbf16> to vector<128x128xbf16>
    %c5_128 = arith.constant 5 : index
    %c0_129 = arith.constant 0 : index
    %c0_130 = arith.constant 0 : index
    %118 = vector.load %arg2[%c5_128, %c0_129, %c0_130] : memref<9x128x128xbf16, #tpu.memory_space<vmem>>, vector<1x128x128xbf16>
    %119 = vector.shape_cast %118 : vector<1x128x128xbf16> to vector<128x128xbf16>
    %cst_131 = arith.constant dense<0.000000e+00> : vector<128x128xf32>
    %120 = tpu.matmul %117, %119, %cst_131 {dimension_numbers = #tpu.dot_dimension_numbers<[1], [0], [0], [1], [0, 0, 1, 1], [], []>} : vector<128x128xbf16>, vector<128x128xbf16>, vector<128x128xf32> -> vector<128x128xf32>
    %121 = arith.addf %114, %120 : vector<128x128xf32>
    %c0_132 = arith.constant 0 : index
    %c10 = arith.constant 10 : index
    %c0_133 = arith.constant 0 : index
    %c0_134 = arith.constant 0 : index
    %122 = vector.load %arg1[%c0_132, %c10, %c0_133, %c0_134] : memref<1x18x18x128xbf16, #tpu.memory_space<vmem>>, vector<1x8x16x128xbf16>
    %123 = vector.shape_cast %122 : vector<1x8x16x128xbf16> to vector<8x16x128xbf16>
    %124 = vector.shape_cast %123 : vector<8x16x128xbf16> to vector<128x128xbf16>
    %c6_135 = arith.constant 6 : index
    %c0_136 = arith.constant 0 : index
    %c0_137 = arith.constant 0 : index
    %125 = vector.load %arg2[%c6_135, %c0_136, %c0_137] : memref<9x128x128xbf16, #tpu.memory_space<vmem>>, vector<1x128x128xbf16>
    %126 = vector.shape_cast %125 : vector<1x128x128xbf16> to vector<128x128xbf16>
    %cst_138 = arith.constant dense<0.000000e+00> : vector<128x128xf32>
    %127 = tpu.matmul %124, %126, %cst_138 {dimension_numbers = #tpu.dot_dimension_numbers<[1], [0], [0], [1], [0, 0, 1, 1], [], []>} : vector<128x128xbf16>, vector<128x128xbf16>, vector<128x128xf32> -> vector<128x128xf32>
    %128 = arith.addf %121, %127 : vector<128x128xf32>
    %c0_139 = arith.constant 0 : index
    %c10_140 = arith.constant 10 : index
    %c1_141 = arith.constant 1 : index
    %c0_142 = arith.constant 0 : index
    %129 = vector.load %arg1[%c0_139, %c10_140, %c1_141, %c0_142] : memref<1x18x18x128xbf16, #tpu.memory_space<vmem>>, vector<1x8x16x128xbf16>
    %130 = vector.shape_cast %129 : vector<1x8x16x128xbf16> to vector<8x16x128xbf16>
    %131 = vector.shape_cast %130 : vector<8x16x128xbf16> to vector<128x128xbf16>
    %c7_143 = arith.constant 7 : index
    %c0_144 = arith.constant 0 : index
    %c0_145 = arith.constant 0 : index
    %132 = vector.load %arg2[%c7_143, %c0_144, %c0_145] : memref<9x128x128xbf16, #tpu.memory_space<vmem>>, vector<1x128x128xbf16>
    %133 = vector.shape_cast %132 : vector<1x128x128xbf16> to vector<128x128xbf16>
    %cst_146 = arith.constant dense<0.000000e+00> : vector<128x128xf32>
    %134 = tpu.matmul %131, %133, %cst_146 {dimension_numbers = #tpu.dot_dimension_numbers<[1], [0], [0], [1], [0, 0, 1, 1], [], []>} : vector<128x128xbf16>, vector<128x128xbf16>, vector<128x128xf32> -> vector<128x128xf32>
    %135 = arith.addf %128, %134 : vector<128x128xf32>
    %c0_147 = arith.constant 0 : index
    %c10_148 = arith.constant 10 : index
    %c2_149 = arith.constant 2 : index
    %c0_150 = arith.constant 0 : index
    %136 = vector.load %arg1[%c0_147, %c10_148, %c2_149, %c0_150] : memref<1x18x18x128xbf16, #tpu.memory_space<vmem>>, vector<1x8x16x128xbf16>
    %137 = vector.shape_cast %136 : vector<1x8x16x128xbf16> to vector<8x16x128xbf16>
    %138 = vector.shape_cast %137 : vector<8x16x128xbf16> to vector<128x128xbf16>
    %c8_151 = arith.constant 8 : index
    %c0_152 = arith.constant 0 : index
    %c0_153 = arith.constant 0 : index
    %139 = vector.load %arg2[%c8_151, %c0_152, %c0_153] : memref<9x128x128xbf16, #tpu.memory_space<vmem>>, vector<1x128x128xbf16>
    %140 = vector.shape_cast %139 : vector<1x128x128xbf16> to vector<128x128xbf16>
    %cst_154 = arith.constant dense<0.000000e+00> : vector<128x128xf32>
    %141 = tpu.matmul %138, %140, %cst_154 {dimension_numbers = #tpu.dot_dimension_numbers<[1], [0], [0], [1], [0, 0, 1, 1], [], []>} : vector<128x128xbf16>, vector<128x128xbf16>, vector<128x128xf32> -> vector<128x128xf32>
    %142 = arith.addf %135, %141 : vector<128x128xf32>
    %143 = vector.broadcast %6 : vector<1x128xf32> to vector<128x128xf32>
    %144 = arith.addf %142, %143 : vector<128x128xf32>
    %cst_155 = arith.constant 0.000000e+00 : f32
    %145 = vector.broadcast %cst_155 : f32 to vector<128x128xf32>
    %146 = arith.maximumf %144, %145 : vector<128x128xf32>
    %147 = vector.shape_cast %146 : vector<128x128xf32> to vector<8x16x128xf32>
    %148 = arith.truncf %147 : vector<8x16x128xf32> to vector<8x16x128xbf16>
    %c9_156 = arith.constant 9 : index
    %c1_157 = arith.constant 1 : index
    %c0_158 = arith.constant 0 : index
    %149 = vector.load %arg7[%c9_156, %c1_157, %c0_158] : memref<18x18x128xbf16, #tpu.memory_space<vmem>>, vector<8x16x128xbf16>
    tpu.vector_store %arg7[%c9_156, %c1_157, %c0_158], %148 {strides = array<i32>} : memref<18x18x128xbf16, #tpu.memory_space<vmem>>, vector<8x16x128xbf16>,
    %cst_159 = arith.constant 0.000000e+00 : f32
    %150 = vector.broadcast %cst_159 : f32 to vector<128x128xf32>
    %c0_160 = arith.constant 0 : index
    %c0_161 = arith.constant 0 : index
    %c0_162 = arith.constant 0 : index
    %151 = vector.load %arg7[%c0_160, %c0_161, %c0_162] : memref<18x18x128xbf16, #tpu.memory_space<vmem>>, vector<8x16x128xbf16>
    %152 = vector.shape_cast %151 : vector<8x16x128xbf16> to vector<128x128xbf16>
    %c0_163 = arith.constant 0 : index
    %c0_164 = arith.constant 0 : index
    %c0_165 = arith.constant 0 : index
    %153 = vector.load %arg3[%c0_163, %c0_164, %c0_165] : memref<9x128x128xbf16, #tpu.memory_space<vmem>>, vector<1x128x128xbf16>
    %154 = vector.shape_cast %153 : vector<1x128x128xbf16> to vector<128x128xbf16>
    %cst_166 = arith.constant dense<0.000000e+00> : vector<128x128xf32>
    %155 = tpu.matmul %152, %154, %cst_166 {dimension_numbers = #tpu.dot_dimension_numbers<[1], [0], [0], [1], [0, 0, 1, 1], [], []>} : vector<128x128xbf16>, vector<128x128xbf16>, vector<128x128xf32> -> vector<128x128xf32>
    %156 = arith.addf %150, %155 : vector<128x128xf32>
    %c0_167 = arith.constant 0 : index
    %c1_168 = arith.constant 1 : index
    %c0_169 = arith.constant 0 : index
    %157 = vector.load %arg7[%c0_167, %c1_168, %c0_169] : memref<18x18x128xbf16, #tpu.memory_space<vmem>>, vector<8x16x128xbf16>
    %158 = vector.shape_cast %157 : vector<8x16x128xbf16> to vector<128x128xbf16>
    %c1_170 = arith.constant 1 : index
    %c0_171 = arith.constant 0 : index
    %c0_172 = arith.constant 0 : index
    %159 = vector.load %arg3[%c1_170, %c0_171, %c0_172] : memref<9x128x128xbf16, #tpu.memory_space<vmem>>, vector<1x128x128xbf16>
    %160 = vector.shape_cast %159 : vector<1x128x128xbf16> to vector<128x128xbf16>
    %cst_173 = arith.constant dense<0.000000e+00> : vector<128x128xf32>
    %161 = tpu.matmul %158, %160, %cst_173 {dimension_numbers = #tpu.dot_dimension_numbers<[1], [0], [0], [1], [0, 0, 1, 1], [], []>} : vector<128x128xbf16>, vector<128x128xbf16>, vector<128x128xf32> -> vector<128x128xf32>
    %162 = arith.addf %156, %161 : vector<128x128xf32>
    %c0_174 = arith.constant 0 : index
    %c2_175 = arith.constant 2 : index
    %c0_176 = arith.constant 0 : index
    %163 = vector.load %arg7[%c0_174, %c2_175, %c0_176] : memref<18x18x128xbf16, #tpu.memory_space<vmem>>, vector<8x16x128xbf16>
    %164 = vector.shape_cast %163 : vector<8x16x128xbf16> to vector<128x128xbf16>
    %c2_177 = arith.constant 2 : index
    %c0_178 = arith.constant 0 : index
    %c0_179 = arith.constant 0 : index
    %165 = vector.load %arg3[%c2_177, %c0_178, %c0_179] : memref<9x128x128xbf16, #tpu.memory_space<vmem>>, vector<1x128x128xbf16>
    %166 = vector.shape_cast %165 : vector<1x128x128xbf16> to vector<128x128xbf16>
    %cst_180 = arith.constant dense<0.000000e+00> : vector<128x128xf32>
    %167 = tpu.matmul %164, %166, %cst_180 {dimension_numbers = #tpu.dot_dimension_numbers<[1], [0], [0], [1], [0, 0, 1, 1], [], []>} : vector<128x128xbf16>, vector<128x128xbf16>, vector<128x128xf32> -> vector<128x128xf32>
    %168 = arith.addf %162, %167 : vector<128x128xf32>
    %c1_181 = arith.constant 1 : index
    %c0_182 = arith.constant 0 : index
    %c0_183 = arith.constant 0 : index
    %169 = vector.load %arg7[%c1_181, %c0_182, %c0_183] : memref<18x18x128xbf16, #tpu.memory_space<vmem>>, vector<8x16x128xbf16>
    %170 = vector.shape_cast %169 : vector<8x16x128xbf16> to vector<128x128xbf16>
    %c3_184 = arith.constant 3 : index
    %c0_185 = arith.constant 0 : index
    %c0_186 = arith.constant 0 : index
    %171 = vector.load %arg3[%c3_184, %c0_185, %c0_186] : memref<9x128x128xbf16, #tpu.memory_space<vmem>>, vector<1x128x128xbf16>
    %172 = vector.shape_cast %171 : vector<1x128x128xbf16> to vector<128x128xbf16>
    %cst_187 = arith.constant dense<0.000000e+00> : vector<128x128xf32>
    %173 = tpu.matmul %170, %172, %cst_187 {dimension_numbers = #tpu.dot_dimension_numbers<[1], [0], [0], [1], [0, 0, 1, 1], [], []>} : vector<128x128xbf16>, vector<128x128xbf16>, vector<128x128xf32> -> vector<128x128xf32>
    %174 = arith.addf %168, %173 : vector<128x128xf32>
    %c1_188 = arith.constant 1 : index
    %c1_189 = arith.constant 1 : index
    %c0_190 = arith.constant 0 : index
    %175 = vector.load %arg7[%c1_188, %c1_189, %c0_190] : memref<18x18x128xbf16, #tpu.memory_space<vmem>>, vector<8x16x128xbf16>
    %176 = vector.shape_cast %175 : vector<8x16x128xbf16> to vector<128x128xbf16>
    %c4_191 = arith.constant 4 : index
    %c0_192 = arith.constant 0 : index
    %c0_193 = arith.constant 0 : index
    %177 = vector.load %arg3[%c4_191, %c0_192, %c0_193] : memref<9x128x128xbf16, #tpu.memory_space<vmem>>, vector<1x128x128xbf16>
    %178 = vector.shape_cast %177 : vector<1x128x128xbf16> to vector<128x128xbf16>
    %cst_194 = arith.constant dense<0.000000e+00> : vector<128x128xf32>
    %179 = tpu.matmul %176, %178, %cst_194 {dimension_numbers = #tpu.dot_dimension_numbers<[1], [0], [0], [1], [0, 0, 1, 1], [], []>} : vector<128x128xbf16>, vector<128x128xbf16>, vector<128x128xf32> -> vector<128x128xf32>
    %180 = arith.addf %174, %179 : vector<128x128xf32>
    %c1_195 = arith.constant 1 : index
    %c2_196 = arith.constant 2 : index
    %c0_197 = arith.constant 0 : index
    %181 = vector.load %arg7[%c1_195, %c2_196, %c0_197] : memref<18x18x128xbf16, #tpu.memory_space<vmem>>, vector<8x16x128xbf16>
    %182 = vector.shape_cast %181 : vector<8x16x128xbf16> to vector<128x128xbf16>
    %c5_198 = arith.constant 5 : index
    %c0_199 = arith.constant 0 : index
    %c0_200 = arith.constant 0 : index
    %183 = vector.load %arg3[%c5_198, %c0_199, %c0_200] : memref<9x128x128xbf16, #tpu.memory_space<vmem>>, vector<1x128x128xbf16>
    %184 = vector.shape_cast %183 : vector<1x128x128xbf16> to vector<128x128xbf16>
    %cst_201 = arith.constant dense<0.000000e+00> : vector<128x128xf32>
    %185 = tpu.matmul %182, %184, %cst_201 {dimension_numbers = #tpu.dot_dimension_numbers<[1], [0], [0], [1], [0, 0, 1, 1], [], []>} : vector<128x128xbf16>, vector<128x128xbf16>, vector<128x128xf32> -> vector<128x128xf32>
    %186 = arith.addf %180, %185 : vector<128x128xf32>
    %c2_202 = arith.constant 2 : index
    %c0_203 = arith.constant 0 : index
    %c0_204 = arith.constant 0 : index
    %187 = vector.load %arg7[%c2_202, %c0_203, %c0_204] : memref<18x18x128xbf16, #tpu.memory_space<vmem>>, vector<8x16x128xbf16>
    %188 = vector.shape_cast %187 : vector<8x16x128xbf16> to vector<128x128xbf16>
    %c6_205 = arith.constant 6 : index
    %c0_206 = arith.constant 0 : index
    %c0_207 = arith.constant 0 : index
    %189 = vector.load %arg3[%c6_205, %c0_206, %c0_207] : memref<9x128x128xbf16, #tpu.memory_space<vmem>>, vector<1x128x128xbf16>
    %190 = vector.shape_cast %189 : vector<1x128x128xbf16> to vector<128x128xbf16>
    %cst_208 = arith.constant dense<0.000000e+00> : vector<128x128xf32>
    %191 = tpu.matmul %188, %190, %cst_208 {dimension_numbers = #tpu.dot_dimension_numbers<[1], [0], [0], [1], [0, 0, 1, 1], [], []>} : vector<128x128xbf16>, vector<128x128xbf16>, vector<128x128xf32> -> vector<128x128xf32>
    %192 = arith.addf %186, %191 : vector<128x128xf32>
    %c2_209 = arith.constant 2 : index
    %c1_210 = arith.constant 1 : index
    %c0_211 = arith.constant 0 : index
    %193 = vector.load %arg7[%c2_209, %c1_210, %c0_211] : memref<18x18x128xbf16, #tpu.memory_space<vmem>>, vector<8x16x128xbf16>
    %194 = vector.shape_cast %193 : vector<8x16x128xbf16> to vector<128x128xbf16>
    %c7_212 = arith.constant 7 : index
    %c0_213 = arith.constant 0 : index
    %c0_214 = arith.constant 0 : index
    %195 = vector.load %arg3[%c7_212, %c0_213, %c0_214] : memref<9x128x128xbf16, #tpu.memory_space<vmem>>, vector<1x128x128xbf16>
    %196 = vector.shape_cast %195 : vector<1x128x128xbf16> to vector<128x128xbf16>
    %cst_215 = arith.constant dense<0.000000e+00> : vector<128x128xf32>
    %197 = tpu.matmul %194, %196, %cst_215 {dimension_numbers = #tpu.dot_dimension_numbers<[1], [0], [0], [1], [0, 0, 1, 1], [], []>} : vector<128x128xbf16>, vector<128x128xbf16>, vector<128x128xf32> -> vector<128x128xf32>
    %198 = arith.addf %192, %197 : vector<128x128xf32>
    %c2_216 = arith.constant 2 : index
    %c2_217 = arith.constant 2 : index
    %c0_218 = arith.constant 0 : index
    %199 = vector.load %arg7[%c2_216, %c2_217, %c0_218] : memref<18x18x128xbf16, #tpu.memory_space<vmem>>, vector<8x16x128xbf16>
    %200 = vector.shape_cast %199 : vector<8x16x128xbf16> to vector<128x128xbf16>
    %c8_219 = arith.constant 8 : index
    %c0_220 = arith.constant 0 : index
    %c0_221 = arith.constant 0 : index
    %201 = vector.load %arg3[%c8_219, %c0_220, %c0_221] : memref<9x128x128xbf16, #tpu.memory_space<vmem>>, vector<1x128x128xbf16>
    %202 = vector.shape_cast %201 : vector<1x128x128xbf16> to vector<128x128xbf16>
    %cst_222 = arith.constant dense<0.000000e+00> : vector<128x128xf32>
    %203 = tpu.matmul %200, %202, %cst_222 {dimension_numbers = #tpu.dot_dimension_numbers<[1], [0], [0], [1], [0, 0, 1, 1], [], []>} : vector<128x128xbf16>, vector<128x128xbf16>, vector<128x128xf32> -> vector<128x128xf32>
    %204 = arith.addf %198, %203 : vector<128x128xf32>
    %c0_223 = arith.constant 0 : index
    %c1_224 = arith.constant 1 : index
    %c1_225 = arith.constant 1 : index
    %c0_226 = arith.constant 0 : index
    %205 = vector.load %arg1[%c0_223, %c1_224, %c1_225, %c0_226] : memref<1x18x18x128xbf16, #tpu.memory_space<vmem>>, vector<1x8x16x128xbf16>
    %206 = vector.shape_cast %205 : vector<1x8x16x128xbf16> to vector<8x16x128xbf16>
    %207 = vector.broadcast %7 : vector<1x128xf32> to vector<128x128xf32>
    %208 = arith.addf %204, %207 : vector<128x128xf32>
    %209 = vector.shape_cast %206 : vector<8x16x128xbf16> to vector<128x128xbf16>
    %210 = arith.extf %209 : vector<128x128xbf16> to vector<128x128xf32>
    %211 = arith.addf %208, %210 : vector<128x128xf32>
    %cst_227 = arith.constant 0.000000e+00 : f32
    %212 = vector.broadcast %cst_227 : f32 to vector<128x128xf32>
    %213 = arith.maximumf %211, %212 : vector<128x128xf32>
    %214 = vector.shape_cast %213 : vector<128x128xf32> to vector<8x16x128xf32>
    %c0_228 = arith.constant 0 : index
    %c0_229 = arith.constant 0 : index
    %c0_230 = arith.constant 0 : index
    %c0_231 = arith.constant 0 : index
    %215 = vector.load %arg6[%c0_228, %c0_229, %c0_230, %c0_231] : memref<1x16x16x128xf32, #tpu.memory_space<vmem>>, vector<1x8x16x128xf32>
    %216 = vector.shape_cast %215 : vector<1x8x16x128xf32> to vector<8x16x128xf32>
    %217 = vector.shape_cast %214 : vector<8x16x128xf32> to vector<1x8x16x128xf32>
    tpu.vector_store %arg6[%c0_228, %c0_229, %c0_230, %c0_231], %217 {strides = array<i32>} : memref<1x16x16x128xf32, #tpu.memory_space<vmem>>, vector<1x8x16x128xf32>,
    %cst_232 = arith.constant 0.000000e+00 : f32
    %218 = vector.broadcast %cst_232 : f32 to vector<128x128xf32>
    %c8_233 = arith.constant 8 : index
    %c0_234 = arith.constant 0 : index
    %c0_235 = arith.constant 0 : index
    %219 = vector.load %arg7[%c8_233, %c0_234, %c0_235] : memref<18x18x128xbf16, #tpu.memory_space<vmem>>, vector<8x16x128xbf16>
    %220 = vector.shape_cast %219 : vector<8x16x128xbf16> to vector<128x128xbf16>
    %c0_236 = arith.constant 0 : index
    %c0_237 = arith.constant 0 : index
    %c0_238 = arith.constant 0 : index
    %221 = vector.load %arg3[%c0_236, %c0_237, %c0_238] : memref<9x128x128xbf16, #tpu.memory_space<vmem>>, vector<1x128x128xbf16>
    %222 = vector.shape_cast %221 : vector<1x128x128xbf16> to vector<128x128xbf16>
    %cst_239 = arith.constant dense<0.000000e+00> : vector<128x128xf32>
    %223 = tpu.matmul %220, %222, %cst_239 {dimension_numbers = #tpu.dot_dimension_numbers<[1], [0], [0], [1], [0, 0, 1, 1], [], []>} : vector<128x128xbf16>, vector<128x128xbf16>, vector<128x128xf32> -> vector<128x128xf32>
    %224 = arith.addf %218, %223 : vector<128x128xf32>
    %c8_240 = arith.constant 8 : index
    %c1_241 = arith.constant 1 : index
    %c0_242 = arith.constant 0 : index
    %225 = vector.load %arg7[%c8_240, %c1_241, %c0_242] : memref<18x18x128xbf16, #tpu.memory_space<vmem>>, vector<8x16x128xbf16>
    %226 = vector.shape_cast %225 : vector<8x16x128xbf16> to vector<128x128xbf16>
    %c1_243 = arith.constant 1 : index
    %c0_244 = arith.constant 0 : index
    %c0_245 = arith.constant 0 : index
    %227 = vector.load %arg3[%c1_243, %c0_244, %c0_245] : memref<9x128x128xbf16, #tpu.memory_space<vmem>>, vector<1x128x128xbf16>
    %228 = vector.shape_cast %227 : vector<1x128x128xbf16> to vector<128x128xbf16>
    %cst_246 = arith.constant dense<0.000000e+00> : vector<128x128xf32>
    %229 = tpu.matmul %226, %228, %cst_246 {dimension_numbers = #tpu.dot_dimension_numbers<[1], [0], [0], [1], [0, 0, 1, 1], [], []>} : vector<128x128xbf16>, vector<128x128xbf16>, vector<128x128xf32> -> vector<128x128xf32>
    %230 = arith.addf %224, %229 : vector<128x128xf32>
    %c8_247 = arith.constant 8 : index
    %c2_248 = arith.constant 2 : index
    %c0_249 = arith.constant 0 : index
    %231 = vector.load %arg7[%c8_247, %c2_248, %c0_249] : memref<18x18x128xbf16, #tpu.memory_space<vmem>>, vector<8x16x128xbf16>
    %232 = vector.shape_cast %231 : vector<8x16x128xbf16> to vector<128x128xbf16>
    %c2_250 = arith.constant 2 : index
    %c0_251 = arith.constant 0 : index
    %c0_252 = arith.constant 0 : index
    %233 = vector.load %arg3[%c2_250, %c0_251, %c0_252] : memref<9x128x128xbf16, #tpu.memory_space<vmem>>, vector<1x128x128xbf16>
    %234 = vector.shape_cast %233 : vector<1x128x128xbf16> to vector<128x128xbf16>
    %cst_253 = arith.constant dense<0.000000e+00> : vector<128x128xf32>
    %235 = tpu.matmul %232, %234, %cst_253 {dimension_numbers = #tpu.dot_dimension_numbers<[1], [0], [0], [1], [0, 0, 1, 1], [], []>} : vector<128x128xbf16>, vector<128x128xbf16>, vector<128x128xf32> -> vector<128x128xf32>
    %236 = arith.addf %230, %235 : vector<128x128xf32>
    %c9_254 = arith.constant 9 : index
    %c0_255 = arith.constant 0 : index
    %c0_256 = arith.constant 0 : index
    %237 = vector.load %arg7[%c9_254, %c0_255, %c0_256] : memref<18x18x128xbf16, #tpu.memory_space<vmem>>, vector<8x16x128xbf16>
    %238 = vector.shape_cast %237 : vector<8x16x128xbf16> to vector<128x128xbf16>
    %c3_257 = arith.constant 3 : index
    %c0_258 = arith.constant 0 : index
    %c0_259 = arith.constant 0 : index
    %239 = vector.load %arg3[%c3_257, %c0_258, %c0_259] : memref<9x128x128xbf16, #tpu.memory_space<vmem>>, vector<1x128x128xbf16>
    %240 = vector.shape_cast %239 : vector<1x128x128xbf16> to vector<128x128xbf16>
    %cst_260 = arith.constant dense<0.000000e+00> : vector<128x128xf32>
    %241 = tpu.matmul %238, %240, %cst_260 {dimension_numbers = #tpu.dot_dimension_numbers<[1], [0], [0], [1], [0, 0, 1, 1], [], []>} : vector<128x128xbf16>, vector<128x128xbf16>, vector<128x128xf32> -> vector<128x128xf32>
    %242 = arith.addf %236, %241 : vector<128x128xf32>
    %c9_261 = arith.constant 9 : index
    %c1_262 = arith.constant 1 : index
    %c0_263 = arith.constant 0 : index
    %243 = vector.load %arg7[%c9_261, %c1_262, %c0_263] : memref<18x18x128xbf16, #tpu.memory_space<vmem>>, vector<8x16x128xbf16>
    %244 = vector.shape_cast %243 : vector<8x16x128xbf16> to vector<128x128xbf16>
    %c4_264 = arith.constant 4 : index
    %c0_265 = arith.constant 0 : index
    %c0_266 = arith.constant 0 : index
    %245 = vector.load %arg3[%c4_264, %c0_265, %c0_266] : memref<9x128x128xbf16, #tpu.memory_space<vmem>>, vector<1x128x128xbf16>
    %246 = vector.shape_cast %245 : vector<1x128x128xbf16> to vector<128x128xbf16>
    %cst_267 = arith.constant dense<0.000000e+00> : vector<128x128xf32>
    %247 = tpu.matmul %244, %246, %cst_267 {dimension_numbers = #tpu.dot_dimension_numbers<[1], [0], [0], [1], [0, 0, 1, 1], [], []>} : vector<128x128xbf16>, vector<128x128xbf16>, vector<128x128xf32> -> vector<128x128xf32>
    %248 = arith.addf %242, %247 : vector<128x128xf32>
    %c9_268 = arith.constant 9 : index
    %c2_269 = arith.constant 2 : index
    %c0_270 = arith.constant 0 : index
    %249 = vector.load %arg7[%c9_268, %c2_269, %c0_270] : memref<18x18x128xbf16, #tpu.memory_space<vmem>>, vector<8x16x128xbf16>
    %250 = vector.shape_cast %249 : vector<8x16x128xbf16> to vector<128x128xbf16>
    %c5_271 = arith.constant 5 : index
    %c0_272 = arith.constant 0 : index
    %c0_273 = arith.constant 0 : index
    %251 = vector.load %arg3[%c5_271, %c0_272, %c0_273] : memref<9x128x128xbf16, #tpu.memory_space<vmem>>, vector<1x128x128xbf16>
    %252 = vector.shape_cast %251 : vector<1x128x128xbf16> to vector<128x128xbf16>
    %cst_274 = arith.constant dense<0.000000e+00> : vector<128x128xf32>
    %253 = tpu.matmul %250, %252, %cst_274 {dimension_numbers = #tpu.dot_dimension_numbers<[1], [0], [0], [1], [0, 0, 1, 1], [], []>} : vector<128x128xbf16>, vector<128x128xbf16>, vector<128x128xf32> -> vector<128x128xf32>
    %254 = arith.addf %248, %253 : vector<128x128xf32>
    %c10_275 = arith.constant 10 : index
    %c0_276 = arith.constant 0 : index
    %c0_277 = arith.constant 0 : index
    %255 = vector.load %arg7[%c10_275, %c0_276, %c0_277] : memref<18x18x128xbf16, #tpu.memory_space<vmem>>, vector<8x16x128xbf16>
    %256 = vector.shape_cast %255 : vector<8x16x128xbf16> to vector<128x128xbf16>
    %c6_278 = arith.constant 6 : index
    %c0_279 = arith.constant 0 : index
    %c0_280 = arith.constant 0 : index
    %257 = vector.load %arg3[%c6_278, %c0_279, %c0_280] : memref<9x128x128xbf16, #tpu.memory_space<vmem>>, vector<1x128x128xbf16>
    %258 = vector.shape_cast %257 : vector<1x128x128xbf16> to vector<128x128xbf16>
    %cst_281 = arith.constant dense<0.000000e+00> : vector<128x128xf32>
    %259 = tpu.matmul %256, %258, %cst_281 {dimension_numbers = #tpu.dot_dimension_numbers<[1], [0], [0], [1], [0, 0, 1, 1], [], []>} : vector<128x128xbf16>, vector<128x128xbf16>, vector<128x128xf32> -> vector<128x128xf32>
    %260 = arith.addf %254, %259 : vector<128x128xf32>
    %c10_282 = arith.constant 10 : index
    %c1_283 = arith.constant 1 : index
    %c0_284 = arith.constant 0 : index
    %261 = vector.load %arg7[%c10_282, %c1_283, %c0_284] : memref<18x18x128xbf16, #tpu.memory_space<vmem>>, vector<8x16x128xbf16>
    %262 = vector.shape_cast %261 : vector<8x16x128xbf16> to vector<128x128xbf16>
    %c7_285 = arith.constant 7 : index
    %c0_286 = arith.constant 0 : index
    %c0_287 = arith.constant 0 : index
    %263 = vector.load %arg3[%c7_285, %c0_286, %c0_287] : memref<9x128x128xbf16, #tpu.memory_space<vmem>>, vector<1x128x128xbf16>
    %264 = vector.shape_cast %263 : vector<1x128x128xbf16> to vector<128x128xbf16>
    %cst_288 = arith.constant dense<0.000000e+00> : vector<128x128xf32>
    %265 = tpu.matmul %262, %264, %cst_288 {dimension_numbers = #tpu.dot_dimension_numbers<[1], [0], [0], [1], [0, 0, 1, 1], [], []>} : vector<128x128xbf16>, vector<128x128xbf16>, vector<128x128xf32> -> vector<128x128xf32>
    %266 = arith.addf %260, %265 : vector<128x128xf32>
    %c10_289 = arith.constant 10 : index
    %c2_290 = arith.constant 2 : index
    %c0_291 = arith.constant 0 : index
    %267 = vector.load %arg7[%c10_289, %c2_290, %c0_291] : memref<18x18x128xbf16, #tpu.memory_space<vmem>>, vector<8x16x128xbf16>
    %268 = vector.shape_cast %267 : vector<8x16x128xbf16> to vector<128x128xbf16>
    %c8_292 = arith.constant 8 : index
    %c0_293 = arith.constant 0 : index
    %c0_294 = arith.constant 0 : index
    %269 = vector.load %arg3[%c8_292, %c0_293, %c0_294] : memref<9x128x128xbf16, #tpu.memory_space<vmem>>, vector<1x128x128xbf16>
    %270 = vector.shape_cast %269 : vector<1x128x128xbf16> to vector<128x128xbf16>
    %cst_295 = arith.constant dense<0.000000e+00> : vector<128x128xf32>
    %271 = tpu.matmul %268, %270, %cst_295 {dimension_numbers = #tpu.dot_dimension_numbers<[1], [0], [0], [1], [0, 0, 1, 1], [], []>} : vector<128x128xbf16>, vector<128x128xbf16>, vector<128x128xf32> -> vector<128x128xf32>
    %272 = arith.addf %266, %271 : vector<128x128xf32>
    %c0_296 = arith.constant 0 : index
    %c9_297 = arith.constant 9 : index
    %c1_298 = arith.constant 1 : index
    %c0_299 = arith.constant 0 : index
    %273 = vector.load %arg1[%c0_296, %c9_297, %c1_298, %c0_299] : memref<1x18x18x128xbf16, #tpu.memory_space<vmem>>, vector<1x8x16x128xbf16>
    %274 = vector.shape_cast %273 : vector<1x8x16x128xbf16> to vector<8x16x128xbf16>
    %275 = vector.broadcast %7 : vector<1x128xf32> to vector<128x128xf32>
    %276 = arith.addf %272, %275 : vector<128x128xf32>
    %277 = vector.shape_cast %274 : vector<8x16x128xbf16> to vector<128x128xbf16>
    %278 = arith.extf %277 : vector<128x128xbf16> to vector<128x128xf32>
    %279 = arith.addf %276, %278 : vector<128x128xf32>
    %cst_300 = arith.constant 0.000000e+00 : f32
    %280 = vector.broadcast %cst_300 : f32 to vector<128x128xf32>
    %281 = arith.maximumf %279, %280 : vector<128x128xf32>
    %282 = vector.shape_cast %281 : vector<128x128xf32> to vector<8x16x128xf32>
    %c0_301 = arith.constant 0 : index
    %c8_302 = arith.constant 8 : index
    %c0_303 = arith.constant 0 : index
    %c0_304 = arith.constant 0 : index
    %283 = vector.load %arg6[%c0_301, %c8_302, %c0_303, %c0_304] : memref<1x16x16x128xf32, #tpu.memory_space<vmem>>, vector<1x8x16x128xf32>
    %284 = vector.shape_cast %283 : vector<1x8x16x128xf32> to vector<8x16x128xf32>
    %285 = vector.shape_cast %282 : vector<8x16x128xf32> to vector<1x8x16x128xf32>
    tpu.vector_store %arg6[%c0_301, %c8_302, %c0_303, %c0_304], %285 {strides = array<i32>} : memref<1x16x16x128xf32, #tpu.memory_space<vmem>>, vector<1x8x16x128xf32>,
    return
  }
  func.func @transform_0(%arg0: i32) -> (i32, i32, i32, i32) {
    %c0_i32 = arith.constant 0 : i32
    %c0_i32_0 = arith.constant 0 : i32
    %c0_i32_1 = arith.constant 0 : i32
    %c0_i32_2 = arith.constant 0 : i32
    return %arg0, %c0_i32, %c0_i32_0, %c0_i32_1 : i32, i32, i32, i32
  }
  func.func @transform_1(%arg0: i32) -> (i32, i32, i32) {
    %c0_i32 = arith.constant 0 : i32
    %c0_i32_0 = arith.constant 0 : i32
    %c0_i32_1 = arith.constant 0 : i32
    %c0_i32_2 = arith.constant 0 : i32
    return %c0_i32, %c0_i32_0, %c0_i32_1 : i32, i32, i32
  }
  func.func @transform_2(%arg0: i32) -> (i32, i32, i32) {
    %c0_i32 = arith.constant 0 : i32
    %c0_i32_0 = arith.constant 0 : i32
    %c0_i32_1 = arith.constant 0 : i32
    %c0_i32_2 = arith.constant 0 : i32
    return %c0_i32, %c0_i32_0, %c0_i32_1 : i32, i32, i32
  }
  func.func @transform_3(%arg0: i32) -> (i32, i32) {
    %c0_i32 = arith.constant 0 : i32
    %c0_i32_0 = arith.constant 0 : i32
    %c0_i32_1 = arith.constant 0 : i32
    return %c0_i32, %c0_i32_0 : i32, i32
  }
  func.func @transform_4(%arg0: i32) -> (i32, i32) {
    %c0_i32 = arith.constant 0 : i32
    %c0_i32_0 = arith.constant 0 : i32
    %c0_i32_1 = arith.constant 0 : i32
    return %c0_i32, %c0_i32_0 : i32, i32
  }
  func.func @transform_5(%arg0: i32) -> (i32, i32, i32, i32) {
    %c0_i32 = arith.constant 0 : i32
    %c0_i32_0 = arith.constant 0 : i32
    %c0_i32_1 = arith.constant 0 : i32
    %c0_i32_2 = arith.constant 0 : i32
    return %arg0, %c0_i32, %c0_i32_0, %c0_i32_1 : i32, i32, i32, i32
  }
}

</mosaic_0001>

<llo_original>
// kernel: basic_block_pallas.1
$region0: #{basic_block_pallas.1}
  #allocation0 [shape = 'u32[]', space=smem, size = 0x4, offset = 0x4, fixed_abs, tag = 'smem constant byte address 0x4 - core index']
  #allocation1 [shape = 'u32[72,128]{1,0:T(1,128)}', space=vmem, size = 0x9000, scoped, tag = 'internal scratch']
  #allocation2 [shape = 'bf16[18,18,128]{2,1,0:T(8,128)(2,1)}', space=vmem, size = 0x1b000, scoped, tag = 'scratch operand']
  %s0 = inlined_call_operand.vmem [shape: bf16[2,18,18,128], index: 0, kind: input, shape index: {}]
  %s1 = inlined_call_operand.vmem [shape: bf16[9,128,128], index: 1, kind: input, shape index: {}]
  %s2 = inlined_call_operand.vmem [shape: bf16[9,128,128], index: 2, kind: input, shape index: {}]
  %s3 = inlined_call_operand.vmem [shape: f32[1,128], index: 3, kind: input, shape index: {}]
  %s4 = inlined_call_operand.vmem [shape: f32[1,128], index: 4, kind: input, shape index: {}]
  %s5 = inlined_call_operand.vmem [shape: f32[2,16,16,128], index: 5, kind: output, shape index: {}]
  %s6 = sld [smem:[#allocation0]]
  $region53: #{basic_block_pallas.1} parent=0
    _
  %s8 = ssub.s32 1, %s6
  %s9 = scalar_select 0, %s8, %s6
  loop: start=0, step=1, limit=4
  $region2: #{basic_block_pallas.1} parent=0 // loop_pre_header
    _
  $region3: #{basic_block_pallas.1} parent=0 // loop_header
    %s11 = sphi 0, %s15
    %p12 = scmp.ge.s32.totalorder %s11, 4
    %s21 = sphi 0, %s23
    %s24 = sphi 0, %s21
    %s25 = sphi 0, %s24
    %s41 = sphi 0, %s25
    %s45 = sphi 0, %s45
    %s47 = sphi 0, %s45
    %s48 = sphi 0, %s47
    %s62 = sphi 0, %s48
    %s66 = sphi 0, %s66
    %s68 = sphi 0, %s66
    %s69 = sphi 0, %s68
    %s83 = sphi 0, %s69
    %s87 = sphi 0, %s87
    %s89 = sphi 0, %s87
    %s90 = sphi 0, %s89
    %s104 = sphi 0, %s90
    %s108 = sphi 0, %s108
    %s110 = sphi 0, %s108
    %s111 = sphi 0, %s110
    %s125 = sphi 0, %s111
    %s131 = sphi 0, %s133
    %s134 = sphi 0, %s131
    %s135 = sphi 0, %s134
    %s151 = sphi 0, %s135
  $region4: #{basic_block_pallas.1} parent=0 // loop_header_branch
    %14 = sbr.rel (%p12) target = $region8
  $region5: #{basic_block_pallas.1} parent=0 // loop_body
    %s16 = ssub.s32 %s11, 1
    %s17 = ssub.s32 %s11, 2
    %s18 = sadd.s32 %s11, 1
    %s19 = ssub.s32 %s11, %s18
    %p20 = scmp.eq.s32.totalorder %s19, 0
    %s22 = sadd.s32 %s21, 1
    %s23 = scalar_select %p20, %s21, %s22
    %p26 = pneg %p20
    %p27 = scmp.eq.s32.totalorder %s11, 1
    %p28 = por %p26, %p27
    %p29 = scmp.ne.s32.totalorder %s21, %s24
    %p30 = scmp.eq.s32.totalorder %s11, 0
    %p31 = por %p29, %p30
    %p32 = scmp.ne.s32.totalorder %s21, %s24
    %p33 = scmp.eq.s32.totalorder %s16, 1
    %p34 = por %p32, %p33
    %p35 = scmp.ne.s32.totalorder %s24, %s25
    %p36 = scmp.eq.s32.totalorder %s16, 0
    %p37 = por %p35, %p36
    %p38 = scmp.ne.s32.totalorder %s24, %s25
    %p39 = scmp.eq.s32.totalorder %s17, 1
    %p40 = por %p38, %p39
    %p42 = scmp.ne.s32.totalorder %s25, %s41
    %p43 = scmp.eq.s32.totalorder %s17, 0
    %p44 = por %p42, %p43
    %s46 = sadd.s32 %s45, 1
    %p49 = scmp.eq.s32.totalorder %s11, 1
    %p50 = scmp.ne.s32.totalorder %s45, %s47
    %p51 = scmp.eq.s32.totalorder %s11, 0
    %p52 = por %p50, %p51
    %p53 = scmp.ne.s32.totalorder %s45, %s47
    %p54 = scmp.eq.s32.totalorder %s16, 1
    %p55 = por %p53, %p54
    %p56 = scmp.ne.s32.totalorder %s47, %s48
    %p57 = scmp.eq.s32.totalorder %s16, 0
    %p58 = por %p56, %p57
    %p59 = scmp.ne.s32.totalorder %s47, %s48
    %p60 = scmp.eq.s32.totalorder %s17, 1
    %p61 = por %p59, %p60
    %p63 = scmp.ne.s32.totalorder %s48, %s62
    %p64 = scmp.eq.s32.totalorder %s17, 0
    %p65 = por %p63, %p64
    %s67 = sadd.s32 %s66, 1
    %p70 = scmp.eq.s32.totalorder %s11, 1
    %p71 = scmp.ne.s32.totalorder %s66, %s68
    %p72 = scmp.eq.s32.totalorder %s11, 0
    %p73 = por %p71, %p72
    %p74 = scmp.ne.s32.totalorder %s66, %s68
    %p75 = scmp.eq.s32.totalorder %s16, 1
    %p76 = por %p74, %p75
    %p77 = scmp.ne.s32.totalorder %s68, %s69
    %p78 = scmp.eq.s32.totalorder %s16, 0
    %p79 = por %p77, %p78
    %p80 = scmp.ne.s32.totalorder %s68, %s69
    %p81 = scmp.eq.s32.totalorder %s17, 1
    %p82 = por %p80, %p81
    %p84 = scmp.ne.s32.totalorder %s69, %s83
    %p85 = scmp.eq.s32.totalorder %s17, 0
    %p86 = por %p84, %p85
    %s88 = sadd.s32 %s87, 1
    %p91 = scmp.eq.s32.totalorder %s11, 1
    %p92 = scmp.ne.s32.totalorder %s87, %s89
    %p93 = scmp.eq.s32.totalorder %s11, 0
    %p94 = por %p92, %p93
    %p95 = scmp.ne.s32.totalorder %s87, %s89
    %p96 = scmp.eq.s32.totalorder %s16, 1
    %p97 = por %p95, %p96
    %p98 = scmp.ne.s32.totalorder %s89, %s90
    %p99 = scmp.eq.s32.totalorder %s16, 0
    %p100 = por %p98, %p99
    %p101 = scmp.ne.s32.totalorder %s89, %s90
    %p102 = scmp.eq.s32.totalorder %s17, 1
    %p103 = por %p101, %p102
    %p105 = scmp.ne.s32.totalorder %s90, %s104
    %p106 = scmp.eq.s32.totalorder %s17, 0
    %p107 = por %p105, %p106
    %s109 = sadd.s32 %s108, 1
    %p112 = scmp.eq.s32.totalorder %s11, 1
    %p113 = scmp.ne.s32.totalorder %s108, %s110
    %p114 = scmp.eq.s32.totalorder %s11, 0
    %p115 = por %p113, %p114
    %p116 = scmp.ne.s32.totalorder %s108, %s110
    %p117 = scmp.eq.s32.totalorder %s16, 1
    %p118 = por %p116, %p117
    %p119 = scmp.ne.s32.totalorder %s110, %s111
    %p120 = scmp.eq.s32.totalorder %s16, 0
    %p121 = por %p119, %p120
    %p122 = scmp.ne.s32.totalorder %s110, %s111
    %p123 = scmp.eq.s32.totalorder %s17, 1
    %p124 = por %p122, %p123
    %p126 = scmp.ne.s32.totalorder %s111, %s125
    %p127 = scmp.eq.s32.totalorder %s17, 0
    %p128 = por %p126, %p127
    %s129 = ssub.s32 %s11, %s18
    %p130 = scmp.eq.s32.totalorder %s129, 0
    %s132 = sadd.s32 %s131, 1
    %s133 = scalar_select %p130, %s131, %s132
    %p136 = pneg %p130
    %p137 = scmp.eq.s32.totalorder %s11, 1
    %p138 = por %p136, %p137
    %p139 = scmp.ne.s32.totalorder %s131, %s134
    %p140 = scmp.eq.s32.totalorder %s11, 0
    %p141 = por %p139, %p140
    %p142 = scmp.ne.s32.totalorder %s131, %s134
    %p143 = scmp.eq.s32.totalorder %s16, 1
    %p144 = por %p142, %p143
    %p145 = scmp.ne.s32.totalorder %s134, %s135
    %p146 = scmp.eq.s32.totalorder %s16, 0
    %p147 = por %p145, %p146
    %p148 = scmp.ne.s32.totalorder %s134, %s135
    %p149 = scmp.eq.s32.totalorder %s17, 1
    %p150 = por %p148, %p149
    %p152 = scmp.ne.s32.totalorder %s135, %s151
    %p153 = scmp.eq.s32.totalorder %s17, 0
    %p154 = por %p152, %p153
    %p155 = scmp.le.s32.totalorder 1, %s11
    %p156 = scmp.lt.s32.totalorder %s11, 3
    %p157 = pnand %p155, %p156
    %p158 = pneg %p157
    // Predicated region
    $region9: #{basic_block_pallas.1} parent=5 // pred_check
      _
    $region10: #{basic_block_pallas.1} parent=5 // pred_check_branch
      %160 = sbr.rel (%p157) target = $region12
    $region11: #{basic_block_pallas.1} parent=5 // pred_region
      %s161 = ssub.s32 %s11, 1
      // Predicated region
      $region13: #{basic_block_pallas.1} parent=11 // pred_check
        %p162 = pneg %p58
      $region14: #{basic_block_pallas.1} parent=11 // pred_check_branch
        %164 = sbr.rel (%p162) target = $region16
      $region15: #{basic_block_pallas.1} parent=11 // pred_region
        _
      $region16: #{basic_block_pallas.1} parent=11 // pred_fallthru
        _
      // Predicated region
      $region17: #{basic_block_pallas.1} parent=11 // pred_check
        %p165 = pneg %p79
      $region18: #{basic_block_pallas.1} parent=11 // pred_check_branch
        %167 = sbr.rel (%p165) target = $region20
      $region19: #{basic_block_pallas.1} parent=11 // pred_region
        _
      $region20: #{basic_block_pallas.1} parent=11 // pred_fallthru
        _
      // Predicated region
      $region21: #{basic_block_pallas.1} parent=11 // pred_check
        %p168 = pneg %p100
      $region22: #{basic_block_pallas.1} parent=11 // pred_check_branch
        %170 = sbr.rel (%p168) target = $region24
      $region23: #{basic_block_pallas.1} parent=11 // pred_region
        _
      $region24: #{basic_block_pallas.1} parent=11 // pred_fallthru
        _
      // Predicated region
      $region25: #{basic_block_pallas.1} parent=11 // pred_check
        %p171 = pneg %p121
      $region26: #{basic_block_pallas.1} parent=11 // pred_check_branch
        %173 = sbr.rel (%p171) target = $region28
      $region27: #{basic_block_pallas.1} parent=11 // pred_region
        _
      $region28: #{basic_block_pallas.1} parent=11 // pred_fallthru
        _
    $region12: #{basic_block_pallas.1} parent=5 // pred_fallthru
      _
    %p174 = scmp.lt.s32.totalorder %s11, 2
    // Predicated region
    $region29: #{basic_block_pallas.1} parent=5 // pred_check
      %p175 = pneg %p174
    $region30: #{basic_block_pallas.1} parent=5 // pred_check_branch
      %177 = sbr.rel (%p175) target = $region32
    $region31: #{basic_block_pallas.1} parent=5 // pred_region
      // Predicated region
      $region33: #{basic_block_pallas.1} parent=31 // pred_check
        %p178 = pneg %p31
      $region34: #{basic_block_pallas.1} parent=31 // pred_check_branch
        %180 = sbr.rel (%p178) target = $region36
      $region35: #{basic_block_pallas.1} parent=31 // pred_region
        %p181 = scmp.lt.s32.totalorder %s11, 1
        %s182 = scalar_select %p181, %s11, 1
        %s183 = smul.addr %s182, 54
        %s184 = smul.addr %s183, 4
        %s185 = scalar_lea.vmem %s0, %s184
      $region36: #{basic_block_pallas.1} parent=31 // pred_fallthru
        _
    $region32: #{basic_block_pallas.1} parent=5 // pred_fallthru
      _
    %p186 = scmp.le.s32.totalorder 1, %s11
    %p187 = scmp.lt.s32.totalorder %s11, 3
    %p188 = pnand %p186, %p187
    %p189 = pneg %p188
    // Predicated region
    $region37: #{basic_block_pallas.1} parent=5 // pred_check
      _
    $region38: #{basic_block_pallas.1} parent=5 // pred_check_branch
      %191 = sbr.rel (%p188) target = $region40
    $region39: #{basic_block_pallas.1} parent=5 // pred_region
      %s192 = ssub.s32 %s11, 1
      %p193 = scmp.lt.s32.totalorder %s16, 1
      %s194 = scalar_select %p193, %s16, 1
      %s195 = smul.addr %s194, 54
      %s196 = smul.addr %s195, 4
      %s197 = scalar_lea.vmem %s0, %s196
      %p198 = pneg %p37
      %p199 = pneg %p34
      %p200 = pneg %p58
      %p201 = pneg %p55
      %p202 = pneg %p79
      %p203 = pneg %p76
      %p204 = pneg %p100
      %p205 = pneg %p97
      %p206 = pneg %p121
      %p207 = pneg %p118
      %p208 = pneg %p147
      %p209 = pneg %p144
      %p210 = scmp.lt.s32.totalorder %s16, 1
      %s211 = scalar_select %p210, %s16, 1
      %s212 = smul.addr %s211, 32
      %s213 = smul.addr %s212, 8
      %s214 = scalar_lea.vmem %s5, %s213
      %p215 = scmp.lt.s32.totalorder %s16, 1
      %s216 = scalar_select %p215, %s16, 1
      %s217 = smul.addr %s216, 54
      %s218 = smul.addr %s217, 4
      %s219 = scalar_lea.vmem %s0, %s218
      %p220 = scmp.lt.s32.totalorder %s16, 1
      %s221 = scalar_select %p220, %s16, 1
      %s222 = smul.addr %s221, 32
      %s223 = smul.addr %s222, 8
      %s224 = scalar_lea.vmem %s5, %s223
      %226 = vst [vmem:[#allocation2] sm:$0xf] 0
      %227 = vst [vmem:[#allocation2 + $0x4] sm:$0xf] 0
      %228 = vst [vmem:[#allocation2 + $0x8] sm:$0x1] 0
      %s229 = scalar_lea.vmem [#allocation2], 204
      %230 = vst [vmem:[%s229] sm:$0xf] 0
      %231 = vst [vmem:[%s229 + $0x4] sm:$0xf] 0
      %232 = vst [vmem:[%s229 + $0x8] sm:$0x1] 0
      %vm233 = vcmask 1040384
      %vm234 = vsmask.f32 256
      %vm235 = vmand %vm233, %vm234
      %v236 = vld [vmem:[#allocation2] sm:$0x1]
      %v237 = vsel %vm235, 0, %v236
      %238 = vst [vmem:[#allocation2] sm:$0x1] %v237
      %v239 = vld [vmem:[#allocation2 + $0xc] sm:$0x1]
      %v240 = vsel %vm235, 0, %v239
      %241 = vst [vmem:[#allocation2 + $0xc] sm:$0x1] %v240
      %v242 = vld [vmem:[#allocation2 + $0x18] sm:$0x1]
      %v243 = vsel %vm235, 0, %v242
      %244 = vst [vmem:[#allocation2 + $0x18] sm:$0x1] %v243
      %v245 = vld [vmem:[#allocation2 + $0x24] sm:$0x1]
      %v246 = vsel %vm235, 0, %v245
      %247 = vst [vmem:[#allocation2 + $0x24] sm:$0x1] %v246
      %v248 = vld [vmem:[#allocation2 + $0x30] sm:$0x1]
      %v249 = vsel %vm235, 0, %v248
      %250 = vst [vmem:[#allocation2 + $0x30] sm:$0x1] %v249
      %v251 = vld [vmem:[#allocation2 + $0x3c] sm:$0x1]
      %v252 = vsel %vm235, 0, %v251
      %253 = vst [vmem:[#allocation2 + $0x3c] sm:$0x1] %v252
      %v254 = vld [vmem:[#allocation2 + $0x48] sm:$0x1]
      %v255 = vsel %vm235, 0, %v254
      %256 = vst [vmem:[#allocation2 + $0x48] sm:$0x1] %v255
      %v257 = vld [vmem:[#allocation2 + $0x54] sm:$0x1]
      %v258 = vsel %vm235, 0, %v257
      %259 = vst [vmem:[#allocation2 + $0x54] sm:$0x1] %v258
      %v260 = vld [vmem:[#allocation2 + $0x60] sm:$0x1]
      %v261 = vsel %vm235, 0, %v260
      %262 = vst [vmem:[#allocation2 + $0x60] sm:$0x1] %v261
      %v263 = vld [vmem:[#allocation2 + $0x6c] sm:$0x1]
      %v264 = vsel %vm235, 0, %v263
      %265 = vst [vmem:[#allocation2 + $0x6c] sm:$0x1] %v264
      %v266 = vld [vmem:[#allocation2 + $0x78] sm:$0x1]
      %v267 = vsel %vm235, 0, %v266
      %268 = vst [vmem:[#allocation2 + $0x78] sm:$0x1] %v267
      %v269 = vld [vmem:[#allocation2 + $0x84] sm:$0x1]
      %v270 = vsel %vm235, 0, %v269
      %271 = vst [vmem:[#allocation2 + $0x84] sm:$0x1] %v270
      %v272 = vld [vmem:[#allocation2 + $0x90] sm:$0x1]
      %v273 = vsel %vm235, 0, %v272
      %274 = vst [vmem:[#allocation2 + $0x90] sm:$0x1] %v273
      %v275 = vld [vmem:[#allocation2 + $0x9c] sm:$0x1]
      %v276 = vsel %vm235, 0, %v275
      %277 = vst [vmem:[#allocation2 + $0x9c] sm:$0x1] %v276
      %v278 = vld [vmem:[#allocation2 + $0xa8] sm:$0x1]
      %v279 = vsel %vm235, 0, %v278
      %280 = vst [vmem:[#allocation2 + $0xa8] sm:$0x1] %v279
      %v281 = vld [vmem:[#allocation2 + $0xb4] sm:$0x1]
      %v282 = vsel %vm235, 0, %v281
      %283 = vst [vmem:[#allocation2 + $0xb4] sm:$0x1] %v282
      %v284 = vld [vmem:[#allocation2 + $0xc0] sm:$0x1]
      %v285 = vsel %vm235, 0, %v284
      %286 = vst [vmem:[#allocation2 + $0xc0] sm:$0x1] %v285
      %v287 = vld [vmem:[#allocation2 + $0xcc] sm:$0x1]
      %v288 = vsel %vm235, 0, %v287
      %289 = vst [vmem:[#allocation2 + $0xcc] sm:$0x1] %v288
      %vm290 = vsmask.f32 7938
      %vm291 = vmand %vm233, %vm290
      %v292 = vld [vmem:[#allocation2 + $0x8] sm:$0x1]
      %v293 = vsel %vm291, 0, %v292
      %294 = vst [vmem:[#allocation2 + $0x8] sm:$0x1] %v293
      %v295 = vld [vmem:[#allocation2 + $0x14] sm:$0x1]
      %v296 = vsel %vm291, 0, %v295
      %297 = vst [vmem:[#allocation2 + $0x14] sm:$0x1] %v296
      %v298 = vld [vmem:[#allocation2 + $0x20] sm:$0x1]
      %v299 = vsel %vm291, 0, %v298
      %300 = vst [vmem:[#allocation2 + $0x20] sm:$0x1] %v299
      %v301 = vld [vmem:[#allocation2 + $0x2c] sm:$0x1]
      %v302 = vsel %vm291, 0, %v301
      %303 = vst [vmem:[#allocation2 + $0x2c] sm:$0x1] %v302
      %v304 = vld [vmem:[#allocation2 + $0x38] sm:$0x1]
      %v305 = vsel %vm291, 0, %v304
      %306 = vst [vmem:[#allocation2 + $0x38] sm:$0x1] %v305
      %v307 = vld [vmem:[#allocation2 + $0x44] sm:$0x1]
      %v308 = vsel %vm291, 0, %v307
      %309 = vst [vmem:[#allocation2 + $0x44] sm:$0x1] %v308
      %v310 = vld [vmem:[#allocation2 + $0x50] sm:$0x1]
      %v311 = vsel %vm291, 0, %v310
      %312 = vst [vmem:[#allocation2 + $0x50] sm:$0x1] %v311
      %v313 = vld [vmem:[#allocation2 + $0x5c] sm:$0x1]
      %v314 = vsel %vm291, 0, %v313
      %315 = vst [vmem:[#allocation2 + $0x5c] sm:$0x1] %v314
      %v316 = vld [vmem:[#allocation2 + $0x68] sm:$0x1]
      %v317 = vsel %vm291, 0, %v316
      %318 = vst [vmem:[#allocation2 + $0x68] sm:$0x1] %v317
      %v319 = vld [vmem:[#allocation2 + $0x74] sm:$0x1]
      %v320 = vsel %vm291, 0, %v319
      %321 = vst [vmem:[#allocation2 + $0x74] sm:$0x1] %v320
      %v322 = vld [vmem:[#allocation2 + $0x80] sm:$0x1]
      %v323 = vsel %vm291, 0, %v322
      %324 = vst [vmem:[#allocation2 + $0x80] sm:$0x1] %v323
      %v325 = vld [vmem:[#allocation2 + $0x8c] sm:$0x1]
      %v326 = vsel %vm291, 0, %v325
      %327 = vst [vmem:[#allocation2 + $0x8c] sm:$0x1] %v326
      %v328 = vld [vmem:[#allocation2 + $0x98] sm:$0x1]
      %v329 = vsel %vm291, 0, %v328
      %330 = vst [vmem:[#allocation2 + $0x98] sm:$0x1] %v329
      %v331 = vld [vmem:[#allocation2 + $0xa4] sm:$0x1]
      %v332 = vsel %vm291, 0, %v331
      %333 = vst [vmem:[#allocation2 + $0xa4] sm:$0x1] %v332
      %v334 = vld [vmem:[#allocation2 + $0xb0] sm:$0x1]
      %v335 = vsel %vm291, 0, %v334
      %336 = vst [vmem:[#allocation2 + $0xb0] sm:$0x1] %v335
      %v337 = vld [vmem:[#allocation2 + $0xbc] sm:$0x1]
      %v338 = vsel %vm291, 0, %v337
      %339 = vst [vmem:[#allocation2 + $0xbc] sm:$0x1] %v338
      %v340 = vld [vmem:[#allocation2 + $0xc8] sm:$0x1]
      %v341 = vsel %vm291, 0, %v340
      %342 = vst [vmem:[#allocation2 + $0xc8] sm:$0x1] %v341
      %v343 = vld [vmem:[#allocation2 + $0xd4] sm:$0x1]
      %v344 = vsel %vm291, 0, %v343
      %345 = vst [vmem:[#allocation2 + $0xd4] sm:$0x1] %v344
      %v346 = vld [vmem:[%s3] sm:$0x1]
      %v347 = vld [vmem:[%s4] sm:$0x1]
      %v348 = vld [vmem:[%s219] sm:$0xf]
      %v349 = vld [vmem:[%s219 + $0x4] sm:$0xf]
      %v350 = vld [vmem:[%s219 + $0xc] sm:$0xf]
      %v351 = vld [vmem:[%s219 + $0x10] sm:$0xf]
      %v352 = vld [vmem:[%s219 + $0x18] sm:$0xf]
      %v353 = vld [vmem:[%s219 + $0x1c] sm:$0xf]
      %v354 = vld [vmem:[%s219 + $0x24] sm:$0xf]
      %v355 = vld [vmem:[%s219 + $0x28] sm:$0xf]
      %v356 = vld [vmem:[%s219 + $0x30] sm:$0xf]
      %v357 = vld [vmem:[%s219 + $0x34] sm:$0xf]
      %v358 = vld [vmem:[%s219 + $0x3c] sm:$0xf]
      %v359 = vld [vmem:[%s219 + $0x40] sm:$0xf]
      %v360 = vld [vmem:[%s219 + $0x48] sm:$0xf]
      %v361 = vld [vmem:[%s219 + $0x4c] sm:$0xf]
      %v362 = vld [vmem:[%s219 + $0x54] sm:$0xf]
      %v363 = vld [vmem:[%s219 + $0x58] sm:$0xf]
      %v364 = vld [vmem:[%s1] sm:$0xf]
      %v365 = vld [vmem:[%s1 + $0x4] sm:$0xf]
      %v366 = vld [vmem:[%s1 + $0x8] sm:$0xf]
      %v367 = vld [vmem:[%s1 + $0xc] sm:$0xf]
      %v368 = vld [vmem:[%s1 + $0x10] sm:$0xf]
      %v369 = vld [vmem:[%s1 + $0x14] sm:$0xf]
      %v370 = vld [vmem:[%s1 + $0x18] sm:$0xf]
      %v371 = vld [vmem:[%s1 + $0x1c] sm:$0xf]
      %v372 = vld [vmem:[%s1 + $0x20] sm:$0xf]
      %v373 = vld [vmem:[%s1 + $0x24] sm:$0xf]
      %v374 = vld [vmem:[%s1 + $0x28] sm:$0xf]
      %v375 = vld [vmem:[%s1 + $0x2c] sm:$0xf]
      %v376 = vld [vmem:[%s1 + $0x30] sm:$0xf]
      %v377 = vld [vmem:[%s1 + $0x34] sm:$0xf]
      %v378 = vld [vmem:[%s1 + $0x38] sm:$0xf]
      %v379 = vld [vmem:[%s1 + $0x3c] sm:$0xf]
      %v380 = vld [vmem:[%s219 + $0x8] sm:$0x1]
      %v381 = vld [vmem:[%s219 + $0x14] sm:$0x1]
      %v382 = vld [vmem:[%s219 + $0x20] sm:$0x1]
      %v383 = vld [vmem:[%s219 + $0x2c] sm:$0x1]
      %v384 = vld [vmem:[%s219 + $0x38] sm:$0x1]
      %v385 = vld [vmem:[%s219 + $0x44] sm:$0x1]
      %v386 = vld [vmem:[%s219 + $0x50] sm:$0x1]
      %v387 = vld [vmem:[%s219 + $0x5c] sm:$0x1]
      %vm388 = vsmask.f32 3328
      %vm389 = vsmask.f32 7440
      %vm390 = vmor %vm388, %vm389
      %v392 = vshrl.u32 %v348, 16
      %v394 = vrot.slane %v392, 4
      %v395 = vshll.u32 %v348, 16
      %v397 = vrot.slane %v395, 5
      %v398 = vor.u32 %v394, %v397
      %v399 = vrot.slane %v398, 4
      %v401 = vshll.u32 %v349, 16
      %v403 = vrot.slane %v401, 5
      %v404 = vsel %vm390, %v399, %v403
      %v405 = vshrl.u32 %v349, 16
      %v407 = vrot.slane %v405, 4
      %v408 = vor.u32 %v407, %v403
      %v409 = vrot.slane %v408, 4
      %v411 = vshll.u32 %v380, 16
      %v413 = vrot.slane %v411, 5
      %v414 = vsel %vm390, %v409, %v413
      %v416 = vshrl.u32 %v350, 16
      %v418 = vrot.slane %v416, 4
      %v419 = vshll.u32 %v350, 16
      %v421 = vrot.slane %v419, 5
      %v422 = vor.u32 %v418, %v421
      %v423 = vrot.slane %v422, 4
      %v425 = vshll.u32 %v351, 16
      %v427 = vrot.slane %v425, 5
      %v428 = vsel %vm390, %v423, %v427
      %v429 = vshrl.u32 %v351, 16
      %v431 = vrot.slane %v429, 4
      %v432 = vor.u32 %v431, %v427
      %v433 = vrot.slane %v432, 4
      %v435 = vshll.u32 %v381, 16
      %v437 = vrot.slane %v435, 5
      %v438 = vsel %vm390, %v433, %v437
      %v440 = vshrl.u32 %v352, 16
      %v442 = vrot.slane %v440, 4
      %v443 = vshll.u32 %v352, 16
      %v445 = vrot.slane %v443, 5
      %v446 = vor.u32 %v442, %v445
      %v447 = vrot.slane %v446, 4
      %v449 = vshll.u32 %v353, 16
      %v451 = vrot.slane %v449, 5
      %v452 = vsel %vm390, %v447, %v451
      %v453 = vshrl.u32 %v353, 16
      %v455 = vrot.slane %v453, 4
      %v456 = vor.u32 %v455, %v451
      %v457 = vrot.slane %v456, 4
      %v459 = vshll.u32 %v382, 16
      %v461 = vrot.slane %v459, 5
      %v462 = vsel %vm390, %v457, %v461
      %v464 = vshrl.u32 %v354, 16
      %v466 = vrot.slane %v464, 4
      %v467 = vshll.u32 %v354, 16
      %v469 = vrot.slane %v467, 5
      %v470 = vor.u32 %v466, %v469
      %v471 = vrot.slane %v470, 4
      %v473 = vshll.u32 %v355, 16
      %v475 = vrot.slane %v473, 5
      %v476 = vsel %vm390, %v471, %v475
      %v477 = vshrl.u32 %v355, 16
      %v479 = vrot.slane %v477, 4
      %v480 = vor.u32 %v479, %v475
      %v481 = vrot.slane %v480, 4
      %v483 = vshll.u32 %v383, 16
      %v485 = vrot.slane %v483, 5
      %v486 = vsel %vm390, %v481, %v485
      %v488 = vshrl.u32 %v356, 16
      %v490 = vrot.slane %v488, 4
      %v491 = vshll.u32 %v356, 16
      %v493 = vrot.slane %v491, 5
      %v494 = vor.u32 %v490, %v493
      %v495 = vrot.slane %v494, 4
      %v497 = vshll.u32 %v357, 16
      %v499 = vrot.slane %v497, 5
      %v500 = vsel %vm390, %v495, %v499
      %v501 = vshrl.u32 %v357, 16
      %v503 = vrot.slane %v501, 4
      %v504 = vor.u32 %v503, %v499
      %v505 = vrot.slane %v504, 4
      %v507 = vshll.u32 %v384, 16
      %v509 = vrot.slane %v507, 5
      %v510 = vsel %vm390, %v505, %v509
      %v512 = vshrl.u32 %v358, 16
      %v514 = vrot.slane %v512, 4
      %v515 = vshll.u32 %v358, 16
      %v517 = vrot.slane %v515, 5
      %v518 = vor.u32 %v514, %v517
      %v519 = vrot.slane %v518, 4
      %v521 = vshll.u32 %v359, 16
      %v523 = vrot.slane %v521, 5
      %v524 = vsel %vm390, %v519, %v523
      %v525 = vshrl.u32 %v359, 16
      %v527 = vrot.slane %v525, 4
      %v528 = vor.u32 %v527, %v523
      %v529 = vrot.slane %v528, 4
      %v531 = vshll.u32 %v385, 16
      %v533 = vrot.slane %v531, 5
      %v534 = vsel %vm390, %v529, %v533
      %v536 = vshrl.u32 %v360, 16
      %v538 = vrot.slane %v536, 4
      %v539 = vshll.u32 %v360, 16
      %v541 = vrot.slane %v539, 5
      %v542 = vor.u32 %v538, %v541
      %v543 = vrot.slane %v542, 4
      %v545 = vshll.u32 %v361, 16
      %v547 = vrot.slane %v545, 5
      %v548 = vsel %vm390, %v543, %v547
      %v549 = vshrl.u32 %v361, 16
      %v551 = vrot.slane %v549, 4
      %v552 = vor.u32 %v551, %v547
      %v553 = vrot.slane %v552, 4
      %v555 = vshll.u32 %v386, 16
      %v557 = vrot.slane %v555, 5
      %v558 = vsel %vm390, %v553, %v557
      %v560 = vshrl.u32 %v362, 16
      %v562 = vrot.slane %v560, 4
      %v563 = vshll.u32 %v362, 16
      %v565 = vrot.slane %v563, 5
      %v566 = vor.u32 %v562, %v565
      %v567 = vrot.slane %v566, 4
      %v569 = vshll.u32 %v363, 16
      %v571 = vrot.slane %v569, 5
      %v572 = vsel %vm390, %v567, %v571
      %v573 = vshrl.u32 %v363, 16
      %v575 = vrot.slane %v573, 4
      %v576 = vor.u32 %v575, %v571
      %v577 = vrot.slane %v576, 4
      %v579 = vshll.u32 %v387, 16
      %v581 = vrot.slane %v579, 5
      %v582 = vsel %vm390, %v577, %v581
      %s583 = scalar_lea.vmem %s1, 64
      %v584 = vld [vmem:[%s583] sm:$0xf]
      %v585 = vld [vmem:[%s583 + $0x4] sm:$0xf]
      %v586 = vld [vmem:[%s583 + $0x8] sm:$0xf]
      %v587 = vld [vmem:[%s583 + $0xc] sm:$0xf]
      %v588 = vld [vmem:[%s583 + $0x10] sm:$0xf]
      %v589 = vld [vmem:[%s583 + $0x14] sm:$0xf]
      %v590 = vld [vmem:[%s583 + $0x18] sm:$0xf]
      %v591 = vld [vmem:[%s583 + $0x1c] sm:$0xf]
      %v592 = vld [vmem:[%s583 + $0x20] sm:$0xf]
      %v593 = vld [vmem:[%s583 + $0x24] sm:$0xf]
      %v594 = vld [vmem:[%s583 + $0x28] sm:$0xf]
      %v595 = vld [vmem:[%s583 + $0x2c] sm:$0xf]
      %v596 = vld [vmem:[%s583 + $0x30] sm:$0xf]
      %v597 = vld [vmem:[%s583 + $0x34] sm:$0xf]
      %v598 = vld [vmem:[%s583 + $0x38] sm:$0xf]
      %v599 = vld [vmem:[%s583 + $0x3c] sm:$0xf]
      %v600 = vunpack.c.l.b16 %v404
      %v601 = vunpack.c.l.b16 %v414
      %v602 = vunpack.c.l.b16 %v428
      %v603 = vunpack.c.l.b16 %v438
      %v604 = vunpack.c.l.b16 %v452
      %v605 = vunpack.c.l.b16 %v462
      %v606 = vunpack.c.l.b16 %v476
      %v607 = vunpack.c.l.b16 %v486
      %v608 = vunpack.c.l.b16 %v500
      %v609 = vunpack.c.l.b16 %v510
      %v610 = vunpack.c.l.b16 %v524
      %v611 = vunpack.c.l.b16 %v534
      %v612 = vunpack.c.l.b16 %v548
      %v613 = vunpack.c.l.b16 %v558
      %v614 = vunpack.c.l.b16 %v572
      %v615 = vunpack.c.l.b16 %v582
      %v616 = vpack.c.b16 %v601, %v600
      %v617 = vpack.c.b16 %v603, %v602
      %v618 = vpack.c.b16 %v605, %v604
      %v619 = vpack.c.b16 %v607, %v606
      %v620 = vpack.c.b16 %v609, %v608
      %v621 = vpack.c.b16 %v611, %v610
      %v622 = vpack.c.b16 %v613, %v612
      %v623 = vpack.c.b16 %v615, %v614
      %v648 = vunpack.c.l.b16 %v584
      %v649 = vunpack.c.l.b16 %v585
      %v650 = vunpack.c.l.b16 %v586
      %v651 = vunpack.c.l.b16 %v587
      %v652 = vunpack.c.l.b16 %v588
      %v653 = vunpack.c.l.b16 %v589
      %v654 = vunpack.c.l.b16 %v590
      %v655 = vunpack.c.l.b16 %v591
      %v656 = vunpack.c.l.b16 %v592
      %v657 = vunpack.c.l.b16 %v593
      %v658 = vunpack.c.l.b16 %v594
      %v659 = vunpack.c.l.b16 %v595
      %v660 = vunpack.c.l.b16 %v596
      %v661 = vunpack.c.l.b16 %v597
      %v662 = vunpack.c.l.b16 %v598
      %v663 = vunpack.c.l.b16 %v599
      %v664 = vpack.c.b16 %v649, %v648
      %v665 = vpack.c.b16 %v651, %v650
      %v666 = vpack.c.b16 %v653, %v652
      %v667 = vpack.c.b16 %v655, %v654
      %v668 = vpack.c.b16 %v657, %v656
      %v669 = vpack.c.b16 %v659, %v658
      %v670 = vpack.c.b16 %v661, %v660
      %v671 = vpack.c.b16 %v663, %v662
      %680 = vmatpush.bf16.msra.mxu0 %v671
      %681 = vmatpush.bf16.msra.mxu0 %v670
      %682 = vmatpush.bf16.msra.mxu0 %v669
      %683 = vmatpush.bf16.msra.mxu0 %v668
      %684 = vmatpush.bf16.msra.mxu0 %v667
      %685 = vmatpush.bf16.msra.mxu0 %v666
      %686 = vmatpush.bf16.msra.mxu0 %v665
      %687 = vmatpush.bf16.msra.mxu0 %v664
      %688 = vmatmul.bf16.gmra.mxu0 %v616
      %v689 = vpop.f32.mrf.mxu0
      %v690 = vadd.f32 0.0, %v689
      %v691 = vpop.f32.mrf.mxu0
      %v692 = vadd.f32 0.0, %v691
      %693 = vmatmul.bf16.gmra.mxu0 %v617
      %v694 = vpop.f32.mrf.mxu0
      %v695 = vadd.f32 0.0, %v694
      %v696 = vpop.f32.mrf.mxu0
      %v697 = vadd.f32 0.0, %v696
      %698 = vmatmul.bf16.gmra.mxu0 %v618
      %v699 = vpop.f32.mrf.mxu0
      %v700 = vadd.f32 0.0, %v699
      %v701 = vpop.f32.mrf.mxu0
      %v702 = vadd.f32 0.0, %v701
      %703 = vmatmul.bf16.gmra.mxu0 %v619
      %v704 = vpop.f32.mrf.mxu0
      %v705 = vadd.f32 0.0, %v704
      %v706 = vpop.f32.mrf.mxu0
      %v707 = vadd.f32 0.0, %v706
      %708 = vmatmul.bf16.gmra.mxu0 %v620
      %v709 = vpop.f32.mrf.mxu0
      %v710 = vadd.f32 0.0, %v709
      %v711 = vpop.f32.mrf.mxu0
      %v712 = vadd.f32 0.0, %v711
      %713 = vmatmul.bf16.gmra.mxu0 %v621
      %v714 = vpop.f32.mrf.mxu0
      %v715 = vadd.f32 0.0, %v714
      %v716 = vpop.f32.mrf.mxu0
      %v717 = vadd.f32 0.0, %v716
      %718 = vmatmul.bf16.gmra.mxu0 %v622
      %v719 = vpop.f32.mrf.mxu0
      %v720 = vadd.f32 0.0, %v719
      %v721 = vpop.f32.mrf.mxu0
      %v722 = vadd.f32 0.0, %v721
      %723 = vmatmul.bf16.gmra.mxu0 %v623
      %v724 = vpop.f32.mrf.mxu0
      %v725 = vadd.f32 0.0, %v724
      %v726 = vpop.f32.mrf.mxu0
      %v727 = vadd.f32 0.0, %v726
      %728 = vdwg.mxu0
      %v745 = vunpack.c.l.b16 %v348
      %v746 = vunpack.c.l.b16 %v349
      %v747 = vunpack.c.l.b16 %v350
      %v748 = vunpack.c.l.b16 %v351
      %v749 = vunpack.c.l.b16 %v352
      %v750 = vunpack.c.l.b16 %v353
      %v751 = vunpack.c.l.b16 %v354
      %v752 = vunpack.c.l.b16 %v355
      %v753 = vunpack.c.l.b16 %v356
      %v754 = vunpack.c.l.b16 %v357
      %v755 = vunpack.c.l.b16 %v358
      %v756 = vunpack.c.l.b16 %v359
      %v757 = vunpack.c.l.b16 %v360
      %v758 = vunpack.c.l.b16 %v361
      %v759 = vunpack.c.l.b16 %v362
      %v760 = vunpack.c.l.b16 %v363
      %v761 = vpack.c.b16 %v746, %v745
      %v762 = vpack.c.b16 %v748, %v747
      %v763 = vpack.c.b16 %v750, %v749
      %v764 = vpack.c.b16 %v752, %v751
      %v765 = vpack.c.b16 %v754, %v753
      %v766 = vpack.c.b16 %v756, %v755
      %v767 = vpack.c.b16 %v758, %v757
      %v768 = vpack.c.b16 %v760, %v759
      %v793 = vunpack.c.l.b16 %v364
      %v794 = vunpack.c.l.b16 %v365
      %v795 = vunpack.c.l.b16 %v366
      %v796 = vunpack.c.l.b16 %v367
      %v797 = vunpack.c.l.b16 %v368
      %v798 = vunpack.c.l.b16 %v369
      %v799 = vunpack.c.l.b16 %v370
      %v800 = vunpack.c.l.b16 %v371
      %v801 = vunpack.c.l.b16 %v372
      %v802 = vunpack.c.l.b16 %v373
      %v803 = vunpack.c.l.b16 %v374
      %v804 = vunpack.c.l.b16 %v375
      %v805 = vunpack.c.l.b16 %v376
      %v806 = vunpack.c.l.b16 %v377
      %v807 = vunpack.c.l.b16 %v378
      %v808 = vunpack.c.l.b16 %v379
      %v809 = vpack.c.b16 %v794, %v793
      %v810 = vpack.c.b16 %v796, %v795
      %v811 = vpack.c.b16 %v798, %v797
      %v812 = vpack.c.b16 %v800, %v799
      %v813 = vpack.c.b16 %v802, %v801
      %v814 = vpack.c.b16 %v804, %v803
      %v815 = vpack.c.b16 %v806, %v805
      %v816 = vpack.c.b16 %v808, %v807
      %825 = vmatpush.bf16.msra.mxu0 %v816
      %826 = vmatpush.bf16.msra.mxu0 %v815
      %827 = vmatpush.bf16.msra.mxu0 %v814
      %828 = vmatpush.bf16.msra.mxu0 %v813
      %829 = vmatpush.bf16.msra.mxu0 %v812
      %830 = vmatpush.bf16.msra.mxu0 %v811
      %831 = vmatpush.bf16.msra.mxu0 %v810
      %832 = vmatpush.bf16.msra.mxu0 %v809
      %833 = vmatmul.bf16.gmra.mxu0 %v761
      %v834 = vpop.f32.mrf.mxu0
      %v835 = vadd.f32 %v690, %v834
      %v836 = vpop.f32.mrf.mxu0
      %v837 = vadd.f32 %v692, %v836
      %838 = vmatmul.bf16.gmra.mxu0 %v762
      %v839 = vpop.f32.mrf.mxu0
      %v840 = vadd.f32 %v695, %v839
      %v841 = vpop.f32.mrf.mxu0
      %v842 = vadd.f32 %v697, %v841
      %843 = vmatmul.bf16.gmra.mxu0 %v763
      %v844 = vpop.f32.mrf.mxu0
      %v845 = vadd.f32 %v700, %v844
      %v846 = vpop.f32.mrf.mxu0
      %v847 = vadd.f32 %v702, %v846
      %848 = vmatmul.bf16.gmra.mxu0 %v764
      %v849 = vpop.f32.mrf.mxu0
      %v850 = vadd.f32 %v705, %v849
      %v851 = vpop.f32.mrf.mxu0
      %v852 = vadd.f32 %v707, %v851
      %853 = vmatmul.bf16.gmra.mxu0 %v765
      %v854 = vpop.f32.mrf.mxu0
      %v855 = vadd.f32 %v710, %v854
      %v856 = vpop.f32.mrf.mxu0
      %v857 = vadd.f32 %v712, %v856
      %858 = vmatmul.bf16.gmra.mxu0 %v766
      %v859 = vpop.f32.mrf.mxu0
      %v860 = vadd.f32 %v715, %v859
      %v861 = vpop.f32.mrf.mxu0
      %v862 = vadd.f32 %v717, %v861
      %863 = vmatmul.bf16.gmra.mxu0 %v767
      %v864 = vpop.f32.mrf.mxu0
      %v865 = vadd.f32 %v720, %v864
      %v866 = vpop.f32.mrf.mxu0
      %v867 = vadd.f32 %v722, %v866
      %868 = vmatmul.bf16.gmra.mxu0 %v768
      %v869 = vpop.f32.mrf.mxu0
      %v870 = vadd.f32 %v725, %v869
      %v871 = vpop.f32.mrf.mxu0
      %v872 = vadd.f32 %v727, %v871
      %873 = vdwg.mxu0
      %v874 = vld [vmem:[%s219] sm:$0xe]
      %v875 = vld [vmem:[%s219 + $0xc] sm:$0xe]
      %v876 = vld [vmem:[%s219 + $0x18] sm:$0xe]
      %v877 = vld [vmem:[%s219 + $0x24] sm:$0xe]
      %v878 = vld [vmem:[%s219 + $0x30] sm:$0xe]
      %v879 = vld [vmem:[%s219 + $0x3c] sm:$0xe]
      %v880 = vld [vmem:[%s219 + $0x48] sm:$0xe]
      %v881 = vld [vmem:[%s219 + $0x54] sm:$0xe]
      %vm898 = vcmask 1042432
      %vm899 = vcmask 1046532
      %vm900 = vmor %vm898, %vm899
      %v901 = vrot.slane %v874, 5
      %v902 = vrot.slane %v901, 4
      %v903 = vrot.slane %v349, 5
      %v904 = vsel %vm900, %v902, %v903
      %v905 = vrot.slane %v903, 4
      %v906 = vrot.slane %v380, 5
      %v907 = vsel %vm900, %v905, %v906
      %v908 = vrot.slane %v875, 5
      %v909 = vrot.slane %v908, 4
      %v910 = vrot.slane %v351, 5
      %v911 = vsel %vm900, %v909, %v910
      %v912 = vrot.slane %v910, 4
      %v913 = vrot.slane %v381, 5
      %v914 = vsel %vm900, %v912, %v913
      %v915 = vrot.slane %v876, 5
      %v916 = vrot.slane %v915, 4
      %v917 = vrot.slane %v353, 5
      %v918 = vsel %vm900, %v916, %v917
      %v919 = vrot.slane %v917, 4
      %v920 = vrot.slane %v382, 5
      %v921 = vsel %vm900, %v919, %v920
      %v922 = vrot.slane %v877, 5
      %v923 = vrot.slane %v922, 4
      %v924 = vrot.slane %v355, 5
      %v925 = vsel %vm900, %v923, %v924
      %v926 = vrot.slane %v924, 4
      %v927 = vrot.slane %v383, 5
      %v928 = vsel %vm900, %v926, %v927
      %v929 = vrot.slane %v878, 5
      %v930 = vrot.slane %v929, 4
      %v931 = vrot.slane %v357, 5
      %v932 = vsel %vm900, %v930, %v931
      %v933 = vrot.slane %v931, 4
      %v934 = vrot.slane %v384, 5
      %v935 = vsel %vm900, %v933, %v934
      %v936 = vrot.slane %v879, 5
      %v937 = vrot.slane %v936, 4
      %v938 = vrot.slane %v359, 5
      %v939 = vsel %vm900, %v937, %v938
      %v940 = vrot.slane %v938, 4
      %v941 = vrot.slane %v385, 5
      %v942 = vsel %vm900, %v940, %v941
      %v943 = vrot.slane %v880, 5
      %v944 = vrot.slane %v943, 4
      %v945 = vrot.slane %v361, 5
      %v946 = vsel %vm900, %v944, %v945
      %v947 = vrot.slane %v945, 4
      %v948 = vrot.slane %v386, 5
      %v949 = vsel %vm900, %v947, %v948
      %v950 = vrot.slane %v881, 5
      %v951 = vrot.slane %v950, 4
      %v952 = vrot.slane %v363, 5
      %v953 = vsel %vm900, %v951, %v952
      %v954 = vrot.slane %v952, 4
      %v955 = vrot.slane %v387, 5
      %v956 = vsel %vm900, %v954, %v955
      %s957 = scalar_lea.vmem %s1, 128
      %v958 = vld [vmem:[%s957] sm:$0xf]
      %v959 = vld [vmem:[%s957 + $0x4] sm:$0xf]
      %v960 = vld [vmem:[%s957 + $0x8] sm:$0xf]
      %v961 = vld [vmem:[%s957 + $0xc] sm:$0xf]
      %v962 = vld [vmem:[%s957 + $0x10] sm:$0xf]
      %v963 = vld [vmem:[%s957 + $0x14] sm:$0xf]
      %v964 = vld [vmem:[%s957 + $0x18] sm:$0xf]
      %v965 = vld [vmem:[%s957 + $0x1c] sm:$0xf]
      %v966 = vld [vmem:[%s957 + $0x20] sm:$0xf]
      %v967 = vld [vmem:[%s957 + $0x24] sm:$0xf]
      %v968 = vld [vmem:[%s957 + $0x28] sm:$0xf]
      %v969 = vld [vmem:[%s957 + $0x2c] sm:$0xf]
      %v970 = vld [vmem:[%s957 + $0x30] sm:$0xf]
      %v971 = vld [vmem:[%s957 + $0x34] sm:$0xf]
      %v972 = vld [vmem:[%s957 + $0x38] sm:$0xf]
      %v973 = vld [vmem:[%s957 + $0x3c] sm:$0xf]
      %v974 = vunpack.c.l.b16 %v904
      %v975 = vunpack.c.l.b16 %v907
      %v976 = vunpack.c.l.b16 %v911
      %v977 = vunpack.c.l.b16 %v914
      %v978 = vunpack.c.l.b16 %v918
      %v979 = vunpack.c.l.b16 %v921
      %v980 = vunpack.c.l.b16 %v925
      %v981 = vunpack.c.l.b16 %v928
      %v982 = vunpack.c.l.b16 %v932
      %v983 = vunpack.c.l.b16 %v935
      %v984 = vunpack.c.l.b16 %v939
      %v985 = vunpack.c.l.b16 %v942
      %v986 = vunpack.c.l.b16 %v946
      %v987 = vunpack.c.l.b16 %v949
      %v988 = vunpack.c.l.b16 %v953
      %v989 = vunpack.c.l.b16 %v956
      %v990 = vpack.c.b16 %v975, %v974
      %v991 = vpack.c.b16 %v977, %v976
      %v992 = vpack.c.b16 %v979, %v978
      %v993 = vpack.c.b16 %v981, %v980
      %v994 = vpack.c.b16 %v983, %v982
      %v995 = vpack.c.b16 %v985, %v984
      %v996 = vpack.c.b16 %v987, %v986
      %v997 = vpack.c.b16 %v989, %v988
      %v1022 = vunpack.c.l.b16 %v958
      %v1023 = vunpack.c.l.b16 %v959
      %v1024 = vunpack.c.l.b16 %v960
      %v1025 = vunpack.c.l.b16 %v961
      %v1026 = vunpack.c.l.b16 %v962
      %v1027 = vunpack.c.l.b16 %v963
      %v1028 = vunpack.c.l.b16 %v964
      %v1029 = vunpack.c.l.b16 %v965
      %v1030 = vunpack.c.l.b16 %v966
      %v1031 = vunpack.c.l.b16 %v967
      %v1032 = vunpack.c.l.b16 %v968
      %v1033 = vunpack.c.l.b16 %v969
      %v1034 = vunpack.c.l.b16 %v970
      %v1035 = vunpack.c.l.b16 %v971
      %v1036 = vunpack.c.l.b16 %v972
      %v1037 = vunpack.c.l.b16 %v973
      %v1038 = vpack.c.b16 %v1023, %v1022
      %v1039 = vpack.c.b16 %v1025, %v1024
      %v1040 = vpack.c.b16 %v1027, %v1026
      %v1041 = vpack.c.b16 %v1029, %v1028
      %v1042 = vpack.c.b16 %v1031, %v1030
      %v1043 = vpack.c.b16 %v1033, %v1032
      %v1044 = vpack.c.b16 %v1035, %v1034
      %v1045 = vpack.c.b16 %v1037, %v1036
      %1054 = vmatpush.bf16.msra.mxu0 %v1045
      %1055 = vmatpush.bf16.msra.mxu0 %v1044
      %1056 = vmatpush.bf16.msra.mxu0 %v1043
      %1057 = vmatpush.bf16.msra.mxu0 %v1042
      %1058 = vmatpush.bf16.msra.mxu0 %v1041
      %1059 = vmatpush.bf16.msra.mxu0 %v1040
      %1060 = vmatpush.bf16.msra.mxu0 %v1039
      %1061 = vmatpush.bf16.msra.mxu0 %v1038
      %1062 = vmatmul.bf16.gmra.mxu0 %v990
      %v1063 = vpop.f32.mrf.mxu0
      %v1064 = vadd.f32 0.0, %v1063
      %v1065 = vpop.f32.mrf.mxu0
      %v1066 = vadd.f32 0.0, %v1065
      %1067 = vmatmul.bf16.gmra.mxu0 %v991
      %v1068 = vpop.f32.mrf.mxu0
      %v1069 = vadd.f32 0.0, %v1068
      %v1070 = vpop.f32.mrf.mxu0
      %v1071 = vadd.f32 0.0, %v1070
      %1072 = vmatmul.bf16.gmra.mxu0 %v992
      %v1073 = vpop.f32.mrf.mxu0
      %v1074 = vadd.f32 0.0, %v1073
      %v1075 = vpop.f32.mrf.mxu0
      %v1076 = vadd.f32 0.0, %v1075
      %1077 = vmatmul.bf16.gmra.mxu0 %v993
      %v1078 = vpop.f32.mrf.mxu0
      %v1079 = vadd.f32 0.0, %v1078
      %v1080 = vpop.f32.mrf.mxu0
      %v1081 = vadd.f32 0.0, %v1080
      %1082 = vmatmul.bf16.gmra.mxu0 %v994
      %v1083 = vpop.f32.mrf.mxu0
      %v1084 = vadd.f32 0.0, %v1083
      %v1085 = vpop.f32.mrf.mxu0
      %v1086 = vadd.f32 0.0, %v1085
      %1087 = vmatmul.bf16.gmra.mxu0 %v995
      %v1088 = vpop.f32.mrf.mxu0
      %v1089 = vadd.f32 0.0, %v1088
      %v1090 = vpop.f32.mrf.mxu0
      %v1091 = vadd.f32 0.0, %v1090
      %1092 = vmatmul.bf16.gmra.mxu0 %v996
      %v1093 = vpop.f32.mrf.mxu0
      %v1094 = vadd.f32 0.0, %v1093
      %v1095 = vpop.f32.mrf.mxu0
      %v1096 = vadd.f32 0.0, %v1095
      %1097 = vmatmul.bf16.gmra.mxu0 %v997
      %v1098 = vpop.f32.mrf.mxu0
      %v1099 = vadd.f32 0.0, %v1098
      %v1100 = vpop.f32.mrf.mxu0
      %v1101 = vadd.f32 0.0, %v1100
      %1102 = vdwg.mxu0
      %v1103 = vadd.f32 %v835, %v1064
      %v1104 = vadd.f32 %v837, %v1066
      %v1105 = vadd.f32 %v840, %v1069
      %v1106 = vadd.f32 %v842, %v1071
      %v1107 = vadd.f32 %v845, %v1074
      %v1108 = vadd.f32 %v847, %v1076
      %v1109 = vadd.f32 %v850, %v1079
      %v1110 = vadd.f32 %v852, %v1081
      %v1111 = vadd.f32 %v855, %v1084
      %v1112 = vadd.f32 %v857, %v1086
      %v1113 = vadd.f32 %v860, %v1089
      %v1114 = vadd.f32 %v862, %v1091
      %v1115 = vadd.f32 %v865, %v1094
      %v1116 = vadd.f32 %v867, %v1096
      %v1117 = vadd.f32 %v870, %v1099
      %v1118 = vadd.f32 %v872, %v1101
      %s1119 = scalar_lea.vmem %s219, 12
      %v1120 = vld [vmem:[%s1119] sm:$0xf]
      %v1121 = vld [vmem:[%s1119 + $0x4] sm:$0xf]
      %v1122 = vld [vmem:[%s1119 + $0xc] sm:$0xf]
      %v1123 = vld [vmem:[%s1119 + $0x10] sm:$0xf]
      %v1124 = vld [vmem:[%s1119 + $0x18] sm:$0xf]
      %v1125 = vld [vmem:[%s1119 + $0x1c] sm:$0xf]
      %v1126 = vld [vmem:[%s1119 + $0x24] sm:$0xf]
      %v1127 = vld [vmem:[%s1119 + $0x28] sm:$0xf]
      %v1128 = vld [vmem:[%s1119 + $0x30] sm:$0xf]
      %v1129 = vld [vmem:[%s1119 + $0x34] sm:$0xf]
      %v1130 = vld [vmem:[%s1119 + $0x3c] sm:$0xf]
      %v1131 = vld [vmem:[%s1119 + $0x40] sm:$0xf]
      %v1132 = vld [vmem:[%s1119 + $0x48] sm:$0xf]
      %v1133 = vld [vmem:[%s1119 + $0x4c] sm:$0xf]
      %v1134 = vld [vmem:[%s1119 + $0x54] sm:$0xf]
      %v1135 = vld [vmem:[%s1119 + $0x58] sm:$0xf]
      %s1136 = scalar_lea.vmem %s1, 192
      %v1137 = vld [vmem:[%s1136] sm:$0xf]
      %v1138 = vld [vmem:[%s1136 + $0x4] sm:$0xf]
      %v1139 = vld [vmem:[%s1136 + $0x8] sm:$0xf]
      %v1140 = vld [vmem:[%s1136 + $0xc] sm:$0xf]
      %v1141 = vld [vmem:[%s1136 + $0x10] sm:$0xf]
      %v1142 = vld [vmem:[%s1136 + $0x14] sm:$0xf]
      %v1143 = vld [vmem:[%s1136 + $0x18] sm:$0xf]
      %v1144 = vld [vmem:[%s1136 + $0x1c] sm:$0xf]
      %v1145 = vld [vmem:[%s1136 + $0x20] sm:$0xf]
      %v1146 = vld [vmem:[%s1136 + $0x24] sm:$0xf]
      %v1147 = vld [vmem:[%s1136 + $0x28] sm:$0xf]
      %v1148 = vld [vmem:[%s1136 + $0x2c] sm:$0xf]
      %v1149 = vld [vmem:[%s1136 + $0x30] sm:$0xf]
      %v1150 = vld [vmem:[%s1136 + $0x34] sm:$0xf]
      %v1151 = vld [vmem:[%s1136 + $0x38] sm:$0xf]
      %v1152 = vld [vmem:[%s1136 + $0x3c] sm:$0xf]
      %v1169 = vunpack.c.l.b16 %v1120
      %v1170 = vunpack.c.l.b16 %v1121
      %v1171 = vunpack.c.l.b16 %v1122
      %v1172 = vunpack.c.l.b16 %v1123
      %v1173 = vunpack.c.l.b16 %v1124
      %v1174 = vunpack.c.l.b16 %v1125
      %v1175 = vunpack.c.l.b16 %v1126
      %v1176 = vunpack.c.l.b16 %v1127
      %v1177 = vunpack.c.l.b16 %v1128
      %v1178 = vunpack.c.l.b16 %v1129
      %v1179 = vunpack.c.l.b16 %v1130
      %v1180 = vunpack.c.l.b16 %v1131
      %v1181 = vunpack.c.l.b16 %v1132
      %v1182 = vunpack.c.l.b16 %v1133
      %v1183 = vunpack.c.l.b16 %v1134
      %v1184 = vunpack.c.l.b16 %v1135
      %v1185 = vpack.c.b16 %v1170, %v1169
      %v1186 = vpack.c.b16 %v1172, %v1171
      %v1187 = vpack.c.b16 %v1174, %v1173
      %v1188 = vpack.c.b16 %v1176, %v1175
      %v1189 = vpack.c.b16 %v1178, %v1177
      %v1190 = vpack.c.b16 %v1180, %v1179
      %v1191 = vpack.c.b16 %v1182, %v1181
      %v1192 = vpack.c.b16 %v1184, %v1183
      %v1217 = vunpack.c.l.b16 %v1137
      %v1218 = vunpack.c.l.b16 %v1138
      %v1219 = vunpack.c.l.b16 %v1139
      %v1220 = vunpack.c.l.b16 %v1140
      %v1221 = vunpack.c.l.b16 %v1141
      %v1222 = vunpack.c.l.b16 %v1142
      %v1223 = vunpack.c.l.b16 %v1143
      %v1224 = vunpack.c.l.b16 %v1144
      %v1225 = vunpack.c.l.b16 %v1145
      %v1226 = vunpack.c.l.b16 %v1146
      %v1227 = vunpack.c.l.b16 %v1147
      %v1228 = vunpack.c.l.b16 %v1148
      %v1229 = vunpack.c.l.b16 %v1149
      %v1230 = vunpack.c.l.b16 %v1150
      %v1231 = vunpack.c.l.b16 %v1151
      %v1232 = vunpack.c.l.b16 %v1152
      %v1233 = vpack.c.b16 %v1218, %v1217
      %v1234 = vpack.c.b16 %v1220, %v1219
      %v1235 = vpack.c.b16 %v1222, %v1221
      %v1236 = vpack.c.b16 %v1224, %v1223
      %v1237 = vpack.c.b16 %v1226, %v1225
      %v1238 = vpack.c.b16 %v1228, %v1227
      %v1239 = vpack.c.b16 %v1230, %v1229
      %v1240 = vpack.c.b16 %v1232, %v1231
      %1249 = vmatpush.bf16.msra.mxu0 %v1240
      %1250 = vmatpush.bf16.msra.mxu0 %v1239
      %1251 = vmatpush.bf16.msra.mxu0 %v1238
      %1252 = vmatpush.bf16.msra.mxu0 %v1237
      %1253 = vmatpush.bf16.msra.mxu0 %v1236
      %1254 = vmatpush.bf16.msra.mxu0 %v1235
      %1255 = vmatpush.bf16.msra.mxu0 %v1234
      %1256 = vmatpush.bf16.msra.mxu0 %v1233
      %1257 = vmatmul.bf16.gmra.mxu0 %v1185
      %v1258 = vpop.f32.mrf.mxu0
      %v1259 = vadd.f32 0.0, %v1258
      %v1260 = vpop.f32.mrf.mxu0
      %v1261 = vadd.f32 0.0, %v1260
      %1262 = vmatmul.bf16.gmra.mxu0 %v1186
      %v1263 = vpop.f32.mrf.mxu0
      %v1264 = vadd.f32 0.0, %v1263
      %v1265 = vpop.f32.mrf.mxu0
      %v1266 = vadd.f32 0.0, %v1265
      %1267 = vmatmul.bf16.gmra.mxu0 %v1187
      %v1268 = vpop.f32.mrf.mxu0
      %v1269 = vadd.f32 0.0, %v1268
      %v1270 = vpop.f32.mrf.mxu0
      %v1271 = vadd.f32 0.0, %v1270
      %1272 = vmatmul.bf16.gmra.mxu0 %v1188
      %v1273 = vpop.f32.mrf.mxu0
      %v1274 = vadd.f32 0.0, %v1273
      %v1275 = vpop.f32.mrf.mxu0
      %v1276 = vadd.f32 0.0, %v1275
      %1277 = vmatmul.bf16.gmra.mxu0 %v1189
      %v1278 = vpop.f32.mrf.mxu0
      %v1279 = vadd.f32 0.0, %v1278
      %v1280 = vpop.f32.mrf.mxu0
      %v1281 = vadd.f32 0.0, %v1280
      %1282 = vmatmul.bf16.gmra.mxu0 %v1190
      %v1283 = vpop.f32.mrf.mxu0
      %v1284 = vadd.f32 0.0, %v1283
      %v1285 = vpop.f32.mrf.mxu0
      %v1286 = vadd.f32 0.0, %v1285
      %1287 = vmatmul.bf16.gmra.mxu0 %v1191
      %v1288 = vpop.f32.mrf.mxu0
      %v1289 = vadd.f32 0.0, %v1288
      %v1290 = vpop.f32.mrf.mxu0
      %v1291 = vadd.f32 0.0, %v1290
      %1292 = vmatmul.bf16.gmra.mxu0 %v1192
      %v1293 = vpop.f32.mrf.mxu0
      %v1294 = vadd.f32 0.0, %v1293
      %v1295 = vpop.f32.mrf.mxu0
      %v1296 = vadd.f32 0.0, %v1295
      %1297 = vdwg.mxu0
      %v1298 = vadd.f32 %v1103, %v1259
      %v1299 = vadd.f32 %v1104, %v1261
      %v1300 = vadd.f32 %v1105, %v1264
      %v1301 = vadd.f32 %v1106, %v1266
      %v1302 = vadd.f32 %v1107, %v1269
      %v1303 = vadd.f32 %v1108, %v1271
      %v1304 = vadd.f32 %v1109, %v1274
      %v1305 = vadd.f32 %v1110, %v1276
      %v1306 = vadd.f32 %v1111, %v1279
      %v1307 = vadd.f32 %v1112, %v1281
      %v1308 = vadd.f32 %v1113, %v1284
      %v1309 = vadd.f32 %v1114, %v1286
      %v1310 = vadd.f32 %v1115, %v1289
      %v1311 = vadd.f32 %v1116, %v1291
      %v1312 = vadd.f32 %v1117, %v1294
      %v1313 = vadd.f32 %v1118, %v1296
      %v1314 = vld [vmem:[%s1119] sm:$0xf]
      %v1315 = vld [vmem:[%s1119 + $0x4] sm:$0xf]
      %v1316 = vld [vmem:[%s1119 + $0x8] sm:$0x1]
      %v1317 = vld [vmem:[%s1119 + $0xc] sm:$0xf]
      %v1318 = vld [vmem:[%s1119 + $0x10] sm:$0xf]
      %v1319 = vld [vmem:[%s1119 + $0x14] sm:$0x1]
      %v1320 = vld [vmem:[%s1119 + $0x18] sm:$0xf]
      %v1321 = vld [vmem:[%s1119 + $0x1c] sm:$0xf]
      %v1322 = vld [vmem:[%s1119 + $0x20] sm:$0x1]
      %v1323 = vld [vmem:[%s1119 + $0x24] sm:$0xf]
      %v1324 = vld [vmem:[%s1119 + $0x28] sm:$0xf]
      %v1325 = vld [vmem:[%s1119 + $0x2c] sm:$0x1]
      %v1326 = vld [vmem:[%s1119 + $0x30] sm:$0xf]
      %v1327 = vld [vmem:[%s1119 + $0x34] sm:$0xf]
      %v1328 = vld [vmem:[%s1119 + $0x38] sm:$0x1]
      %v1329 = vld [vmem:[%s1119 + $0x3c] sm:$0xf]
      %v1330 = vld [vmem:[%s1119 + $0x40] sm:$0xf]
      %v1331 = vld [vmem:[%s1119 + $0x44] sm:$0x1]
      %v1332 = vld [vmem:[%s1119 + $0x48] sm:$0xf]
      %v1333 = vld [vmem:[%s1119 + $0x4c] sm:$0xf]
      %v1334 = vld [vmem:[%s1119 + $0x50] sm:$0x1]
      %v1335 = vld [vmem:[%s1119 + $0x54] sm:$0xf]
      %v1336 = vld [vmem:[%s1119 + $0x58] sm:$0xf]
      %v1337 = vld [vmem:[%s1119 + $0x5c] sm:$0x1]
      %v1339 = vshrl.u32 %v1314, 16
      %v1341 = vrot.slane %v1339, 4
      %v1342 = vshll.u32 %v1314, 16
      %v1344 = vrot.slane %v1342, 5
      %v1345 = vor.u32 %v1341, %v1344
      %v1346 = vrot.slane %v1345, 4
      %v1348 = vshll.u32 %v1315, 16
      %v1350 = vrot.slane %v1348, 5
      %v1351 = vsel %vm390, %v1346, %v1350
      %v1352 = vshrl.u32 %v1315, 16
      %v1354 = vrot.slane %v1352, 4
      %v1355 = vor.u32 %v1354, %v1350
      %v1356 = vrot.slane %v1355, 4
      %v1358 = vshll.u32 %v1316, 16
      %v1360 = vrot.slane %v1358, 5
      %v1361 = vsel %vm390, %v1356, %v1360
      %v1363 = vshrl.u32 %v1317, 16
      %v1365 = vrot.slane %v1363, 4
      %v1366 = vshll.u32 %v1317, 16
      %v1368 = vrot.slane %v1366, 5
      %v1369 = vor.u32 %v1365, %v1368
      %v1370 = vrot.slane %v1369, 4
      %v1372 = vshll.u32 %v1318, 16
      %v1374 = vrot.slane %v1372, 5
      %v1375 = vsel %vm390, %v1370, %v1374
      %v1376 = vshrl.u32 %v1318, 16
      %v1378 = vrot.slane %v1376, 4
      %v1379 = vor.u32 %v1378, %v1374
      %v1380 = vrot.slane %v1379, 4
      %v1382 = vshll.u32 %v1319, 16
      %v1384 = vrot.slane %v1382, 5
      %v1385 = vsel %vm390, %v1380, %v1384
      %v1387 = vshrl.u32 %v1320, 16
      %v1389 = vrot.slane %v1387, 4
      %v1390 = vshll.u32 %v1320, 16
      %v1392 = vrot.slane %v1390, 5
      %v1393 = vor.u32 %v1389, %v1392
      %v1394 = vrot.slane %v1393, 4
      %v1396 = vshll.u32 %v1321, 16
      %v1398 = vrot.slane %v1396, 5
      %v1399 = vsel %vm390, %v1394, %v1398
      %v1400 = vshrl.u32 %v1321, 16
      %v1402 = vrot.slane %v1400, 4
      %v1403 = vor.u32 %v1402, %v1398
      %v1404 = vrot.slane %v1403, 4
      %v1406 = vshll.u32 %v1322, 16
      %v1408 = vrot.slane %v1406, 5
      %v1409 = vsel %vm390, %v1404, %v1408
      %v1411 = vshrl.u32 %v1323, 16
      %v1413 = vrot.slane %v1411, 4
      %v1414 = vshll.u32 %v1323, 16
      %v1416 = vrot.slane %v1414, 5
      %v1417 = vor.u32 %v1413, %v1416
      %v1418 = vrot.slane %v1417, 4
      %v1420 = vshll.u32 %v1324, 16
      %v1422 = vrot.slane %v1420, 5
      %v1423 = vsel %vm390, %v1418, %v1422
      %v1424 = vshrl.u32 %v1324, 16
      %v1426 = vrot.slane %v1424, 4
      %v1427 = vor.u32 %v1426, %v1422
      %v1428 = vrot.slane %v1427, 4
      %v1430 = vshll.u32 %v1325, 16
      %v1432 = vrot.slane %v1430, 5
      %v1433 = vsel %vm390, %v1428, %v1432
      %v1435 = vshrl.u32 %v1326, 16
      %v1437 = vrot.slane %v1435, 4
      %v1438 = vshll.u32 %v1326, 16
      %v1440 = vrot.slane %v1438, 5
      %v1441 = vor.u32 %v1437, %v1440
      %v1442 = vrot.slane %v1441, 4
      %v1444 = vshll.u32 %v1327, 16
      %v1446 = vrot.slane %v1444, 5
      %v1447 = vsel %vm390, %v1442, %v1446
      %v1448 = vshrl.u32 %v1327, 16
      %v1450 = vrot.slane %v1448, 4
      %v1451 = vor.u32 %v1450, %v1446
      %v1452 = vrot.slane %v1451, 4
      %v1454 = vshll.u32 %v1328, 16
      %v1456 = vrot.slane %v1454, 5
      %v1457 = vsel %vm390, %v1452, %v1456
      %v1459 = vshrl.u32 %v1329, 16
      %v1461 = vrot.slane %v1459, 4
      %v1462 = vshll.u32 %v1329, 16
      %v1464 = vrot.slane %v1462, 5
      %v1465 = vor.u32 %v1461, %v1464
      %v1466 = vrot.slane %v1465, 4
      %v1468 = vshll.u32 %v1330, 16
      %v1470 = vrot.slane %v1468, 5
      %v1471 = vsel %vm390, %v1466, %v1470
      %v1472 = vshrl.u32 %v1330, 16
      %v1474 = vrot.slane %v1472, 4
      %v1475 = vor.u32 %v1474, %v1470
      %v1476 = vrot.slane %v1475, 4
      %v1478 = vshll.u32 %v1331, 16
      %v1480 = vrot.slane %v1478, 5
      %v1481 = vsel %vm390, %v1476, %v1480
      %v1483 = vshrl.u32 %v1332, 16
      %v1485 = vrot.slane %v1483, 4
      %v1486 = vshll.u32 %v1332, 16
      %v1488 = vrot.slane %v1486, 5
      %v1489 = vor.u32 %v1485, %v1488
      %v1490 = vrot.slane %v1489, 4
      %v1492 = vshll.u32 %v1333, 16
      %v1494 = vrot.slane %v1492, 5
      %v1495 = vsel %vm390, %v1490, %v1494
      %v1496 = vshrl.u32 %v1333, 16
      %v1498 = vrot.slane %v1496, 4
      %v1499 = vor.u32 %v1498, %v1494
      %v1500 = vrot.slane %v1499, 4
      %v1502 = vshll.u32 %v1334, 16
      %v1504 = vrot.slane %v1502, 5
      %v1505 = vsel %vm390, %v1500, %v1504
      %v1507 = vshrl.u32 %v1335, 16
      %v1509 = vrot.slane %v1507, 4
      %v1510 = vshll.u32 %v1335, 16
      %v1512 = vrot.slane %v1510, 5
      %v1513 = vor.u32 %v1509, %v1512
      %v1514 = vrot.slane %v1513, 4
      %v1516 = vshll.u32 %v1336, 16
      %v1518 = vrot.slane %v1516, 5
      %v1519 = vsel %vm390, %v1514, %v1518
      %v1520 = vshrl.u32 %v1336, 16
      %v1522 = vrot.slane %v1520, 4
      %v1523 = vor.u32 %v1522, %v1518
      %v1524 = vrot.slane %v1523, 4
      %v1526 = vshll.u32 %v1337, 16
      %v1528 = vrot.slane %v1526, 5
      %v1529 = vsel %vm390, %v1524, %v1528
      %s1530 = scalar_lea.vmem %s1, 256
      %v1531 = vld [vmem:[%s1530] sm:$0xf]
      %v1532 = vld [vmem:[%s1530 + $0x4] sm:$0xf]
      %v1533 = vld [vmem:[%s1530 + $0x8] sm:$0xf]
      %v1534 = vld [vmem:[%s1530 + $0xc] sm:$0xf]
      %v1535 = vld [vmem:[%s1530 + $0x10] sm:$0xf]
      %v1536 = vld [vmem:[%s1530 + $0x14] sm:$0xf]
      %v1537 = vld [vmem:[%s1530 + $0x18] sm:$0xf]
      %v1538 = vld [vmem:[%s1530 + $0x1c] sm:$0xf]
      %v1539 = vld [vmem:[%s1530 + $0x20] sm:$0xf]
      %v1540 = vld [vmem:[%s1530 + $0x24] sm:$0xf]
      %v1541 = vld [vmem:[%s1530 + $0x28] sm:$0xf]
      %v1542 = vld [vmem:[%s1530 + $0x2c] sm:$0xf]
      %v1543 = vld [vmem:[%s1530 + $0x30] sm:$0xf]
      %v1544 = vld [vmem:[%s1530 + $0x34] sm:$0xf]
      %v1545 = vld [vmem:[%s1530 + $0x38] sm:$0xf]
      %v1546 = vld [vmem:[%s1530 + $0x3c] sm:$0xf]
      %v1547 = vunpack.c.l.b16 %v1351
      %v1548 = vunpack.c.l.b16 %v1361
      %v1549 = vunpack.c.l.b16 %v1375
      %v1550 = vunpack.c.l.b16 %v1385
      %v1551 = vunpack.c.l.b16 %v1399
      %v1552 = vunpack.c.l.b16 %v1409
      %v1553 = vunpack.c.l.b16 %v1423
      %v1554 = vunpack.c.l.b16 %v1433
      %v1555 = vunpack.c.l.b16 %v1447
      %v1556 = vunpack.c.l.b16 %v1457
      %v1557 = vunpack.c.l.b16 %v1471
      %v1558 = vunpack.c.l.b16 %v1481
      %v1559 = vunpack.c.l.b16 %v1495
      %v1560 = vunpack.c.l.b16 %v1505
      %v1561 = vunpack.c.l.b16 %v1519
      %v1562 = vunpack.c.l.b16 %v1529
      %v1563 = vpack.c.b16 %v1548, %v1547
      %v1564 = vpack.c.b16 %v1550, %v1549
      %v1565 = vpack.c.b16 %v1552, %v1551
      %v1566 = vpack.c.b16 %v1554, %v1553
      %v1567 = vpack.c.b16 %v1556, %v1555
      %v1568 = vpack.c.b16 %v1558, %v1557
      %v1569 = vpack.c.b16 %v1560, %v1559
      %v1570 = vpack.c.b16 %v1562, %v1561
      %v1595 = vunpack.c.l.b16 %v1531
      %v1596 = vunpack.c.l.b16 %v1532
      %v1597 = vunpack.c.l.b16 %v1533
      %v1598 = vunpack.c.l.b16 %v1534
      %v1599 = vunpack.c.l.b16 %v1535
      %v1600 = vunpack.c.l.b16 %v1536
      %v1601 = vunpack.c.l.b16 %v1537
      %v1602 = vunpack.c.l.b16 %v1538
      %v1603 = vunpack.c.l.b16 %v1539
      %v1604 = vunpack.c.l.b16 %v1540
      %v1605 = vunpack.c.l.b16 %v1541
      %v1606 = vunpack.c.l.b16 %v1542
      %v1607 = vunpack.c.l.b16 %v1543
      %v1608 = vunpack.c.l.b16 %v1544
      %v1609 = vunpack.c.l.b16 %v1545
      %v1610 = vunpack.c.l.b16 %v1546
      %v1611 = vpack.c.b16 %v1596, %v1595
      %v1612 = vpack.c.b16 %v1598, %v1597
      %v1613 = vpack.c.b16 %v1600, %v1599
      %v1614 = vpack.c.b16 %v1602, %v1601
      %v1615 = vpack.c.b16 %v1604, %v1603
      %v1616 = vpack.c.b16 %v1606, %v1605
      %v1617 = vpack.c.b16 %v1608, %v1607
      %v1618 = vpack.c.b16 %v1610, %v1609
      %1627 = vmatpush.bf16.msra.mxu0 %v1618
      %1628 = vmatpush.bf16.msra.mxu0 %v1617
      %1629 = vmatpush.bf16.msra.mxu0 %v1616
      %1630 = vmatpush.bf16.msra.mxu0 %v1615
      %1631 = vmatpush.bf16.msra.mxu0 %v1614
      %1632 = vmatpush.bf16.msra.mxu0 %v1613
      %1633 = vmatpush.bf16.msra.mxu0 %v1612
      %1634 = vmatpush.bf16.msra.mxu0 %v1611
      %1635 = vmatmul.bf16.gmra.mxu0 %v1563
      %v1636 = vpop.f32.mrf.mxu0
      %v1637 = vadd.f32 0.0, %v1636
      %v1638 = vpop.f32.mrf.mxu0
      %v1639 = vadd.f32 0.0, %v1638
      %1640 = vmatmul.bf16.gmra.mxu0 %v1564
      %v1641 = vpop.f32.mrf.mxu0
      %v1642 = vadd.f32 0.0, %v1641
      %v1643 = vpop.f32.mrf.mxu0
      %v1644 = vadd.f32 0.0, %v1643
      %1645 = vmatmul.bf16.gmra.mxu0 %v1565
      %v1646 = vpop.f32.mrf.mxu0
      %v1647 = vadd.f32 0.0, %v1646
      %v1648 = vpop.f32.mrf.mxu0
      %v1649 = vadd.f32 0.0, %v1648
      %1650 = vmatmul.bf16.gmra.mxu0 %v1566
      %v1651 = vpop.f32.mrf.mxu0
      %v1652 = vadd.f32 0.0, %v1651
      %v1653 = vpop.f32.mrf.mxu0
      %v1654 = vadd.f32 0.0, %v1653
      %1655 = vmatmul.bf16.gmra.mxu0 %v1567
      %v1656 = vpop.f32.mrf.mxu0
      %v1657 = vadd.f32 0.0, %v1656
      %v1658 = vpop.f32.mrf.mxu0
      %v1659 = vadd.f32 0.0, %v1658
      %1660 = vmatmul.bf16.gmra.mxu0 %v1568
      %v1661 = vpop.f32.mrf.mxu0
      %v1662 = vadd.f32 0.0, %v1661
      %v1663 = vpop.f32.mrf.mxu0
      %v1664 = vadd.f32 0.0, %v1663
      %1665 = vmatmul.bf16.gmra.mxu0 %v1569
      %v1666 = vpop.f32.mrf.mxu0
      %v1667 = vadd.f32 0.0, %v1666
      %v1668 = vpop.f32.mrf.mxu0
      %v1669 = vadd.f32 0.0, %v1668
      %1670 = vmatmul.bf16.gmra.mxu0 %v1570
      %v1671 = vpop.f32.mrf.mxu0
      %v1672 = vadd.f32 0.0, %v1671
      %v1673 = vpop.f32.mrf.mxu0
      %v1674 = vadd.f32 0.0, %v1673
      %1675 = vdwg.mxu0
      %v1676 = vadd.f32 %v1298, %v1637
      %v1677 = vadd.f32 %v1299, %v1639
      %v1678 = vadd.f32 %v1300, %v1642
      %v1679 = vadd.f32 %v1301, %v1644
      %v1680 = vadd.f32 %v1302, %v1647
      %v1681 = vadd.f32 %v1303, %v1649
      %v1682 = vadd.f32 %v1304, %v1652
      %v1683 = vadd.f32 %v1305, %v1654
      %v1684 = vadd.f32 %v1306, %v1657
      %v1685 = vadd.f32 %v1307, %v1659
      %v1686 = vadd.f32 %v1308, %v1662
      %v1687 = vadd.f32 %v1309, %v1664
      %v1688 = vadd.f32 %v1310, %v1667
      %v1689 = vadd.f32 %v1311, %v1669
      %v1690 = vadd.f32 %v1312, %v1672
      %v1691 = vadd.f32 %v1313, %v1674
      %v1692 = vld [vmem:[%s1119] sm:$0xe]
      %v1693 = vld [vmem:[%s1119 + $0xc] sm:$0xe]
      %v1694 = vld [vmem:[%s1119 + $0x18] sm:$0xe]
      %v1695 = vld [vmem:[%s1119 + $0x24] sm:$0xe]
      %v1696 = vld [vmem:[%s1119 + $0x30] sm:$0xe]
      %v1697 = vld [vmem:[%s1119 + $0x3c] sm:$0xe]
      %v1698 = vld [vmem:[%s1119 + $0x48] sm:$0xe]
      %v1699 = vld [vmem:[%s1119 + $0x54] sm:$0xe]
      %v1724 = vrot.slane %v1692, 5
      %v1725 = vrot.slane %v1724, 4
      %v1726 = vrot.slane %v1315, 5
      %v1727 = vsel %vm900, %v1725, %v1726
      %v1728 = vrot.slane %v1726, 4
      %v1729 = vrot.slane %v1316, 5
      %v1730 = vsel %vm900, %v1728, %v1729
      %v1731 = vrot.slane %v1693, 5
      %v1732 = vrot.slane %v1731, 4
      %v1733 = vrot.slane %v1318, 5
      %v1734 = vsel %vm900, %v1732, %v1733
      %v1735 = vrot.slane %v1733, 4
      %v1736 = vrot.slane %v1319, 5
      %v1737 = vsel %vm900, %v1735, %v1736
      %v1738 = vrot.slane %v1694, 5
      %v1739 = vrot.slane %v1738, 4
      %v1740 = vrot.slane %v1321, 5
      %v1741 = vsel %vm900, %v1739, %v1740
      %v1742 = vrot.slane %v1740, 4
      %v1743 = vrot.slane %v1322, 5
      %v1744 = vsel %vm900, %v1742, %v1743
      %v1745 = vrot.slane %v1695, 5
      %v1746 = vrot.slane %v1745, 4
      %v1747 = vrot.slane %v1324, 5
      %v1748 = vsel %vm900, %v1746, %v1747
      %v1749 = vrot.slane %v1747, 4
      %v1750 = vrot.slane %v1325, 5
      %v1751 = vsel %vm900, %v1749, %v1750
      %v1752 = vrot.slane %v1696, 5
      %v1753 = vrot.slane %v1752, 4
      %v1754 = vrot.slane %v1327, 5
      %v1755 = vsel %vm900, %v1753, %v1754
      %v1756 = vrot.slane %v1754, 4
      %v1757 = vrot.slane %v1328, 5
      %v1758 = vsel %vm900, %v1756, %v1757
      %v1759 = vrot.slane %v1697, 5
      %v1760 = vrot.slane %v1759, 4
      %v1761 = vrot.slane %v1330, 5
      %v1762 = vsel %vm900, %v1760, %v1761
      %v1763 = vrot.slane %v1761, 4
      %v1764 = vrot.slane %v1331, 5
      %v1765 = vsel %vm900, %v1763, %v1764
      %v1766 = vrot.slane %v1698, 5
      %v1767 = vrot.slane %v1766, 4
      %v1768 = vrot.slane %v1333, 5
      %v1769 = vsel %vm900, %v1767, %v1768
      %v1770 = vrot.slane %v1768, 4
      %v1771 = vrot.slane %v1334, 5
      %v1772 = vsel %vm900, %v1770, %v1771
      %v1773 = vrot.slane %v1699, 5
      %v1774 = vrot.slane %v1773, 4
      %v1775 = vrot.slane %v1336, 5
      %v1776 = vsel %vm900, %v1774, %v1775
      %v1777 = vrot.slane %v1775, 4
      %v1778 = vrot.slane %v1337, 5
      %v1779 = vsel %vm900, %v1777, %v1778
      %s1780 = scalar_lea.vmem %s1, 320
      %v1781 = vld [vmem:[%s1780] sm:$0xf]
      %v1782 = vld [vmem:[%s1780 + $0x4] sm:$0xf]
      %v1783 = vld [vmem:[%s1780 + $0x8] sm:$0xf]
      %v1784 = vld [vmem:[%s1780 + $0xc] sm:$0xf]
      %v1785 = vld [vmem:[%s1780 + $0x10] sm:$0xf]
      %v1786 = vld [vmem:[%s1780 + $0x14] sm:$0xf]
      %v1787 = vld [vmem:[%s1780 + $0x18] sm:$0xf]
      %v1788 = vld [vmem:[%s1780 + $0x1c] sm:$0xf]
      %v1789 = vld [vmem:[%s1780 + $0x20] sm:$0xf]
      %v1790 = vld [vmem:[%s1780 + $0x24] sm:$0xf]
      %v1791 = vld [vmem:[%s1780 + $0x28] sm:$0xf]
      %v1792 = vld [vmem:[%s1780 + $0x2c] sm:$0xf]
      %v1793 = vld [vmem:[%s1780 + $0x30] sm:$0xf]
      %v1794 = vld [vmem:[%s1780 + $0x34] sm:$0xf]
      %v1795 = vld [vmem:[%s1780 + $0x38] sm:$0xf]
      %v1796 = vld [vmem:[%s1780 + $0x3c] sm:$0xf]
      %v1797 = vunpack.c.l.b16 %v1727
      %v1798 = vunpack.c.l.b16 %v1730
      %v1799 = vunpack.c.l.b16 %v1734
      %v1800 = vunpack.c.l.b16 %v1737
      %v1801 = vunpack.c.l.b16 %v1741
      %v1802 = vunpack.c.l.b16 %v1744
      %v1803 = vunpack.c.l.b16 %v1748
      %v1804 = vunpack.c.l.b16 %v1751
      %v1805 = vunpack.c.l.b16 %v1755
      %v1806 = vunpack.c.l.b16 %v1758
      %v1807 = vunpack.c.l.b16 %v1762
      %v1808 = vunpack.c.l.b16 %v1765
      %v1809 = vunpack.c.l.b16 %v1769
      %v1810 = vunpack.c.l.b16 %v1772
      %v1811 = vunpack.c.l.b16 %v1776
      %v1812 = vunpack.c.l.b16 %v1779
      %v1813 = vpack.c.b16 %v1798, %v1797
      %v1814 = vpack.c.b16 %v1800, %v1799
      %v1815 = vpack.c.b16 %v1802, %v1801
      %v1816 = vpack.c.b16 %v1804, %v1803
      %v1817 = vpack.c.b16 %v1806, %v1805
      %v1818 = vpack.c.b16 %v1808, %v1807
      %v1819 = vpack.c.b16 %v1810, %v1809
      %v1820 = vpack.c.b16 %v1812, %v1811
      %v1845 = vunpack.c.l.b16 %v1781
      %v1846 = vunpack.c.l.b16 %v1782
      %v1847 = vunpack.c.l.b16 %v1783
      %v1848 = vunpack.c.l.b16 %v1784
      %v1849 = vunpack.c.l.b16 %v1785
      %v1850 = vunpack.c.l.b16 %v1786
      %v1851 = vunpack.c.l.b16 %v1787
      %v1852 = vunpack.c.l.b16 %v1788
      %v1853 = vunpack.c.l.b16 %v1789
      %v1854 = vunpack.c.l.b16 %v1790
      %v1855 = vunpack.c.l.b16 %v1791
      %v1856 = vunpack.c.l.b16 %v1792
      %v1857 = vunpack.c.l.b16 %v1793
      %v1858 = vunpack.c.l.b16 %v1794
      %v1859 = vunpack.c.l.b16 %v1795
      %v1860 = vunpack.c.l.b16 %v1796
      %v1861 = vpack.c.b16 %v1846, %v1845
      %v1862 = vpack.c.b16 %v1848, %v1847
      %v1863 = vpack.c.b16 %v1850, %v1849
      %v1864 = vpack.c.b16 %v1852, %v1851
      %v1865 = vpack.c.b16 %v1854, %v1853
      %v1866 = vpack.c.b16 %v1856, %v1855
      %v1867 = vpack.c.b16 %v1858, %v1857
      %v1868 = vpack.c.b16 %v1860, %v1859
      %1877 = vmatpush.bf16.msra.mxu0 %v1868
      %1878 = vmatpush.bf16.msra.mxu0 %v1867
      %1879 = vmatpush.bf16.msra.mxu0 %v1866
      %1880 = vmatpush.bf16.msra.mxu0 %v1865
      %1881 = vmatpush.bf16.msra.mxu0 %v1864
      %1882 = vmatpush.bf16.msra.mxu0 %v1863
      %1883 = vmatpush.bf16.msra.mxu0 %v1862
      %1884 = vmatpush.bf16.msra.mxu0 %v1861
      %1885 = vmatmul.bf16.gmra.mxu0 %v1813
      %v1886 = vpop.f32.mrf.mxu0
      %v1887 = vadd.f32 0.0, %v1886
      %v1888 = vpop.f32.mrf.mxu0
      %v1889 = vadd.f32 0.0, %v1888
      %1890 = vmatmul.bf16.gmra.mxu0 %v1814
      %v1891 = vpop.f32.mrf.mxu0
      %v1892 = vadd.f32 0.0, %v1891
      %v1893 = vpop.f32.mrf.mxu0
      %v1894 = vadd.f32 0.0, %v1893
      %1895 = vmatmul.bf16.gmra.mxu0 %v1815
      %v1896 = vpop.f32.mrf.mxu0
      %v1897 = vadd.f32 0.0, %v1896
      %v1898 = vpop.f32.mrf.mxu0
      %v1899 = vadd.f32 0.0, %v1898
      %1900 = vmatmul.bf16.gmra.mxu0 %v1816
      %v1901 = vpop.f32.mrf.mxu0
      %v1902 = vadd.f32 0.0, %v1901
      %v1903 = vpop.f32.mrf.mxu0
      %v1904 = vadd.f32 0.0, %v1903
      %1905 = vmatmul.bf16.gmra.mxu0 %v1817
      %v1906 = vpop.f32.mrf.mxu0
      %v1907 = vadd.f32 0.0, %v1906
      %v1908 = vpop.f32.mrf.mxu0
      %v1909 = vadd.f32 0.0, %v1908
      %1910 = vmatmul.bf16.gmra.mxu0 %v1818
      %v1911 = vpop.f32.mrf.mxu0
      %v1912 = vadd.f32 0.0, %v1911
      %v1913 = vpop.f32.mrf.mxu0
      %v1914 = vadd.f32 0.0, %v1913
      %1915 = vmatmul.bf16.gmra.mxu0 %v1819
      %v1916 = vpop.f32.mrf.mxu0
      %v1917 = vadd.f32 0.0, %v1916
      %v1918 = vpop.f32.mrf.mxu0
      %v1919 = vadd.f32 0.0, %v1918
      %1920 = vmatmul.bf16.gmra.mxu0 %v1820
      %v1921 = vpop.f32.mrf.mxu0
      %v1922 = vadd.f32 0.0, %v1921
      %v1923 = vpop.f32.mrf.mxu0
      %v1924 = vadd.f32 0.0, %v1923
      %1925 = vdwg.mxu0
      %v1926 = vadd.f32 %v1676, %v1887
      %v1927 = vadd.f32 %v1677, %v1889
      %v1928 = vadd.f32 %v1678, %v1892
      %v1929 = vadd.f32 %v1679, %v1894
      %v1930 = vadd.f32 %v1680, %v1897
      %v1931 = vadd.f32 %v1681, %v1899
      %v1932 = vadd.f32 %v1682, %v1902
      %v1933 = vadd.f32 %v1683, %v1904
      %v1934 = vadd.f32 %v1684, %v1907
      %v1935 = vadd.f32 %v1685, %v1909
      %v1936 = vadd.f32 %v1686, %v1912
      %v1937 = vadd.f32 %v1687, %v1914
      %v1938 = vadd.f32 %v1688, %v1917
      %v1939 = vadd.f32 %v1689, %v1919
      %v1940 = vadd.f32 %v1690, %v1922
      %v1941 = vadd.f32 %v1691, %v1924
      %s1942 = scalar_lea.vmem %s219, 24
      %v1943 = vld [vmem:[%s1942] sm:$0xf]
      %v1944 = vld [vmem:[%s1942 + $0x4] sm:$0xf]
      %v1945 = vld [vmem:[%s1942 + $0xc] sm:$0xf]
      %v1946 = vld [vmem:[%s1942 + $0x10] sm:$0xf]
      %v1947 = vld [vmem:[%s1942 + $0x18] sm:$0xf]
      %v1948 = vld [vmem:[%s1942 + $0x1c] sm:$0xf]
      %v1949 = vld [vmem:[%s1942 + $0x24] sm:$0xf]
      %v1950 = vld [vmem:[%s1942 + $0x28] sm:$0xf]
      %v1951 = vld [vmem:[%s1942 + $0x30] sm:$0xf]
      %v1952 = vld [vmem:[%s1942 + $0x34] sm:$0xf]
      %v1953 = vld [vmem:[%s1942 + $0x3c] sm:$0xf]
      %v1954 = vld [vmem:[%s1942 + $0x40] sm:$0xf]
      %v1955 = vld [vmem:[%s1942 + $0x48] sm:$0xf]
      %v1956 = vld [vmem:[%s1942 + $0x4c] sm:$0xf]
      %v1957 = vld [vmem:[%s1942 + $0x54] sm:$0xf]
      %v1958 = vld [vmem:[%s1942 + $0x58] sm:$0xf]
      %s1959 = scalar_lea.vmem %s1, 384
      %v1960 = vld [vmem:[%s1959] sm:$0xf]
      %v1961 = vld [vmem:[%s1959 + $0x4] sm:$0xf]
      %v1962 = vld [vmem:[%s1959 + $0x8] sm:$0xf]
      %v1963 = vld [vmem:[%s1959 + $0xc] sm:$0xf]
      %v1964 = vld [vmem:[%s1959 + $0x10] sm:$0xf]
      %v1965 = vld [vmem:[%s1959 + $0x14] sm:$0xf]
      %v1966 = vld [vmem:[%s1959 + $0x18] sm:$0xf]
      %v1967 = vld [vmem:[%s1959 + $0x1c] sm:$0xf]
      %v1968 = vld [vmem:[%s1959 + $0x20] sm:$0xf]
      %v1969 = vld [vmem:[%s1959 + $0x24] sm:$0xf]
      %v1970 = vld [vmem:[%s1959 + $0x28] sm:$0xf]
      %v1971 = vld [vmem:[%s1959 + $0x2c] sm:$0xf]
      %v1972 = vld [vmem:[%s1959 + $0x30] sm:$0xf]
      %v1973 = vld [vmem:[%s1959 + $0x34] sm:$0xf]
      %v1974 = vld [vmem:[%s1959 + $0x38] sm:$0xf]
      %v1975 = vld [vmem:[%s1959 + $0x3c] sm:$0xf]
      %v1992 = vunpack.c.l.b16 %v1943
      %v1993 = vunpack.c.l.b16 %v1944
      %v1994 = vunpack.c.l.b16 %v1945
      %v1995 = vunpack.c.l.b16 %v1946
      %v1996 = vunpack.c.l.b16 %v1947
      %v1997 = vunpack.c.l.b16 %v1948
      %v1998 = vunpack.c.l.b16 %v1949
      %v1999 = vunpack.c.l.b16 %v1950
      %v2000 = vunpack.c.l.b16 %v1951
      %v2001 = vunpack.c.l.b16 %v1952
      %v2002 = vunpack.c.l.b16 %v1953
      %v2003 = vunpack.c.l.b16 %v1954
      %v2004 = vunpack.c.l.b16 %v1955
      %v2005 = vunpack.c.l.b16 %v1956
      %v2006 = vunpack.c.l.b16 %v1957
      %v2007 = vunpack.c.l.b16 %v1958
      %v2008 = vpack.c.b16 %v1993, %v1992
      %v2009 = vpack.c.b16 %v1995, %v1994
      %v2010 = vpack.c.b16 %v1997, %v1996
      %v2011 = vpack.c.b16 %v1999, %v1998
      %v2012 = vpack.c.b16 %v2001, %v2000
      %v2013 = vpack.c.b16 %v2003, %v2002
      %v2014 = vpack.c.b16 %v2005, %v2004
      %v2015 = vpack.c.b16 %v2007, %v2006
      %v2040 = vunpack.c.l.b16 %v1960
      %v2041 = vunpack.c.l.b16 %v1961
      %v2042 = vunpack.c.l.b16 %v1962
      %v2043 = vunpack.c.l.b16 %v1963
      %v2044 = vunpack.c.l.b16 %v1964
      %v2045 = vunpack.c.l.b16 %v1965
      %v2046 = vunpack.c.l.b16 %v1966
      %v2047 = vunpack.c.l.b16 %v1967
      %v2048 = vunpack.c.l.b16 %v1968
      %v2049 = vunpack.c.l.b16 %v1969
      %v2050 = vunpack.c.l.b16 %v1970
      %v2051 = vunpack.c.l.b16 %v1971
      %v2052 = vunpack.c.l.b16 %v1972
      %v2053 = vunpack.c.l.b16 %v1973
      %v2054 = vunpack.c.l.b16 %v1974
      %v2055 = vunpack.c.l.b16 %v1975
      %v2056 = vpack.c.b16 %v2041, %v2040
      %v2057 = vpack.c.b16 %v2043, %v2042
      %v2058 = vpack.c.b16 %v2045, %v2044
      %v2059 = vpack.c.b16 %v2047, %v2046
      %v2060 = vpack.c.b16 %v2049, %v2048
      %v2061 = vpack.c.b16 %v2051, %v2050
      %v2062 = vpack.c.b16 %v2053, %v2052
      %v2063 = vpack.c.b16 %v2055, %v2054
      %2072 = vmatpush.bf16.msra.mxu0 %v2063
      %2073 = vmatpush.bf16.msra.mxu0 %v2062
      %2074 = vmatpush.bf16.msra.mxu0 %v2061
      %2075 = vmatpush.bf16.msra.mxu0 %v2060
      %2076 = vmatpush.bf16.msra.mxu0 %v2059
      %2077 = vmatpush.bf16.msra.mxu0 %v2058
      %2078 = vmatpush.bf16.msra.mxu0 %v2057
      %2079 = vmatpush.bf16.msra.mxu0 %v2056
      %2080 = vmatmul.bf16.gmra.mxu0 %v2008
      %v2081 = vpop.f32.mrf.mxu0
      %v2082 = vadd.f32 0.0, %v2081
      %v2083 = vpop.f32.mrf.mxu0
      %v2084 = vadd.f32 0.0, %v2083
      %2085 = vmatmul.bf16.gmra.mxu0 %v2009
      %v2086 = vpop.f32.mrf.mxu0
      %v2087 = vadd.f32 0.0, %v2086
      %v2088 = vpop.f32.mrf.mxu0
      %v2089 = vadd.f32 0.0, %v2088
      %2090 = vmatmul.bf16.gmra.mxu0 %v2010
      %v2091 = vpop.f32.mrf.mxu0
      %v2092 = vadd.f32 0.0, %v2091
      %v2093 = vpop.f32.mrf.mxu0
      %v2094 = vadd.f32 0.0, %v2093
      %2095 = vmatmul.bf16.gmra.mxu0 %v2011
      %v2096 = vpop.f32.mrf.mxu0
      %v2097 = vadd.f32 0.0, %v2096
      %v2098 = vpop.f32.mrf.mxu0
      %v2099 = vadd.f32 0.0, %v2098
      %2100 = vmatmul.bf16.gmra.mxu0 %v2012
      %v2101 = vpop.f32.mrf.mxu0
      %v2102 = vadd.f32 0.0, %v2101
      %v2103 = vpop.f32.mrf.mxu0
      %v2104 = vadd.f32 0.0, %v2103
      %2105 = vmatmul.bf16.gmra.mxu0 %v2013
      %v2106 = vpop.f32.mrf.mxu0
      %v2107 = vadd.f32 0.0, %v2106
      %v2108 = vpop.f32.mrf.mxu0
      %v2109 = vadd.f32 0.0, %v2108
      %2110 = vmatmul.bf16.gmra.mxu0 %v2014
      %v2111 = vpop.f32.mrf.mxu0
      %v2112 = vadd.f32 0.0, %v2111
      %v2113 = vpop.f32.mrf.mxu0
      %v2114 = vadd.f32 0.0, %v2113
      %2115 = vmatmul.bf16.gmra.mxu0 %v2015
      %v2116 = vpop.f32.mrf.mxu0
      %v2117 = vadd.f32 0.0, %v2116
      %v2118 = vpop.f32.mrf.mxu0
      %v2119 = vadd.f32 0.0, %v2118
      %2120 = vdwg.mxu0
      %v2121 = vadd.f32 %v1926, %v2082
      %v2122 = vadd.f32 %v1927, %v2084
      %v2123 = vadd.f32 %v1928, %v2087
      %v2124 = vadd.f32 %v1929, %v2089
      %v2125 = vadd.f32 %v1930, %v2092
      %v2126 = vadd.f32 %v1931, %v2094
      %v2127 = vadd.f32 %v1932, %v2097
      %v2128 = vadd.f32 %v1933, %v2099
      %v2129 = vadd.f32 %v1934, %v2102
      %v2130 = vadd.f32 %v1935, %v2104
      %v2131 = vadd.f32 %v1936, %v2107
      %v2132 = vadd.f32 %v1937, %v2109
      %v2133 = vadd.f32 %v1938, %v2112
      %v2134 = vadd.f32 %v1939, %v2114
      %v2135 = vadd.f32 %v1940, %v2117
      %v2136 = vadd.f32 %v1941, %v2119
      %v2137 = vld [vmem:[%s1942] sm:$0xf]
      %v2138 = vld [vmem:[%s1942 + $0x4] sm:$0xf]
      %v2139 = vld [vmem:[%s1942 + $0x8] sm:$0x1]
      %v2140 = vld [vmem:[%s1942 + $0xc] sm:$0xf]
      %v2141 = vld [vmem:[%s1942 + $0x10] sm:$0xf]
      %v2142 = vld [vmem:[%s1942 + $0x14] sm:$0x1]
      %v2143 = vld [vmem:[%s1942 + $0x18] sm:$0xf]
      %v2144 = vld [vmem:[%s1942 + $0x1c] sm:$0xf]
      %v2145 = vld [vmem:[%s1942 + $0x20] sm:$0x1]
      %v2146 = vld [vmem:[%s1942 + $0x24] sm:$0xf]
      %v2147 = vld [vmem:[%s1942 + $0x28] sm:$0xf]
      %v2148 = vld [vmem:[%s1942 + $0x2c] sm:$0x1]
      %v2149 = vld [vmem:[%s1942 + $0x30] sm:$0xf]
      %v2150 = vld [vmem:[%s1942 + $0x34] sm:$0xf]
      %v2151 = vld [vmem:[%s1942 + $0x38] sm:$0x1]
      %v2152 = vld [vmem:[%s1942 + $0x3c] sm:$0xf]
      %v2153 = vld [vmem:[%s1942 + $0x40] sm:$0xf]
      %v2154 = vld [vmem:[%s1942 + $0x44] sm:$0x1]
      %v2155 = vld [vmem:[%s1942 + $0x48] sm:$0xf]
      %v2156 = vld [vmem:[%s1942 + $0x4c] sm:$0xf]
      %v2157 = vld [vmem:[%s1942 + $0x50] sm:$0x1]
      %v2158 = vld [vmem:[%s1942 + $0x54] sm:$0xf]
      %v2159 = vld [vmem:[%s1942 + $0x58] sm:$0xf]
      %v2160 = vld [vmem:[%s1942 + $0x5c] sm:$0x1]
      %v2162 = vshrl.u32 %v2137, 16
      %v2164 = vrot.slane %v2162, 4
      %v2165 = vshll.u32 %v2137, 16
      %v2167 = vrot.slane %v2165, 5
      %v2168 = vor.u32 %v2164, %v2167
      %v2169 = vrot.slane %v2168, 4
      %v2171 = vshll.u32 %v2138, 16
      %v2173 = vrot.slane %v2171, 5
      %v2174 = vsel %vm390, %v2169, %v2173
      %v2175 = vshrl.u32 %v2138, 16
      %v2177 = vrot.slane %v2175, 4
      %v2178 = vor.u32 %v2177, %v2173
      %v2179 = vrot.slane %v2178, 4
      %v2181 = vshll.u32 %v2139, 16
      %v2183 = vrot.slane %v2181, 5
      %v2184 = vsel %vm390, %v2179, %v2183
      %v2186 = vshrl.u32 %v2140, 16
      %v2188 = vrot.slane %v2186, 4
      %v2189 = vshll.u32 %v2140, 16
      %v2191 = vrot.slane %v2189, 5
      %v2192 = vor.u32 %v2188, %v2191
      %v2193 = vrot.slane %v2192, 4
      %v2195 = vshll.u32 %v2141, 16
      %v2197 = vrot.slane %v2195, 5
      %v2198 = vsel %vm390, %v2193, %v2197
      %v2199 = vshrl.u32 %v2141, 16
      %v2201 = vrot.slane %v2199, 4
      %v2202 = vor.u32 %v2201, %v2197
      %v2203 = vrot.slane %v2202, 4
      %v2205 = vshll.u32 %v2142, 16
      %v2207 = vrot.slane %v2205, 5
      %v2208 = vsel %vm390, %v2203, %v2207
      %v2210 = vshrl.u32 %v2143, 16
      %v2212 = vrot.slane %v2210, 4
      %v2213 = vshll.u32 %v2143, 16
      %v2215 = vrot.slane %v2213, 5
      %v2216 = vor.u32 %v2212, %v2215
      %v2217 = vrot.slane %v2216, 4
      %v2219 = vshll.u32 %v2144, 16
      %v2221 = vrot.slane %v2219, 5
      %v2222 = vsel %vm390, %v2217, %v2221
      %v2223 = vshrl.u32 %v2144, 16
      %v2225 = vrot.slane %v2223, 4
      %v2226 = vor.u32 %v2225, %v2221
      %v2227 = vrot.slane %v2226, 4
      %v2229 = vshll.u32 %v2145, 16
      %v2231 = vrot.slane %v2229, 5
      %v2232 = vsel %vm390, %v2227, %v2231
      %v2234 = vshrl.u32 %v2146, 16
      %v2236 = vrot.slane %v2234, 4
      %v2237 = vshll.u32 %v2146, 16
      %v2239 = vrot.slane %v2237, 5
      %v2240 = vor.u32 %v2236, %v2239
      %v2241 = vrot.slane %v2240, 4
      %v2243 = vshll.u32 %v2147, 16
      %v2245 = vrot.slane %v2243, 5
      %v2246 = vsel %vm390, %v2241, %v2245
      %v2247 = vshrl.u32 %v2147, 16
      %v2249 = vrot.slane %v2247, 4
      %v2250 = vor.u32 %v2249, %v2245
      %v2251 = vrot.slane %v2250, 4
      %v2253 = vshll.u32 %v2148, 16
      %v2255 = vrot.slane %v2253, 5
      %v2256 = vsel %vm390, %v2251, %v2255
      %v2258 = vshrl.u32 %v2149, 16
      %v2260 = vrot.slane %v2258, 4
      %v2261 = vshll.u32 %v2149, 16
      %v2263 = vrot.slane %v2261, 5
      %v2264 = vor.u32 %v2260, %v2263
      %v2265 = vrot.slane %v2264, 4
      %v2267 = vshll.u32 %v2150, 16
      %v2269 = vrot.slane %v2267, 5
      %v2270 = vsel %vm390, %v2265, %v2269
      %v2271 = vshrl.u32 %v2150, 16
      %v2273 = vrot.slane %v2271, 4
      %v2274 = vor.u32 %v2273, %v2269
      %v2275 = vrot.slane %v2274, 4
      %v2277 = vshll.u32 %v2151, 16
      %v2279 = vrot.slane %v2277, 5
      %v2280 = vsel %vm390, %v2275, %v2279
      %v2282 = vshrl.u32 %v2152, 16
      %v2284 = vrot.slane %v2282, 4
      %v2285 = vshll.u32 %v2152, 16
      %v2287 = vrot.slane %v2285, 5
      %v2288 = vor.u32 %v2284, %v2287
      %v2289 = vrot.slane %v2288, 4
      %v2291 = vshll.u32 %v2153, 16
      %v2293 = vrot.slane %v2291, 5
      %v2294 = vsel %vm390, %v2289, %v2293
      %v2295 = vshrl.u32 %v2153, 16
      %v2297 = vrot.slane %v2295, 4
      %v2298 = vor.u32 %v2297, %v2293
      %v2299 = vrot.slane %v2298, 4
      %v2301 = vshll.u32 %v2154, 16
      %v2303 = vrot.slane %v2301, 5
      %v2304 = vsel %vm390, %v2299, %v2303
      %v2306 = vshrl.u32 %v2155, 16
      %v2308 = vrot.slane %v2306, 4
      %v2309 = vshll.u32 %v2155, 16
      %v2311 = vrot.slane %v2309, 5
      %v2312 = vor.u32 %v2308, %v2311
      %v2313 = vrot.slane %v2312, 4
      %v2315 = vshll.u32 %v2156, 16
      %v2317 = vrot.slane %v2315, 5
      %v2318 = vsel %vm390, %v2313, %v2317
      %v2319 = vshrl.u32 %v2156, 16
      %v2321 = vrot.slane %v2319, 4
      %v2322 = vor.u32 %v2321, %v2317
      %v2323 = vrot.slane %v2322, 4
      %v2325 = vshll.u32 %v2157, 16
      %v2327 = vrot.slane %v2325, 5
      %v2328 = vsel %vm390, %v2323, %v2327
      %v2330 = vshrl.u32 %v2158, 16
      %v2332 = vrot.slane %v2330, 4
      %v2333 = vshll.u32 %v2158, 16
      %v2335 = vrot.slane %v2333, 5
      %v2336 = vor.u32 %v2332, %v2335
      %v2337 = vrot.slane %v2336, 4
      %v2339 = vshll.u32 %v2159, 16
      %v2341 = vrot.slane %v2339, 5
      %v2342 = vsel %vm390, %v2337, %v2341
      %v2343 = vshrl.u32 %v2159, 16
      %v2345 = vrot.slane %v2343, 4
      %v2346 = vor.u32 %v2345, %v2341
      %v2347 = vrot.slane %v2346, 4
      %v2349 = vshll.u32 %v2160, 16
      %v2351 = vrot.slane %v2349, 5
      %v2352 = vsel %vm390, %v2347, %v2351
      %s2353 = scalar_lea.vmem %s1, 448
      %v2354 = vld [vmem:[%s2353] sm:$0xf]
      %v2355 = vld [vmem:[%s2353 + $0x4] sm:$0xf]
      %v2356 = vld [vmem:[%s2353 + $0x8] sm:$0xf]
      %v2357 = vld [vmem:[%s2353 + $0xc] sm:$0xf]
      %v2358 = vld [vmem:[%s2353 + $0x10] sm:$0xf]
      %v2359 = vld [vmem:[%s2353 + $0x14] sm:$0xf]
      %v2360 = vld [vmem:[%s2353 + $0x18] sm:$0xf]
      %v2361 = vld [vmem:[%s2353 + $0x1c] sm:$0xf]
      %v2362 = vld [vmem:[%s2353 + $0x20] sm:$0xf]
      %v2363 = vld [vmem:[%s2353 + $0x24] sm:$0xf]
      %v2364 = vld [vmem:[%s2353 + $0x28] sm:$0xf]
      %v2365 = vld [vmem:[%s2353 + $0x2c] sm:$0xf]
      %v2366 = vld [vmem:[%s2353 + $0x30] sm:$0xf]
      %v2367 = vld [vmem:[%s2353 + $0x34] sm:$0xf]
      %v2368 = vld [vmem:[%s2353 + $0x38] sm:$0xf]
      %v2369 = vld [vmem:[%s2353 + $0x3c] sm:$0xf]
      %v2370 = vunpack.c.l.b16 %v2174
      %v2371 = vunpack.c.l.b16 %v2184
      %v2372 = vunpack.c.l.b16 %v2198
      %v2373 = vunpack.c.l.b16 %v2208
      %v2374 = vunpack.c.l.b16 %v2222
      %v2375 = vunpack.c.l.b16 %v2232
      %v2376 = vunpack.c.l.b16 %v2246
      %v2377 = vunpack.c.l.b16 %v2256
      %v2378 = vunpack.c.l.b16 %v2270
      %v2379 = vunpack.c.l.b16 %v2280
      %v2380 = vunpack.c.l.b16 %v2294
      %v2381 = vunpack.c.l.b16 %v2304
      %v2382 = vunpack.c.l.b16 %v2318
      %v2383 = vunpack.c.l.b16 %v2328
      %v2384 = vunpack.c.l.b16 %v2342
      %v2385 = vunpack.c.l.b16 %v2352
      %v2386 = vpack.c.b16 %v2371, %v2370
      %v2387 = vpack.c.b16 %v2373, %v2372
      %v2388 = vpack.c.b16 %v2375, %v2374
      %v2389 = vpack.c.b16 %v2377, %v2376
      %v2390 = vpack.c.b16 %v2379, %v2378
      %v2391 = vpack.c.b16 %v2381, %v2380
      %v2392 = vpack.c.b16 %v2383, %v2382
      %v2393 = vpack.c.b16 %v2385, %v2384
      %v2418 = vunpack.c.l.b16 %v2354
      %v2419 = vunpack.c.l.b16 %v2355
      %v2420 = vunpack.c.l.b16 %v2356
      %v2421 = vunpack.c.l.b16 %v2357
      %v2422 = vunpack.c.l.b16 %v2358
      %v2423 = vunpack.c.l.b16 %v2359
      %v2424 = vunpack.c.l.b16 %v2360
      %v2425 = vunpack.c.l.b16 %v2361
      %v2426 = vunpack.c.l.b16 %v2362
      %v2427 = vunpack.c.l.b16 %v2363
      %v2428 = vunpack.c.l.b16 %v2364
      %v2429 = vunpack.c.l.b16 %v2365
      %v2430 = vunpack.c.l.b16 %v2366
      %v2431 = vunpack.c.l.b16 %v2367
      %v2432 = vunpack.c.l.b16 %v2368
      %v2433 = vunpack.c.l.b16 %v2369
      %v2434 = vpack.c.b16 %v2419, %v2418
      %v2435 = vpack.c.b16 %v2421, %v2420
      %v2436 = vpack.c.b16 %v2423, %v2422
      %v2437 = vpack.c.b16 %v2425, %v2424
      %v2438 = vpack.c.b16 %v2427, %v2426
      %v2439 = vpack.c.b16 %v2429, %v2428
      %v2440 = vpack.c.b16 %v2431, %v2430
      %v2441 = vpack.c.b16 %v2433, %v2432
      %2450 = vmatpush.bf16.msra.mxu0 %v2441
      %2451 = vmatpush.bf16.msra.mxu0 %v2440
      %2452 = vmatpush.bf16.msra.mxu0 %v2439
      %2453 = vmatpush.bf16.msra.mxu0 %v2438
      %2454 = vmatpush.bf16.msra.mxu0 %v2437
      %2455 = vmatpush.bf16.msra.mxu0 %v2436
      %2456 = vmatpush.bf16.msra.mxu0 %v2435
      %2457 = vmatpush.bf16.msra.mxu0 %v2434
      %2458 = vmatmul.bf16.gmra.mxu0 %v2386
      %v2459 = vpop.f32.mrf.mxu0
      %v2460 = vadd.f32 0.0, %v2459
      %v2461 = vpop.f32.mrf.mxu0
      %v2462 = vadd.f32 0.0, %v2461
      %2463 = vmatmul.bf16.gmra.mxu0 %v2387
      %v2464 = vpop.f32.mrf.mxu0
      %v2465 = vadd.f32 0.0, %v2464
      %v2466 = vpop.f32.mrf.mxu0
      %v2467 = vadd.f32 0.0, %v2466
      %2468 = vmatmul.bf16.gmra.mxu0 %v2388
      %v2469 = vpop.f32.mrf.mxu0
      %v2470 = vadd.f32 0.0, %v2469
      %v2471 = vpop.f32.mrf.mxu0
      %v2472 = vadd.f32 0.0, %v2471
      %2473 = vmatmul.bf16.gmra.mxu0 %v2389
      %v2474 = vpop.f32.mrf.mxu0
      %v2475 = vadd.f32 0.0, %v2474
      %v2476 = vpop.f32.mrf.mxu0
      %v2477 = vadd.f32 0.0, %v2476
      %2478 = vmatmul.bf16.gmra.mxu0 %v2390
      %v2479 = vpop.f32.mrf.mxu0
      %v2480 = vadd.f32 0.0, %v2479
      %v2481 = vpop.f32.mrf.mxu0
      %v2482 = vadd.f32 0.0, %v2481
      %2483 = vmatmul.bf16.gmra.mxu0 %v2391
      %v2484 = vpop.f32.mrf.mxu0
      %v2485 = vadd.f32 0.0, %v2484
      %v2486 = vpop.f32.mrf.mxu0
      %v2487 = vadd.f32 0.0, %v2486
      %2488 = vmatmul.bf16.gmra.mxu0 %v2392
      %v2489 = vpop.f32.mrf.mxu0
      %v2490 = vadd.f32 0.0, %v2489
      %v2491 = vpop.f32.mrf.mxu0
      %v2492 = vadd.f32 0.0, %v2491
      %2493 = vmatmul.bf16.gmra.mxu0 %v2393
      %v2494 = vpop.f32.mrf.mxu0
      %v2495 = vadd.f32 0.0, %v2494
      %v2496 = vpop.f32.mrf.mxu0
      %v2497 = vadd.f32 0.0, %v2496
      %2498 = vdwg.mxu0
      %v2499 = vadd.f32 %v2121, %v2460
      %v2500 = vadd.f32 %v2122, %v2462
      %v2501 = vadd.f32 %v2123, %v2465
      %v2502 = vadd.f32 %v2124, %v2467
      %v2503 = vadd.f32 %v2125, %v2470
      %v2504 = vadd.f32 %v2126, %v2472
      %v2505 = vadd.f32 %v2127, %v2475
      %v2506 = vadd.f32 %v2128, %v2477
      %v2507 = vadd.f32 %v2129, %v2480
      %v2508 = vadd.f32 %v2130, %v2482
      %v2509 = vadd.f32 %v2131, %v2485
      %v2510 = vadd.f32 %v2132, %v2487
      %v2511 = vadd.f32 %v2133, %v2490
      %v2512 = vadd.f32 %v2134, %v2492
      %v2513 = vadd.f32 %v2135, %v2495
      %v2514 = vadd.f32 %v2136, %v2497
      %v2515 = vld [vmem:[%s1942] sm:$0xe]
      %v2516 = vld [vmem:[%s1942 + $0xc] sm:$0xe]
      %v2517 = vld [vmem:[%s1942 + $0x18] sm:$0xe]
      %v2518 = vld [vmem:[%s1942 + $0x24] sm:$0xe]
      %v2519 = vld [vmem:[%s1942 + $0x30] sm:$0xe]
      %v2520 = vld [vmem:[%s1942 + $0x3c] sm:$0xe]
      %v2521 = vld [vmem:[%s1942 + $0x48] sm:$0xe]
      %v2522 = vld [vmem:[%s1942 + $0x54] sm:$0xe]
      %v2547 = vrot.slane %v2515, 5
      %v2548 = vrot.slane %v2547, 4
      %v2549 = vrot.slane %v2138, 5
      %v2550 = vsel %vm900, %v2548, %v2549
      %v2551 = vrot.slane %v2549, 4
      %v2552 = vrot.slane %v2139, 5
      %v2553 = vsel %vm900, %v2551, %v2552
      %v2554 = vrot.slane %v2516, 5
      %v2555 = vrot.slane %v2554, 4
      %v2556 = vrot.slane %v2141, 5
      %v2557 = vsel %vm900, %v2555, %v2556
      %v2558 = vrot.slane %v2556, 4
      %v2559 = vrot.slane %v2142, 5
      %v2560 = vsel %vm900, %v2558, %v2559
      %v2561 = vrot.slane %v2517, 5
      %v2562 = vrot.slane %v2561, 4
      %v2563 = vrot.slane %v2144, 5
      %v2564 = vsel %vm900, %v2562, %v2563
      %v2565 = vrot.slane %v2563, 4
      %v2566 = vrot.slane %v2145, 5
      %v2567 = vsel %vm900, %v2565, %v2566
      %v2568 = vrot.slane %v2518, 5
      %v2569 = vrot.slane %v2568, 4
      %v2570 = vrot.slane %v2147, 5
      %v2571 = vsel %vm900, %v2569, %v2570
      %v2572 = vrot.slane %v2570, 4
      %v2573 = vrot.slane %v2148, 5
      %v2574 = vsel %vm900, %v2572, %v2573
      %v2575 = vrot.slane %v2519, 5
      %v2576 = vrot.slane %v2575, 4
      %v2577 = vrot.slane %v2150, 5
      %v2578 = vsel %vm900, %v2576, %v2577
      %v2579 = vrot.slane %v2577, 4
      %v2580 = vrot.slane %v2151, 5
      %v2581 = vsel %vm900, %v2579, %v2580
      %v2582 = vrot.slane %v2520, 5
      %v2583 = vrot.slane %v2582, 4
      %v2584 = vrot.slane %v2153, 5
      %v2585 = vsel %vm900, %v2583, %v2584
      %v2586 = vrot.slane %v2584, 4
      %v2587 = vrot.slane %v2154, 5
      %v2588 = vsel %vm900, %v2586, %v2587
      %v2589 = vrot.slane %v2521, 5
      %v2590 = vrot.slane %v2589, 4
      %v2591 = vrot.slane %v2156, 5
      %v2592 = vsel %vm900, %v2590, %v2591
      %v2593 = vrot.slane %v2591, 4
      %v2594 = vrot.slane %v2157, 5
      %v2595 = vsel %vm900, %v2593, %v2594
      %v2596 = vrot.slane %v2522, 5
      %v2597 = vrot.slane %v2596, 4
      %v2598 = vrot.slane %v2159, 5
      %v2599 = vsel %vm900, %v2597, %v2598
      %v2600 = vrot.slane %v2598, 4
      %v2601 = vrot.slane %v2160, 5
      %v2602 = vsel %vm900, %v2600, %v2601
      %s2603 = scalar_lea.vmem %s1, 512
      %v2604 = vld [vmem:[%s2603] sm:$0xf]
      %v2605 = vld [vmem:[%s2603 + $0x4] sm:$0xf]
      %v2606 = vld [vmem:[%s2603 + $0x8] sm:$0xf]
      %v2607 = vld [vmem:[%s2603 + $0xc] sm:$0xf]
      %v2608 = vld [vmem:[%s2603 + $0x10] sm:$0xf]
      %v2609 = vld [vmem:[%s2603 + $0x14] sm:$0xf]
      %v2610 = vld [vmem:[%s2603 + $0x18] sm:$0xf]
      %v2611 = vld [vmem:[%s2603 + $0x1c] sm:$0xf]
      %v2612 = vld [vmem:[%s2603 + $0x20] sm:$0xf]
      %v2613 = vld [vmem:[%s2603 + $0x24] sm:$0xf]
      %v2614 = vld [vmem:[%s2603 + $0x28] sm:$0xf]
      %v2615 = vld [vmem:[%s2603 + $0x2c] sm:$0xf]
      %v2616 = vld [vmem:[%s2603 + $0x30] sm:$0xf]
      %v2617 = vld [vmem:[%s2603 + $0x34] sm:$0xf]
      %v2618 = vld [vmem:[%s2603 + $0x38] sm:$0xf]
      %v2619 = vld [vmem:[%s2603 + $0x3c] sm:$0xf]
      %v2620 = vunpack.c.l.b16 %v2550
      %v2621 = vunpack.c.l.b16 %v2553
      %v2622 = vunpack.c.l.b16 %v2557
      %v2623 = vunpack.c.l.b16 %v2560
      %v2624 = vunpack.c.l.b16 %v2564
      %v2625 = vunpack.c.l.b16 %v2567
      %v2626 = vunpack.c.l.b16 %v2571
      %v2627 = vunpack.c.l.b16 %v2574
      %v2628 = vunpack.c.l.b16 %v2578
      %v2629 = vunpack.c.l.b16 %v2581
      %v2630 = vunpack.c.l.b16 %v2585
      %v2631 = vunpack.c.l.b16 %v2588
      %v2632 = vunpack.c.l.b16 %v2592
      %v2633 = vunpack.c.l.b16 %v2595
      %v2634 = vunpack.c.l.b16 %v2599
      %v2635 = vunpack.c.l.b16 %v2602
      %v2636 = vpack.c.b16 %v2621, %v2620
      %v2637 = vpack.c.b16 %v2623, %v2622
      %v2638 = vpack.c.b16 %v2625, %v2624
      %v2639 = vpack.c.b16 %v2627, %v2626
      %v2640 = vpack.c.b16 %v2629, %v2628
      %v2641 = vpack.c.b16 %v2631, %v2630
      %v2642 = vpack.c.b16 %v2633, %v2632
      %v2643 = vpack.c.b16 %v2635, %v2634
      %v2668 = vunpack.c.l.b16 %v2604
      %v2669 = vunpack.c.l.b16 %v2605
      %v2670 = vunpack.c.l.b16 %v2606
      %v2671 = vunpack.c.l.b16 %v2607
      %v2672 = vunpack.c.l.b16 %v2608
      %v2673 = vunpack.c.l.b16 %v2609
      %v2674 = vunpack.c.l.b16 %v2610
      %v2675 = vunpack.c.l.b16 %v2611
      %v2676 = vunpack.c.l.b16 %v2612
      %v2677 = vunpack.c.l.b16 %v2613
      %v2678 = vunpack.c.l.b16 %v2614
      %v2679 = vunpack.c.l.b16 %v2615
      %v2680 = vunpack.c.l.b16 %v2616
      %v2681 = vunpack.c.l.b16 %v2617
      %v2682 = vunpack.c.l.b16 %v2618
      %v2683 = vunpack.c.l.b16 %v2619
      %v2684 = vpack.c.b16 %v2669, %v2668
      %v2685 = vpack.c.b16 %v2671, %v2670
      %v2686 = vpack.c.b16 %v2673, %v2672
      %v2687 = vpack.c.b16 %v2675, %v2674
      %v2688 = vpack.c.b16 %v2677, %v2676
      %v2689 = vpack.c.b16 %v2679, %v2678
      %v2690 = vpack.c.b16 %v2681, %v2680
      %v2691 = vpack.c.b16 %v2683, %v2682
      %2700 = vmatpush.bf16.msra.mxu0 %v2691
      %2701 = vmatpush.bf16.msra.mxu0 %v2690
      %2702 = vmatpush.bf16.msra.mxu0 %v2689
      %2703 = vmatpush.bf16.msra.mxu0 %v2688
      %2704 = vmatpush.bf16.msra.mxu0 %v2687
      %2705 = vmatpush.bf16.msra.mxu0 %v2686
      %2706 = vmatpush.bf16.msra.mxu0 %v2685
      %2707 = vmatpush.bf16.msra.mxu0 %v2684
      %2708 = vmatmul.bf16.gmra.mxu0 %v2636
      %v2709 = vpop.f32.mrf.mxu0
      %v2710 = vadd.f32 0.0, %v2709
      %v2711 = vpop.f32.mrf.mxu0
      %v2712 = vadd.f32 0.0, %v2711
      %2713 = vmatmul.bf16.gmra.mxu0 %v2637
      %v2714 = vpop.f32.mrf.mxu0
      %v2715 = vadd.f32 0.0, %v2714
      %v2716 = vpop.f32.mrf.mxu0
      %v2717 = vadd.f32 0.0, %v2716
      %2718 = vmatmul.bf16.gmra.mxu0 %v2638
      %v2719 = vpop.f32.mrf.mxu0
      %v2720 = vadd.f32 0.0, %v2719
      %v2721 = vpop.f32.mrf.mxu0
      %v2722 = vadd.f32 0.0, %v2721
      %2723 = vmatmul.bf16.gmra.mxu0 %v2639
      %v2724 = vpop.f32.mrf.mxu0
      %v2725 = vadd.f32 0.0, %v2724
      %v2726 = vpop.f32.mrf.mxu0
      %v2727 = vadd.f32 0.0, %v2726
      %2728 = vmatmul.bf16.gmra.mxu0 %v2640
      %v2729 = vpop.f32.mrf.mxu0
      %v2730 = vadd.f32 0.0, %v2729
      %v2731 = vpop.f32.mrf.mxu0
      %v2732 = vadd.f32 0.0, %v2731
      %2733 = vmatmul.bf16.gmra.mxu0 %v2641
      %v2734 = vpop.f32.mrf.mxu0
      %v2735 = vadd.f32 0.0, %v2734
      %v2736 = vpop.f32.mrf.mxu0
      %v2737 = vadd.f32 0.0, %v2736
      %2738 = vmatmul.bf16.gmra.mxu0 %v2642
      %v2739 = vpop.f32.mrf.mxu0
      %v2740 = vadd.f32 0.0, %v2739
      %v2741 = vpop.f32.mrf.mxu0
      %v2742 = vadd.f32 0.0, %v2741
      %2743 = vmatmul.bf16.gmra.mxu0 %v2643
      %v2744 = vpop.f32.mrf.mxu0
      %v2745 = vadd.f32 0.0, %v2744
      %v2746 = vpop.f32.mrf.mxu0
      %v2747 = vadd.f32 0.0, %v2746
      %2748 = vdwg.mxu0
      %v2749 = vadd.f32 %v2499, %v2710
      %v2750 = vadd.f32 %v2500, %v2712
      %v2751 = vadd.f32 %v2501, %v2715
      %v2752 = vadd.f32 %v2502, %v2717
      %v2753 = vadd.f32 %v2503, %v2720
      %v2754 = vadd.f32 %v2504, %v2722
      %v2755 = vadd.f32 %v2505, %v2725
      %v2756 = vadd.f32 %v2506, %v2727
      %v2757 = vadd.f32 %v2507, %v2730
      %v2758 = vadd.f32 %v2508, %v2732
      %v2759 = vadd.f32 %v2509, %v2735
      %v2760 = vadd.f32 %v2510, %v2737
      %v2761 = vadd.f32 %v2511, %v2740
      %v2762 = vadd.f32 %v2512, %v2742
      %v2763 = vadd.f32 %v2513, %v2745
      %v2764 = vadd.f32 %v2514, %v2747
      %v2766 = vperm.slane %v346, 0
      %v2768 = vadd.f32 %v2749, %v2766
      %v2769 = vadd.f32 %v2750, %v2766
      %v2770 = vadd.f32 %v2751, %v2766
      %v2771 = vadd.f32 %v2752, %v2766
      %v2772 = vadd.f32 %v2753, %v2766
      %v2773 = vadd.f32 %v2754, %v2766
      %v2774 = vadd.f32 %v2755, %v2766
      %v2775 = vadd.f32 %v2756, %v2766
      %v2776 = vadd.f32 %v2757, %v2766
      %v2777 = vadd.f32 %v2758, %v2766
      %v2778 = vadd.f32 %v2759, %v2766
      %v2779 = vadd.f32 %v2760, %v2766
      %v2780 = vadd.f32 %v2761, %v2766
      %v2781 = vadd.f32 %v2762, %v2766
      %v2782 = vadd.f32 %v2763, %v2766
      %v2783 = vadd.f32 %v2764, %v2766
      %v2784 = vmax.f32 %v2768, 0.0
      %v2785 = vmax.f32 %v2769, 0.0
      %v2786 = vmax.f32 %v2770, 0.0
      %v2787 = vmax.f32 %v2771, 0.0
      %v2788 = vmax.f32 %v2772, 0.0
      %v2789 = vmax.f32 %v2773, 0.0
      %v2790 = vmax.f32 %v2774, 0.0
      %v2791 = vmax.f32 %v2775, 0.0
      %v2792 = vmax.f32 %v2776, 0.0
      %v2793 = vmax.f32 %v2777, 0.0
      %v2794 = vmax.f32 %v2778, 0.0
      %v2795 = vmax.f32 %v2779, 0.0
      %v2796 = vmax.f32 %v2780, 0.0
      %v2797 = vmax.f32 %v2781, 0.0
      %v2798 = vmax.f32 %v2782, 0.0
      %v2799 = vmax.f32 %v2783, 0.0
      %v2800 = vpack.c.bf16 %v2784, %v2784
      %v2801 = vpack.c.bf16 %v2785, %v2785
      %v2802 = vpack.c.bf16 %v2786, %v2786
      %v2803 = vpack.c.bf16 %v2787, %v2787
      %v2804 = vpack.c.bf16 %v2788, %v2788
      %v2805 = vpack.c.bf16 %v2789, %v2789
      %v2806 = vpack.c.bf16 %v2790, %v2790
      %v2807 = vpack.c.bf16 %v2791, %v2791
      %v2808 = vpack.c.bf16 %v2792, %v2792
      %v2809 = vpack.c.bf16 %v2793, %v2793
      %v2810 = vpack.c.bf16 %v2794, %v2794
      %v2811 = vpack.c.bf16 %v2795, %v2795
      %v2812 = vpack.c.bf16 %v2796, %v2796
      %v2813 = vpack.c.bf16 %v2797, %v2797
      %v2814 = vpack.c.bf16 %v2798, %v2798
      %v2815 = vpack.c.bf16 %v2799, %v2799
      %vm2816 = vsmask.f32 4368
      %vm2817 = vmor %vm234, %vm2816
      %v2819 = vshrl.u32 %v2800, 16
      %v2821 = vrot.slane %v2819, 7
      %v2822 = vshll.u32 %v2800, 16
      %v2824 = vor.u32 %v2821, %v2822
      %v2825 = vrot.slane %v2821, 4
      %v2827 = vshrl.u32 %v2801, 16
      %v2829 = vrot.slane %v2827, 7
      %v2830 = vshll.u32 %v2801, 16
      %v2832 = vor.u32 %v2829, %v2830
      %v2833 = vsel %vm2817, %v2825, %v2832
      %v2834 = vrot.slane %v2829, 4
      %v2836 = vshrl.u32 %v2802, 16
      %v2838 = vrot.slane %v2836, 7
      %v2839 = vshll.u32 %v2802, 16
      %v2841 = vor.u32 %v2838, %v2839
      %v2842 = vrot.slane %v2838, 4
      %v2844 = vshrl.u32 %v2803, 16
      %v2846 = vrot.slane %v2844, 7
      %v2847 = vshll.u32 %v2803, 16
      %v2849 = vor.u32 %v2846, %v2847
      %v2850 = vsel %vm2817, %v2842, %v2849
      %v2851 = vrot.slane %v2846, 4
      %v2853 = vshrl.u32 %v2804, 16
      %v2855 = vrot.slane %v2853, 7
      %v2856 = vshll.u32 %v2804, 16
      %v2858 = vor.u32 %v2855, %v2856
      %v2859 = vrot.slane %v2855, 4
      %v2861 = vshrl.u32 %v2805, 16
      %v2863 = vrot.slane %v2861, 7
      %v2864 = vshll.u32 %v2805, 16
      %v2866 = vor.u32 %v2863, %v2864
      %v2867 = vsel %vm2817, %v2859, %v2866
      %v2868 = vrot.slane %v2863, 4
      %v2870 = vshrl.u32 %v2806, 16
      %v2872 = vrot.slane %v2870, 7
      %v2873 = vshll.u32 %v2806, 16
      %v2875 = vor.u32 %v2872, %v2873
      %v2876 = vrot.slane %v2872, 4
      %v2878 = vshrl.u32 %v2807, 16
      %v2880 = vrot.slane %v2878, 7
      %v2881 = vshll.u32 %v2807, 16
      %v2883 = vor.u32 %v2880, %v2881
      %v2884 = vsel %vm2817, %v2876, %v2883
      %v2885 = vrot.slane %v2880, 4
      %v2887 = vshrl.u32 %v2808, 16
      %v2889 = vrot.slane %v2887, 7
      %v2890 = vshll.u32 %v2808, 16
      %v2892 = vor.u32 %v2889, %v2890
      %v2893 = vrot.slane %v2889, 4
      %v2895 = vshrl.u32 %v2809, 16
      %v2897 = vrot.slane %v2895, 7
      %v2898 = vshll.u32 %v2809, 16
      %v2900 = vor.u32 %v2897, %v2898
      %v2901 = vsel %vm2817, %v2893, %v2900
      %v2902 = vrot.slane %v2897, 4
      %v2904 = vshrl.u32 %v2810, 16
      %v2906 = vrot.slane %v2904, 7
      %v2907 = vshll.u32 %v2810, 16
      %v2909 = vor.u32 %v2906, %v2907
      %v2910 = vrot.slane %v2906, 4
      %v2912 = vshrl.u32 %v2811, 16
      %v2914 = vrot.slane %v2912, 7
      %v2915 = vshll.u32 %v2811, 16
      %v2917 = vor.u32 %v2914, %v2915
      %v2918 = vsel %vm2817, %v2910, %v2917
      %v2919 = vrot.slane %v2914, 4
      %v2921 = vshrl.u32 %v2812, 16
      %v2923 = vrot.slane %v2921, 7
      %v2924 = vshll.u32 %v2812, 16
      %v2926 = vor.u32 %v2923, %v2924
      %v2927 = vrot.slane %v2923, 4
      %v2929 = vshrl.u32 %v2813, 16
      %v2931 = vrot.slane %v2929, 7
      %v2932 = vshll.u32 %v2813, 16
      %v2934 = vor.u32 %v2931, %v2932
      %v2935 = vsel %vm2817, %v2927, %v2934
      %v2936 = vrot.slane %v2931, 4
      %v2938 = vshrl.u32 %v2814, 16
      %v2940 = vrot.slane %v2938, 7
      %v2941 = vshll.u32 %v2814, 16
      %v2943 = vor.u32 %v2940, %v2941
      %v2944 = vrot.slane %v2940, 4
      %v2946 = vshrl.u32 %v2815, 16
      %v2948 = vrot.slane %v2946, 7
      %v2949 = vshll.u32 %v2815, 16
      %v2951 = vor.u32 %v2948, %v2949
      %v2952 = vsel %vm2817, %v2944, %v2951
      %v2953 = vrot.slane %v2948, 4
      %s2978 = scalar_lea.vmem [#allocation2], 12
      %vm2979 = vcmask 1043456
      %vm2980 = vmand %vm2979, %vm290
      %v2981 = vld [vmem:[%s2978] sm:$0xf]
      %v2982 = vsel %vm2980, %v2824, %v2981
      %2983 = vst [vmem:[%s2978] sm:$0xf] %v2982
      %2984 = vst [vmem:[%s2978 + $0x4] sm:$0xf] %v2833
      %v2985 = vld [vmem:[%s2978 + $0x8] sm:$0x1]
      %v2986 = vsel %vm235, %v2834, %v2985
      %2987 = vst [vmem:[%s2978 + $0x8] sm:$0x1] %v2986
      %v2988 = vld [vmem:[%s2978 + $0xc] sm:$0xf]
      %v2989 = vsel %vm2980, %v2841, %v2988
      %2990 = vst [vmem:[%s2978 + $0xc] sm:$0xf] %v2989
      %2991 = vst [vmem:[%s2978 + $0x10] sm:$0xf] %v2850
      %v2992 = vld [vmem:[%s2978 + $0x14] sm:$0x1]
      %v2993 = vsel %vm235, %v2851, %v2992
      %2994 = vst [vmem:[%s2978 + $0x14] sm:$0x1] %v2993
      %v2995 = vld [vmem:[%s2978 + $0x18] sm:$0xf]
      %v2996 = vsel %vm2980, %v2858, %v2995
      %2997 = vst [vmem:[%s2978 + $0x18] sm:$0xf] %v2996
      %2998 = vst [vmem:[%s2978 + $0x1c] sm:$0xf] %v2867
      %v2999 = vld [vmem:[%s2978 + $0x20] sm:$0x1]
      %v3000 = vsel %vm235, %v2868, %v2999
      %3001 = vst [vmem:[%s2978 + $0x20] sm:$0x1] %v3000
      %v3002 = vld [vmem:[%s2978 + $0x24] sm:$0xf]
      %v3003 = vsel %vm2980, %v2875, %v3002
      %3004 = vst [vmem:[%s2978 + $0x24] sm:$0xf] %v3003
      %3005 = vst [vmem:[%s2978 + $0x28] sm:$0xf] %v2884
      %v3006 = vld [vmem:[%s2978 + $0x2c] sm:$0x1]
      %v3007 = vsel %vm235, %v2885, %v3006
      %3008 = vst [vmem:[%s2978 + $0x2c] sm:$0x1] %v3007
      %v3009 = vld [vmem:[%s2978 + $0x30] sm:$0xf]
      %v3010 = vsel %vm2980, %v2892, %v3009
      %3011 = vst [vmem:[%s2978 + $0x30] sm:$0xf] %v3010
      %3012 = vst [vmem:[%s2978 + $0x34] sm:$0xf] %v2901
      %v3013 = vld [vmem:[%s2978 + $0x38] sm:$0x1]
      %v3014 = vsel %vm235, %v2902, %v3013
      %3015 = vst [vmem:[%s2978 + $0x38] sm:$0x1] %v3014
      %v3016 = vld [vmem:[%s2978 + $0x3c] sm:$0xf]
      %v3017 = vsel %vm2980, %v2909, %v3016
      %3018 = vst [vmem:[%s2978 + $0x3c] sm:$0xf] %v3017
      %3019 = vst [vmem:[%s2978 + $0x40] sm:$0xf] %v2918
      %v3020 = vld [vmem:[%s2978 + $0x44] sm:$0x1]
      %v3021 = vsel %vm235, %v2919, %v3020
      %3022 = vst [vmem:[%s2978 + $0x44] sm:$0x1] %v3021
      %v3023 = vld [vmem:[%s2978 + $0x48] sm:$0xf]
      %v3024 = vsel %vm2980, %v2926, %v3023
      %3025 = vst [vmem:[%s2978 + $0x48] sm:$0xf] %v3024
      %3026 = vst [vmem:[%s2978 + $0x4c] sm:$0xf] %v2935
      %v3027 = vld [vmem:[%s2978 + $0x50] sm:$0x1]
      %v3028 = vsel %vm235, %v2936, %v3027
      %3029 = vst [vmem:[%s2978 + $0x50] sm:$0x1] %v3028
      %v3030 = vld [vmem:[%s2978 + $0x54] sm:$0xf]
      %v3031 = vsel %vm2980, %v2943, %v3030
      %3032 = vst [vmem:[%s2978 + $0x54] sm:$0xf] %v3031
      %3033 = vst [vmem:[%s2978 + $0x58] sm:$0xf] %v2952
      %v3034 = vld [vmem:[%s2978 + $0x5c] sm:$0x1]
      %v3035 = vsel %vm235, %v2953, %v3034
      %3036 = vst [vmem:[%s2978 + $0x5c] sm:$0x1] %v3035
      %s3037 = scalar_lea.vmem %s219, 96
      %v3038 = vld [vmem:[%s3037] sm:$0xf]
      %v3039 = vld [vmem:[%s3037 + $0x4] sm:$0xf]
      %v3040 = vld [vmem:[%s3037 + $0xc] sm:$0xf]
      %v3041 = vld [vmem:[%s3037 + $0x10] sm:$0xf]
      %v3042 = vld [vmem:[%s3037 + $0x18] sm:$0xf]
      %v3043 = vld [vmem:[%s3037 + $0x1c] sm:$0xf]
      %v3044 = vld [vmem:[%s3037 + $0x24] sm:$0xf]
      %v3045 = vld [vmem:[%s3037 + $0x28] sm:$0xf]
      %v3046 = vld [vmem:[%s3037 + $0x30] sm:$0xf]
      %v3047 = vld [vmem:[%s3037 + $0x34] sm:$0xf]
      %v3048 = vld [vmem:[%s3037 + $0x3c] sm:$0xf]
      %v3049 = vld [vmem:[%s3037 + $0x40] sm:$0xf]
      %v3050 = vld [vmem:[%s3037 + $0x48] sm:$0xf]
      %v3051 = vld [vmem:[%s3037 + $0x4c] sm:$0xf]
      %v3052 = vld [vmem:[%s3037 + $0x54] sm:$0xf]
      %v3053 = vld [vmem:[%s3037 + $0x58] sm:$0xf]
      %v3054 = vld [vmem:[%s1] sm:$0xf]
      %v3055 = vld [vmem:[%s1 + $0x4] sm:$0xf]
      %v3056 = vld [vmem:[%s1 + $0x8] sm:$0xf]
      %v3057 = vld [vmem:[%s1 + $0xc] sm:$0xf]
      %v3058 = vld [vmem:[%s1 + $0x10] sm:$0xf]
      %v3059 = vld [vmem:[%s1 + $0x14] sm:$0xf]
      %v3060 = vld [vmem:[%s1 + $0x18] sm:$0xf]
      %v3061 = vld [vmem:[%s1 + $0x1c] sm:$0xf]
      %v3062 = vld [vmem:[%s1 + $0x20] sm:$0xf]
      %v3063 = vld [vmem:[%s1 + $0x24] sm:$0xf]
      %v3064 = vld [vmem:[%s1 + $0x28] sm:$0xf]
      %v3065 = vld [vmem:[%s1 + $0x2c] sm:$0xf]
      %v3066 = vld [vmem:[%s1 + $0x30] sm:$0xf]
      %v3067 = vld [vmem:[%s1 + $0x34] sm:$0xf]
      %v3068 = vld [vmem:[%s1 + $0x38] sm:$0xf]
      %v3069 = vld [vmem:[%s1 + $0x3c] sm:$0xf]
      %v3070 = vld [vmem:[%s3037 + $0x8] sm:$0x1]
      %v3071 = vld [vmem:[%s3037 + $0x14] sm:$0x1]
      %v3072 = vld [vmem:[%s3037 + $0x20] sm:$0x1]
      %v3073 = vld [vmem:[%s3037 + $0x2c] sm:$0x1]
      %v3074 = vld [vmem:[%s3037 + $0x38] sm:$0x1]
      %v3075 = vld [vmem:[%s3037 + $0x44] sm:$0x1]
      %v3076 = vld [vmem:[%s3037 + $0x50] sm:$0x1]
      %v3077 = vld [vmem:[%s3037 + $0x5c] sm:$0x1]
      %v3079 = vshrl.u32 %v3038, 16
      %v3081 = vrot.slane %v3079, 4
      %v3082 = vshll.u32 %v3038, 16
      %v3084 = vrot.slane %v3082, 5
      %v3085 = vor.u32 %v3081, %v3084
      %v3086 = vrot.slane %v3085, 4
      %v3088 = vshll.u32 %v3039, 16
      %v3090 = vrot.slane %v3088, 5
      %v3091 = vsel %vm390, %v3086, %v3090
      %v3092 = vshrl.u32 %v3039, 16
      %v3094 = vrot.slane %v3092, 4
      %v3095 = vor.u32 %v3094, %v3090
      %v3096 = vrot.slane %v3095, 4
      %v3098 = vshll.u32 %v3070, 16
      %v3100 = vrot.slane %v3098, 5
      %v3101 = vsel %vm390, %v3096, %v3100
      %v3103 = vshrl.u32 %v3040, 16
      %v3105 = vrot.slane %v3103, 4
      %v3106 = vshll.u32 %v3040, 16
      %v3108 = vrot.slane %v3106, 5
      %v3109 = vor.u32 %v3105, %v3108
      %v3110 = vrot.slane %v3109, 4
      %v3112 = vshll.u32 %v3041, 16
      %v3114 = vrot.slane %v3112, 5
      %v3115 = vsel %vm390, %v3110, %v3114
      %v3116 = vshrl.u32 %v3041, 16
      %v3118 = vrot.slane %v3116, 4
      %v3119 = vor.u32 %v3118, %v3114
      %v3120 = vrot.slane %v3119, 4
      %v3122 = vshll.u32 %v3071, 16
      %v3124 = vrot.slane %v3122, 5
      %v3125 = vsel %vm390, %v3120, %v3124
      %v3127 = vshrl.u32 %v3042, 16
      %v3129 = vrot.slane %v3127, 4
      %v3130 = vshll.u32 %v3042, 16
      %v3132 = vrot.slane %v3130, 5
      %v3133 = vor.u32 %v3129, %v3132
      %v3134 = vrot.slane %v3133, 4
      %v3136 = vshll.u32 %v3043, 16
      %v3138 = vrot.slane %v3136, 5
      %v3139 = vsel %vm390, %v3134, %v3138
      %v3140 = vshrl.u32 %v3043, 16
      %v3142 = vrot.slane %v3140, 4
      %v3143 = vor.u32 %v3142, %v3138
      %v3144 = vrot.slane %v3143, 4
      %v3146 = vshll.u32 %v3072, 16
      %v3148 = vrot.slane %v3146, 5
      %v3149 = vsel %vm390, %v3144, %v3148
      %v3151 = vshrl.u32 %v3044, 16
      %v3153 = vrot.slane %v3151, 4
      %v3154 = vshll.u32 %v3044, 16
      %v3156 = vrot.slane %v3154, 5
      %v3157 = vor.u32 %v3153, %v3156
      %v3158 = vrot.slane %v3157, 4
      %v3160 = vshll.u32 %v3045, 16
      %v3162 = vrot.slane %v3160, 5
      %v3163 = vsel %vm390, %v3158, %v3162
      %v3164 = vshrl.u32 %v3045, 16
      %v3166 = vrot.slane %v3164, 4
      %v3167 = vor.u32 %v3166, %v3162
      %v3168 = vrot.slane %v3167, 4
      %v3170 = vshll.u32 %v3073, 16
      %v3172 = vrot.slane %v3170, 5
      %v3173 = vsel %vm390, %v3168, %v3172
      %v3175 = vshrl.u32 %v3046, 16
      %v3177 = vrot.slane %v3175, 4
      %v3178 = vshll.u32 %v3046, 16
      %v3180 = vrot.slane %v3178, 5
      %v3181 = vor.u32 %v3177, %v3180
      %v3182 = vrot.slane %v3181, 4
      %v3184 = vshll.u32 %v3047, 16
      %v3186 = vrot.slane %v3184, 5
      %v3187 = vsel %vm390, %v3182, %v3186
      %v3188 = vshrl.u32 %v3047, 16
      %v3190 = vrot.slane %v3188, 4
      %v3191 = vor.u32 %v3190, %v3186
      %v3192 = vrot.slane %v3191, 4
      %v3194 = vshll.u32 %v3074, 16
      %v3196 = vrot.slane %v3194, 5
      %v3197 = vsel %vm390, %v3192, %v3196
      %v3199 = vshrl.u32 %v3048, 16
      %v3201 = vrot.slane %v3199, 4
      %v3202 = vshll.u32 %v3048, 16
      %v3204 = vrot.slane %v3202, 5
      %v3205 = vor.u32 %v3201, %v3204
      %v3206 = vrot.slane %v3205, 4
      %v3208 = vshll.u32 %v3049, 16
      %v3210 = vrot.slane %v3208, 5
      %v3211 = vsel %vm390, %v3206, %v3210
      %v3212 = vshrl.u32 %v3049, 16
      %v3214 = vrot.slane %v3212, 4
      %v3215 = vor.u32 %v3214, %v3210
      %v3216 = vrot.slane %v3215, 4
      %v3218 = vshll.u32 %v3075, 16
      %v3220 = vrot.slane %v3218, 5
      %v3221 = vsel %vm390, %v3216, %v3220
      %v3223 = vshrl.u32 %v3050, 16
      %v3225 = vrot.slane %v3223, 4
      %v3226 = vshll.u32 %v3050, 16
      %v3228 = vrot.slane %v3226, 5
      %v3229 = vor.u32 %v3225, %v3228
      %v3230 = vrot.slane %v3229, 4
      %v3232 = vshll.u32 %v3051, 16
      %v3234 = vrot.slane %v3232, 5
      %v3235 = vsel %vm390, %v3230, %v3234
      %v3236 = vshrl.u32 %v3051, 16
      %v3238 = vrot.slane %v3236, 4
      %v3239 = vor.u32 %v3238, %v3234
      %v3240 = vrot.slane %v3239, 4
      %v3242 = vshll.u32 %v3076, 16
      %v3244 = vrot.slane %v3242, 5
      %v3245 = vsel %vm390, %v3240, %v3244
      %v3247 = vshrl.u32 %v3052, 16
      %v3249 = vrot.slane %v3247, 4
      %v3250 = vshll.u32 %v3052, 16
      %v3252 = vrot.slane %v3250, 5
      %v3253 = vor.u32 %v3249, %v3252
      %v3254 = vrot.slane %v3253, 4
      %v3256 = vshll.u32 %v3053, 16
      %v3258 = vrot.slane %v3256, 5
      %v3259 = vsel %vm390, %v3254, %v3258
      %v3260 = vshrl.u32 %v3053, 16
      %v3262 = vrot.slane %v3260, 4
      %v3263 = vor.u32 %v3262, %v3258
      %v3264 = vrot.slane %v3263, 4
      %v3266 = vshll.u32 %v3077, 16
      %v3268 = vrot.slane %v3266, 5
      %v3269 = vsel %vm390, %v3264, %v3268
      %v3270 = vld [vmem:[%s583] sm:$0xf]
      %v3271 = vld [vmem:[%s583 + $0x4] sm:$0xf]
      %v3272 = vld [vmem:[%s583 + $0x8] sm:$0xf]
      %v3273 = vld [vmem:[%s583 + $0xc] sm:$0xf]
      %v3274 = vld [vmem:[%s583 + $0x10] sm:$0xf]
      %v3275 = vld [vmem:[%s583 + $0x14] sm:$0xf]
      %v3276 = vld [vmem:[%s583 + $0x18] sm:$0xf]
      %v3277 = vld [vmem:[%s583 + $0x1c] sm:$0xf]
      %v3278 = vld [vmem:[%s583 + $0x20] sm:$0xf]
      %v3279 = vld [vmem:[%s583 + $0x24] sm:$0xf]
      %v3280 = vld [vmem:[%s583 + $0x28] sm:$0xf]
      %v3281 = vld [vmem:[%s583 + $0x2c] sm:$0xf]
      %v3282 = vld [vmem:[%s583 + $0x30] sm:$0xf]
      %v3283 = vld [vmem:[%s583 + $0x34] sm:$0xf]
      %v3284 = vld [vmem:[%s583 + $0x38] sm:$0xf]
      %v3285 = vld [vmem:[%s583 + $0x3c] sm:$0xf]
      %v3286 = vunpack.c.l.b16 %v3091
      %v3287 = vunpack.c.l.b16 %v3101
      %v3288 = vunpack.c.l.b16 %v3115
      %v3289 = vunpack.c.l.b16 %v3125
      %v3290 = vunpack.c.l.b16 %v3139
      %v3291 = vunpack.c.l.b16 %v3149
      %v3292 = vunpack.c.l.b16 %v3163
      %v3293 = vunpack.c.l.b16 %v3173
      %v3294 = vunpack.c.l.b16 %v3187
      %v3295 = vunpack.c.l.b16 %v3197
      %v3296 = vunpack.c.l.b16 %v3211
      %v3297 = vunpack.c.l.b16 %v3221
      %v3298 = vunpack.c.l.b16 %v3235
      %v3299 = vunpack.c.l.b16 %v3245
      %v3300 = vunpack.c.l.b16 %v3259
      %v3301 = vunpack.c.l.b16 %v3269
      %v3302 = vpack.c.b16 %v3287, %v3286
      %v3303 = vpack.c.b16 %v3289, %v3288
      %v3304 = vpack.c.b16 %v3291, %v3290
      %v3305 = vpack.c.b16 %v3293, %v3292
      %v3306 = vpack.c.b16 %v3295, %v3294
      %v3307 = vpack.c.b16 %v3297, %v3296
      %v3308 = vpack.c.b16 %v3299, %v3298
      %v3309 = vpack.c.b16 %v3301, %v3300
      %v3334 = vunpack.c.l.b16 %v3270
      %v3335 = vunpack.c.l.b16 %v3271
      %v3336 = vunpack.c.l.b16 %v3272
      %v3337 = vunpack.c.l.b16 %v3273
      %v3338 = vunpack.c.l.b16 %v3274
      %v3339 = vunpack.c.l.b16 %v3275
      %v3340 = vunpack.c.l.b16 %v3276
      %v3341 = vunpack.c.l.b16 %v3277
      %v3342 = vunpack.c.l.b16 %v3278
      %v3343 = vunpack.c.l.b16 %v3279
      %v3344 = vunpack.c.l.b16 %v3280
      %v3345 = vunpack.c.l.b16 %v3281
      %v3346 = vunpack.c.l.b16 %v3282
      %v3347 = vunpack.c.l.b16 %v3283
      %v3348 = vunpack.c.l.b16 %v3284
      %v3349 = vunpack.c.l.b16 %v3285
      %v3350 = vpack.c.b16 %v3335, %v3334
      %v3351 = vpack.c.b16 %v3337, %v3336
      %v3352 = vpack.c.b16 %v3339, %v3338
      %v3353 = vpack.c.b16 %v3341, %v3340
      %v3354 = vpack.c.b16 %v3343, %v3342
      %v3355 = vpack.c.b16 %v3345, %v3344
      %v3356 = vpack.c.b16 %v3347, %v3346
      %v3357 = vpack.c.b16 %v3349, %v3348
      %3366 = vmatpush.bf16.msra.mxu0 %v3357
      %3367 = vmatpush.bf16.msra.mxu0 %v3356
      %3368 = vmatpush.bf16.msra.mxu0 %v3355
      %3369 = vmatpush.bf16.msra.mxu0 %v3354
      %3370 = vmatpush.bf16.msra.mxu0 %v3353
      %3371 = vmatpush.bf16.msra.mxu0 %v3352
      %3372 = vmatpush.bf16.msra.mxu0 %v3351
      %3373 = vmatpush.bf16.msra.mxu0 %v3350
      %3374 = vmatmul.bf16.gmra.mxu0 %v3302
      %v3375 = vpop.f32.mrf.mxu0
      %v3376 = vadd.f32 0.0, %v3375
      %v3377 = vpop.f32.mrf.mxu0
      %v3378 = vadd.f32 0.0, %v3377
      %3379 = vmatmul.bf16.gmra.mxu0 %v3303
      %v3380 = vpop.f32.mrf.mxu0
      %v3381 = vadd.f32 0.0, %v3380
      %v3382 = vpop.f32.mrf.mxu0
      %v3383 = vadd.f32 0.0, %v3382
      %3384 = vmatmul.bf16.gmra.mxu0 %v3304
      %v3385 = vpop.f32.mrf.mxu0
      %v3386 = vadd.f32 0.0, %v3385
      %v3387 = vpop.f32.mrf.mxu0
      %v3388 = vadd.f32 0.0, %v3387
      %3389 = vmatmul.bf16.gmra.mxu0 %v3305
      %v3390 = vpop.f32.mrf.mxu0
      %v3391 = vadd.f32 0.0, %v3390
      %v3392 = vpop.f32.mrf.mxu0
      %v3393 = vadd.f32 0.0, %v3392
      %3394 = vmatmul.bf16.gmra.mxu0 %v3306
      %v3395 = vpop.f32.mrf.mxu0
      %v3396 = vadd.f32 0.0, %v3395
      %v3397 = vpop.f32.mrf.mxu0
      %v3398 = vadd.f32 0.0, %v3397
      %3399 = vmatmul.bf16.gmra.mxu0 %v3307
      %v3400 = vpop.f32.mrf.mxu0
      %v3401 = vadd.f32 0.0, %v3400
      %v3402 = vpop.f32.mrf.mxu0
      %v3403 = vadd.f32 0.0, %v3402
      %3404 = vmatmul.bf16.gmra.mxu0 %v3308
      %v3405 = vpop.f32.mrf.mxu0
      %v3406 = vadd.f32 0.0, %v3405
      %v3407 = vpop.f32.mrf.mxu0
      %v3408 = vadd.f32 0.0, %v3407
      %3409 = vmatmul.bf16.gmra.mxu0 %v3309
      %v3410 = vpop.f32.mrf.mxu0
      %v3411 = vadd.f32 0.0, %v3410
      %v3412 = vpop.f32.mrf.mxu0
      %v3413 = vadd.f32 0.0, %v3412
      %3414 = vdwg.mxu0
      %v3431 = vunpack.c.l.b16 %v3038
      %v3432 = vunpack.c.l.b16 %v3039
      %v3433 = vunpack.c.l.b16 %v3040
      %v3434 = vunpack.c.l.b16 %v3041
      %v3435 = vunpack.c.l.b16 %v3042
      %v3436 = vunpack.c.l.b16 %v3043
      %v3437 = vunpack.c.l.b16 %v3044
      %v3438 = vunpack.c.l.b16 %v3045
      %v3439 = vunpack.c.l.b16 %v3046
      %v3440 = vunpack.c.l.b16 %v3047
      %v3441 = vunpack.c.l.b16 %v3048
      %v3442 = vunpack.c.l.b16 %v3049
      %v3443 = vunpack.c.l.b16 %v3050
      %v3444 = vunpack.c.l.b16 %v3051
      %v3445 = vunpack.c.l.b16 %v3052
      %v3446 = vunpack.c.l.b16 %v3053
      %v3447 = vpack.c.b16 %v3432, %v3431
      %v3448 = vpack.c.b16 %v3434, %v3433
      %v3449 = vpack.c.b16 %v3436, %v3435
      %v3450 = vpack.c.b16 %v3438, %v3437
      %v3451 = vpack.c.b16 %v3440, %v3439
      %v3452 = vpack.c.b16 %v3442, %v3441
      %v3453 = vpack.c.b16 %v3444, %v3443
      %v3454 = vpack.c.b16 %v3446, %v3445
      %v3479 = vunpack.c.l.b16 %v3054
      %v3480 = vunpack.c.l.b16 %v3055
      %v3481 = vunpack.c.l.b16 %v3056
      %v3482 = vunpack.c.l.b16 %v3057
      %v3483 = vunpack.c.l.b16 %v3058
      %v3484 = vunpack.c.l.b16 %v3059
      %v3485 = vunpack.c.l.b16 %v3060
      %v3486 = vunpack.c.l.b16 %v3061
      %v3487 = vunpack.c.l.b16 %v3062
      %v3488 = vunpack.c.l.b16 %v3063
      %v3489 = vunpack.c.l.b16 %v3064
      %v3490 = vunpack.c.l.b16 %v3065
      %v3491 = vunpack.c.l.b16 %v3066
      %v3492 = vunpack.c.l.b16 %v3067
      %v3493 = vunpack.c.l.b16 %v3068
      %v3494 = vunpack.c.l.b16 %v3069
      %v3495 = vpack.c.b16 %v3480, %v3479
      %v3496 = vpack.c.b16 %v3482, %v3481
      %v3497 = vpack.c.b16 %v3484, %v3483
      %v3498 = vpack.c.b16 %v3486, %v3485
      %v3499 = vpack.c.b16 %v3488, %v3487
      %v3500 = vpack.c.b16 %v3490, %v3489
      %v3501 = vpack.c.b16 %v3492, %v3491
      %v3502 = vpack.c.b16 %v3494, %v3493
      %3511 = vmatpush.bf16.msra.mxu0 %v3502
      %3512 = vmatpush.bf16.msra.mxu0 %v3501
      %3513 = vmatpush.bf16.msra.mxu0 %v3500
      %3514 = vmatpush.bf16.msra.mxu0 %v3499
      %3515 = vmatpush.bf16.msra.mxu0 %v3498
      %3516 = vmatpush.bf16.msra.mxu0 %v3497
      %3517 = vmatpush.bf16.msra.mxu0 %v3496
      %3518 = vmatpush.bf16.msra.mxu0 %v3495
      %3519 = vmatmul.bf16.gmra.mxu0 %v3447
      %v3520 = vpop.f32.mrf.mxu0
      %v3521 = vadd.f32 %v3376, %v3520
      %v3522 = vpop.f32.mrf.mxu0
      %v3523 = vadd.f32 %v3378, %v3522
      %3524 = vmatmul.bf16.gmra.mxu0 %v3448
      %v3525 = vpop.f32.mrf.mxu0
      %v3526 = vadd.f32 %v3381, %v3525
      %v3527 = vpop.f32.mrf.mxu0
      %v3528 = vadd.f32 %v3383, %v3527
      %3529 = vmatmul.bf16.gmra.mxu0 %v3449
      %v3530 = vpop.f32.mrf.mxu0
      %v3531 = vadd.f32 %v3386, %v3530
      %v3532 = vpop.f32.mrf.mxu0
      %v3533 = vadd.f32 %v3388, %v3532
      %3534 = vmatmul.bf16.gmra.mxu0 %v3450
      %v3535 = vpop.f32.mrf.mxu0
      %v3536 = vadd.f32 %v3391, %v3535
      %v3537 = vpop.f32.mrf.mxu0
      %v3538 = vadd.f32 %v3393, %v3537
      %3539 = vmatmul.bf16.gmra.mxu0 %v3451
      %v3540 = vpop.f32.mrf.mxu0
      %v3541 = vadd.f32 %v3396, %v3540
      %v3542 = vpop.f32.mrf.mxu0
      %v3543 = vadd.f32 %v3398, %v3542
      %3544 = vmatmul.bf16.gmra.mxu0 %v3452
      %v3545 = vpop.f32.mrf.mxu0
      %v3546 = vadd.f32 %v3401, %v3545
      %v3547 = vpop.f32.mrf.mxu0
      %v3548 = vadd.f32 %v3403, %v3547
      %3549 = vmatmul.bf16.gmra.mxu0 %v3453
      %v3550 = vpop.f32.mrf.mxu0
      %v3551 = vadd.f32 %v3406, %v3550
      %v3552 = vpop.f32.mrf.mxu0
      %v3553 = vadd.f32 %v3408, %v3552
      %3554 = vmatmul.bf16.gmra.mxu0 %v3454
      %v3555 = vpop.f32.mrf.mxu0
      %v3556 = vadd.f32 %v3411, %v3555
      %v3557 = vpop.f32.mrf.mxu0
      %v3558 = vadd.f32 %v3413, %v3557
      %3559 = vdwg.mxu0
      %v3560 = vld [vmem:[%s3037] sm:$0xe]
      %v3561 = vld [vmem:[%s3037 + $0xc] sm:$0xe]
      %v3562 = vld [vmem:[%s3037 + $0x18] sm:$0xe]
      %v3563 = vld [vmem:[%s3037 + $0x24] sm:$0xe]
      %v3564 = vld [vmem:[%s3037 + $0x30] sm:$0xe]
      %v3565 = vld [vmem:[%s3037 + $0x3c] sm:$0xe]
      %v3566 = vld [vmem:[%s3037 + $0x48] sm:$0xe]
      %v3567 = vld [vmem:[%s3037 + $0x54] sm:$0xe]
      %v3584 = vrot.slane %v3560, 5
      %v3585 = vrot.slane %v3584, 4
      %v3586 = vrot.slane %v3039, 5
      %v3587 = vsel %vm900, %v3585, %v3586
      %v3588 = vrot.slane %v3586, 4
      %v3589 = vrot.slane %v3070, 5
      %v3590 = vsel %vm900, %v3588, %v3589
      %v3591 = vrot.slane %v3561, 5
      %v3592 = vrot.slane %v3591, 4
      %v3593 = vrot.slane %v3041, 5
      %v3594 = vsel %vm900, %v3592, %v3593
      %v3595 = vrot.slane %v3593, 4
      %v3596 = vrot.slane %v3071, 5
      %v3597 = vsel %vm900, %v3595, %v3596
      %v3598 = vrot.slane %v3562, 5
      %v3599 = vrot.slane %v3598, 4
      %v3600 = vrot.slane %v3043, 5
      %v3601 = vsel %vm900, %v3599, %v3600
      %v3602 = vrot.slane %v3600, 4
      %v3603 = vrot.slane %v3072, 5
      %v3604 = vsel %vm900, %v3602, %v3603
      %v3605 = vrot.slane %v3563, 5
      %v3606 = vrot.slane %v3605, 4
      %v3607 = vrot.slane %v3045, 5
      %v3608 = vsel %vm900, %v3606, %v3607
      %v3609 = vrot.slane %v3607, 4
      %v3610 = vrot.slane %v3073, 5
      %v3611 = vsel %vm900, %v3609, %v3610
      %v3612 = vrot.slane %v3564, 5
      %v3613 = vrot.slane %v3612, 4
      %v3614 = vrot.slane %v3047, 5
      %v3615 = vsel %vm900, %v3613, %v3614
      %v3616 = vrot.slane %v3614, 4
      %v3617 = vrot.slane %v3074, 5
      %v3618 = vsel %vm900, %v3616, %v3617
      %v3619 = vrot.slane %v3565, 5
      %v3620 = vrot.slane %v3619, 4
      %v3621 = vrot.slane %v3049, 5
      %v3622 = vsel %vm900, %v3620, %v3621
      %v3623 = vrot.slane %v3621, 4
      %v3624 = vrot.slane %v3075, 5
      %v3625 = vsel %vm900, %v3623, %v3624
      %v3626 = vrot.slane %v3566, 5
      %v3627 = vrot.slane %v3626, 4
      %v3628 = vrot.slane %v3051, 5
      %v3629 = vsel %vm900, %v3627, %v3628
      %v3630 = vrot.slane %v3628, 4
      %v3631 = vrot.slane %v3076, 5
      %v3632 = vsel %vm900, %v3630, %v3631
      %v3633 = vrot.slane %v3567, 5
      %v3634 = vrot.slane %v3633, 4
      %v3635 = vrot.slane %v3053, 5
      %v3636 = vsel %vm900, %v3634, %v3635
      %v3637 = vrot.slane %v3635, 4
      %v3638 = vrot.slane %v3077, 5
      %v3639 = vsel %vm900, %v3637, %v3638
      %v3640 = vld [vmem:[%s957] sm:$0xf]
      %v3641 = vld [vmem:[%s957 + $0x4] sm:$0xf]
      %v3642 = vld [vmem:[%s957 + $0x8] sm:$0xf]
      %v3643 = vld [vmem:[%s957 + $0xc] sm:$0xf]
      %v3644 = vld [vmem:[%s957 + $0x10] sm:$0xf]
      %v3645 = vld [vmem:[%s957 + $0x14] sm:$0xf]
      %v3646 = vld [vmem:[%s957 + $0x18] sm:$0xf]
      %v3647 = vld [vmem:[%s957 + $0x1c] sm:$0xf]
      %v3648 = vld [vmem:[%s957 + $0x20] sm:$0xf]
      %v3649 = vld [vmem:[%s957 + $0x24] sm:$0xf]
      %v3650 = vld [vmem:[%s957 + $0x28] sm:$0xf]
      %v3651 = vld [vmem:[%s957 + $0x2c] sm:$0xf]
      %v3652 = vld [vmem:[%s957 + $0x30] sm:$0xf]
      %v3653 = vld [vmem:[%s957 + $0x34] sm:$0xf]
      %v3654 = vld [vmem:[%s957 + $0x38] sm:$0xf]
      %v3655 = vld [vmem:[%s957 + $0x3c] sm:$0xf]
      %v3656 = vunpack.c.l.b16 %v3587
      %v3657 = vunpack.c.l.b16 %v3590
      %v3658 = vunpack.c.l.b16 %v3594
      %v3659 = vunpack.c.l.b16 %v3597
      %v3660 = vunpack.c.l.b16 %v3601
      %v3661 = vunpack.c.l.b16 %v3604
      %v3662 = vunpack.c.l.b16 %v3608
      %v3663 = vunpack.c.l.b16 %v3611
      %v3664 = vunpack.c.l.b16 %v3615
      %v3665 = vunpack.c.l.b16 %v3618
      %v3666 = vunpack.c.l.b16 %v3622
      %v3667 = vunpack.c.l.b16 %v3625
      %v3668 = vunpack.c.l.b16 %v3629
      %v3669 = vunpack.c.l.b16 %v3632
      %v3670 = vunpack.c.l.b16 %v3636
      %v3671 = vunpack.c.l.b16 %v3639
      %v3672 = vpack.c.b16 %v3657, %v3656
      %v3673 = vpack.c.b16 %v3659, %v3658
      %v3674 = vpack.c.b16 %v3661, %v3660
      %v3675 = vpack.c.b16 %v3663, %v3662
      %v3676 = vpack.c.b16 %v3665, %v3664
      %v3677 = vpack.c.b16 %v3667, %v3666
      %v3678 = vpack.c.b16 %v3669, %v3668
      %v3679 = vpack.c.b16 %v3671, %v3670
      %v3704 = vunpack.c.l.b16 %v3640
      %v3705 = vunpack.c.l.b16 %v3641
      %v3706 = vunpack.c.l.b16 %v3642
      %v3707 = vunpack.c.l.b16 %v3643
      %v3708 = vunpack.c.l.b16 %v3644
      %v3709 = vunpack.c.l.b16 %v3645
      %v3710 = vunpack.c.l.b16 %v3646
      %v3711 = vunpack.c.l.b16 %v3647
      %v3712 = vunpack.c.l.b16 %v3648
      %v3713 = vunpack.c.l.b16 %v3649
      %v3714 = vunpack.c.l.b16 %v3650
      %v3715 = vunpack.c.l.b16 %v3651
      %v3716 = vunpack.c.l.b16 %v3652
      %v3717 = vunpack.c.l.b16 %v3653
      %v3718 = vunpack.c.l.b16 %v3654
      %v3719 = vunpack.c.l.b16 %v3655
      %v3720 = vpack.c.b16 %v3705, %v3704
      %v3721 = vpack.c.b16 %v3707, %v3706
      %v3722 = vpack.c.b16 %v3709, %v3708
      %v3723 = vpack.c.b16 %v3711, %v3710
      %v3724 = vpack.c.b16 %v3713, %v3712
      %v3725 = vpack.c.b16 %v3715, %v3714
      %v3726 = vpack.c.b16 %v3717, %v3716
      %v3727 = vpack.c.b16 %v3719, %v3718
      %3736 = vmatpush.bf16.msra.mxu0 %v3727
      %3737 = vmatpush.bf16.msra.mxu0 %v3726
      %3738 = vmatpush.bf16.msra.mxu0 %v3725
      %3739 = vmatpush.bf16.msra.mxu0 %v3724
      %3740 = vmatpush.bf16.msra.mxu0 %v3723
      %3741 = vmatpush.bf16.msra.mxu0 %v3722
      %3742 = vmatpush.bf16.msra.mxu0 %v3721
      %3743 = vmatpush.bf16.msra.mxu0 %v3720
      %3744 = vmatmul.bf16.gmra.mxu0 %v3672
      %v3745 = vpop.f32.mrf.mxu0
      %v3746 = vadd.f32 0.0, %v3745
      %v3747 = vpop.f32.mrf.mxu0
      %v3748 = vadd.f32 0.0, %v3747
      %3749 = vmatmul.bf16.gmra.mxu0 %v3673
      %v3750 = vpop.f32.mrf.mxu0
      %v3751 = vadd.f32 0.0, %v3750
      %v3752 = vpop.f32.mrf.mxu0
      %v3753 = vadd.f32 0.0, %v3752
      %3754 = vmatmul.bf16.gmra.mxu0 %v3674
      %v3755 = vpop.f32.mrf.mxu0
      %v3756 = vadd.f32 0.0, %v3755
      %v3757 = vpop.f32.mrf.mxu0
      %v3758 = vadd.f32 0.0, %v3757
      %3759 = vmatmul.bf16.gmra.mxu0 %v3675
      %v3760 = vpop.f32.mrf.mxu0
      %v3761 = vadd.f32 0.0, %v3760
      %v3762 = vpop.f32.mrf.mxu0
      %v3763 = vadd.f32 0.0, %v3762
      %3764 = vmatmul.bf16.gmra.mxu0 %v3676
      %v3765 = vpop.f32.mrf.mxu0
      %v3766 = vadd.f32 0.0, %v3765
      %v3767 = vpop.f32.mrf.mxu0
      %v3768 = vadd.f32 0.0, %v3767
      %3769 = vmatmul.bf16.gmra.mxu0 %v3677
      %v3770 = vpop.f32.mrf.mxu0
      %v3771 = vadd.f32 0.0, %v3770
      %v3772 = vpop.f32.mrf.mxu0
      %v3773 = vadd.f32 0.0, %v3772
      %3774 = vmatmul.bf16.gmra.mxu0 %v3678
      %v3775 = vpop.f32.mrf.mxu0
      %v3776 = vadd.f32 0.0, %v3775
      %v3777 = vpop.f32.mrf.mxu0
      %v3778 = vadd.f32 0.0, %v3777
      %3779 = vmatmul.bf16.gmra.mxu0 %v3679
      %v3780 = vpop.f32.mrf.mxu0
      %v3781 = vadd.f32 0.0, %v3780
      %v3782 = vpop.f32.mrf.mxu0
      %v3783 = vadd.f32 0.0, %v3782
      %3784 = vdwg.mxu0
      %v3785 = vadd.f32 %v3521, %v3746
      %v3786 = vadd.f32 %v3523, %v3748
      %v3787 = vadd.f32 %v3526, %v3751
      %v3788 = vadd.f32 %v3528, %v3753
      %v3789 = vadd.f32 %v3531, %v3756
      %v3790 = vadd.f32 %v3533, %v3758
      %v3791 = vadd.f32 %v3536, %v3761
      %v3792 = vadd.f32 %v3538, %v3763
      %v3793 = vadd.f32 %v3541, %v3766
      %v3794 = vadd.f32 %v3543, %v3768
      %v3795 = vadd.f32 %v3546, %v3771
      %v3796 = vadd.f32 %v3548, %v3773
      %v3797 = vadd.f32 %v3551, %v3776
      %v3798 = vadd.f32 %v3553, %v3778
      %v3799 = vadd.f32 %v3556, %v3781
      %v3800 = vadd.f32 %v3558, %v3783
      %s3801 = scalar_lea.vmem %s219, 108
      %v3802 = vld [vmem:[%s3801] sm:$0xf]
      %v3803 = vld [vmem:[%s3801 + $0x4] sm:$0xf]
      %v3804 = vld [vmem:[%s3801 + $0xc] sm:$0xf]
      %v3805 = vld [vmem:[%s3801 + $0x10] sm:$0xf]
      %v3806 = vld [vmem:[%s3801 + $0x18] sm:$0xf]
      %v3807 = vld [vmem:[%s3801 + $0x1c] sm:$0xf]
      %v3808 = vld [vmem:[%s3801 + $0x24] sm:$0xf]
      %v3809 = vld [vmem:[%s3801 + $0x28] sm:$0xf]
      %v3810 = vld [vmem:[%s3801 + $0x30] sm:$0xf]
      %v3811 = vld [vmem:[%s3801 + $0x34] sm:$0xf]
      %v3812 = vld [vmem:[%s3801 + $0x3c] sm:$0xf]
      %v3813 = vld [vmem:[%s3801 + $0x40] sm:$0xf]
      %v3814 = vld [vmem:[%s3801 + $0x48] sm:$0xf]
      %v3815 = vld [vmem:[%s3801 + $0x4c] sm:$0xf]
      %v3816 = vld [vmem:[%s3801 + $0x54] sm:$0xf]
      %v3817 = vld [vmem:[%s3801 + $0x58] sm:$0xf]
      %v3818 = vld [vmem:[%s1136] sm:$0xf]
      %v3819 = vld [vmem:[%s1136 + $0x4] sm:$0xf]
      %v3820 = vld [vmem:[%s1136 + $0x8] sm:$0xf]
      %v3821 = vld [vmem:[%s1136 + $0xc] sm:$0xf]
      %v3822 = vld [vmem:[%s1136 + $0x10] sm:$0xf]
      %v3823 = vld [vmem:[%s1136 + $0x14] sm:$0xf]
      %v3824 = vld [vmem:[%s1136 + $0x18] sm:$0xf]
      %v3825 = vld [vmem:[%s1136 + $0x1c] sm:$0xf]
      %v3826 = vld [vmem:[%s1136 + $0x20] sm:$0xf]
      %v3827 = vld [vmem:[%s1136 + $0x24] sm:$0xf]
      %v3828 = vld [vmem:[%s1136 + $0x28] sm:$0xf]
      %v3829 = vld [vmem:[%s1136 + $0x2c] sm:$0xf]
      %v3830 = vld [vmem:[%s1136 + $0x30] sm:$0xf]
      %v3831 = vld [vmem:[%s1136 + $0x34] sm:$0xf]
      %v3832 = vld [vmem:[%s1136 + $0x38] sm:$0xf]
      %v3833 = vld [vmem:[%s1136 + $0x3c] sm:$0xf]
      %v3850 = vunpack.c.l.b16 %v3802
      %v3851 = vunpack.c.l.b16 %v3803
      %v3852 = vunpack.c.l.b16 %v3804
      %v3853 = vunpack.c.l.b16 %v3805
      %v3854 = vunpack.c.l.b16 %v3806
      %v3855 = vunpack.c.l.b16 %v3807
      %v3856 = vunpack.c.l.b16 %v3808
      %v3857 = vunpack.c.l.b16 %v3809
      %v3858 = vunpack.c.l.b16 %v3810
      %v3859 = vunpack.c.l.b16 %v3811
      %v3860 = vunpack.c.l.b16 %v3812
      %v3861 = vunpack.c.l.b16 %v3813
      %v3862 = vunpack.c.l.b16 %v3814
      %v3863 = vunpack.c.l.b16 %v3815
      %v3864 = vunpack.c.l.b16 %v3816
      %v3865 = vunpack.c.l.b16 %v3817
      %v3866 = vpack.c.b16 %v3851, %v3850
      %v3867 = vpack.c.b16 %v3853, %v3852
      %v3868 = vpack.c.b16 %v3855, %v3854
      %v3869 = vpack.c.b16 %v3857, %v3856
      %v3870 = vpack.c.b16 %v3859, %v3858
      %v3871 = vpack.c.b16 %v3861, %v3860
      %v3872 = vpack.c.b16 %v3863, %v3862
      %v3873 = vpack.c.b16 %v3865, %v3864
      %v3898 = vunpack.c.l.b16 %v3818
      %v3899 = vunpack.c.l.b16 %v3819
      %v3900 = vunpack.c.l.b16 %v3820
      %v3901 = vunpack.c.l.b16 %v3821
      %v3902 = vunpack.c.l.b16 %v3822
      %v3903 = vunpack.c.l.b16 %v3823
      %v3904 = vunpack.c.l.b16 %v3824
      %v3905 = vunpack.c.l.b16 %v3825
      %v3906 = vunpack.c.l.b16 %v3826
      %v3907 = vunpack.c.l.b16 %v3827
      %v3908 = vunpack.c.l.b16 %v3828
      %v3909 = vunpack.c.l.b16 %v3829
      %v3910 = vunpack.c.l.b16 %v3830
      %v3911 = vunpack.c.l.b16 %v3831
      %v3912 = vunpack.c.l.b16 %v3832
      %v3913 = vunpack.c.l.b16 %v3833
      %v3914 = vpack.c.b16 %v3899, %v3898
      %v3915 = vpack.c.b16 %v3901, %v3900
      %v3916 = vpack.c.b16 %v3903, %v3902
      %v3917 = vpack.c.b16 %v3905, %v3904
      %v3918 = vpack.c.b16 %v3907, %v3906
      %v3919 = vpack.c.b16 %v3909, %v3908
      %v3920 = vpack.c.b16 %v3911, %v3910
      %v3921 = vpack.c.b16 %v3913, %v3912
      %3930 = vmatpush.bf16.msra.mxu0 %v3921
      %3931 = vmatpush.bf16.msra.mxu0 %v3920
      %3932 = vmatpush.bf16.msra.mxu0 %v3919
      %3933 = vmatpush.bf16.msra.mxu0 %v3918
      %3934 = vmatpush.bf16.msra.mxu0 %v3917
      %3935 = vmatpush.bf16.msra.mxu0 %v3916
      %3936 = vmatpush.bf16.msra.mxu0 %v3915
      %3937 = vmatpush.bf16.msra.mxu0 %v3914
      %3938 = vmatmul.bf16.gmra.mxu0 %v3866
      %v3939 = vpop.f32.mrf.mxu0
      %v3940 = vadd.f32 0.0, %v3939
      %v3941 = vpop.f32.mrf.mxu0
      %v3942 = vadd.f32 0.0, %v3941
      %3943 = vmatmul.bf16.gmra.mxu0 %v3867
      %v3944 = vpop.f32.mrf.mxu0
      %v3945 = vadd.f32 0.0, %v3944
      %v3946 = vpop.f32.mrf.mxu0
      %v3947 = vadd.f32 0.0, %v3946
      %3948 = vmatmul.bf16.gmra.mxu0 %v3868
      %v3949 = vpop.f32.mrf.mxu0
      %v3950 = vadd.f32 0.0, %v3949
      %v3951 = vpop.f32.mrf.mxu0
      %v3952 = vadd.f32 0.0, %v3951
      %3953 = vmatmul.bf16.gmra.mxu0 %v3869
      %v3954 = vpop.f32.mrf.mxu0
      %v3955 = vadd.f32 0.0, %v3954
      %v3956 = vpop.f32.mrf.mxu0
      %v3957 = vadd.f32 0.0, %v3956
      %3958 = vmatmul.bf16.gmra.mxu0 %v3870
      %v3959 = vpop.f32.mrf.mxu0
      %v3960 = vadd.f32 0.0, %v3959
      %v3961 = vpop.f32.mrf.mxu0
      %v3962 = vadd.f32 0.0, %v3961
      %3963 = vmatmul.bf16.gmra.mxu0 %v3871
      %v3964 = vpop.f32.mrf.mxu0
      %v3965 = vadd.f32 0.0, %v3964
      %v3966 = vpop.f32.mrf.mxu0
      %v3967 = vadd.f32 0.0, %v3966
      %3968 = vmatmul.bf16.gmra.mxu0 %v3872
      %v3969 = vpop.f32.mrf.mxu0
      %v3970 = vadd.f32 0.0, %v3969
      %v3971 = vpop.f32.mrf.mxu0
      %v3972 = vadd.f32 0.0, %v3971
      %3973 = vmatmul.bf16.gmra.mxu0 %v3873
      %v3974 = vpop.f32.mrf.mxu0
      %v3975 = vadd.f32 0.0, %v3974
      %v3976 = vpop.f32.mrf.mxu0
      %v3977 = vadd.f32 0.0, %v3976
      %3978 = vdwg.mxu0
      %v3979 = vadd.f32 %v3785, %v3940
      %v3980 = vadd.f32 %v3786, %v3942
      %v3981 = vadd.f32 %v3787, %v3945
      %v3982 = vadd.f32 %v3788, %v3947
      %v3983 = vadd.f32 %v3789, %v3950
      %v3984 = vadd.f32 %v3790, %v3952
      %v3985 = vadd.f32 %v3791, %v3955
      %v3986 = vadd.f32 %v3792, %v3957
      %v3987 = vadd.f32 %v3793, %v3960
      %v3988 = vadd.f32 %v3794, %v3962
      %v3989 = vadd.f32 %v3795, %v3965
      %v3990 = vadd.f32 %v3796, %v3967
      %v3991 = vadd.f32 %v3797, %v3970
      %v3992 = vadd.f32 %v3798, %v3972
      %v3993 = vadd.f32 %v3799, %v3975
      %v3994 = vadd.f32 %v3800, %v3977
      %v3995 = vld [vmem:[%s3801] sm:$0xf]
      %v3996 = vld [vmem:[%s3801 + $0x4] sm:$0xf]
      %v3997 = vld [vmem:[%s3801 + $0x8] sm:$0x1]
      %v3998 = vld [vmem:[%s3801 + $0xc] sm:$0xf]
      %v3999 = vld [vmem:[%s3801 + $0x10] sm:$0xf]
      %v4000 = vld [vmem:[%s3801 + $0x14] sm:$0x1]
      %v4001 = vld [vmem:[%s3801 + $0x18] sm:$0xf]
      %v4002 = vld [vmem:[%s3801 + $0x1c] sm:$0xf]
      %v4003 = vld [vmem:[%s3801 + $0x20] sm:$0x1]
      %v4004 = vld [vmem:[%s3801 + $0x24] sm:$0xf]
      %v4005 = vld [vmem:[%s3801 + $0x28] sm:$0xf]
      %v4006 = vld [vmem:[%s3801 + $0x2c] sm:$0x1]
      %v4007 = vld [vmem:[%s3801 + $0x30] sm:$0xf]
      %v4008 = vld [vmem:[%s3801 + $0x34] sm:$0xf]
      %v4009 = vld [vmem:[%s3801 + $0x38] sm:$0x1]
      %v4010 = vld [vmem:[%s3801 + $0x3c] sm:$0xf]
      %v4011 = vld [vmem:[%s3801 + $0x40] sm:$0xf]
      %v4012 = vld [vmem:[%s3801 + $0x44] sm:$0x1]
      %v4013 = vld [vmem:[%s3801 + $0x48] sm:$0xf]
      %v4014 = vld [vmem:[%s3801 + $0x4c] sm:$0xf]
      %v4015 = vld [vmem:[%s3801 + $0x50] sm:$0x1]
      %v4016 = vld [vmem:[%s3801 + $0x54] sm:$0xf]
      %v4017 = vld [vmem:[%s3801 + $0x58] sm:$0xf]
      %v4018 = vld [vmem:[%s3801 + $0x5c] sm:$0x1]
      %v4020 = vshrl.u32 %v3995, 16
      %v4022 = vrot.slane %v4020, 4
      %v4023 = vshll.u32 %v3995, 16
      %v4025 = vrot.slane %v4023, 5
      %v4026 = vor.u32 %v4022, %v4025
      %v4027 = vrot.slane %v4026, 4
      %v4029 = vshll.u32 %v3996, 16
      %v4031 = vrot.slane %v4029, 5
      %v4032 = vsel %vm390, %v4027, %v4031
      %v4033 = vshrl.u32 %v3996, 16
      %v4035 = vrot.slane %v4033, 4
      %v4036 = vor.u32 %v4035, %v4031
      %v4037 = vrot.slane %v4036, 4
      %v4039 = vshll.u32 %v3997, 16
      %v4041 = vrot.slane %v4039, 5
      %v4042 = vsel %vm390, %v4037, %v4041
      %v4044 = vshrl.u32 %v3998, 16
      %v4046 = vrot.slane %v4044, 4
      %v4047 = vshll.u32 %v3998, 16
      %v4049 = vrot.slane %v4047, 5
      %v4050 = vor.u32 %v4046, %v4049
      %v4051 = vrot.slane %v4050, 4
      %v4053 = vshll.u32 %v3999, 16
      %v4055 = vrot.slane %v4053, 5
      %v4056 = vsel %vm390, %v4051, %v4055
      %v4057 = vshrl.u32 %v3999, 16
      %v4059 = vrot.slane %v4057, 4
      %v4060 = vor.u32 %v4059, %v4055
      %v4061 = vrot.slane %v4060, 4
      %v4063 = vshll.u32 %v4000, 16
      %v4065 = vrot.slane %v4063, 5
      %v4066 = vsel %vm390, %v4061, %v4065
      %v4068 = vshrl.u32 %v4001, 16
      %v4070 = vrot.slane %v4068, 4
      %v4071 = vshll.u32 %v4001, 16
      %v4073 = vrot.slane %v4071, 5
      %v4074 = vor.u32 %v4070, %v4073
      %v4075 = vrot.slane %v4074, 4
      %v4077 = vshll.u32 %v4002, 16
      %v4079 = vrot.slane %v4077, 5
      %v4080 = vsel %vm390, %v4075, %v4079
      %v4081 = vshrl.u32 %v4002, 16
      %v4083 = vrot.slane %v4081, 4
      %v4084 = vor.u32 %v4083, %v4079
      %v4085 = vrot.slane %v4084, 4
      %v4087 = vshll.u32 %v4003, 16
      %v4089 = vrot.slane %v4087, 5
      %v4090 = vsel %vm390, %v4085, %v4089
      %v4092 = vshrl.u32 %v4004, 16
      %v4094 = vrot.slane %v4092, 4
      %v4095 = vshll.u32 %v4004, 16
      %v4097 = vrot.slane %v4095, 5
      %v4098 = vor.u32 %v4094, %v4097
      %v4099 = vrot.slane %v4098, 4
      %v4101 = vshll.u32 %v4005, 16
      %v4103 = vrot.slane %v4101, 5
      %v4104 = vsel %vm390, %v4099, %v4103
      %v4105 = vshrl.u32 %v4005, 16
      %v4107 = vrot.slane %v4105, 4
      %v4108 = vor.u32 %v4107, %v4103
      %v4109 = vrot.slane %v4108, 4
      %v4111 = vshll.u32 %v4006, 16
      %v4113 = vrot.slane %v4111, 5
      %v4114 = vsel %vm390, %v4109, %v4113
      %v4116 = vshrl.u32 %v4007, 16
      %v4118 = vrot.slane %v4116, 4
      %v4119 = vshll.u32 %v4007, 16
      %v4121 = vrot.slane %v4119, 5
      %v4122 = vor.u32 %v4118, %v4121
      %v4123 = vrot.slane %v4122, 4
      %v4125 = vshll.u32 %v4008, 16
      %v4127 = vrot.slane %v4125, 5
      %v4128 = vsel %vm390, %v4123, %v4127
      %v4129 = vshrl.u32 %v4008, 16
      %v4131 = vrot.slane %v4129, 4
      %v4132 = vor.u32 %v4131, %v4127
      %v4133 = vrot.slane %v4132, 4
      %v4135 = vshll.u32 %v4009, 16
      %v4137 = vrot.slane %v4135, 5
      %v4138 = vsel %vm390, %v4133, %v4137
      %v4140 = vshrl.u32 %v4010, 16
      %v4142 = vrot.slane %v4140, 4
      %v4143 = vshll.u32 %v4010, 16
      %v4145 = vrot.slane %v4143, 5
      %v4146 = vor.u32 %v4142, %v4145
      %v4147 = vrot.slane %v4146, 4
      %v4149 = vshll.u32 %v4011, 16
      %v4151 = vrot.slane %v4149, 5
      %v4152 = vsel %vm390, %v4147, %v4151
      %v4153 = vshrl.u32 %v4011, 16
      %v4155 = vrot.slane %v4153, 4
      %v4156 = vor.u32 %v4155, %v4151
      %v4157 = vrot.slane %v4156, 4
      %v4159 = vshll.u32 %v4012, 16
      %v4161 = vrot.slane %v4159, 5
      %v4162 = vsel %vm390, %v4157, %v4161
      %v4164 = vshrl.u32 %v4013, 16
      %v4166 = vrot.slane %v4164, 4
      %v4167 = vshll.u32 %v4013, 16
      %v4169 = vrot.slane %v4167, 5
      %v4170 = vor.u32 %v4166, %v4169
      %v4171 = vrot.slane %v4170, 4
      %v4173 = vshll.u32 %v4014, 16
      %v4175 = vrot.slane %v4173, 5
      %v4176 = vsel %vm390, %v4171, %v4175
      %v4177 = vshrl.u32 %v4014, 16
      %v4179 = vrot.slane %v4177, 4
      %v4180 = vor.u32 %v4179, %v4175
      %v4181 = vrot.slane %v4180, 4
      %v4183 = vshll.u32 %v4015, 16
      %v4185 = vrot.slane %v4183, 5
      %v4186 = vsel %vm390, %v4181, %v4185
      %v4188 = vshrl.u32 %v4016, 16
      %v4190 = vrot.slane %v4188, 4
      %v4191 = vshll.u32 %v4016, 16
      %v4193 = vrot.slane %v4191, 5
      %v4194 = vor.u32 %v4190, %v4193
      %v4195 = vrot.slane %v4194, 4
      %v4197 = vshll.u32 %v4017, 16
      %v4199 = vrot.slane %v4197, 5
      %v4200 = vsel %vm390, %v4195, %v4199
      %v4201 = vshrl.u32 %v4017, 16
      %v4203 = vrot.slane %v4201, 4
      %v4204 = vor.u32 %v4203, %v4199
      %v4205 = vrot.slane %v4204, 4
      %v4207 = vshll.u32 %v4018, 16
      %v4209 = vrot.slane %v4207, 5
      %v4210 = vsel %vm390, %v4205, %v4209
      %v4211 = vld [vmem:[%s1530] sm:$0xf]
      %v4212 = vld [vmem:[%s1530 + $0x4] sm:$0xf]
      %v4213 = vld [vmem:[%s1530 + $0x8] sm:$0xf]
      %v4214 = vld [vmem:[%s1530 + $0xc] sm:$0xf]
      %v4215 = vld [vmem:[%s1530 + $0x10] sm:$0xf]
      %v4216 = vld [vmem:[%s1530 + $0x14] sm:$0xf]
      %v4217 = vld [vmem:[%s1530 + $0x18] sm:$0xf]
      %v4218 = vld [vmem:[%s1530 + $0x1c] sm:$0xf]
      %v4219 = vld [vmem:[%s1530 + $0x20] sm:$0xf]
      %v4220 = vld [vmem:[%s1530 + $0x24] sm:$0xf]
      %v4221 = vld [vmem:[%s1530 + $0x28] sm:$0xf]
      %v4222 = vld [vmem:[%s1530 + $0x2c] sm:$0xf]
      %v4223 = vld [vmem:[%s1530 + $0x30] sm:$0xf]
      %v4224 = vld [vmem:[%s1530 + $0x34] sm:$0xf]
      %v4225 = vld [vmem:[%s1530 + $0x38] sm:$0xf]
      %v4226 = vld [vmem:[%s1530 + $0x3c] sm:$0xf]
      %v4227 = vunpack.c.l.b16 %v4032
      %v4228 = vunpack.c.l.b16 %v4042
      %v4229 = vunpack.c.l.b16 %v4056
      %v4230 = vunpack.c.l.b16 %v4066
      %v4231 = vunpack.c.l.b16 %v4080
      %v4232 = vunpack.c.l.b16 %v4090
      %v4233 = vunpack.c.l.b16 %v4104
      %v4234 = vunpack.c.l.b16 %v4114
      %v4235 = vunpack.c.l.b16 %v4128
      %v4236 = vunpack.c.l.b16 %v4138
      %v4237 = vunpack.c.l.b16 %v4152
      %v4238 = vunpack.c.l.b16 %v4162
      %v4239 = vunpack.c.l.b16 %v4176
      %v4240 = vunpack.c.l.b16 %v4186
      %v4241 = vunpack.c.l.b16 %v4200
      %v4242 = vunpack.c.l.b16 %v4210
      %v4243 = vpack.c.b16 %v4228, %v4227
      %v4244 = vpack.c.b16 %v4230, %v4229
      %v4245 = vpack.c.b16 %v4232, %v4231
      %v4246 = vpack.c.b16 %v4234, %v4233
      %v4247 = vpack.c.b16 %v4236, %v4235
      %v4248 = vpack.c.b16 %v4238, %v4237
      %v4249 = vpack.c.b16 %v4240, %v4239
      %v4250 = vpack.c.b16 %v4242, %v4241
      %v4275 = vunpack.c.l.b16 %v4211
      %v4276 = vunpack.c.l.b16 %v4212
      %v4277 = vunpack.c.l.b16 %v4213
      %v4278 = vunpack.c.l.b16 %v4214
      %v4279 = vunpack.c.l.b16 %v4215
      %v4280 = vunpack.c.l.b16 %v4216
      %v4281 = vunpack.c.l.b16 %v4217
      %v4282 = vunpack.c.l.b16 %v4218
      %v4283 = vunpack.c.l.b16 %v4219
      %v4284 = vunpack.c.l.b16 %v4220
      %v4285 = vunpack.c.l.b16 %v4221
      %v4286 = vunpack.c.l.b16 %v4222
      %v4287 = vunpack.c.l.b16 %v4223
      %v4288 = vunpack.c.l.b16 %v4224
      %v4289 = vunpack.c.l.b16 %v4225
      %v4290 = vunpack.c.l.b16 %v4226
      %v4291 = vpack.c.b16 %v4276, %v4275
      %v4292 = vpack.c.b16 %v4278, %v4277
      %v4293 = vpack.c.b16 %v4280, %v4279
      %v4294 = vpack.c.b16 %v4282, %v4281
      %v4295 = vpack.c.b16 %v4284, %v4283
      %v4296 = vpack.c.b16 %v4286, %v4285
      %v4297 = vpack.c.b16 %v4288, %v4287
      %v4298 = vpack.c.b16 %v4290, %v4289
      %4307 = vmatpush.bf16.msra.mxu0 %v4298
      %4308 = vmatpush.bf16.msra.mxu0 %v4297
      %4309 = vmatpush.bf16.msra.mxu0 %v4296
      %4310 = vmatpush.bf16.msra.mxu0 %v4295
      %4311 = vmatpush.bf16.msra.mxu0 %v4294
      %4312 = vmatpush.bf16.msra.mxu0 %v4293
      %4313 = vmatpush.bf16.msra.mxu0 %v4292
      %4314 = vmatpush.bf16.msra.mxu0 %v4291
      %4315 = vmatmul.bf16.gmra.mxu0 %v4243
      %v4316 = vpop.f32.mrf.mxu0
      %v4317 = vadd.f32 0.0, %v4316
      %v4318 = vpop.f32.mrf.mxu0
      %v4319 = vadd.f32 0.0, %v4318
      %4320 = vmatmul.bf16.gmra.mxu0 %v4244
      %v4321 = vpop.f32.mrf.mxu0
      %v4322 = vadd.f32 0.0, %v4321
      %v4323 = vpop.f32.mrf.mxu0
      %v4324 = vadd.f32 0.0, %v4323
      %4325 = vmatmul.bf16.gmra.mxu0 %v4245
      %v4326 = vpop.f32.mrf.mxu0
      %v4327 = vadd.f32 0.0, %v4326
      %v4328 = vpop.f32.mrf.mxu0
      %v4329 = vadd.f32 0.0, %v4328
      %4330 = vmatmul.bf16.gmra.mxu0 %v4246
      %v4331 = vpop.f32.mrf.mxu0
      %v4332 = vadd.f32 0.0, %v4331
      %v4333 = vpop.f32.mrf.mxu0
      %v4334 = vadd.f32 0.0, %v4333
      %4335 = vmatmul.bf16.gmra.mxu0 %v4247
      %v4336 = vpop.f32.mrf.mxu0
      %v4337 = vadd.f32 0.0, %v4336
      %v4338 = vpop.f32.mrf.mxu0
      %v4339 = vadd.f32 0.0, %v4338
      %4340 = vmatmul.bf16.gmra.mxu0 %v4248
      %v4341 = vpop.f32.mrf.mxu0
      %v4342 = vadd.f32 0.0, %v4341
      %v4343 = vpop.f32.mrf.mxu0
      %v4344 = vadd.f32 0.0, %v4343
      %4345 = vmatmul.bf16.gmra.mxu0 %v4249
      %v4346 = vpop.f32.mrf.mxu0
      %v4347 = vadd.f32 0.0, %v4346
      %v4348 = vpop.f32.mrf.mxu0
      %v4349 = vadd.f32 0.0, %v4348
      %4350 = vmatmul.bf16.gmra.mxu0 %v4250
      %v4351 = vpop.f32.mrf.mxu0
      %v4352 = vadd.f32 0.0, %v4351
      %v4353 = vpop.f32.mrf.mxu0
      %v4354 = vadd.f32 0.0, %v4353
      %4355 = vdwg.mxu0
      %v4356 = vadd.f32 %v3979, %v4317
      %v4357 = vadd.f32 %v3980, %v4319
      %v4358 = vadd.f32 %v3981, %v4322
      %v4359 = vadd.f32 %v3982, %v4324
      %v4360 = vadd.f32 %v3983, %v4327
      %v4361 = vadd.f32 %v3984, %v4329
      %v4362 = vadd.f32 %v3985, %v4332
      %v4363 = vadd.f32 %v3986, %v4334
      %v4364 = vadd.f32 %v3987, %v4337
      %v4365 = vadd.f32 %v3988, %v4339
      %v4366 = vadd.f32 %v3989, %v4342
      %v4367 = vadd.f32 %v3990, %v4344
      %v4368 = vadd.f32 %v3991, %v4347
      %v4369 = vadd.f32 %v3992, %v4349
      %v4370 = vadd.f32 %v3993, %v4352
      %v4371 = vadd.f32 %v3994, %v4354
      %v4372 = vld [vmem:[%s3801] sm:$0xe]
      %v4373 = vld [vmem:[%s3801 + $0xc] sm:$0xe]
      %v4374 = vld [vmem:[%s3801 + $0x18] sm:$0xe]
      %v4375 = vld [vmem:[%s3801 + $0x24] sm:$0xe]
      %v4376 = vld [vmem:[%s3801 + $0x30] sm:$0xe]
      %v4377 = vld [vmem:[%s3801 + $0x3c] sm:$0xe]
      %v4378 = vld [vmem:[%s3801 + $0x48] sm:$0xe]
      %v4379 = vld [vmem:[%s3801 + $0x54] sm:$0xe]
      %v4404 = vrot.slane %v4372, 5
      %v4405 = vrot.slane %v4404, 4
      %v4406 = vrot.slane %v3996, 5
      %v4407 = vsel %vm900, %v4405, %v4406
      %v4408 = vrot.slane %v4406, 4
      %v4409 = vrot.slane %v3997, 5
      %v4410 = vsel %vm900, %v4408, %v4409
      %v4411 = vrot.slane %v4373, 5
      %v4412 = vrot.slane %v4411, 4
      %v4413 = vrot.slane %v3999, 5
      %v4414 = vsel %vm900, %v4412, %v4413
      %v4415 = vrot.slane %v4413, 4
      %v4416 = vrot.slane %v4000, 5
      %v4417 = vsel %vm900, %v4415, %v4416
      %v4418 = vrot.slane %v4374, 5
      %v4419 = vrot.slane %v4418, 4
      %v4420 = vrot.slane %v4002, 5
      %v4421 = vsel %vm900, %v4419, %v4420
      %v4422 = vrot.slane %v4420, 4
      %v4423 = vrot.slane %v4003, 5
      %v4424 = vsel %vm900, %v4422, %v4423
      %v4425 = vrot.slane %v4375, 5
      %v4426 = vrot.slane %v4425, 4
      %v4427 = vrot.slane %v4005, 5
      %v4428 = vsel %vm900, %v4426, %v4427
      %v4429 = vrot.slane %v4427, 4
      %v4430 = vrot.slane %v4006, 5
      %v4431 = vsel %vm900, %v4429, %v4430
      %v4432 = vrot.slane %v4376, 5
      %v4433 = vrot.slane %v4432, 4
      %v4434 = vrot.slane %v4008, 5
      %v4435 = vsel %vm900, %v4433, %v4434
      %v4436 = vrot.slane %v4434, 4
      %v4437 = vrot.slane %v4009, 5
      %v4438 = vsel %vm900, %v4436, %v4437
      %v4439 = vrot.slane %v4377, 5
      %v4440 = vrot.slane %v4439, 4
      %v4441 = vrot.slane %v4011, 5
      %v4442 = vsel %vm900, %v4440, %v4441
      %v4443 = vrot.slane %v4441, 4
      %v4444 = vrot.slane %v4012, 5
      %v4445 = vsel %vm900, %v4443, %v4444
      %v4446 = vrot.slane %v4378, 5
      %v4447 = vrot.slane %v4446, 4
      %v4448 = vrot.slane %v4014, 5
      %v4449 = vsel %vm900, %v4447, %v4448
      %v4450 = vrot.slane %v4448, 4
      %v4451 = vrot.slane %v4015, 5
      %v4452 = vsel %vm900, %v4450, %v4451
      %v4453 = vrot.slane %v4379, 5
      %v4454 = vrot.slane %v4453, 4
      %v4455 = vrot.slane %v4017, 5
      %v4456 = vsel %vm900, %v4454, %v4455
      %v4457 = vrot.slane %v4455, 4
      %v4458 = vrot.slane %v4018, 5
      %v4459 = vsel %vm900, %v4457, %v4458
      %v4460 = vld [vmem:[%s1780] sm:$0xf]
      %v4461 = vld [vmem:[%s1780 + $0x4] sm:$0xf]
      %v4462 = vld [vmem:[%s1780 + $0x8] sm:$0xf]
      %v4463 = vld [vmem:[%s1780 + $0xc] sm:$0xf]
      %v4464 = vld [vmem:[%s1780 + $0x10] sm:$0xf]
      %v4465 = vld [vmem:[%s1780 + $0x14] sm:$0xf]
      %v4466 = vld [vmem:[%s1780 + $0x18] sm:$0xf]
      %v4467 = vld [vmem:[%s1780 + $0x1c] sm:$0xf]
      %v4468 = vld [vmem:[%s1780 + $0x20] sm:$0xf]
      %v4469 = vld [vmem:[%s1780 + $0x24] sm:$0xf]
      %v4470 = vld [vmem:[%s1780 + $0x28] sm:$0xf]
      %v4471 = vld [vmem:[%s1780 + $0x2c] sm:$0xf]
      %v4472 = vld [vmem:[%s1780 + $0x30] sm:$0xf]
      %v4473 = vld [vmem:[%s1780 + $0x34] sm:$0xf]
      %v4474 = vld [vmem:[%s1780 + $0x38] sm:$0xf]
      %v4475 = vld [vmem:[%s1780 + $0x3c] sm:$0xf]
      %v4476 = vunpack.c.l.b16 %v4407
      %v4477 = vunpack.c.l.b16 %v4410
      %v4478 = vunpack.c.l.b16 %v4414
      %v4479 = vunpack.c.l.b16 %v4417
      %v4480 = vunpack.c.l.b16 %v4421
      %v4481 = vunpack.c.l.b16 %v4424
      %v4482 = vunpack.c.l.b16 %v4428
      %v4483 = vunpack.c.l.b16 %v4431
      %v4484 = vunpack.c.l.b16 %v4435
      %v4485 = vunpack.c.l.b16 %v4438
      %v4486 = vunpack.c.l.b16 %v4442
      %v4487 = vunpack.c.l.b16 %v4445
      %v4488 = vunpack.c.l.b16 %v4449
      %v4489 = vunpack.c.l.b16 %v4452
      %v4490 = vunpack.c.l.b16 %v4456
      %v4491 = vunpack.c.l.b16 %v4459
      %v4492 = vpack.c.b16 %v4477, %v4476
      %v4493 = vpack.c.b16 %v4479, %v4478
      %v4494 = vpack.c.b16 %v4481, %v4480
      %v4495 = vpack.c.b16 %v4483, %v4482
      %v4496 = vpack.c.b16 %v4485, %v4484
      %v4497 = vpack.c.b16 %v4487, %v4486
      %v4498 = vpack.c.b16 %v4489, %v4488
      %v4499 = vpack.c.b16 %v4491, %v4490
      %v4524 = vunpack.c.l.b16 %v4460
      %v4525 = vunpack.c.l.b16 %v4461
      %v4526 = vunpack.c.l.b16 %v4462
      %v4527 = vunpack.c.l.b16 %v4463
      %v4528 = vunpack.c.l.b16 %v4464
      %v4529 = vunpack.c.l.b16 %v4465
      %v4530 = vunpack.c.l.b16 %v4466
      %v4531 = vunpack.c.l.b16 %v4467
      %v4532 = vunpack.c.l.b16 %v4468
      %v4533 = vunpack.c.l.b16 %v4469
      %v4534 = vunpack.c.l.b16 %v4470
      %v4535 = vunpack.c.l.b16 %v4471
      %v4536 = vunpack.c.l.b16 %v4472
      %v4537 = vunpack.c.l.b16 %v4473
      %v4538 = vunpack.c.l.b16 %v4474
      %v4539 = vunpack.c.l.b16 %v4475
      %v4540 = vpack.c.b16 %v4525, %v4524
      %v4541 = vpack.c.b16 %v4527, %v4526
      %v4542 = vpack.c.b16 %v4529, %v4528
      %v4543 = vpack.c.b16 %v4531, %v4530
      %v4544 = vpack.c.b16 %v4533, %v4532
      %v4545 = vpack.c.b16 %v4535, %v4534
      %v4546 = vpack.c.b16 %v4537, %v4536
      %v4547 = vpack.c.b16 %v4539, %v4538
      %4556 = vmatpush.bf16.msra.mxu0 %v4547
      %4557 = vmatpush.bf16.msra.mxu0 %v4546
      %4558 = vmatpush.bf16.msra.mxu0 %v4545
      %4559 = vmatpush.bf16.msra.mxu0 %v4544
      %4560 = vmatpush.bf16.msra.mxu0 %v4543
      %4561 = vmatpush.bf16.msra.mxu0 %v4542
      %4562 = vmatpush.bf16.msra.mxu0 %v4541
      %4563 = vmatpush.bf16.msra.mxu0 %v4540
      %4564 = vmatmul.bf16.gmra.mxu0 %v4492
      %v4565 = vpop.f32.mrf.mxu0
      %v4566 = vadd.f32 0.0, %v4565
      %v4567 = vpop.f32.mrf.mxu0
      %v4568 = vadd.f32 0.0, %v4567
      %4569 = vmatmul.bf16.gmra.mxu0 %v4493
      %v4570 = vpop.f32.mrf.mxu0
      %v4571 = vadd.f32 0.0, %v4570
      %v4572 = vpop.f32.mrf.mxu0
      %v4573 = vadd.f32 0.0, %v4572
      %4574 = vmatmul.bf16.gmra.mxu0 %v4494
      %v4575 = vpop.f32.mrf.mxu0
      %v4576 = vadd.f32 0.0, %v4575
      %v4577 = vpop.f32.mrf.mxu0
      %v4578 = vadd.f32 0.0, %v4577
      %4579 = vmatmul.bf16.gmra.mxu0 %v4495
      %v4580 = vpop.f32.mrf.mxu0
      %v4581 = vadd.f32 0.0, %v4580
      %v4582 = vpop.f32.mrf.mxu0
      %v4583 = vadd.f32 0.0, %v4582
      %4584 = vmatmul.bf16.gmra.mxu0 %v4496
      %v4585 = vpop.f32.mrf.mxu0
      %v4586 = vadd.f32 0.0, %v4585
      %v4587 = vpop.f32.mrf.mxu0
      %v4588 = vadd.f32 0.0, %v4587
      %4589 = vmatmul.bf16.gmra.mxu0 %v4497
      %v4590 = vpop.f32.mrf.mxu0
      %v4591 = vadd.f32 0.0, %v4590
      %v4592 = vpop.f32.mrf.mxu0
      %v4593 = vadd.f32 0.0, %v4592
      %4594 = vmatmul.bf16.gmra.mxu0 %v4498
      %v4595 = vpop.f32.mrf.mxu0
      %v4596 = vadd.f32 0.0, %v4595
      %v4597 = vpop.f32.mrf.mxu0
      %v4598 = vadd.f32 0.0, %v4597
      %4599 = vmatmul.bf16.gmra.mxu0 %v4499
      %v4600 = vpop.f32.mrf.mxu0
      %v4601 = vadd.f32 0.0, %v4600
      %v4602 = vpop.f32.mrf.mxu0
      %v4603 = vadd.f32 0.0, %v4602
      %4604 = vdwg.mxu0
      %v4605 = vadd.f32 %v4356, %v4566
      %v4606 = vadd.f32 %v4357, %v4568
      %v4607 = vadd.f32 %v4358, %v4571
      %v4608 = vadd.f32 %v4359, %v4573
      %v4609 = vadd.f32 %v4360, %v4576
      %v4610 = vadd.f32 %v4361, %v4578
      %v4611 = vadd.f32 %v4362, %v4581
      %v4612 = vadd.f32 %v4363, %v4583
      %v4613 = vadd.f32 %v4364, %v4586
      %v4614 = vadd.f32 %v4365, %v4588
      %v4615 = vadd.f32 %v4366, %v4591
      %v4616 = vadd.f32 %v4367, %v4593
      %v4617 = vadd.f32 %v4368, %v4596
      %v4618 = vadd.f32 %v4369, %v4598
      %v4619 = vadd.f32 %v4370, %v4601
      %v4620 = vadd.f32 %v4371, %v4603
      %s4621 = scalar_lea.vmem %s219, 120
      %v4622 = vld [vmem:[%s4621] sm:$0xf]
      %v4623 = vld [vmem:[%s4621 + $0x4] sm:$0xf]
      %v4624 = vld [vmem:[%s4621 + $0xc] sm:$0xf]
      %v4625 = vld [vmem:[%s4621 + $0x10] sm:$0xf]
      %v4626 = vld [vmem:[%s4621 + $0x18] sm:$0xf]
      %v4627 = vld [vmem:[%s4621 + $0x1c] sm:$0xf]
      %v4628 = vld [vmem:[%s4621 + $0x24] sm:$0xf]
      %v4629 = vld [vmem:[%s4621 + $0x28] sm:$0xf]
      %v4630 = vld [vmem:[%s4621 + $0x30] sm:$0xf]
      %v4631 = vld [vmem:[%s4621 + $0x34] sm:$0xf]
      %v4632 = vld [vmem:[%s4621 + $0x3c] sm:$0xf]
      %v4633 = vld [vmem:[%s4621 + $0x40] sm:$0xf]
      %v4634 = vld [vmem:[%s4621 + $0x48] sm:$0xf]
      %v4635 = vld [vmem:[%s4621 + $0x4c] sm:$0xf]
      %v4636 = vld [vmem:[%s4621 + $0x54] sm:$0xf]
      %v4637 = vld [vmem:[%s4621 + $0x58] sm:$0xf]
      %v4638 = vld [vmem:[%s1959] sm:$0xf]
      %v4639 = vld [vmem:[%s1959 + $0x4] sm:$0xf]
      %v4640 = vld [vmem:[%s1959 + $0x8] sm:$0xf]
      %v4641 = vld [vmem:[%s1959 + $0xc] sm:$0xf]
      %v4642 = vld [vmem:[%s1959 + $0x10] sm:$0xf]
      %v4643 = vld [vmem:[%s1959 + $0x14] sm:$0xf]
      %v4644 = vld [vmem:[%s1959 + $0x18] sm:$0xf]
      %v4645 = vld [vmem:[%s1959 + $0x1c] sm:$0xf]
      %v4646 = vld [vmem:[%s1959 + $0x20] sm:$0xf]
      %v4647 = vld [vmem:[%s1959 + $0x24] sm:$0xf]
      %v4648 = vld [vmem:[%s1959 + $0x28] sm:$0xf]
      %v4649 = vld [vmem:[%s1959 + $0x2c] sm:$0xf]
      %v4650 = vld [vmem:[%s1959 + $0x30] sm:$0xf]
      %v4651 = vld [vmem:[%s1959 + $0x34] sm:$0xf]
      %v4652 = vld [vmem:[%s1959 + $0x38] sm:$0xf]
      %v4653 = vld [vmem:[%s1959 + $0x3c] sm:$0xf]
      %v4670 = vunpack.c.l.b16 %v4622
      %v4671 = vunpack.c.l.b16 %v4623
      %v4672 = vunpack.c.l.b16 %v4624
      %v4673 = vunpack.c.l.b16 %v4625
      %v4674 = vunpack.c.l.b16 %v4626
      %v4675 = vunpack.c.l.b16 %v4627
      %v4676 = vunpack.c.l.b16 %v4628
      %v4677 = vunpack.c.l.b16 %v4629
      %v4678 = vunpack.c.l.b16 %v4630
      %v4679 = vunpack.c.l.b16 %v4631
      %v4680 = vunpack.c.l.b16 %v4632
      %v4681 = vunpack.c.l.b16 %v4633
      %v4682 = vunpack.c.l.b16 %v4634
      %v4683 = vunpack.c.l.b16 %v4635
      %v4684 = vunpack.c.l.b16 %v4636
      %v4685 = vunpack.c.l.b16 %v4637
      %v4686 = vpack.c.b16 %v4671, %v4670
      %v4687 = vpack.c.b16 %v4673, %v4672
      %v4688 = vpack.c.b16 %v4675, %v4674
      %v4689 = vpack.c.b16 %v4677, %v4676
      %v4690 = vpack.c.b16 %v4679, %v4678
      %v4691 = vpack.c.b16 %v4681, %v4680
      %v4692 = vpack.c.b16 %v4683, %v4682
      %v4693 = vpack.c.b16 %v4685, %v4684
      %v4718 = vunpack.c.l.b16 %v4638
      %v4719 = vunpack.c.l.b16 %v4639
      %v4720 = vunpack.c.l.b16 %v4640
      %v4721 = vunpack.c.l.b16 %v4641
      %v4722 = vunpack.c.l.b16 %v4642
      %v4723 = vunpack.c.l.b16 %v4643
      %v4724 = vunpack.c.l.b16 %v4644
      %v4725 = vunpack.c.l.b16 %v4645
      %v4726 = vunpack.c.l.b16 %v4646
      %v4727 = vunpack.c.l.b16 %v4647
      %v4728 = vunpack.c.l.b16 %v4648
      %v4729 = vunpack.c.l.b16 %v4649
      %v4730 = vunpack.c.l.b16 %v4650
      %v4731 = vunpack.c.l.b16 %v4651
      %v4732 = vunpack.c.l.b16 %v4652
      %v4733 = vunpack.c.l.b16 %v4653
      %v4734 = vpack.c.b16 %v4719, %v4718
      %v4735 = vpack.c.b16 %v4721, %v4720
      %v4736 = vpack.c.b16 %v4723, %v4722
      %v4737 = vpack.c.b16 %v4725, %v4724
      %v4738 = vpack.c.b16 %v4727, %v4726
      %v4739 = vpack.c.b16 %v4729, %v4728
      %v4740 = vpack.c.b16 %v4731, %v4730
      %v4741 = vpack.c.b16 %v4733, %v4732
      %4750 = vmatpush.bf16.msra.mxu0 %v4741
      %4751 = vmatpush.bf16.msra.mxu0 %v4740
      %4752 = vmatpush.bf16.msra.mxu0 %v4739
      %4753 = vmatpush.bf16.msra.mxu0 %v4738
      %4754 = vmatpush.bf16.msra.mxu0 %v4737
      %4755 = vmatpush.bf16.msra.mxu0 %v4736
      %4756 = vmatpush.bf16.msra.mxu0 %v4735
      %4757 = vmatpush.bf16.msra.mxu0 %v4734
      %4758 = vmatmul.bf16.gmra.mxu0 %v4686
      %v4759 = vpop.f32.mrf.mxu0
      %v4760 = vadd.f32 0.0, %v4759
      %v4761 = vpop.f32.mrf.mxu0
      %v4762 = vadd.f32 0.0, %v4761
      %4763 = vmatmul.bf16.gmra.mxu0 %v4687
      %v4764 = vpop.f32.mrf.mxu0
      %v4765 = vadd.f32 0.0, %v4764
      %v4766 = vpop.f32.mrf.mxu0
      %v4767 = vadd.f32 0.0, %v4766
      %4768 = vmatmul.bf16.gmra.mxu0 %v4688
      %v4769 = vpop.f32.mrf.mxu0
      %v4770 = vadd.f32 0.0, %v4769
      %v4771 = vpop.f32.mrf.mxu0
      %v4772 = vadd.f32 0.0, %v4771
      %4773 = vmatmul.bf16.gmra.mxu0 %v4689
      %v4774 = vpop.f32.mrf.mxu0
      %v4775 = vadd.f32 0.0, %v4774
      %v4776 = vpop.f32.mrf.mxu0
      %v4777 = vadd.f32 0.0, %v4776
      %4778 = vmatmul.bf16.gmra.mxu0 %v4690
      %v4779 = vpop.f32.mrf.mxu0
      %v4780 = vadd.f32 0.0, %v4779
      %v4781 = vpop.f32.mrf.mxu0
      %v4782 = vadd.f32 0.0, %v4781
      %4783 = vmatmul.bf16.gmra.mxu0 %v4691
      %v4784 = vpop.f32.mrf.mxu0
      %v4785 = vadd.f32 0.0, %v4784
      %v4786 = vpop.f32.mrf.mxu0
      %v4787 = vadd.f32 0.0, %v4786
      %4788 = vmatmul.bf16.gmra.mxu0 %v4692
      %v4789 = vpop.f32.mrf.mxu0
      %v4790 = vadd.f32 0.0, %v4789
      %v4791 = vpop.f32.mrf.mxu0
      %v4792 = vadd.f32 0.0, %v4791
      %4793 = vmatmul.bf16.gmra.mxu0 %v4693
      %v4794 = vpop.f32.mrf.mxu0
      %v4795 = vadd.f32 0.0, %v4794
      %v4796 = vpop.f32.mrf.mxu0
      %v4797 = vadd.f32 0.0, %v4796
      %4798 = vdwg.mxu0
      %v4799 = vadd.f32 %v4605, %v4760
      %v4800 = vadd.f32 %v4606, %v4762
      %v4801 = vadd.f32 %v4607, %v4765
      %v4802 = vadd.f32 %v4608, %v4767
      %v4803 = vadd.f32 %v4609, %v4770
      %v4804 = vadd.f32 %v4610, %v4772
      %v4805 = vadd.f32 %v4611, %v4775
      %v4806 = vadd.f32 %v4612, %v4777
      %v4807 = vadd.f32 %v4613, %v4780
      %v4808 = vadd.f32 %v4614, %v4782
      %v4809 = vadd.f32 %v4615, %v4785
      %v4810 = vadd.f32 %v4616, %v4787
      %v4811 = vadd.f32 %v4617, %v4790
      %v4812 = vadd.f32 %v4618, %v4792
      %v4813 = vadd.f32 %v4619, %v4795
      %v4814 = vadd.f32 %v4620, %v4797
      %v4815 = vld [vmem:[%s4621] sm:$0xf]
      %v4816 = vld [vmem:[%s4621 + $0x4] sm:$0xf]
      %v4817 = vld [vmem:[%s4621 + $0x8] sm:$0x1]
      %v4818 = vld [vmem:[%s4621 + $0xc] sm:$0xf]
      %v4819 = vld [vmem:[%s4621 + $0x10] sm:$0xf]
      %v4820 = vld [vmem:[%s4621 + $0x14] sm:$0x1]
      %v4821 = vld [vmem:[%s4621 + $0x18] sm:$0xf]
      %v4822 = vld [vmem:[%s4621 + $0x1c] sm:$0xf]
      %v4823 = vld [vmem:[%s4621 + $0x20] sm:$0x1]
      %v4824 = vld [vmem:[%s4621 + $0x24] sm:$0xf]
      %v4825 = vld [vmem:[%s4621 + $0x28] sm:$0xf]
      %v4826 = vld [vmem:[%s4621 + $0x2c] sm:$0x1]
      %v4827 = vld [vmem:[%s4621 + $0x30] sm:$0xf]
      %v4828 = vld [vmem:[%s4621 + $0x34] sm:$0xf]
      %v4829 = vld [vmem:[%s4621 + $0x38] sm:$0x1]
      %v4830 = vld [vmem:[%s4621 + $0x3c] sm:$0xf]
      %v4831 = vld [vmem:[%s4621 + $0x40] sm:$0xf]
      %v4832 = vld [vmem:[%s4621 + $0x44] sm:$0x1]
      %v4833 = vld [vmem:[%s4621 + $0x48] sm:$0xf]
      %v4834 = vld [vmem:[%s4621 + $0x4c] sm:$0xf]
      %v4835 = vld [vmem:[%s4621 + $0x50] sm:$0x1]
      %v4836 = vld [vmem:[%s4621 + $0x54] sm:$0xf]
      %v4837 = vld [vmem:[%s4621 + $0x58] sm:$0xf]
      %v4838 = vld [vmem:[%s4621 + $0x5c] sm:$0x1]
      %v4840 = vshrl.u32 %v4815, 16
      %v4842 = vrot.slane %v4840, 4
      %v4843 = vshll.u32 %v4815, 16
      %v4845 = vrot.slane %v4843, 5
      %v4846 = vor.u32 %v4842, %v4845
      %v4847 = vrot.slane %v4846, 4
      %v4849 = vshll.u32 %v4816, 16
      %v4851 = vrot.slane %v4849, 5
      %v4852 = vsel %vm390, %v4847, %v4851
      %v4853 = vshrl.u32 %v4816, 16
      %v4855 = vrot.slane %v4853, 4
      %v4856 = vor.u32 %v4855, %v4851
      %v4857 = vrot.slane %v4856, 4
      %v4859 = vshll.u32 %v4817, 16
      %v4861 = vrot.slane %v4859, 5
      %v4862 = vsel %vm390, %v4857, %v4861
      %v4864 = vshrl.u32 %v4818, 16
      %v4866 = vrot.slane %v4864, 4
      %v4867 = vshll.u32 %v4818, 16
      %v4869 = vrot.slane %v4867, 5
      %v4870 = vor.u32 %v4866, %v4869
      %v4871 = vrot.slane %v4870, 4
      %v4873 = vshll.u32 %v4819, 16
      %v4875 = vrot.slane %v4873, 5
      %v4876 = vsel %vm390, %v4871, %v4875
      %v4877 = vshrl.u32 %v4819, 16
      %v4879 = vrot.slane %v4877, 4
      %v4880 = vor.u32 %v4879, %v4875
      %v4881 = vrot.slane %v4880, 4
      %v4883 = vshll.u32 %v4820, 16
      %v4885 = vrot.slane %v4883, 5
      %v4886 = vsel %vm390, %v4881, %v4885
      %v4888 = vshrl.u32 %v4821, 16
      %v4890 = vrot.slane %v4888, 4
      %v4891 = vshll.u32 %v4821, 16
      %v4893 = vrot.slane %v4891, 5
      %v4894 = vor.u32 %v4890, %v4893
      %v4895 = vrot.slane %v4894, 4
      %v4897 = vshll.u32 %v4822, 16
      %v4899 = vrot.slane %v4897, 5
      %v4900 = vsel %vm390, %v4895, %v4899
      %v4901 = vshrl.u32 %v4822, 16
      %v4903 = vrot.slane %v4901, 4
      %v4904 = vor.u32 %v4903, %v4899
      %v4905 = vrot.slane %v4904, 4
      %v4907 = vshll.u32 %v4823, 16
      %v4909 = vrot.slane %v4907, 5
      %v4910 = vsel %vm390, %v4905, %v4909
      %v4912 = vshrl.u32 %v4824, 16
      %v4914 = vrot.slane %v4912, 4
      %v4915 = vshll.u32 %v4824, 16
      %v4917 = vrot.slane %v4915, 5
      %v4918 = vor.u32 %v4914, %v4917
      %v4919 = vrot.slane %v4918, 4
      %v4921 = vshll.u32 %v4825, 16
      %v4923 = vrot.slane %v4921, 5
      %v4924 = vsel %vm390, %v4919, %v4923
      %v4925 = vshrl.u32 %v4825, 16
      %v4927 = vrot.slane %v4925, 4
      %v4928 = vor.u32 %v4927, %v4923
      %v4929 = vrot.slane %v4928, 4
      %v4931 = vshll.u32 %v4826, 16
      %v4933 = vrot.slane %v4931, 5
      %v4934 = vsel %vm390, %v4929, %v4933
      %v4936 = vshrl.u32 %v4827, 16
      %v4938 = vrot.slane %v4936, 4
      %v4939 = vshll.u32 %v4827, 16
      %v4941 = vrot.slane %v4939, 5
      %v4942 = vor.u32 %v4938, %v4941
      %v4943 = vrot.slane %v4942, 4
      %v4945 = vshll.u32 %v4828, 16
      %v4947 = vrot.slane %v4945, 5
      %v4948 = vsel %vm390, %v4943, %v4947
      %v4949 = vshrl.u32 %v4828, 16
      %v4951 = vrot.slane %v4949, 4
      %v4952 = vor.u32 %v4951, %v4947
      %v4953 = vrot.slane %v4952, 4
      %v4955 = vshll.u32 %v4829, 16
      %v4957 = vrot.slane %v4955, 5
      %v4958 = vsel %vm390, %v4953, %v4957
      %v4960 = vshrl.u32 %v4830, 16
      %v4962 = vrot.slane %v4960, 4
      %v4963 = vshll.u32 %v4830, 16
      %v4965 = vrot.slane %v4963, 5
      %v4966 = vor.u32 %v4962, %v4965
      %v4967 = vrot.slane %v4966, 4
      %v4969 = vshll.u32 %v4831, 16
      %v4971 = vrot.slane %v4969, 5
      %v4972 = vsel %vm390, %v4967, %v4971
      %v4973 = vshrl.u32 %v4831, 16
      %v4975 = vrot.slane %v4973, 4
      %v4976 = vor.u32 %v4975, %v4971
      %v4977 = vrot.slane %v4976, 4
      %v4979 = vshll.u32 %v4832, 16
      %v4981 = vrot.slane %v4979, 5
      %v4982 = vsel %vm390, %v4977, %v4981
      %v4984 = vshrl.u32 %v4833, 16
      %v4986 = vrot.slane %v4984, 4
      %v4987 = vshll.u32 %v4833, 16
      %v4989 = vrot.slane %v4987, 5
      %v4990 = vor.u32 %v4986, %v4989
      %v4991 = vrot.slane %v4990, 4
      %v4993 = vshll.u32 %v4834, 16
      %v4995 = vrot.slane %v4993, 5
      %v4996 = vsel %vm390, %v4991, %v4995
      %v4997 = vshrl.u32 %v4834, 16
      %v4999 = vrot.slane %v4997, 4
      %v5000 = vor.u32 %v4999, %v4995
      %v5001 = vrot.slane %v5000, 4
      %v5003 = vshll.u32 %v4835, 16
      %v5005 = vrot.slane %v5003, 5
      %v5006 = vsel %vm390, %v5001, %v5005
      %v5008 = vshrl.u32 %v4836, 16
      %v5010 = vrot.slane %v5008, 4
      %v5011 = vshll.u32 %v4836, 16
      %v5013 = vrot.slane %v5011, 5
      %v5014 = vor.u32 %v5010, %v5013
      %v5015 = vrot.slane %v5014, 4
      %v5017 = vshll.u32 %v4837, 16
      %v5019 = vrot.slane %v5017, 5
      %v5020 = vsel %vm390, %v5015, %v5019
      %v5021 = vshrl.u32 %v4837, 16
      %v5023 = vrot.slane %v5021, 4
      %v5024 = vor.u32 %v5023, %v5019
      %v5025 = vrot.slane %v5024, 4
      %v5027 = vshll.u32 %v4838, 16
      %v5029 = vrot.slane %v5027, 5
      %v5030 = vsel %vm390, %v5025, %v5029
      %v5031 = vld [vmem:[%s2353] sm:$0xf]
      %v5032 = vld [vmem:[%s2353 + $0x4] sm:$0xf]
      %v5033 = vld [vmem:[%s2353 + $0x8] sm:$0xf]
      %v5034 = vld [vmem:[%s2353 + $0xc] sm:$0xf]
      %v5035 = vld [vmem:[%s2353 + $0x10] sm:$0xf]
      %v5036 = vld [vmem:[%s2353 + $0x14] sm:$0xf]
      %v5037 = vld [vmem:[%s2353 + $0x18] sm:$0xf]
      %v5038 = vld [vmem:[%s2353 + $0x1c] sm:$0xf]
      %v5039 = vld [vmem:[%s2353 + $0x20] sm:$0xf]
      %v5040 = vld [vmem:[%s2353 + $0x24] sm:$0xf]
      %v5041 = vld [vmem:[%s2353 + $0x28] sm:$0xf]
      %v5042 = vld [vmem:[%s2353 + $0x2c] sm:$0xf]
      %v5043 = vld [vmem:[%s2353 + $0x30] sm:$0xf]
      %v5044 = vld [vmem:[%s2353 + $0x34] sm:$0xf]
      %v5045 = vld [vmem:[%s2353 + $0x38] sm:$0xf]
      %v5046 = vld [vmem:[%s2353 + $0x3c] sm:$0xf]
      %v5047 = vunpack.c.l.b16 %v4852
      %v5048 = vunpack.c.l.b16 %v4862
      %v5049 = vunpack.c.l.b16 %v4876
      %v5050 = vunpack.c.l.b16 %v4886
      %v5051 = vunpack.c.l.b16 %v4900
      %v5052 = vunpack.c.l.b16 %v4910
      %v5053 = vunpack.c.l.b16 %v4924
      %v5054 = vunpack.c.l.b16 %v4934
      %v5055 = vunpack.c.l.b16 %v4948
      %v5056 = vunpack.c.l.b16 %v4958
      %v5057 = vunpack.c.l.b16 %v4972
      %v5058 = vunpack.c.l.b16 %v4982
      %v5059 = vunpack.c.l.b16 %v4996
      %v5060 = vunpack.c.l.b16 %v5006
      %v5061 = vunpack.c.l.b16 %v5020
      %v5062 = vunpack.c.l.b16 %v5030
      %v5063 = vpack.c.b16 %v5048, %v5047
      %v5064 = vpack.c.b16 %v5050, %v5049
      %v5065 = vpack.c.b16 %v5052, %v5051
      %v5066 = vpack.c.b16 %v5054, %v5053
      %v5067 = vpack.c.b16 %v5056, %v5055
      %v5068 = vpack.c.b16 %v5058, %v5057
      %v5069 = vpack.c.b16 %v5060, %v5059
      %v5070 = vpack.c.b16 %v5062, %v5061
      %v5095 = vunpack.c.l.b16 %v5031
      %v5096 = vunpack.c.l.b16 %v5032
      %v5097 = vunpack.c.l.b16 %v5033
      %v5098 = vunpack.c.l.b16 %v5034
      %v5099 = vunpack.c.l.b16 %v5035
      %v5100 = vunpack.c.l.b16 %v5036
      %v5101 = vunpack.c.l.b16 %v5037
      %v5102 = vunpack.c.l.b16 %v5038
      %v5103 = vunpack.c.l.b16 %v5039
      %v5104 = vunpack.c.l.b16 %v5040
      %v5105 = vunpack.c.l.b16 %v5041
      %v5106 = vunpack.c.l.b16 %v5042
      %v5107 = vunpack.c.l.b16 %v5043
      %v5108 = vunpack.c.l.b16 %v5044
      %v5109 = vunpack.c.l.b16 %v5045
      %v5110 = vunpack.c.l.b16 %v5046
      %v5111 = vpack.c.b16 %v5096, %v5095
      %v5112 = vpack.c.b16 %v5098, %v5097
      %v5113 = vpack.c.b16 %v5100, %v5099
      %v5114 = vpack.c.b16 %v5102, %v5101
      %v5115 = vpack.c.b16 %v5104, %v5103
      %v5116 = vpack.c.b16 %v5106, %v5105
      %v5117 = vpack.c.b16 %v5108, %v5107
      %v5118 = vpack.c.b16 %v5110, %v5109
      %5127 = vmatpush.bf16.msra.mxu0 %v5118
      %5128 = vmatpush.bf16.msra.mxu0 %v5117
      %5129 = vmatpush.bf16.msra.mxu0 %v5116
      %5130 = vmatpush.bf16.msra.mxu0 %v5115
      %5131 = vmatpush.bf16.msra.mxu0 %v5114
      %5132 = vmatpush.bf16.msra.mxu0 %v5113
      %5133 = vmatpush.bf16.msra.mxu0 %v5112
      %5134 = vmatpush.bf16.msra.mxu0 %v5111
      %5135 = vmatmul.bf16.gmra.mxu0 %v5063
      %v5136 = vpop.f32.mrf.mxu0
      %v5137 = vadd.f32 0.0, %v5136
      %v5138 = vpop.f32.mrf.mxu0
      %v5139 = vadd.f32 0.0, %v5138
      %5140 = vmatmul.bf16.gmra.mxu0 %v5064
      %v5141 = vpop.f32.mrf.mxu0
      %v5142 = vadd.f32 0.0, %v5141
      %v5143 = vpop.f32.mrf.mxu0
      %v5144 = vadd.f32 0.0, %v5143
      %5145 = vmatmul.bf16.gmra.mxu0 %v5065
      %v5146 = vpop.f32.mrf.mxu0
      %v5147 = vadd.f32 0.0, %v5146
      %v5148 = vpop.f32.mrf.mxu0
      %v5149 = vadd.f32 0.0, %v5148
      %5150 = vmatmul.bf16.gmra.mxu0 %v5066
      %v5151 = vpop.f32.mrf.mxu0
      %v5152 = vadd.f32 0.0, %v5151
      %v5153 = vpop.f32.mrf.mxu0
      %v5154 = vadd.f32 0.0, %v5153
      %5155 = vmatmul.bf16.gmra.mxu0 %v5067
      %v5156 = vpop.f32.mrf.mxu0
      %v5157 = vadd.f32 0.0, %v5156
      %v5158 = vpop.f32.mrf.mxu0
      %v5159 = vadd.f32 0.0, %v5158
      %5160 = vmatmul.bf16.gmra.mxu0 %v5068
      %v5161 = vpop.f32.mrf.mxu0
      %v5162 = vadd.f32 0.0, %v5161
      %v5163 = vpop.f32.mrf.mxu0
      %v5164 = vadd.f32 0.0, %v5163
      %5165 = vmatmul.bf16.gmra.mxu0 %v5069
      %v5166 = vpop.f32.mrf.mxu0
      %v5167 = vadd.f32 0.0, %v5166
      %v5168 = vpop.f32.mrf.mxu0
      %v5169 = vadd.f32 0.0, %v5168
      %5170 = vmatmul.bf16.gmra.mxu0 %v5070
      %v5171 = vpop.f32.mrf.mxu0
      %v5172 = vadd.f32 0.0, %v5171
      %v5173 = vpop.f32.mrf.mxu0
      %v5174 = vadd.f32 0.0, %v5173
      %5175 = vdwg.mxu0
      %v5176 = vadd.f32 %v4799, %v5137
      %v5177 = vadd.f32 %v4800, %v5139
      %v5178 = vadd.f32 %v4801, %v5142
      %v5179 = vadd.f32 %v4802, %v5144
      %v5180 = vadd.f32 %v4803, %v5147
      %v5181 = vadd.f32 %v4804, %v5149
      %v5182 = vadd.f32 %v4805, %v5152
      %v5183 = vadd.f32 %v4806, %v5154
      %v5184 = vadd.f32 %v4807, %v5157
      %v5185 = vadd.f32 %v4808, %v5159
      %v5186 = vadd.f32 %v4809, %v5162
      %v5187 = vadd.f32 %v4810, %v5164
      %v5188 = vadd.f32 %v4811, %v5167
      %v5189 = vadd.f32 %v4812, %v5169
      %v5190 = vadd.f32 %v4813, %v5172
      %v5191 = vadd.f32 %v4814, %v5174
      %v5192 = vld [vmem:[%s4621] sm:$0xe]
      %v5193 = vld [vmem:[%s4621 + $0xc] sm:$0xe]
      %v5194 = vld [vmem:[%s4621 + $0x18] sm:$0xe]
      %v5195 = vld [vmem:[%s4621 + $0x24] sm:$0xe]
      %v5196 = vld [vmem:[%s4621 + $0x30] sm:$0xe]
      %v5197 = vld [vmem:[%s4621 + $0x3c] sm:$0xe]
      %v5198 = vld [vmem:[%s4621 + $0x48] sm:$0xe]
      %v5199 = vld [vmem:[%s4621 + $0x54] sm:$0xe]
      %v5224 = vrot.slane %v5192, 5
      %v5225 = vrot.slane %v5224, 4
      %v5226 = vrot.slane %v4816, 5
      %v5227 = vsel %vm900, %v5225, %v5226
      %v5228 = vrot.slane %v5226, 4
      %v5229 = vrot.slane %v4817, 5
      %v5230 = vsel %vm900, %v5228, %v5229
      %v5231 = vrot.slane %v5193, 5
      %v5232 = vrot.slane %v5231, 4
      %v5233 = vrot.slane %v4819, 5
      %v5234 = vsel %vm900, %v5232, %v5233
      %v5235 = vrot.slane %v5233, 4
      %v5236 = vrot.slane %v4820, 5
      %v5237 = vsel %vm900, %v5235, %v5236
      %v5238 = vrot.slane %v5194, 5
      %v5239 = vrot.slane %v5238, 4
      %v5240 = vrot.slane %v4822, 5
      %v5241 = vsel %vm900, %v5239, %v5240
      %v5242 = vrot.slane %v5240, 4
      %v5243 = vrot.slane %v4823, 5
      %v5244 = vsel %vm900, %v5242, %v5243
      %v5245 = vrot.slane %v5195, 5
      %v5246 = vrot.slane %v5245, 4
      %v5247 = vrot.slane %v4825, 5
      %v5248 = vsel %vm900, %v5246, %v5247
      %v5249 = vrot.slane %v5247, 4
      %v5250 = vrot.slane %v4826, 5
      %v5251 = vsel %vm900, %v5249, %v5250
      %v5252 = vrot.slane %v5196, 5
      %v5253 = vrot.slane %v5252, 4
      %v5254 = vrot.slane %v4828, 5
      %v5255 = vsel %vm900, %v5253, %v5254
      %v5256 = vrot.slane %v5254, 4
      %v5257 = vrot.slane %v4829, 5
      %v5258 = vsel %vm900, %v5256, %v5257
      %v5259 = vrot.slane %v5197, 5
      %v5260 = vrot.slane %v5259, 4
      %v5261 = vrot.slane %v4831, 5
      %v5262 = vsel %vm900, %v5260, %v5261
      %v5263 = vrot.slane %v5261, 4
      %v5264 = vrot.slane %v4832, 5
      %v5265 = vsel %vm900, %v5263, %v5264
      %v5266 = vrot.slane %v5198, 5
      %v5267 = vrot.slane %v5266, 4
      %v5268 = vrot.slane %v4834, 5
      %v5269 = vsel %vm900, %v5267, %v5268
      %v5270 = vrot.slane %v5268, 4
      %v5271 = vrot.slane %v4835, 5
      %v5272 = vsel %vm900, %v5270, %v5271
      %v5273 = vrot.slane %v5199, 5
      %v5274 = vrot.slane %v5273, 4
      %v5275 = vrot.slane %v4837, 5
      %v5276 = vsel %vm900, %v5274, %v5275
      %v5277 = vrot.slane %v5275, 4
      %v5278 = vrot.slane %v4838, 5
      %v5279 = vsel %vm900, %v5277, %v5278
      %v5280 = vld [vmem:[%s2603] sm:$0xf]
      %v5281 = vld [vmem:[%s2603 + $0x4] sm:$0xf]
      %v5282 = vld [vmem:[%s2603 + $0x8] sm:$0xf]
      %v5283 = vld [vmem:[%s2603 + $0xc] sm:$0xf]
      %v5284 = vld [vmem:[%s2603 + $0x10] sm:$0xf]
      %v5285 = vld [vmem:[%s2603 + $0x14] sm:$0xf]
      %v5286 = vld [vmem:[%s2603 + $0x18] sm:$0xf]
      %v5287 = vld [vmem:[%s2603 + $0x1c] sm:$0xf]
      %v5288 = vld [vmem:[%s2603 + $0x20] sm:$0xf]
      %v5289 = vld [vmem:[%s2603 + $0x24] sm:$0xf]
      %v5290 = vld [vmem:[%s2603 + $0x28] sm:$0xf]
      %v5291 = vld [vmem:[%s2603 + $0x2c] sm:$0xf]
      %v5292 = vld [vmem:[%s2603 + $0x30] sm:$0xf]
      %v5293 = vld [vmem:[%s2603 + $0x34] sm:$0xf]
      %v5294 = vld [vmem:[%s2603 + $0x38] sm:$0xf]
      %v5295 = vld [vmem:[%s2603 + $0x3c] sm:$0xf]
      %v5296 = vunpack.c.l.b16 %v5227
      %v5297 = vunpack.c.l.b16 %v5230
      %v5298 = vunpack.c.l.b16 %v5234
      %v5299 = vunpack.c.l.b16 %v5237
      %v5300 = vunpack.c.l.b16 %v5241
      %v5301 = vunpack.c.l.b16 %v5244
      %v5302 = vunpack.c.l.b16 %v5248
      %v5303 = vunpack.c.l.b16 %v5251
      %v5304 = vunpack.c.l.b16 %v5255
      %v5305 = vunpack.c.l.b16 %v5258
      %v5306 = vunpack.c.l.b16 %v5262
      %v5307 = vunpack.c.l.b16 %v5265
      %v5308 = vunpack.c.l.b16 %v5269
      %v5309 = vunpack.c.l.b16 %v5272
      %v5310 = vunpack.c.l.b16 %v5276
      %v5311 = vunpack.c.l.b16 %v5279
      %v5312 = vpack.c.b16 %v5297, %v5296
      %v5313 = vpack.c.b16 %v5299, %v5298
      %v5314 = vpack.c.b16 %v5301, %v5300
      %v5315 = vpack.c.b16 %v5303, %v5302
      %v5316 = vpack.c.b16 %v5305, %v5304
      %v5317 = vpack.c.b16 %v5307, %v5306
      %v5318 = vpack.c.b16 %v5309, %v5308
      %v5319 = vpack.c.b16 %v5311, %v5310
      %v5344 = vunpack.c.l.b16 %v5280
      %v5345 = vunpack.c.l.b16 %v5281
      %v5346 = vunpack.c.l.b16 %v5282
      %v5347 = vunpack.c.l.b16 %v5283
      %v5348 = vunpack.c.l.b16 %v5284
      %v5349 = vunpack.c.l.b16 %v5285
      %v5350 = vunpack.c.l.b16 %v5286
      %v5351 = vunpack.c.l.b16 %v5287
      %v5352 = vunpack.c.l.b16 %v5288
      %v5353 = vunpack.c.l.b16 %v5289
      %v5354 = vunpack.c.l.b16 %v5290
      %v5355 = vunpack.c.l.b16 %v5291
      %v5356 = vunpack.c.l.b16 %v5292
      %v5357 = vunpack.c.l.b16 %v5293
      %v5358 = vunpack.c.l.b16 %v5294
      %v5359 = vunpack.c.l.b16 %v5295
      %v5360 = vpack.c.b16 %v5345, %v5344
      %v5361 = vpack.c.b16 %v5347, %v5346
      %v5362 = vpack.c.b16 %v5349, %v5348
      %v5363 = vpack.c.b16 %v5351, %v5350
      %v5364 = vpack.c.b16 %v5353, %v5352
      %v5365 = vpack.c.b16 %v5355, %v5354
      %v5366 = vpack.c.b16 %v5357, %v5356
      %v5367 = vpack.c.b16 %v5359, %v5358
      %5376 = vmatpush.bf16.msra.mxu0 %v5367
      %5377 = vmatpush.bf16.msra.mxu0 %v5366
      %5378 = vmatpush.bf16.msra.mxu0 %v5365
      %5379 = vmatpush.bf16.msra.mxu0 %v5364
      %5380 = vmatpush.bf16.msra.mxu0 %v5363
      %5381 = vmatpush.bf16.msra.mxu0 %v5362
      %5382 = vmatpush.bf16.msra.mxu0 %v5361
      %5383 = vmatpush.bf16.msra.mxu0 %v5360
      %5384 = vmatmul.bf16.gmra.mxu0 %v5312
      %v5385 = vpop.f32.mrf.mxu0
      %v5386 = vadd.f32 0.0, %v5385
      %v5387 = vpop.f32.mrf.mxu0
      %v5388 = vadd.f32 0.0, %v5387
      %5389 = vmatmul.bf16.gmra.mxu0 %v5313
      %v5390 = vpop.f32.mrf.mxu0
      %v5391 = vadd.f32 0.0, %v5390
      %v5392 = vpop.f32.mrf.mxu0
      %v5393 = vadd.f32 0.0, %v5392
      %5394 = vmatmul.bf16.gmra.mxu0 %v5314
      %v5395 = vpop.f32.mrf.mxu0
      %v5396 = vadd.f32 0.0, %v5395
      %v5397 = vpop.f32.mrf.mxu0
      %v5398 = vadd.f32 0.0, %v5397
      %5399 = vmatmul.bf16.gmra.mxu0 %v5315
      %v5400 = vpop.f32.mrf.mxu0
      %v5401 = vadd.f32 0.0, %v5400
      %v5402 = vpop.f32.mrf.mxu0
      %v5403 = vadd.f32 0.0, %v5402
      %5404 = vmatmul.bf16.gmra.mxu0 %v5316
      %v5405 = vpop.f32.mrf.mxu0
      %v5406 = vadd.f32 0.0, %v5405
      %v5407 = vpop.f32.mrf.mxu0
      %v5408 = vadd.f32 0.0, %v5407
      %5409 = vmatmul.bf16.gmra.mxu0 %v5317
      %v5410 = vpop.f32.mrf.mxu0
      %v5411 = vadd.f32 0.0, %v5410
      %v5412 = vpop.f32.mrf.mxu0
      %v5413 = vadd.f32 0.0, %v5412
      %5414 = vmatmul.bf16.gmra.mxu0 %v5318
      %v5415 = vpop.f32.mrf.mxu0
      %v5416 = vadd.f32 0.0, %v5415
      %v5417 = vpop.f32.mrf.mxu0
      %v5418 = vadd.f32 0.0, %v5417
      %5419 = vmatmul.bf16.gmra.mxu0 %v5319
      %v5420 = vpop.f32.mrf.mxu0
      %v5421 = vadd.f32 0.0, %v5420
      %v5422 = vpop.f32.mrf.mxu0
      %v5423 = vadd.f32 0.0, %v5422
      %5424 = vdwg.mxu0
      %v5425 = vadd.f32 %v5176, %v5386
      %v5426 = vadd.f32 %v5177, %v5388
      %v5427 = vadd.f32 %v5178, %v5391
      %v5428 = vadd.f32 %v5179, %v5393
      %v5429 = vadd.f32 %v5180, %v5396
      %v5430 = vadd.f32 %v5181, %v5398
      %v5431 = vadd.f32 %v5182, %v5401
      %v5432 = vadd.f32 %v5183, %v5403
      %v5433 = vadd.f32 %v5184, %v5406
      %v5434 = vadd.f32 %v5185, %v5408
      %v5435 = vadd.f32 %v5186, %v5411
      %v5436 = vadd.f32 %v5187, %v5413
      %v5437 = vadd.f32 %v5188, %v5416
      %v5438 = vadd.f32 %v5189, %v5418
      %v5439 = vadd.f32 %v5190, %v5421
      %v5440 = vadd.f32 %v5191, %v5423
      %v5441 = vadd.f32 %v5425, %v2766
      %v5442 = vadd.f32 %v5426, %v2766
      %v5443 = vadd.f32 %v5427, %v2766
      %v5444 = vadd.f32 %v5428, %v2766
      %v5445 = vadd.f32 %v5429, %v2766
      %v5446 = vadd.f32 %v5430, %v2766
      %v5447 = vadd.f32 %v5431, %v2766
      %v5448 = vadd.f32 %v5432, %v2766
      %v5449 = vadd.f32 %v5433, %v2766
      %v5450 = vadd.f32 %v5434, %v2766
      %v5451 = vadd.f32 %v5435, %v2766
      %v5452 = vadd.f32 %v5436, %v2766
      %v5453 = vadd.f32 %v5437, %v2766
      %v5454 = vadd.f32 %v5438, %v2766
      %v5455 = vadd.f32 %v5439, %v2766
      %v5456 = vadd.f32 %v5440, %v2766
      %v5457 = vmax.f32 %v5441, 0.0
      %v5458 = vmax.f32 %v5442, 0.0
      %v5459 = vmax.f32 %v5443, 0.0
      %v5460 = vmax.f32 %v5444, 0.0
      %v5461 = vmax.f32 %v5445, 0.0
      %v5462 = vmax.f32 %v5446, 0.0
      %v5463 = vmax.f32 %v5447, 0.0
      %v5464 = vmax.f32 %v5448, 0.0
      %v5465 = vmax.f32 %v5449, 0.0
      %v5466 = vmax.f32 %v5450, 0.0
      %v5467 = vmax.f32 %v5451, 0.0
      %v5468 = vmax.f32 %v5452, 0.0
      %v5469 = vmax.f32 %v5453, 0.0
      %v5470 = vmax.f32 %v5454, 0.0
      %v5471 = vmax.f32 %v5455, 0.0
      %v5472 = vmax.f32 %v5456, 0.0
      %v5473 = vpack.c.bf16 %v5457, %v5457
      %v5474 = vpack.c.bf16 %v5458, %v5458
      %v5475 = vpack.c.bf16 %v5459, %v5459
      %v5476 = vpack.c.bf16 %v5460, %v5460
      %v5477 = vpack.c.bf16 %v5461, %v5461
      %v5478 = vpack.c.bf16 %v5462, %v5462
      %v5479 = vpack.c.bf16 %v5463, %v5463
      %v5480 = vpack.c.bf16 %v5464, %v5464
      %v5481 = vpack.c.bf16 %v5465, %v5465
      %v5482 = vpack.c.bf16 %v5466, %v5466
      %v5483 = vpack.c.bf16 %v5467, %v5467
      %v5484 = vpack.c.bf16 %v5468, %v5468
      %v5485 = vpack.c.bf16 %v5469, %v5469
      %v5486 = vpack.c.bf16 %v5470, %v5470
      %v5487 = vpack.c.bf16 %v5471, %v5471
      %v5488 = vpack.c.bf16 %v5472, %v5472
      %v5490 = vshrl.u32 %v5473, 16
      %v5492 = vrot.slane %v5490, 7
      %v5493 = vshll.u32 %v5473, 16
      %v5495 = vor.u32 %v5492, %v5493
      %v5496 = vrot.slane %v5492, 4
      %v5498 = vshrl.u32 %v5474, 16
      %v5500 = vrot.slane %v5498, 7
      %v5501 = vshll.u32 %v5474, 16
      %v5503 = vor.u32 %v5500, %v5501
      %v5504 = vsel %vm2817, %v5496, %v5503
      %v5505 = vrot.slane %v5500, 4
      %v5507 = vshrl.u32 %v5475, 16
      %v5509 = vrot.slane %v5507, 7
      %v5510 = vshll.u32 %v5475, 16
      %v5512 = vor.u32 %v5509, %v5510
      %v5513 = vrot.slane %v5509, 4
      %v5515 = vshrl.u32 %v5476, 16
      %v5517 = vrot.slane %v5515, 7
      %v5518 = vshll.u32 %v5476, 16
      %v5520 = vor.u32 %v5517, %v5518
      %v5521 = vsel %vm2817, %v5513, %v5520
      %v5522 = vrot.slane %v5517, 4
      %v5524 = vshrl.u32 %v5477, 16
      %v5526 = vrot.slane %v5524, 7
      %v5527 = vshll.u32 %v5477, 16
      %v5529 = vor.u32 %v5526, %v5527
      %v5530 = vrot.slane %v5526, 4
      %v5532 = vshrl.u32 %v5478, 16
      %v5534 = vrot.slane %v5532, 7
      %v5535 = vshll.u32 %v5478, 16
      %v5537 = vor.u32 %v5534, %v5535
      %v5538 = vsel %vm2817, %v5530, %v5537
      %v5539 = vrot.slane %v5534, 4
      %v5541 = vshrl.u32 %v5479, 16
      %v5543 = vrot.slane %v5541, 7
      %v5544 = vshll.u32 %v5479, 16
      %v5546 = vor.u32 %v5543, %v5544
      %v5547 = vrot.slane %v5543, 4
      %v5549 = vshrl.u32 %v5480, 16
      %v5551 = vrot.slane %v5549, 7
      %v5552 = vshll.u32 %v5480, 16
      %v5554 = vor.u32 %v5551, %v5552
      %v5555 = vsel %vm2817, %v5547, %v5554
      %v5556 = vrot.slane %v5551, 4
      %v5558 = vshrl.u32 %v5481, 16
      %v5560 = vrot.slane %v5558, 7
      %v5561 = vshll.u32 %v5481, 16
      %v5563 = vor.u32 %v5560, %v5561
      %v5564 = vrot.slane %v5560, 4
      %v5566 = vshrl.u32 %v5482, 16
      %v5568 = vrot.slane %v5566, 7
      %v5569 = vshll.u32 %v5482, 16
      %v5571 = vor.u32 %v5568, %v5569
      %v5572 = vsel %vm2817, %v5564, %v5571
      %v5573 = vrot.slane %v5568, 4
      %v5575 = vshrl.u32 %v5483, 16
      %v5577 = vrot.slane %v5575, 7
      %v5578 = vshll.u32 %v5483, 16
      %v5580 = vor.u32 %v5577, %v5578
      %v5581 = vrot.slane %v5577, 4
      %v5583 = vshrl.u32 %v5484, 16
      %v5585 = vrot.slane %v5583, 7
      %v5586 = vshll.u32 %v5484, 16
      %v5588 = vor.u32 %v5585, %v5586
      %v5589 = vsel %vm2817, %v5581, %v5588
      %v5590 = vrot.slane %v5585, 4
      %v5592 = vshrl.u32 %v5485, 16
      %v5594 = vrot.slane %v5592, 7
      %v5595 = vshll.u32 %v5485, 16
      %v5597 = vor.u32 %v5594, %v5595
      %v5598 = vrot.slane %v5594, 4
      %v5600 = vshrl.u32 %v5486, 16
      %v5602 = vrot.slane %v5600, 7
      %v5603 = vshll.u32 %v5486, 16
      %v5605 = vor.u32 %v5602, %v5603
      %v5606 = vsel %vm2817, %v5598, %v5605
      %v5607 = vrot.slane %v5602, 4
      %v5609 = vshrl.u32 %v5487, 16
      %v5611 = vrot.slane %v5609, 7
      %v5612 = vshll.u32 %v5487, 16
      %v5614 = vor.u32 %v5611, %v5612
      %v5615 = vrot.slane %v5611, 4
      %v5617 = vshrl.u32 %v5488, 16
      %v5619 = vrot.slane %v5617, 7
      %v5620 = vshll.u32 %v5488, 16
      %v5622 = vor.u32 %v5619, %v5620
      %v5623 = vsel %vm2817, %v5615, %v5622
      %v5624 = vrot.slane %v5619, 4
      %s5649 = scalar_lea.vmem [#allocation2], 108
      %v5650 = vld [vmem:[%s5649] sm:$0xf]
      %v5651 = vsel %vm2980, %v5495, %v5650
      %5652 = vst [vmem:[%s5649] sm:$0xf] %v5651
      %5653 = vst [vmem:[%s5649 + $0x4] sm:$0xf] %v5504
      %v5654 = vld [vmem:[%s5649 + $0x8] sm:$0x1]
      %v5655 = vsel %vm235, %v5505, %v5654
      %5656 = vst [vmem:[%s5649 + $0x8] sm:$0x1] %v5655
      %v5657 = vld [vmem:[%s5649 + $0xc] sm:$0xf]
      %v5658 = vsel %vm2980, %v5512, %v5657
      %5659 = vst [vmem:[%s5649 + $0xc] sm:$0xf] %v5658
      %5660 = vst [vmem:[%s5649 + $0x10] sm:$0xf] %v5521
      %v5661 = vld [vmem:[%s5649 + $0x14] sm:$0x1]
      %v5662 = vsel %vm235, %v5522, %v5661
      %5663 = vst [vmem:[%s5649 + $0x14] sm:$0x1] %v5662
      %v5664 = vld [vmem:[%s5649 + $0x18] sm:$0xf]
      %v5665 = vsel %vm2980, %v5529, %v5664
      %5666 = vst [vmem:[%s5649 + $0x18] sm:$0xf] %v5665
      %5667 = vst [vmem:[%s5649 + $0x1c] sm:$0xf] %v5538
      %v5668 = vld [vmem:[%s5649 + $0x20] sm:$0x1]
      %v5669 = vsel %vm235, %v5539, %v5668
      %5670 = vst [vmem:[%s5649 + $0x20] sm:$0x1] %v5669
      %v5671 = vld [vmem:[%s5649 + $0x24] sm:$0xf]
      %v5672 = vsel %vm2980, %v5546, %v5671
      %5673 = vst [vmem:[%s5649 + $0x24] sm:$0xf] %v5672
      %5674 = vst [vmem:[%s5649 + $0x28] sm:$0xf] %v5555
      %v5675 = vld [vmem:[%s5649 + $0x2c] sm:$0x1]
      %v5676 = vsel %vm235, %v5556, %v5675
      %5677 = vst [vmem:[%s5649 + $0x2c] sm:$0x1] %v5676
      %v5678 = vld [vmem:[%s5649 + $0x30] sm:$0xf]
      %v5679 = vsel %vm2980, %v5563, %v5678
      %5680 = vst [vmem:[%s5649 + $0x30] sm:$0xf] %v5679
      %5681 = vst [vmem:[%s5649 + $0x34] sm:$0xf] %v5572
      %v5682 = vld [vmem:[%s5649 + $0x38] sm:$0x1]
      %v5683 = vsel %vm235, %v5573, %v5682
      %5684 = vst [vmem:[%s5649 + $0x38] sm:$0x1] %v5683
      %v5685 = vld [vmem:[%s5649 + $0x3c] sm:$0xf]
      %v5686 = vsel %vm2980, %v5580, %v5685
      %5687 = vst [vmem:[%s5649 + $0x3c] sm:$0xf] %v5686
      %5688 = vst [vmem:[%s5649 + $0x40] sm:$0xf] %v5589
      %v5689 = vld [vmem:[%s5649 + $0x44] sm:$0x1]
      %v5690 = vsel %vm235, %v5590, %v5689
      %5691 = vst [vmem:[%s5649 + $0x44] sm:$0x1] %v5690
      %v5692 = vld [vmem:[%s5649 + $0x48] sm:$0xf]
      %v5693 = vsel %vm2980, %v5597, %v5692
      %5694 = vst [vmem:[%s5649 + $0x48] sm:$0xf] %v5693
      %5695 = vst [vmem:[%s5649 + $0x4c] sm:$0xf] %v5606
      %v5696 = vld [vmem:[%s5649 + $0x50] sm:$0x1]
      %v5697 = vsel %vm235, %v5607, %v5696
      %5698 = vst [vmem:[%s5649 + $0x50] sm:$0x1] %v5697
      %v5699 = vld [vmem:[%s5649 + $0x54] sm:$0xf]
      %v5700 = vsel %vm2980, %v5614, %v5699
      %5701 = vst [vmem:[%s5649 + $0x54] sm:$0xf] %v5700
      %5702 = vst [vmem:[%s5649 + $0x58] sm:$0xf] %v5623
      %v5703 = vld [vmem:[%s5649 + $0x5c] sm:$0x1]
      %v5704 = vsel %vm235, %v5624, %v5703
      %5705 = vst [vmem:[%s5649 + $0x5c] sm:$0x1] %v5704
      %v5706 = vld [vmem:[#allocation2] sm:$0xf]
      %v5707 = vld [vmem:[#allocation2 + $0x4] sm:$0xf]
      %v5708 = vld [vmem:[#allocation2 + $0xc] sm:$0xf]
      %v5709 = vld [vmem:[#allocation2 + $0x10] sm:$0xf]
      %v5710 = vld [vmem:[#allocation2 + $0x18] sm:$0xf]
      %v5711 = vld [vmem:[#allocation2 + $0x1c] sm:$0xf]
      %v5712 = vld [vmem:[#allocation2 + $0x24] sm:$0xf]
      %v5713 = vld [vmem:[#allocation2 + $0x28] sm:$0xf]
      %v5714 = vld [vmem:[#allocation2 + $0x30] sm:$0xf]
      %v5715 = vld [vmem:[#allocation2 + $0x34] sm:$0xf]
      %v5716 = vld [vmem:[#allocation2 + $0x3c] sm:$0xf]
      %v5717 = vld [vmem:[#allocation2 + $0x40] sm:$0xf]
      %v5718 = vld [vmem:[#allocation2 + $0x48] sm:$0xf]
      %v5719 = vld [vmem:[#allocation2 + $0x4c] sm:$0xf]
      %v5720 = vld [vmem:[#allocation2 + $0x54] sm:$0xf]
      %v5721 = vld [vmem:[#allocation2 + $0x58] sm:$0xf]
      %v5722 = vld [vmem:[%s2] sm:$0xf]
      %v5723 = vld [vmem:[%s2 + $0x4] sm:$0xf]
      %v5724 = vld [vmem:[%s2 + $0x8] sm:$0xf]
      %v5725 = vld [vmem:[%s2 + $0xc] sm:$0xf]
      %v5726 = vld [vmem:[%s2 + $0x10] sm:$0xf]
      %v5727 = vld [vmem:[%s2 + $0x14] sm:$0xf]
      %v5728 = vld [vmem:[%s2 + $0x18] sm:$0xf]
      %v5729 = vld [vmem:[%s2 + $0x1c] sm:$0xf]
      %v5730 = vld [vmem:[%s2 + $0x20] sm:$0xf]
      %v5731 = vld [vmem:[%s2 + $0x24] sm:$0xf]
      %v5732 = vld [vmem:[%s2 + $0x28] sm:$0xf]
      %v5733 = vld [vmem:[%s2 + $0x2c] sm:$0xf]
      %v5734 = vld [vmem:[%s2 + $0x30] sm:$0xf]
      %v5735 = vld [vmem:[%s2 + $0x34] sm:$0xf]
      %v5736 = vld [vmem:[%s2 + $0x38] sm:$0xf]
      %v5737 = vld [vmem:[%s2 + $0x3c] sm:$0xf]
      %v5738 = vld [vmem:[#allocation2 + $0x8] sm:$0x1]
      %v5739 = vld [vmem:[#allocation2 + $0x14] sm:$0x1]
      %v5740 = vld [vmem:[#allocation2 + $0x20] sm:$0x1]
      %v5741 = vld [vmem:[#allocation2 + $0x2c] sm:$0x1]
      %v5742 = vld [vmem:[#allocation2 + $0x38] sm:$0x1]
      %v5743 = vld [vmem:[#allocation2 + $0x44] sm:$0x1]
      %v5744 = vld [vmem:[#allocation2 + $0x50] sm:$0x1]
      %v5745 = vld [vmem:[#allocation2 + $0x5c] sm:$0x1]
      %v5747 = vshrl.u32 %v5706, 16
      %v5749 = vrot.slane %v5747, 4
      %v5750 = vshll.u32 %v5706, 16
      %v5752 = vrot.slane %v5750, 5
      %v5753 = vor.u32 %v5749, %v5752
      %v5754 = vrot.slane %v5753, 4
      %v5756 = vshll.u32 %v5707, 16
      %v5758 = vrot.slane %v5756, 5
      %v5759 = vsel %vm390, %v5754, %v5758
      %v5760 = vshrl.u32 %v5707, 16
      %v5762 = vrot.slane %v5760, 4
      %v5763 = vor.u32 %v5762, %v5758
      %v5764 = vrot.slane %v5763, 4
      %v5766 = vshll.u32 %v5738, 16
      %v5768 = vrot.slane %v5766, 5
      %v5769 = vsel %vm390, %v5764, %v5768
      %v5771 = vshrl.u32 %v5708, 16
      %v5773 = vrot.slane %v5771, 4
      %v5774 = vshll.u32 %v5708, 16
      %v5776 = vrot.slane %v5774, 5
      %v5777 = vor.u32 %v5773, %v5776
      %v5778 = vrot.slane %v5777, 4
      %v5780 = vshll.u32 %v5709, 16
      %v5782 = vrot.slane %v5780, 5
      %v5783 = vsel %vm390, %v5778, %v5782
      %v5784 = vshrl.u32 %v5709, 16
      %v5786 = vrot.slane %v5784, 4
      %v5787 = vor.u32 %v5786, %v5782
      %v5788 = vrot.slane %v5787, 4
      %v5790 = vshll.u32 %v5739, 16
      %v5792 = vrot.slane %v5790, 5
      %v5793 = vsel %vm390, %v5788, %v5792
      %v5795 = vshrl.u32 %v5710, 16
      %v5797 = vrot.slane %v5795, 4
      %v5798 = vshll.u32 %v5710, 16
      %v5800 = vrot.slane %v5798, 5
      %v5801 = vor.u32 %v5797, %v5800
      %v5802 = vrot.slane %v5801, 4
      %v5804 = vshll.u32 %v5711, 16
      %v5806 = vrot.slane %v5804, 5
      %v5807 = vsel %vm390, %v5802, %v5806
      %v5808 = vshrl.u32 %v5711, 16
      %v5810 = vrot.slane %v5808, 4
      %v5811 = vor.u32 %v5810, %v5806
      %v5812 = vrot.slane %v5811, 4
      %v5814 = vshll.u32 %v5740, 16
      %v5816 = vrot.slane %v5814, 5
      %v5817 = vsel %vm390, %v5812, %v5816
      %v5819 = vshrl.u32 %v5712, 16
      %v5821 = vrot.slane %v5819, 4
      %v5822 = vshll.u32 %v5712, 16
      %v5824 = vrot.slane %v5822, 5
      %v5825 = vor.u32 %v5821, %v5824
      %v5826 = vrot.slane %v5825, 4
      %v5828 = vshll.u32 %v5713, 16
      %v5830 = vrot.slane %v5828, 5
      %v5831 = vsel %vm390, %v5826, %v5830
      %v5832 = vshrl.u32 %v5713, 16
      %v5834 = vrot.slane %v5832, 4
      %v5835 = vor.u32 %v5834, %v5830
      %v5836 = vrot.slane %v5835, 4
      %v5838 = vshll.u32 %v5741, 16
      %v5840 = vrot.slane %v5838, 5
      %v5841 = vsel %vm390, %v5836, %v5840
      %v5843 = vshrl.u32 %v5714, 16
      %v5845 = vrot.slane %v5843, 4
      %v5846 = vshll.u32 %v5714, 16
      %v5848 = vrot.slane %v5846, 5
      %v5849 = vor.u32 %v5845, %v5848
      %v5850 = vrot.slane %v5849, 4
      %v5852 = vshll.u32 %v5715, 16
      %v5854 = vrot.slane %v5852, 5
      %v5855 = vsel %vm390, %v5850, %v5854
      %v5856 = vshrl.u32 %v5715, 16
      %v5858 = vrot.slane %v5856, 4
      %v5859 = vor.u32 %v5858, %v5854
      %v5860 = vrot.slane %v5859, 4
      %v5862 = vshll.u32 %v5742, 16
      %v5864 = vrot.slane %v5862, 5
      %v5865 = vsel %vm390, %v5860, %v5864
      %v5867 = vshrl.u32 %v5716, 16
      %v5869 = vrot.slane %v5867, 4
      %v5870 = vshll.u32 %v5716, 16
      %v5872 = vrot.slane %v5870, 5
      %v5873 = vor.u32 %v5869, %v5872
      %v5874 = vrot.slane %v5873, 4
      %v5876 = vshll.u32 %v5717, 16
      %v5878 = vrot.slane %v5876, 5
      %v5879 = vsel %vm390, %v5874, %v5878
      %v5880 = vshrl.u32 %v5717, 16
      %v5882 = vrot.slane %v5880, 4
      %v5883 = vor.u32 %v5882, %v5878
      %v5884 = vrot.slane %v5883, 4
      %v5886 = vshll.u32 %v5743, 16
      %v5888 = vrot.slane %v5886, 5
      %v5889 = vsel %vm390, %v5884, %v5888
      %v5891 = vshrl.u32 %v5718, 16
      %v5893 = vrot.slane %v5891, 4
      %v5894 = vshll.u32 %v5718, 16
      %v5896 = vrot.slane %v5894, 5
      %v5897 = vor.u32 %v5893, %v5896
      %v5898 = vrot.slane %v5897, 4
      %v5900 = vshll.u32 %v5719, 16
      %v5902 = vrot.slane %v5900, 5
      %v5903 = vsel %vm390, %v5898, %v5902
      %v5904 = vshrl.u32 %v5719, 16
      %v5906 = vrot.slane %v5904, 4
      %v5907 = vor.u32 %v5906, %v5902
      %v5908 = vrot.slane %v5907, 4
      %v5910 = vshll.u32 %v5744, 16
      %v5912 = vrot.slane %v5910, 5
      %v5913 = vsel %vm390, %v5908, %v5912
      %v5915 = vshrl.u32 %v5720, 16
      %v5917 = vrot.slane %v5915, 4
      %v5918 = vshll.u32 %v5720, 16
      %v5920 = vrot.slane %v5918, 5
      %v5921 = vor.u32 %v5917, %v5920
      %v5922 = vrot.slane %v5921, 4
      %v5924 = vshll.u32 %v5721, 16
      %v5926 = vrot.slane %v5924, 5
      %v5927 = vsel %vm390, %v5922, %v5926
      %v5928 = vshrl.u32 %v5721, 16
      %v5930 = vrot.slane %v5928, 4
      %v5931 = vor.u32 %v5930, %v5926
      %v5932 = vrot.slane %v5931, 4
      %v5934 = vshll.u32 %v5745, 16
      %v5936 = vrot.slane %v5934, 5
      %v5937 = vsel %vm390, %v5932, %v5936
      %s5938 = scalar_lea.vmem %s2, 64
      %v5939 = vld [vmem:[%s5938] sm:$0xf]
      %v5940 = vld [vmem:[%s5938 + $0x4] sm:$0xf]
      %v5941 = vld [vmem:[%s5938 + $0x8] sm:$0xf]
      %v5942 = vld [vmem:[%s5938 + $0xc] sm:$0xf]
      %v5943 = vld [vmem:[%s5938 + $0x10] sm:$0xf]
      %v5944 = vld [vmem:[%s5938 + $0x14] sm:$0xf]
      %v5945 = vld [vmem:[%s5938 + $0x18] sm:$0xf]
      %v5946 = vld [vmem:[%s5938 + $0x1c] sm:$0xf]
      %v5947 = vld [vmem:[%s5938 + $0x20] sm:$0xf]
      %v5948 = vld [vmem:[%s5938 + $0x24] sm:$0xf]
      %v5949 = vld [vmem:[%s5938 + $0x28] sm:$0xf]
      %v5950 = vld [vmem:[%s5938 + $0x2c] sm:$0xf]
      %v5951 = vld [vmem:[%s5938 + $0x30] sm:$0xf]
      %v5952 = vld [vmem:[%s5938 + $0x34] sm:$0xf]
      %v5953 = vld [vmem:[%s5938 + $0x38] sm:$0xf]
      %v5954 = vld [vmem:[%s5938 + $0x3c] sm:$0xf]
      %v5955 = vunpack.c.l.b16 %v5759
      %v5956 = vunpack.c.l.b16 %v5769
      %v5957 = vunpack.c.l.b16 %v5783
      %v5958 = vunpack.c.l.b16 %v5793
      %v5959 = vunpack.c.l.b16 %v5807
      %v5960 = vunpack.c.l.b16 %v5817
      %v5961 = vunpack.c.l.b16 %v5831
      %v5962 = vunpack.c.l.b16 %v5841
      %v5963 = vunpack.c.l.b16 %v5855
      %v5964 = vunpack.c.l.b16 %v5865
      %v5965 = vunpack.c.l.b16 %v5879
      %v5966 = vunpack.c.l.b16 %v5889
      %v5967 = vunpack.c.l.b16 %v5903
      %v5968 = vunpack.c.l.b16 %v5913
      %v5969 = vunpack.c.l.b16 %v5927
      %v5970 = vunpack.c.l.b16 %v5937
      %v5971 = vpack.c.b16 %v5956, %v5955
      %v5972 = vpack.c.b16 %v5958, %v5957
      %v5973 = vpack.c.b16 %v5960, %v5959
      %v5974 = vpack.c.b16 %v5962, %v5961
      %v5975 = vpack.c.b16 %v5964, %v5963
      %v5976 = vpack.c.b16 %v5966, %v5965
      %v5977 = vpack.c.b16 %v5968, %v5967
      %v5978 = vpack.c.b16 %v5970, %v5969
      %v6003 = vunpack.c.l.b16 %v5939
      %v6004 = vunpack.c.l.b16 %v5940
      %v6005 = vunpack.c.l.b16 %v5941
      %v6006 = vunpack.c.l.b16 %v5942
      %v6007 = vunpack.c.l.b16 %v5943
      %v6008 = vunpack.c.l.b16 %v5944
      %v6009 = vunpack.c.l.b16 %v5945
      %v6010 = vunpack.c.l.b16 %v5946
      %v6011 = vunpack.c.l.b16 %v5947
      %v6012 = vunpack.c.l.b16 %v5948
      %v6013 = vunpack.c.l.b16 %v5949
      %v6014 = vunpack.c.l.b16 %v5950
      %v6015 = vunpack.c.l.b16 %v5951
      %v6016 = vunpack.c.l.b16 %v5952
      %v6017 = vunpack.c.l.b16 %v5953
      %v6018 = vunpack.c.l.b16 %v5954
      %v6019 = vpack.c.b16 %v6004, %v6003
      %v6020 = vpack.c.b16 %v6006, %v6005
      %v6021 = vpack.c.b16 %v6008, %v6007
      %v6022 = vpack.c.b16 %v6010, %v6009
      %v6023 = vpack.c.b16 %v6012, %v6011
      %v6024 = vpack.c.b16 %v6014, %v6013
      %v6025 = vpack.c.b16 %v6016, %v6015
      %v6026 = vpack.c.b16 %v6018, %v6017
      %6035 = vmatpush.bf16.msra.mxu0 %v6026
      %6036 = vmatpush.bf16.msra.mxu0 %v6025
      %6037 = vmatpush.bf16.msra.mxu0 %v6024
      %6038 = vmatpush.bf16.msra.mxu0 %v6023
      %6039 = vmatpush.bf16.msra.mxu0 %v6022
      %6040 = vmatpush.bf16.msra.mxu0 %v6021
      %6041 = vmatpush.bf16.msra.mxu0 %v6020
      %6042 = vmatpush.bf16.msra.mxu0 %v6019
      %6043 = vmatmul.bf16.gmra.mxu0 %v5971
      %v6044 = vpop.f32.mrf.mxu0
      %v6045 = vadd.f32 0.0, %v6044
      %v6046 = vpop.f32.mrf.mxu0
      %v6047 = vadd.f32 0.0, %v6046
      %6048 = vmatmul.bf16.gmra.mxu0 %v5972
      %v6049 = vpop.f32.mrf.mxu0
      %v6050 = vadd.f32 0.0, %v6049
      %v6051 = vpop.f32.mrf.mxu0
      %v6052 = vadd.f32 0.0, %v6051
      %6053 = vmatmul.bf16.gmra.mxu0 %v5973
      %v6054 = vpop.f32.mrf.mxu0
      %v6055 = vadd.f32 0.0, %v6054
      %v6056 = vpop.f32.mrf.mxu0
      %v6057 = vadd.f32 0.0, %v6056
      %6058 = vmatmul.bf16.gmra.mxu0 %v5974
      %v6059 = vpop.f32.mrf.mxu0
      %v6060 = vadd.f32 0.0, %v6059
      %v6061 = vpop.f32.mrf.mxu0
      %v6062 = vadd.f32 0.0, %v6061
      %6063 = vmatmul.bf16.gmra.mxu0 %v5975
      %v6064 = vpop.f32.mrf.mxu0
      %v6065 = vadd.f32 0.0, %v6064
      %v6066 = vpop.f32.mrf.mxu0
      %v6067 = vadd.f32 0.0, %v6066
      %6068 = vmatmul.bf16.gmra.mxu0 %v5976
      %v6069 = vpop.f32.mrf.mxu0
      %v6070 = vadd.f32 0.0, %v6069
      %v6071 = vpop.f32.mrf.mxu0
      %v6072 = vadd.f32 0.0, %v6071
      %6073 = vmatmul.bf16.gmra.mxu0 %v5977
      %v6074 = vpop.f32.mrf.mxu0
      %v6075 = vadd.f32 0.0, %v6074
      %v6076 = vpop.f32.mrf.mxu0
      %v6077 = vadd.f32 0.0, %v6076
      %6078 = vmatmul.bf16.gmra.mxu0 %v5978
      %v6079 = vpop.f32.mrf.mxu0
      %v6080 = vadd.f32 0.0, %v6079
      %v6081 = vpop.f32.mrf.mxu0
      %v6082 = vadd.f32 0.0, %v6081
      %6083 = vdwg.mxu0
      %v6100 = vunpack.c.l.b16 %v5706
      %v6101 = vunpack.c.l.b16 %v5707
      %v6102 = vunpack.c.l.b16 %v5708
      %v6103 = vunpack.c.l.b16 %v5709
      %v6104 = vunpack.c.l.b16 %v5710
      %v6105 = vunpack.c.l.b16 %v5711
      %v6106 = vunpack.c.l.b16 %v5712
      %v6107 = vunpack.c.l.b16 %v5713
      %v6108 = vunpack.c.l.b16 %v5714
      %v6109 = vunpack.c.l.b16 %v5715
      %v6110 = vunpack.c.l.b16 %v5716
      %v6111 = vunpack.c.l.b16 %v5717
      %v6112 = vunpack.c.l.b16 %v5718
      %v6113 = vunpack.c.l.b16 %v5719
      %v6114 = vunpack.c.l.b16 %v5720
      %v6115 = vunpack.c.l.b16 %v5721
      %v6116 = vpack.c.b16 %v6101, %v6100
      %v6117 = vpack.c.b16 %v6103, %v6102
      %v6118 = vpack.c.b16 %v6105, %v6104
      %v6119 = vpack.c.b16 %v6107, %v6106
      %v6120 = vpack.c.b16 %v6109, %v6108
      %v6121 = vpack.c.b16 %v6111, %v6110
      %v6122 = vpack.c.b16 %v6113, %v6112
      %v6123 = vpack.c.b16 %v6115, %v6114
      %v6148 = vunpack.c.l.b16 %v5722
      %v6149 = vunpack.c.l.b16 %v5723
      %v6150 = vunpack.c.l.b16 %v5724
      %v6151 = vunpack.c.l.b16 %v5725
      %v6152 = vunpack.c.l.b16 %v5726
      %v6153 = vunpack.c.l.b16 %v5727
      %v6154 = vunpack.c.l.b16 %v5728
      %v6155 = vunpack.c.l.b16 %v5729
      %v6156 = vunpack.c.l.b16 %v5730
      %v6157 = vunpack.c.l.b16 %v5731
      %v6158 = vunpack.c.l.b16 %v5732
      %v6159 = vunpack.c.l.b16 %v5733
      %v6160 = vunpack.c.l.b16 %v5734
      %v6161 = vunpack.c.l.b16 %v5735
      %v6162 = vunpack.c.l.b16 %v5736
      %v6163 = vunpack.c.l.b16 %v5737
      %v6164 = vpack.c.b16 %v6149, %v6148
      %v6165 = vpack.c.b16 %v6151, %v6150
      %v6166 = vpack.c.b16 %v6153, %v6152
      %v6167 = vpack.c.b16 %v6155, %v6154
      %v6168 = vpack.c.b16 %v6157, %v6156
      %v6169 = vpack.c.b16 %v6159, %v6158
      %v6170 = vpack.c.b16 %v6161, %v6160
      %v6171 = vpack.c.b16 %v6163, %v6162
      %6180 = vmatpush.bf16.msra.mxu0 %v6171
      %6181 = vmatpush.bf16.msra.mxu0 %v6170
      %6182 = vmatpush.bf16.msra.mxu0 %v6169
      %6183 = vmatpush.bf16.msra.mxu0 %v6168
      %6184 = vmatpush.bf16.msra.mxu0 %v6167
      %6185 = vmatpush.bf16.msra.mxu0 %v6166
      %6186 = vmatpush.bf16.msra.mxu0 %v6165
      %6187 = vmatpush.bf16.msra.mxu0 %v6164
      %6188 = vmatmul.bf16.gmra.mxu0 %v6116
      %v6189 = vpop.f32.mrf.mxu0
      %v6190 = vadd.f32 %v6045, %v6189
      %v6191 = vpop.f32.mrf.mxu0
      %v6192 = vadd.f32 %v6047, %v6191
      %6193 = vmatmul.bf16.gmra.mxu0 %v6117
      %v6194 = vpop.f32.mrf.mxu0
      %v6195 = vadd.f32 %v6050, %v6194
      %v6196 = vpop.f32.mrf.mxu0
      %v6197 = vadd.f32 %v6052, %v6196
      %6198 = vmatmul.bf16.gmra.mxu0 %v6118
      %v6199 = vpop.f32.mrf.mxu0
      %v6200 = vadd.f32 %v6055, %v6199
      %v6201 = vpop.f32.mrf.mxu0
      %v6202 = vadd.f32 %v6057, %v6201
      %6203 = vmatmul.bf16.gmra.mxu0 %v6119
      %v6204 = vpop.f32.mrf.mxu0
      %v6205 = vadd.f32 %v6060, %v6204
      %v6206 = vpop.f32.mrf.mxu0
      %v6207 = vadd.f32 %v6062, %v6206
      %6208 = vmatmul.bf16.gmra.mxu0 %v6120
      %v6209 = vpop.f32.mrf.mxu0
      %v6210 = vadd.f32 %v6065, %v6209
      %v6211 = vpop.f32.mrf.mxu0
      %v6212 = vadd.f32 %v6067, %v6211
      %6213 = vmatmul.bf16.gmra.mxu0 %v6121
      %v6214 = vpop.f32.mrf.mxu0
      %v6215 = vadd.f32 %v6070, %v6214
      %v6216 = vpop.f32.mrf.mxu0
      %v6217 = vadd.f32 %v6072, %v6216
      %6218 = vmatmul.bf16.gmra.mxu0 %v6122
      %v6219 = vpop.f32.mrf.mxu0
      %v6220 = vadd.f32 %v6075, %v6219
      %v6221 = vpop.f32.mrf.mxu0
      %v6222 = vadd.f32 %v6077, %v6221
      %6223 = vmatmul.bf16.gmra.mxu0 %v6123
      %v6224 = vpop.f32.mrf.mxu0
      %v6225 = vadd.f32 %v6080, %v6224
      %v6226 = vpop.f32.mrf.mxu0
      %v6227 = vadd.f32 %v6082, %v6226
      %6228 = vdwg.mxu0
      %v6229 = vld [vmem:[#allocation2] sm:$0xe]
      %v6230 = vld [vmem:[#allocation2 + $0xc] sm:$0xe]
      %v6231 = vld [vmem:[#allocation2 + $0x18] sm:$0xe]
      %v6232 = vld [vmem:[#allocation2 + $0x24] sm:$0xe]
      %v6233 = vld [vmem:[#allocation2 + $0x30] sm:$0xe]
      %v6234 = vld [vmem:[#allocation2 + $0x3c] sm:$0xe]
      %v6235 = vld [vmem:[#allocation2 + $0x48] sm:$0xe]
      %v6236 = vld [vmem:[#allocation2 + $0x54] sm:$0xe]
      %v6253 = vrot.slane %v6229, 5
      %v6254 = vrot.slane %v6253, 4
      %v6255 = vrot.slane %v5707, 5
      %v6256 = vsel %vm900, %v6254, %v6255
      %v6257 = vrot.slane %v6255, 4
      %v6258 = vrot.slane %v5738, 5
      %v6259 = vsel %vm900, %v6257, %v6258
      %v6260 = vrot.slane %v6230, 5
      %v6261 = vrot.slane %v6260, 4
      %v6262 = vrot.slane %v5709, 5
      %v6263 = vsel %vm900, %v6261, %v6262
      %v6264 = vrot.slane %v6262, 4
      %v6265 = vrot.slane %v5739, 5
      %v6266 = vsel %vm900, %v6264, %v6265
      %v6267 = vrot.slane %v6231, 5
      %v6268 = vrot.slane %v6267, 4
      %v6269 = vrot.slane %v5711, 5
      %v6270 = vsel %vm900, %v6268, %v6269
      %v6271 = vrot.slane %v6269, 4
      %v6272 = vrot.slane %v5740, 5
      %v6273 = vsel %vm900, %v6271, %v6272
      %v6274 = vrot.slane %v6232, 5
      %v6275 = vrot.slane %v6274, 4
      %v6276 = vrot.slane %v5713, 5
      %v6277 = vsel %vm900, %v6275, %v6276
      %v6278 = vrot.slane %v6276, 4
      %v6279 = vrot.slane %v5741, 5
      %v6280 = vsel %vm900, %v6278, %v6279
      %v6281 = vrot.slane %v6233, 5
      %v6282 = vrot.slane %v6281, 4
      %v6283 = vrot.slane %v5715, 5
      %v6284 = vsel %vm900, %v6282, %v6283
      %v6285 = vrot.slane %v6283, 4
      %v6286 = vrot.slane %v5742, 5
      %v6287 = vsel %vm900, %v6285, %v6286
      %v6288 = vrot.slane %v6234, 5
      %v6289 = vrot.slane %v6288, 4
      %v6290 = vrot.slane %v5717, 5
      %v6291 = vsel %vm900, %v6289, %v6290
      %v6292 = vrot.slane %v6290, 4
      %v6293 = vrot.slane %v5743, 5
      %v6294 = vsel %vm900, %v6292, %v6293
      %v6295 = vrot.slane %v6235, 5
      %v6296 = vrot.slane %v6295, 4
      %v6297 = vrot.slane %v5719, 5
      %v6298 = vsel %vm900, %v6296, %v6297
      %v6299 = vrot.slane %v6297, 4
      %v6300 = vrot.slane %v5744, 5
      %v6301 = vsel %vm900, %v6299, %v6300
      %v6302 = vrot.slane %v6236, 5
      %v6303 = vrot.slane %v6302, 4
      %v6304 = vrot.slane %v5721, 5
      %v6305 = vsel %vm900, %v6303, %v6304
      %v6306 = vrot.slane %v6304, 4
      %v6307 = vrot.slane %v5745, 5
      %v6308 = vsel %vm900, %v6306, %v6307
      %s6309 = scalar_lea.vmem %s2, 128
      %v6310 = vld [vmem:[%s6309] sm:$0xf]
      %v6311 = vld [vmem:[%s6309 + $0x4] sm:$0xf]
      %v6312 = vld [vmem:[%s6309 + $0x8] sm:$0xf]
      %v6313 = vld [vmem:[%s6309 + $0xc] sm:$0xf]
      %v6314 = vld [vmem:[%s6309 + $0x10] sm:$0xf]
      %v6315 = vld [vmem:[%s6309 + $0x14] sm:$0xf]
      %v6316 = vld [vmem:[%s6309 + $0x18] sm:$0xf]
      %v6317 = vld [vmem:[%s6309 + $0x1c] sm:$0xf]
      %v6318 = vld [vmem:[%s6309 + $0x20] sm:$0xf]
      %v6319 = vld [vmem:[%s6309 + $0x24] sm:$0xf]
      %v6320 = vld [vmem:[%s6309 + $0x28] sm:$0xf]
      %v6321 = vld [vmem:[%s6309 + $0x2c] sm:$0xf]
      %v6322 = vld [vmem:[%s6309 + $0x30] sm:$0xf]
      %v6323 = vld [vmem:[%s6309 + $0x34] sm:$0xf]
      %v6324 = vld [vmem:[%s6309 + $0x38] sm:$0xf]
      %v6325 = vld [vmem:[%s6309 + $0x3c] sm:$0xf]
      %v6326 = vunpack.c.l.b16 %v6256
      %v6327 = vunpack.c.l.b16 %v6259
      %v6328 = vunpack.c.l.b16 %v6263
      %v6329 = vunpack.c.l.b16 %v6266
      %v6330 = vunpack.c.l.b16 %v6270
      %v6331 = vunpack.c.l.b16 %v6273
      %v6332 = vunpack.c.l.b16 %v6277
      %v6333 = vunpack.c.l.b16 %v6280
      %v6334 = vunpack.c.l.b16 %v6284
      %v6335 = vunpack.c.l.b16 %v6287
      %v6336 = vunpack.c.l.b16 %v6291
      %v6337 = vunpack.c.l.b16 %v6294
      %v6338 = vunpack.c.l.b16 %v6298
      %v6339 = vunpack.c.l.b16 %v6301
      %v6340 = vunpack.c.l.b16 %v6305
      %v6341 = vunpack.c.l.b16 %v6308
      %v6342 = vpack.c.b16 %v6327, %v6326
      %v6343 = vpack.c.b16 %v6329, %v6328
      %v6344 = vpack.c.b16 %v6331, %v6330
      %v6345 = vpack.c.b16 %v6333, %v6332
      %v6346 = vpack.c.b16 %v6335, %v6334
      %v6347 = vpack.c.b16 %v6337, %v6336
      %v6348 = vpack.c.b16 %v6339, %v6338
      %v6349 = vpack.c.b16 %v6341, %v6340
      %v6374 = vunpack.c.l.b16 %v6310
      %v6375 = vunpack.c.l.b16 %v6311
      %v6376 = vunpack.c.l.b16 %v6312
      %v6377 = vunpack.c.l.b16 %v6313
      %v6378 = vunpack.c.l.b16 %v6314
      %v6379 = vunpack.c.l.b16 %v6315
      %v6380 = vunpack.c.l.b16 %v6316
      %v6381 = vunpack.c.l.b16 %v6317
      %v6382 = vunpack.c.l.b16 %v6318
      %v6383 = vunpack.c.l.b16 %v6319
      %v6384 = vunpack.c.l.b16 %v6320
      %v6385 = vunpack.c.l.b16 %v6321
      %v6386 = vunpack.c.l.b16 %v6322
      %v6387 = vunpack.c.l.b16 %v6323
      %v6388 = vunpack.c.l.b16 %v6324
      %v6389 = vunpack.c.l.b16 %v6325
      %v6390 = vpack.c.b16 %v6375, %v6374
      %v6391 = vpack.c.b16 %v6377, %v6376
      %v6392 = vpack.c.b16 %v6379, %v6378
      %v6393 = vpack.c.b16 %v6381, %v6380
      %v6394 = vpack.c.b16 %v6383, %v6382
      %v6395 = vpack.c.b16 %v6385, %v6384
      %v6396 = vpack.c.b16 %v6387, %v6386
      %v6397 = vpack.c.b16 %v6389, %v6388
      %6406 = vmatpush.bf16.msra.mxu0 %v6397
      %6407 = vmatpush.bf16.msra.mxu0 %v6396
      %6408 = vmatpush.bf16.msra.mxu0 %v6395
      %6409 = vmatpush.bf16.msra.mxu0 %v6394
      %6410 = vmatpush.bf16.msra.mxu0 %v6393
      %6411 = vmatpush.bf16.msra.mxu0 %v6392
      %6412 = vmatpush.bf16.msra.mxu0 %v6391
      %6413 = vmatpush.bf16.msra.mxu0 %v6390
      %6414 = vmatmul.bf16.gmra.mxu0 %v6342
      %v6415 = vpop.f32.mrf.mxu0
      %v6416 = vadd.f32 0.0, %v6415
      %v6417 = vpop.f32.mrf.mxu0
      %v6418 = vadd.f32 0.0, %v6417
      %6419 = vmatmul.bf16.gmra.mxu0 %v6343
      %v6420 = vpop.f32.mrf.mxu0
      %v6421 = vadd.f32 0.0, %v6420
      %v6422 = vpop.f32.mrf.mxu0
      %v6423 = vadd.f32 0.0, %v6422
      %6424 = vmatmul.bf16.gmra.mxu0 %v6344
      %v6425 = vpop.f32.mrf.mxu0
      %v6426 = vadd.f32 0.0, %v6425
      %v6427 = vpop.f32.mrf.mxu0
      %v6428 = vadd.f32 0.0, %v6427
      %6429 = vmatmul.bf16.gmra.mxu0 %v6345
      %v6430 = vpop.f32.mrf.mxu0
      %v6431 = vadd.f32 0.0, %v6430
      %v6432 = vpop.f32.mrf.mxu0
      %v6433 = vadd.f32 0.0, %v6432
      %6434 = vmatmul.bf16.gmra.mxu0 %v6346
      %v6435 = vpop.f32.mrf.mxu0
      %v6436 = vadd.f32 0.0, %v6435
      %v6437 = vpop.f32.mrf.mxu0
      %v6438 = vadd.f32 0.0, %v6437
      %6439 = vmatmul.bf16.gmra.mxu0 %v6347
      %v6440 = vpop.f32.mrf.mxu0
      %v6441 = vadd.f32 0.0, %v6440
      %v6442 = vpop.f32.mrf.mxu0
      %v6443 = vadd.f32 0.0, %v6442
      %6444 = vmatmul.bf16.gmra.mxu0 %v6348
      %v6445 = vpop.f32.mrf.mxu0
      %v6446 = vadd.f32 0.0, %v6445
      %v6447 = vpop.f32.mrf.mxu0
      %v6448 = vadd.f32 0.0, %v6447
      %6449 = vmatmul.bf16.gmra.mxu0 %v6349
      %v6450 = vpop.f32.mrf.mxu0
      %v6451 = vadd.f32 0.0, %v6450
      %v6452 = vpop.f32.mrf.mxu0
      %v6453 = vadd.f32 0.0, %v6452
      %6454 = vdwg.mxu0
      %v6455 = vadd.f32 %v6190, %v6416
      %v6456 = vadd.f32 %v6192, %v6418
      %v6457 = vadd.f32 %v6195, %v6421
      %v6458 = vadd.f32 %v6197, %v6423
      %v6459 = vadd.f32 %v6200, %v6426
      %v6460 = vadd.f32 %v6202, %v6428
      %v6461 = vadd.f32 %v6205, %v6431
      %v6462 = vadd.f32 %v6207, %v6433
      %v6463 = vadd.f32 %v6210, %v6436
      %v6464 = vadd.f32 %v6212, %v6438
      %v6465 = vadd.f32 %v6215, %v6441
      %v6466 = vadd.f32 %v6217, %v6443
      %v6467 = vadd.f32 %v6220, %v6446
      %v6468 = vadd.f32 %v6222, %v6448
      %v6469 = vadd.f32 %v6225, %v6451
      %v6470 = vadd.f32 %v6227, %v6453
      %v6471 = vld [vmem:[%s2978] sm:$0xf]
      %v6472 = vld [vmem:[%s2978 + $0x4] sm:$0xf]
      %v6473 = vld [vmem:[%s2978 + $0xc] sm:$0xf]
      %v6474 = vld [vmem:[%s2978 + $0x10] sm:$0xf]
      %v6475 = vld [vmem:[%s2978 + $0x18] sm:$0xf]
      %v6476 = vld [vmem:[%s2978 + $0x1c] sm:$0xf]
      %v6477 = vld [vmem:[%s2978 + $0x24] sm:$0xf]
      %v6478 = vld [vmem:[%s2978 + $0x28] sm:$0xf]
      %v6479 = vld [vmem:[%s2978 + $0x30] sm:$0xf]
      %v6480 = vld [vmem:[%s2978 + $0x34] sm:$0xf]
      %v6481 = vld [vmem:[%s2978 + $0x3c] sm:$0xf]
      %v6482 = vld [vmem:[%s2978 + $0x40] sm:$0xf]
      %v6483 = vld [vmem:[%s2978 + $0x48] sm:$0xf]
      %v6484 = vld [vmem:[%s2978 + $0x4c] sm:$0xf]
      %v6485 = vld [vmem:[%s2978 + $0x54] sm:$0xf]
      %v6486 = vld [vmem:[%s2978 + $0x58] sm:$0xf]
      %s6487 = scalar_lea.vmem %s2, 192
      %v6488 = vld [vmem:[%s6487] sm:$0xf]
      %v6489 = vld [vmem:[%s6487 + $0x4] sm:$0xf]
      %v6490 = vld [vmem:[%s6487 + $0x8] sm:$0xf]
      %v6491 = vld [vmem:[%s6487 + $0xc] sm:$0xf]
      %v6492 = vld [vmem:[%s6487 + $0x10] sm:$0xf]
      %v6493 = vld [vmem:[%s6487 + $0x14] sm:$0xf]
      %v6494 = vld [vmem:[%s6487 + $0x18] sm:$0xf]
      %v6495 = vld [vmem:[%s6487 + $0x1c] sm:$0xf]
      %v6496 = vld [vmem:[%s6487 + $0x20] sm:$0xf]
      %v6497 = vld [vmem:[%s6487 + $0x24] sm:$0xf]
      %v6498 = vld [vmem:[%s6487 + $0x28] sm:$0xf]
      %v6499 = vld [vmem:[%s6487 + $0x2c] sm:$0xf]
      %v6500 = vld [vmem:[%s6487 + $0x30] sm:$0xf]
      %v6501 = vld [vmem:[%s6487 + $0x34] sm:$0xf]
      %v6502 = vld [vmem:[%s6487 + $0x38] sm:$0xf]
      %v6503 = vld [vmem:[%s6487 + $0x3c] sm:$0xf]
      %v6520 = vunpack.c.l.b16 %v6471
      %v6521 = vunpack.c.l.b16 %v6472
      %v6522 = vunpack.c.l.b16 %v6473
      %v6523 = vunpack.c.l.b16 %v6474
      %v6524 = vunpack.c.l.b16 %v6475
      %v6525 = vunpack.c.l.b16 %v6476
      %v6526 = vunpack.c.l.b16 %v6477
      %v6527 = vunpack.c.l.b16 %v6478
      %v6528 = vunpack.c.l.b16 %v6479
      %v6529 = vunpack.c.l.b16 %v6480
      %v6530 = vunpack.c.l.b16 %v6481
      %v6531 = vunpack.c.l.b16 %v6482
      %v6532 = vunpack.c.l.b16 %v6483
      %v6533 = vunpack.c.l.b16 %v6484
      %v6534 = vunpack.c.l.b16 %v6485
      %v6535 = vunpack.c.l.b16 %v6486
      %v6536 = vpack.c.b16 %v6521, %v6520
      %v6537 = vpack.c.b16 %v6523, %v6522
      %v6538 = vpack.c.b16 %v6525, %v6524
      %v6539 = vpack.c.b16 %v6527, %v6526
      %v6540 = vpack.c.b16 %v6529, %v6528
      %v6541 = vpack.c.b16 %v6531, %v6530
      %v6542 = vpack.c.b16 %v6533, %v6532
      %v6543 = vpack.c.b16 %v6535, %v6534
      %v6568 = vunpack.c.l.b16 %v6488
      %v6569 = vunpack.c.l.b16 %v6489
      %v6570 = vunpack.c.l.b16 %v6490
      %v6571 = vunpack.c.l.b16 %v6491
      %v6572 = vunpack.c.l.b16 %v6492
      %v6573 = vunpack.c.l.b16 %v6493
      %v6574 = vunpack.c.l.b16 %v6494
      %v6575 = vunpack.c.l.b16 %v6495
      %v6576 = vunpack.c.l.b16 %v6496
      %v6577 = vunpack.c.l.b16 %v6497
      %v6578 = vunpack.c.l.b16 %v6498
      %v6579 = vunpack.c.l.b16 %v6499
      %v6580 = vunpack.c.l.b16 %v6500
      %v6581 = vunpack.c.l.b16 %v6501
      %v6582 = vunpack.c.l.b16 %v6502
      %v6583 = vunpack.c.l.b16 %v6503
      %v6584 = vpack.c.b16 %v6569, %v6568
      %v6585 = vpack.c.b16 %v6571, %v6570
      %v6586 = vpack.c.b16 %v6573, %v6572
      %v6587 = vpack.c.b16 %v6575, %v6574
      %v6588 = vpack.c.b16 %v6577, %v6576
      %v6589 = vpack.c.b16 %v6579, %v6578
      %v6590 = vpack.c.b16 %v6581, %v6580
      %v6591 = vpack.c.b16 %v6583, %v6582
      %6600 = vmatpush.bf16.msra.mxu0 %v6591
      %6601 = vmatpush.bf16.msra.mxu0 %v6590
      %6602 = vmatpush.bf16.msra.mxu0 %v6589
      %6603 = vmatpush.bf16.msra.mxu0 %v6588
      %6604 = vmatpush.bf16.msra.mxu0 %v6587
      %6605 = vmatpush.bf16.msra.mxu0 %v6586
      %6606 = vmatpush.bf16.msra.mxu0 %v6585
      %6607 = vmatpush.bf16.msra.mxu0 %v6584
      %6608 = vmatmul.bf16.gmra.mxu0 %v6536
      %v6609 = vpop.f32.mrf.mxu0
      %v6610 = vadd.f32 0.0, %v6609
      %v6611 = vpop.f32.mrf.mxu0
      %v6612 = vadd.f32 0.0, %v6611
      %6613 = vmatmul.bf16.gmra.mxu0 %v6537
      %v6614 = vpop.f32.mrf.mxu0
      %v6615 = vadd.f32 0.0, %v6614
      %v6616 = vpop.f32.mrf.mxu0
      %v6617 = vadd.f32 0.0, %v6616
      %6618 = vmatmul.bf16.gmra.mxu0 %v6538
      %v6619 = vpop.f32.mrf.mxu0
      %v6620 = vadd.f32 0.0, %v6619
      %v6621 = vpop.f32.mrf.mxu0
      %v6622 = vadd.f32 0.0, %v6621
      %6623 = vmatmul.bf16.gmra.mxu0 %v6539
      %v6624 = vpop.f32.mrf.mxu0
      %v6625 = vadd.f32 0.0, %v6624
      %v6626 = vpop.f32.mrf.mxu0
      %v6627 = vadd.f32 0.0, %v6626
      %6628 = vmatmul.bf16.gmra.mxu0 %v6540
      %v6629 = vpop.f32.mrf.mxu0
      %v6630 = vadd.f32 0.0, %v6629
      %v6631 = vpop.f32.mrf.mxu0
      %v6632 = vadd.f32 0.0, %v6631
      %6633 = vmatmul.bf16.gmra.mxu0 %v6541
      %v6634 = vpop.f32.mrf.mxu0
      %v6635 = vadd.f32 0.0, %v6634
      %v6636 = vpop.f32.mrf.mxu0
      %v6637 = vadd.f32 0.0, %v6636
      %6638 = vmatmul.bf16.gmra.mxu0 %v6542
      %v6639 = vpop.f32.mrf.mxu0
      %v6640 = vadd.f32 0.0, %v6639
      %v6641 = vpop.f32.mrf.mxu0
      %v6642 = vadd.f32 0.0, %v6641
      %6643 = vmatmul.bf16.gmra.mxu0 %v6543
      %v6644 = vpop.f32.mrf.mxu0
      %v6645 = vadd.f32 0.0, %v6644
      %v6646 = vpop.f32.mrf.mxu0
      %v6647 = vadd.f32 0.0, %v6646
      %6648 = vdwg.mxu0
      %v6649 = vadd.f32 %v6455, %v6610
      %v6650 = vadd.f32 %v6456, %v6612
      %v6651 = vadd.f32 %v6457, %v6615
      %v6652 = vadd.f32 %v6458, %v6617
      %v6653 = vadd.f32 %v6459, %v6620
      %v6654 = vadd.f32 %v6460, %v6622
      %v6655 = vadd.f32 %v6461, %v6625
      %v6656 = vadd.f32 %v6462, %v6627
      %v6657 = vadd.f32 %v6463, %v6630
      %v6658 = vadd.f32 %v6464, %v6632
      %v6659 = vadd.f32 %v6465, %v6635
      %v6660 = vadd.f32 %v6466, %v6637
      %v6661 = vadd.f32 %v6467, %v6640
      %v6662 = vadd.f32 %v6468, %v6642
      %v6663 = vadd.f32 %v6469, %v6645
      %v6664 = vadd.f32 %v6470, %v6647
      %v6665 = vld [vmem:[%s2978] sm:$0xf]
      %v6666 = vld [vmem:[%s2978 + $0x4] sm:$0xf]
      %v6667 = vld [vmem:[%s2978 + $0x8] sm:$0x1]
      %v6668 = vld [vmem:[%s2978 + $0xc] sm:$0xf]
      %v6669 = vld [vmem:[%s2978 + $0x10] sm:$0xf]
      %v6670 = vld [vmem:[%s2978 + $0x14] sm:$0x1]
      %v6671 = vld [vmem:[%s2978 + $0x18] sm:$0xf]
      %v6672 = vld [vmem:[%s2978 + $0x1c] sm:$0xf]
      %v6673 = vld [vmem:[%s2978 + $0x20] sm:$0x1]
      %v6674 = vld [vmem:[%s2978 + $0x24] sm:$0xf]
      %v6675 = vld [vmem:[%s2978 + $0x28] sm:$0xf]
      %v6676 = vld [vmem:[%s2978 + $0x2c] sm:$0x1]
      %v6677 = vld [vmem:[%s2978 + $0x30] sm:$0xf]
      %v6678 = vld [vmem:[%s2978 + $0x34] sm:$0xf]
      %v6679 = vld [vmem:[%s2978 + $0x38] sm:$0x1]
      %v6680 = vld [vmem:[%s2978 + $0x3c] sm:$0xf]
      %v6681 = vld [vmem:[%s2978 + $0x40] sm:$0xf]
      %v6682 = vld [vmem:[%s2978 + $0x44] sm:$0x1]
      %v6683 = vld [vmem:[%s2978 + $0x48] sm:$0xf]
      %v6684 = vld [vmem:[%s2978 + $0x4c] sm:$0xf]
      %v6685 = vld [vmem:[%s2978 + $0x50] sm:$0x1]
      %v6686 = vld [vmem:[%s2978 + $0x54] sm:$0xf]
      %v6687 = vld [vmem:[%s2978 + $0x58] sm:$0xf]
      %v6688 = vld [vmem:[%s2978 + $0x5c] sm:$0x1]
      %v6690 = vshrl.u32 %v6665, 16
      %v6692 = vrot.slane %v6690, 4
      %v6693 = vshll.u32 %v6665, 16
      %v6695 = vrot.slane %v6693, 5
      %v6696 = vor.u32 %v6692, %v6695
      %v6697 = vrot.slane %v6696, 4
      %v6699 = vshll.u32 %v6666, 16
      %v6701 = vrot.slane %v6699, 5
      %v6702 = vsel %vm390, %v6697, %v6701
      %v6703 = vshrl.u32 %v6666, 16
      %v6705 = vrot.slane %v6703, 4
      %v6706 = vor.u32 %v6705, %v6701
      %v6707 = vrot.slane %v6706, 4
      %v6709 = vshll.u32 %v6667, 16
      %v6711 = vrot.slane %v6709, 5
      %v6712 = vsel %vm390, %v6707, %v6711
      %v6714 = vshrl.u32 %v6668, 16
      %v6716 = vrot.slane %v6714, 4
      %v6717 = vshll.u32 %v6668, 16
      %v6719 = vrot.slane %v6717, 5
      %v6720 = vor.u32 %v6716, %v6719
      %v6721 = vrot.slane %v6720, 4
      %v6723 = vshll.u32 %v6669, 16
      %v6725 = vrot.slane %v6723, 5
      %v6726 = vsel %vm390, %v6721, %v6725
      %v6727 = vshrl.u32 %v6669, 16
      %v6729 = vrot.slane %v6727, 4
      %v6730 = vor.u32 %v6729, %v6725
      %v6731 = vrot.slane %v6730, 4
      %v6733 = vshll.u32 %v6670, 16
      %v6735 = vrot.slane %v6733, 5
      %v6736 = vsel %vm390, %v6731, %v6735
      %v6738 = vshrl.u32 %v6671, 16
      %v6740 = vrot.slane %v6738, 4
      %v6741 = vshll.u32 %v6671, 16
      %v6743 = vrot.slane %v6741, 5
      %v6744 = vor.u32 %v6740, %v6743
      %v6745 = vrot.slane %v6744, 4
      %v6747 = vshll.u32 %v6672, 16
      %v6749 = vrot.slane %v6747, 5
      %v6750 = vsel %vm390, %v6745, %v6749
      %v6751 = vshrl.u32 %v6672, 16
      %v6753 = vrot.slane %v6751, 4
      %v6754 = vor.u32 %v6753, %v6749
      %v6755 = vrot.slane %v6754, 4
      %v6757 = vshll.u32 %v6673, 16
      %v6759 = vrot.slane %v6757, 5
      %v6760 = vsel %vm390, %v6755, %v6759
      %v6762 = vshrl.u32 %v6674, 16
      %v6764 = vrot.slane %v6762, 4
      %v6765 = vshll.u32 %v6674, 16
      %v6767 = vrot.slane %v6765, 5
      %v6768 = vor.u32 %v6764, %v6767
      %v6769 = vrot.slane %v6768, 4
      %v6771 = vshll.u32 %v6675, 16
      %v6773 = vrot.slane %v6771, 5
      %v6774 = vsel %vm390, %v6769, %v6773
      %v6775 = vshrl.u32 %v6675, 16
      %v6777 = vrot.slane %v6775, 4
      %v6778 = vor.u32 %v6777, %v6773
      %v6779 = vrot.slane %v6778, 4
      %v6781 = vshll.u32 %v6676, 16
      %v6783 = vrot.slane %v6781, 5
      %v6784 = vsel %vm390, %v6779, %v6783
      %v6786 = vshrl.u32 %v6677, 16
      %v6788 = vrot.slane %v6786, 4
      %v6789 = vshll.u32 %v6677, 16
      %v6791 = vrot.slane %v6789, 5
      %v6792 = vor.u32 %v6788, %v6791
      %v6793 = vrot.slane %v6792, 4
      %v6795 = vshll.u32 %v6678, 16
      %v6797 = vrot.slane %v6795, 5
      %v6798 = vsel %vm390, %v6793, %v6797
      %v6799 = vshrl.u32 %v6678, 16
      %v6801 = vrot.slane %v6799, 4
      %v6802 = vor.u32 %v6801, %v6797
      %v6803 = vrot.slane %v6802, 4
      %v6805 = vshll.u32 %v6679, 16
      %v6807 = vrot.slane %v6805, 5
      %v6808 = vsel %vm390, %v6803, %v6807
      %v6810 = vshrl.u32 %v6680, 16
      %v6812 = vrot.slane %v6810, 4
      %v6813 = vshll.u32 %v6680, 16
      %v6815 = vrot.slane %v6813, 5
      %v6816 = vor.u32 %v6812, %v6815
      %v6817 = vrot.slane %v6816, 4
      %v6819 = vshll.u32 %v6681, 16
      %v6821 = vrot.slane %v6819, 5
      %v6822 = vsel %vm390, %v6817, %v6821
      %v6823 = vshrl.u32 %v6681, 16
      %v6825 = vrot.slane %v6823, 4
      %v6826 = vor.u32 %v6825, %v6821
      %v6827 = vrot.slane %v6826, 4
      %v6829 = vshll.u32 %v6682, 16
      %v6831 = vrot.slane %v6829, 5
      %v6832 = vsel %vm390, %v6827, %v6831
      %v6834 = vshrl.u32 %v6683, 16
      %v6836 = vrot.slane %v6834, 4
      %v6837 = vshll.u32 %v6683, 16
      %v6839 = vrot.slane %v6837, 5
      %v6840 = vor.u32 %v6836, %v6839
      %v6841 = vrot.slane %v6840, 4
      %v6843 = vshll.u32 %v6684, 16
      %v6845 = vrot.slane %v6843, 5
      %v6846 = vsel %vm390, %v6841, %v6845
      %v6847 = vshrl.u32 %v6684, 16
      %v6849 = vrot.slane %v6847, 4
      %v6850 = vor.u32 %v6849, %v6845
      %v6851 = vrot.slane %v6850, 4
      %v6853 = vshll.u32 %v6685, 16
      %v6855 = vrot.slane %v6853, 5
      %v6856 = vsel %vm390, %v6851, %v6855
      %v6858 = vshrl.u32 %v6686, 16
      %v6860 = vrot.slane %v6858, 4
      %v6861 = vshll.u32 %v6686, 16
      %v6863 = vrot.slane %v6861, 5
      %v6864 = vor.u32 %v6860, %v6863
      %v6865 = vrot.slane %v6864, 4
      %v6867 = vshll.u32 %v6687, 16
      %v6869 = vrot.slane %v6867, 5
      %v6870 = vsel %vm390, %v6865, %v6869
      %v6871 = vshrl.u32 %v6687, 16
      %v6873 = vrot.slane %v6871, 4
      %v6874 = vor.u32 %v6873, %v6869
      %v6875 = vrot.slane %v6874, 4
      %v6877 = vshll.u32 %v6688, 16
      %v6879 = vrot.slane %v6877, 5
      %v6880 = vsel %vm390, %v6875, %v6879
      %s6881 = scalar_lea.vmem %s2, 256
      %v6882 = vld [vmem:[%s6881] sm:$0xf]
      %v6883 = vld [vmem:[%s6881 + $0x4] sm:$0xf]
      %v6884 = vld [vmem:[%s6881 + $0x8] sm:$0xf]
      %v6885 = vld [vmem:[%s6881 + $0xc] sm:$0xf]
      %v6886 = vld [vmem:[%s6881 + $0x10] sm:$0xf]
      %v6887 = vld [vmem:[%s6881 + $0x14] sm:$0xf]
      %v6888 = vld [vmem:[%s6881 + $0x18] sm:$0xf]
      %v6889 = vld [vmem:[%s6881 + $0x1c] sm:$0xf]
      %v6890 = vld [vmem:[%s6881 + $0x20] sm:$0xf]
      %v6891 = vld [vmem:[%s6881 + $0x24] sm:$0xf]
      %v6892 = vld [vmem:[%s6881 + $0x28] sm:$0xf]
      %v6893 = vld [vmem:[%s6881 + $0x2c] sm:$0xf]
      %v6894 = vld [vmem:[%s6881 + $0x30] sm:$0xf]
      %v6895 = vld [vmem:[%s6881 + $0x34] sm:$0xf]
      %v6896 = vld [vmem:[%s6881 + $0x38] sm:$0xf]
      %v6897 = vld [vmem:[%s6881 + $0x3c] sm:$0xf]
      %v6898 = vunpack.c.l.b16 %v6702
      %v6899 = vunpack.c.l.b16 %v6712
      %v6900 = vunpack.c.l.b16 %v6726
      %v6901 = vunpack.c.l.b16 %v6736
      %v6902 = vunpack.c.l.b16 %v6750
      %v6903 = vunpack.c.l.b16 %v6760
      %v6904 = vunpack.c.l.b16 %v6774
      %v6905 = vunpack.c.l.b16 %v6784
      %v6906 = vunpack.c.l.b16 %v6798
      %v6907 = vunpack.c.l.b16 %v6808
      %v6908 = vunpack.c.l.b16 %v6822
      %v6909 = vunpack.c.l.b16 %v6832
      %v6910 = vunpack.c.l.b16 %v6846
      %v6911 = vunpack.c.l.b16 %v6856
      %v6912 = vunpack.c.l.b16 %v6870
      %v6913 = vunpack.c.l.b16 %v6880
      %v6914 = vpack.c.b16 %v6899, %v6898
      %v6915 = vpack.c.b16 %v6901, %v6900
      %v6916 = vpack.c.b16 %v6903, %v6902
      %v6917 = vpack.c.b16 %v6905, %v6904
      %v6918 = vpack.c.b16 %v6907, %v6906
      %v6919 = vpack.c.b16 %v6909, %v6908
      %v6920 = vpack.c.b16 %v6911, %v6910
      %v6921 = vpack.c.b16 %v6913, %v6912
      %v6946 = vunpack.c.l.b16 %v6882
      %v6947 = vunpack.c.l.b16 %v6883
      %v6948 = vunpack.c.l.b16 %v6884
      %v6949 = vunpack.c.l.b16 %v6885
      %v6950 = vunpack.c.l.b16 %v6886
      %v6951 = vunpack.c.l.b16 %v6887
      %v6952 = vunpack.c.l.b16 %v6888
      %v6953 = vunpack.c.l.b16 %v6889
      %v6954 = vunpack.c.l.b16 %v6890
      %v6955 = vunpack.c.l.b16 %v6891
      %v6956 = vunpack.c.l.b16 %v6892
      %v6957 = vunpack.c.l.b16 %v6893
      %v6958 = vunpack.c.l.b16 %v6894
      %v6959 = vunpack.c.l.b16 %v6895
      %v6960 = vunpack.c.l.b16 %v6896
      %v6961 = vunpack.c.l.b16 %v6897
      %v6962 = vpack.c.b16 %v6947, %v6946
      %v6963 = vpack.c.b16 %v6949, %v6948
      %v6964 = vpack.c.b16 %v6951, %v6950
      %v6965 = vpack.c.b16 %v6953, %v6952
      %v6966 = vpack.c.b16 %v6955, %v6954
      %v6967 = vpack.c.b16 %v6957, %v6956
      %v6968 = vpack.c.b16 %v6959, %v6958
      %v6969 = vpack.c.b16 %v6961, %v6960
      %6978 = vmatpush.bf16.msra.mxu0 %v6969
      %6979 = vmatpush.bf16.msra.mxu0 %v6968
      %6980 = vmatpush.bf16.msra.mxu0 %v6967
      %6981 = vmatpush.bf16.msra.mxu0 %v6966
      %6982 = vmatpush.bf16.msra.mxu0 %v6965
      %6983 = vmatpush.bf16.msra.mxu0 %v6964
      %6984 = vmatpush.bf16.msra.mxu0 %v6963
      %6985 = vmatpush.bf16.msra.mxu0 %v6962
      %6986 = vmatmul.bf16.gmra.mxu0 %v6914
      %v6987 = vpop.f32.mrf.mxu0
      %v6988 = vadd.f32 0.0, %v6987
      %v6989 = vpop.f32.mrf.mxu0
      %v6990 = vadd.f32 0.0, %v6989
      %6991 = vmatmul.bf16.gmra.mxu0 %v6915
      %v6992 = vpop.f32.mrf.mxu0
      %v6993 = vadd.f32 0.0, %v6992
      %v6994 = vpop.f32.mrf.mxu0
      %v6995 = vadd.f32 0.0, %v6994
      %6996 = vmatmul.bf16.gmra.mxu0 %v6916
      %v6997 = vpop.f32.mrf.mxu0
      %v6998 = vadd.f32 0.0, %v6997
      %v6999 = vpop.f32.mrf.mxu0
      %v7000 = vadd.f32 0.0, %v6999
      %7001 = vmatmul.bf16.gmra.mxu0 %v6917
      %v7002 = vpop.f32.mrf.mxu0
      %v7003 = vadd.f32 0.0, %v7002
      %v7004 = vpop.f32.mrf.mxu0
      %v7005 = vadd.f32 0.0, %v7004
      %7006 = vmatmul.bf16.gmra.mxu0 %v6918
      %v7007 = vpop.f32.mrf.mxu0
      %v7008 = vadd.f32 0.0, %v7007
      %v7009 = vpop.f32.mrf.mxu0
      %v7010 = vadd.f32 0.0, %v7009
      %7011 = vmatmul.bf16.gmra.mxu0 %v6919
      %v7012 = vpop.f32.mrf.mxu0
      %v7013 = vadd.f32 0.0, %v7012
      %v7014 = vpop.f32.mrf.mxu0
      %v7015 = vadd.f32 0.0, %v7014
      %7016 = vmatmul.bf16.gmra.mxu0 %v6920
      %v7017 = vpop.f32.mrf.mxu0
      %v7018 = vadd.f32 0.0, %v7017
      %v7019 = vpop.f32.mrf.mxu0
      %v7020 = vadd.f32 0.0, %v7019
      %7021 = vmatmul.bf16.gmra.mxu0 %v6921
      %v7022 = vpop.f32.mrf.mxu0
      %v7023 = vadd.f32 0.0, %v7022
      %v7024 = vpop.f32.mrf.mxu0
      %v7025 = vadd.f32 0.0, %v7024
      %7026 = vdwg.mxu0
      %v7027 = vadd.f32 %v6649, %v6988
      %v7028 = vadd.f32 %v6650, %v6990
      %v7029 = vadd.f32 %v6651, %v6993
      %v7030 = vadd.f32 %v6652, %v6995
      %v7031 = vadd.f32 %v6653, %v6998
      %v7032 = vadd.f32 %v6654, %v7000
      %v7033 = vadd.f32 %v6655, %v7003
      %v7034 = vadd.f32 %v6656, %v7005
      %v7035 = vadd.f32 %v6657, %v7008
      %v7036 = vadd.f32 %v6658, %v7010
      %v7037 = vadd.f32 %v6659, %v7013
      %v7038 = vadd.f32 %v6660, %v7015
      %v7039 = vadd.f32 %v6661, %v7018
      %v7040 = vadd.f32 %v6662, %v7020
      %v7041 = vadd.f32 %v6663, %v7023
      %v7042 = vadd.f32 %v6664, %v7025
      %v7043 = vld [vmem:[%s2978] sm:$0xe]
      %v7044 = vld [vmem:[%s2978 + $0xc] sm:$0xe]
      %v7045 = vld [vmem:[%s2978 + $0x18] sm:$0xe]
      %v7046 = vld [vmem:[%s2978 + $0x24] sm:$0xe]
      %v7047 = vld [vmem:[%s2978 + $0x30] sm:$0xe]
      %v7048 = vld [vmem:[%s2978 + $0x3c] sm:$0xe]
      %v7049 = vld [vmem:[%s2978 + $0x48] sm:$0xe]
      %v7050 = vld [vmem:[%s2978 + $0x54] sm:$0xe]
      %v7075 = vrot.slane %v7043, 5
      %v7076 = vrot.slane %v7075, 4
      %v7077 = vrot.slane %v6666, 5
      %v7078 = vsel %vm900, %v7076, %v7077
      %v7079 = vrot.slane %v7077, 4
      %v7080 = vrot.slane %v6667, 5
      %v7081 = vsel %vm900, %v7079, %v7080
      %v7082 = vrot.slane %v7044, 5
      %v7083 = vrot.slane %v7082, 4
      %v7084 = vrot.slane %v6669, 5
      %v7085 = vsel %vm900, %v7083, %v7084
      %v7086 = vrot.slane %v7084, 4
      %v7087 = vrot.slane %v6670, 5
      %v7088 = vsel %vm900, %v7086, %v7087
      %v7089 = vrot.slane %v7045, 5
      %v7090 = vrot.slane %v7089, 4
      %v7091 = vrot.slane %v6672, 5
      %v7092 = vsel %vm900, %v7090, %v7091
      %v7093 = vrot.slane %v7091, 4
      %v7094 = vrot.slane %v6673, 5
      %v7095 = vsel %vm900, %v7093, %v7094
      %v7096 = vrot.slane %v7046, 5
      %v7097 = vrot.slane %v7096, 4
      %v7098 = vrot.slane %v6675, 5
      %v7099 = vsel %vm900, %v7097, %v7098
      %v7100 = vrot.slane %v7098, 4
      %v7101 = vrot.slane %v6676, 5
      %v7102 = vsel %vm900, %v7100, %v7101
      %v7103 = vrot.slane %v7047, 5
      %v7104 = vrot.slane %v7103, 4
      %v7105 = vrot.slane %v6678, 5
      %v7106 = vsel %vm900, %v7104, %v7105
      %v7107 = vrot.slane %v7105, 4
      %v7108 = vrot.slane %v6679, 5
      %v7109 = vsel %vm900, %v7107, %v7108
      %v7110 = vrot.slane %v7048, 5
      %v7111 = vrot.slane %v7110, 4
      %v7112 = vrot.slane %v6681, 5
      %v7113 = vsel %vm900, %v7111, %v7112
      %v7114 = vrot.slane %v7112, 4
      %v7115 = vrot.slane %v6682, 5
      %v7116 = vsel %vm900, %v7114, %v7115
      %v7117 = vrot.slane %v7049, 5
      %v7118 = vrot.slane %v7117, 4
      %v7119 = vrot.slane %v6684, 5
      %v7120 = vsel %vm900, %v7118, %v7119
      %v7121 = vrot.slane %v7119, 4
      %v7122 = vrot.slane %v6685, 5
      %v7123 = vsel %vm900, %v7121, %v7122
      %v7124 = vrot.slane %v7050, 5
      %v7125 = vrot.slane %v7124, 4
      %v7126 = vrot.slane %v6687, 5
      %v7127 = vsel %vm900, %v7125, %v7126
      %v7128 = vrot.slane %v7126, 4
      %v7129 = vrot.slane %v6688, 5
      %v7130 = vsel %vm900, %v7128, %v7129
      %s7131 = scalar_lea.vmem %s2, 320
      %v7132 = vld [vmem:[%s7131] sm:$0xf]
      %v7133 = vld [vmem:[%s7131 + $0x4] sm:$0xf]
      %v7134 = vld [vmem:[%s7131 + $0x8] sm:$0xf]
      %v7135 = vld [vmem:[%s7131 + $0xc] sm:$0xf]
      %v7136 = vld [vmem:[%s7131 + $0x10] sm:$0xf]
      %v7137 = vld [vmem:[%s7131 + $0x14] sm:$0xf]
      %v7138 = vld [vmem:[%s7131 + $0x18] sm:$0xf]
      %v7139 = vld [vmem:[%s7131 + $0x1c] sm:$0xf]
      %v7140 = vld [vmem:[%s7131 + $0x20] sm:$0xf]
      %v7141 = vld [vmem:[%s7131 + $0x24] sm:$0xf]
      %v7142 = vld [vmem:[%s7131 + $0x28] sm:$0xf]
      %v7143 = vld [vmem:[%s7131 + $0x2c] sm:$0xf]
      %v7144 = vld [vmem:[%s7131 + $0x30] sm:$0xf]
      %v7145 = vld [vmem:[%s7131 + $0x34] sm:$0xf]
      %v7146 = vld [vmem:[%s7131 + $0x38] sm:$0xf]
      %v7147 = vld [vmem:[%s7131 + $0x3c] sm:$0xf]
      %v7148 = vunpack.c.l.b16 %v7078
      %v7149 = vunpack.c.l.b16 %v7081
      %v7150 = vunpack.c.l.b16 %v7085
      %v7151 = vunpack.c.l.b16 %v7088
      %v7152 = vunpack.c.l.b16 %v7092
      %v7153 = vunpack.c.l.b16 %v7095
      %v7154 = vunpack.c.l.b16 %v7099
      %v7155 = vunpack.c.l.b16 %v7102
      %v7156 = vunpack.c.l.b16 %v7106
      %v7157 = vunpack.c.l.b16 %v7109
      %v7158 = vunpack.c.l.b16 %v7113
      %v7159 = vunpack.c.l.b16 %v7116
      %v7160 = vunpack.c.l.b16 %v7120
      %v7161 = vunpack.c.l.b16 %v7123
      %v7162 = vunpack.c.l.b16 %v7127
      %v7163 = vunpack.c.l.b16 %v7130
      %v7164 = vpack.c.b16 %v7149, %v7148
      %v7165 = vpack.c.b16 %v7151, %v7150
      %v7166 = vpack.c.b16 %v7153, %v7152
      %v7167 = vpack.c.b16 %v7155, %v7154
      %v7168 = vpack.c.b16 %v7157, %v7156
      %v7169 = vpack.c.b16 %v7159, %v7158
      %v7170 = vpack.c.b16 %v7161, %v7160
      %v7171 = vpack.c.b16 %v7163, %v7162
      %v7196 = vunpack.c.l.b16 %v7132
      %v7197 = vunpack.c.l.b16 %v7133
      %v7198 = vunpack.c.l.b16 %v7134
      %v7199 = vunpack.c.l.b16 %v7135
      %v7200 = vunpack.c.l.b16 %v7136
      %v7201 = vunpack.c.l.b16 %v7137
      %v7202 = vunpack.c.l.b16 %v7138
      %v7203 = vunpack.c.l.b16 %v7139
      %v7204 = vunpack.c.l.b16 %v7140
      %v7205 = vunpack.c.l.b16 %v7141
      %v7206 = vunpack.c.l.b16 %v7142
      %v7207 = vunpack.c.l.b16 %v7143
      %v7208 = vunpack.c.l.b16 %v7144
      %v7209 = vunpack.c.l.b16 %v7145
      %v7210 = vunpack.c.l.b16 %v7146
      %v7211 = vunpack.c.l.b16 %v7147
      %v7212 = vpack.c.b16 %v7197, %v7196
      %v7213 = vpack.c.b16 %v7199, %v7198
      %v7214 = vpack.c.b16 %v7201, %v7200
      %v7215 = vpack.c.b16 %v7203, %v7202
      %v7216 = vpack.c.b16 %v7205, %v7204
      %v7217 = vpack.c.b16 %v7207, %v7206
      %v7218 = vpack.c.b16 %v7209, %v7208
      %v7219 = vpack.c.b16 %v7211, %v7210
      %7228 = vmatpush.bf16.msra.mxu0 %v7219
      %7229 = vmatpush.bf16.msra.mxu0 %v7218
      %7230 = vmatpush.bf16.msra.mxu0 %v7217
      %7231 = vmatpush.bf16.msra.mxu0 %v7216
      %7232 = vmatpush.bf16.msra.mxu0 %v7215
      %7233 = vmatpush.bf16.msra.mxu0 %v7214
      %7234 = vmatpush.bf16.msra.mxu0 %v7213
      %7235 = vmatpush.bf16.msra.mxu0 %v7212
      %7236 = vmatmul.bf16.gmra.mxu0 %v7164
      %v7237 = vpop.f32.mrf.mxu0
      %v7238 = vadd.f32 0.0, %v7237
      %v7239 = vpop.f32.mrf.mxu0
      %v7240 = vadd.f32 0.0, %v7239
      %7241 = vmatmul.bf16.gmra.mxu0 %v7165
      %v7242 = vpop.f32.mrf.mxu0
      %v7243 = vadd.f32 0.0, %v7242
      %v7244 = vpop.f32.mrf.mxu0
      %v7245 = vadd.f32 0.0, %v7244
      %7246 = vmatmul.bf16.gmra.mxu0 %v7166
      %v7247 = vpop.f32.mrf.mxu0
      %v7248 = vadd.f32 0.0, %v7247
      %v7249 = vpop.f32.mrf.mxu0
      %v7250 = vadd.f32 0.0, %v7249
      %7251 = vmatmul.bf16.gmra.mxu0 %v7167
      %v7252 = vpop.f32.mrf.mxu0
      %v7253 = vadd.f32 0.0, %v7252
      %v7254 = vpop.f32.mrf.mxu0
      %v7255 = vadd.f32 0.0, %v7254
      %7256 = vmatmul.bf16.gmra.mxu0 %v7168
      %v7257 = vpop.f32.mrf.mxu0
      %v7258 = vadd.f32 0.0, %v7257
      %v7259 = vpop.f32.mrf.mxu0
      %v7260 = vadd.f32 0.0, %v7259
      %7261 = vmatmul.bf16.gmra.mxu0 %v7169
      %v7262 = vpop.f32.mrf.mxu0
      %v7263 = vadd.f32 0.0, %v7262
      %v7264 = vpop.f32.mrf.mxu0
      %v7265 = vadd.f32 0.0, %v7264
      %7266 = vmatmul.bf16.gmra.mxu0 %v7170
      %v7267 = vpop.f32.mrf.mxu0
      %v7268 = vadd.f32 0.0, %v7267
      %v7269 = vpop.f32.mrf.mxu0
      %v7270 = vadd.f32 0.0, %v7269
      %7271 = vmatmul.bf16.gmra.mxu0 %v7171
      %v7272 = vpop.f32.mrf.mxu0
      %v7273 = vadd.f32 0.0, %v7272
      %v7274 = vpop.f32.mrf.mxu0
      %v7275 = vadd.f32 0.0, %v7274
      %7276 = vdwg.mxu0
      %v7277 = vadd.f32 %v7027, %v7238
      %v7278 = vadd.f32 %v7028, %v7240
      %v7279 = vadd.f32 %v7029, %v7243
      %v7280 = vadd.f32 %v7030, %v7245
      %v7281 = vadd.f32 %v7031, %v7248
      %v7282 = vadd.f32 %v7032, %v7250
      %v7283 = vadd.f32 %v7033, %v7253
      %v7284 = vadd.f32 %v7034, %v7255
      %v7285 = vadd.f32 %v7035, %v7258
      %v7286 = vadd.f32 %v7036, %v7260
      %v7287 = vadd.f32 %v7037, %v7263
      %v7288 = vadd.f32 %v7038, %v7265
      %v7289 = vadd.f32 %v7039, %v7268
      %v7290 = vadd.f32 %v7040, %v7270
      %v7291 = vadd.f32 %v7041, %v7273
      %v7292 = vadd.f32 %v7042, %v7275
      %s7293 = scalar_lea.vmem [#allocation2], 24
      %v7294 = vld [vmem:[%s7293] sm:$0xf]
      %v7295 = vld [vmem:[%s7293 + $0x4] sm:$0xf]
      %v7296 = vld [vmem:[%s7293 + $0xc] sm:$0xf]
      %v7297 = vld [vmem:[%s7293 + $0x10] sm:$0xf]
      %v7298 = vld [vmem:[%s7293 + $0x18] sm:$0xf]
      %v7299 = vld [vmem:[%s7293 + $0x1c] sm:$0xf]
      %v7300 = vld [vmem:[%s7293 + $0x24] sm:$0xf]
      %v7301 = vld [vmem:[%s7293 + $0x28] sm:$0xf]
      %v7302 = vld [vmem:[%s7293 + $0x30] sm:$0xf]
      %v7303 = vld [vmem:[%s7293 + $0x34] sm:$0xf]
      %v7304 = vld [vmem:[%s7293 + $0x3c] sm:$0xf]
      %v7305 = vld [vmem:[%s7293 + $0x40] sm:$0xf]
      %v7306 = vld [vmem:[%s7293 + $0x48] sm:$0xf]
      %v7307 = vld [vmem:[%s7293 + $0x4c] sm:$0xf]
      %v7308 = vld [vmem:[%s7293 + $0x54] sm:$0xf]
      %v7309 = vld [vmem:[%s7293 + $0x58] sm:$0xf]
      %s7310 = scalar_lea.vmem %s2, 384
      %v7311 = vld [vmem:[%s7310] sm:$0xf]
      %v7312 = vld [vmem:[%s7310 + $0x4] sm:$0xf]
      %v7313 = vld [vmem:[%s7310 + $0x8] sm:$0xf]
      %v7314 = vld [vmem:[%s7310 + $0xc] sm:$0xf]
      %v7315 = vld [vmem:[%s7310 + $0x10] sm:$0xf]
      %v7316 = vld [vmem:[%s7310 + $0x14] sm:$0xf]
      %v7317 = vld [vmem:[%s7310 + $0x18] sm:$0xf]
      %v7318 = vld [vmem:[%s7310 + $0x1c] sm:$0xf]
      %v7319 = vld [vmem:[%s7310 + $0x20] sm:$0xf]
      %v7320 = vld [vmem:[%s7310 + $0x24] sm:$0xf]
      %v7321 = vld [vmem:[%s7310 + $0x28] sm:$0xf]
      %v7322 = vld [vmem:[%s7310 + $0x2c] sm:$0xf]
      %v7323 = vld [vmem:[%s7310 + $0x30] sm:$0xf]
      %v7324 = vld [vmem:[%s7310 + $0x34] sm:$0xf]
      %v7325 = vld [vmem:[%s7310 + $0x38] sm:$0xf]
      %v7326 = vld [vmem:[%s7310 + $0x3c] sm:$0xf]
      %v7343 = vunpack.c.l.b16 %v7294
      %v7344 = vunpack.c.l.b16 %v7295
      %v7345 = vunpack.c.l.b16 %v7296
      %v7346 = vunpack.c.l.b16 %v7297
      %v7347 = vunpack.c.l.b16 %v7298
      %v7348 = vunpack.c.l.b16 %v7299
      %v7349 = vunpack.c.l.b16 %v7300
      %v7350 = vunpack.c.l.b16 %v7301
      %v7351 = vunpack.c.l.b16 %v7302
      %v7352 = vunpack.c.l.b16 %v7303
      %v7353 = vunpack.c.l.b16 %v7304
      %v7354 = vunpack.c.l.b16 %v7305
      %v7355 = vunpack.c.l.b16 %v7306
      %v7356 = vunpack.c.l.b16 %v7307
      %v7357 = vunpack.c.l.b16 %v7308
      %v7358 = vunpack.c.l.b16 %v7309
      %v7359 = vpack.c.b16 %v7344, %v7343
      %v7360 = vpack.c.b16 %v7346, %v7345
      %v7361 = vpack.c.b16 %v7348, %v7347
      %v7362 = vpack.c.b16 %v7350, %v7349
      %v7363 = vpack.c.b16 %v7352, %v7351
      %v7364 = vpack.c.b16 %v7354, %v7353
      %v7365 = vpack.c.b16 %v7356, %v7355
      %v7366 = vpack.c.b16 %v7358, %v7357
      %v7391 = vunpack.c.l.b16 %v7311
      %v7392 = vunpack.c.l.b16 %v7312
      %v7393 = vunpack.c.l.b16 %v7313
      %v7394 = vunpack.c.l.b16 %v7314
      %v7395 = vunpack.c.l.b16 %v7315
      %v7396 = vunpack.c.l.b16 %v7316
      %v7397 = vunpack.c.l.b16 %v7317
      %v7398 = vunpack.c.l.b16 %v7318
      %v7399 = vunpack.c.l.b16 %v7319
      %v7400 = vunpack.c.l.b16 %v7320
      %v7401 = vunpack.c.l.b16 %v7321
      %v7402 = vunpack.c.l.b16 %v7322
      %v7403 = vunpack.c.l.b16 %v7323
      %v7404 = vunpack.c.l.b16 %v7324
      %v7405 = vunpack.c.l.b16 %v7325
      %v7406 = vunpack.c.l.b16 %v7326
      %v7407 = vpack.c.b16 %v7392, %v7391
      %v7408 = vpack.c.b16 %v7394, %v7393
      %v7409 = vpack.c.b16 %v7396, %v7395
      %v7410 = vpack.c.b16 %v7398, %v7397
      %v7411 = vpack.c.b16 %v7400, %v7399
      %v7412 = vpack.c.b16 %v7402, %v7401
      %v7413 = vpack.c.b16 %v7404, %v7403
      %v7414 = vpack.c.b16 %v7406, %v7405
      %7423 = vmatpush.bf16.msra.mxu0 %v7414
      %7424 = vmatpush.bf16.msra.mxu0 %v7413
      %7425 = vmatpush.bf16.msra.mxu0 %v7412
      %7426 = vmatpush.bf16.msra.mxu0 %v7411
      %7427 = vmatpush.bf16.msra.mxu0 %v7410
      %7428 = vmatpush.bf16.msra.mxu0 %v7409
      %7429 = vmatpush.bf16.msra.mxu0 %v7408
      %7430 = vmatpush.bf16.msra.mxu0 %v7407
      %7431 = vmatmul.bf16.gmra.mxu0 %v7359
      %v7432 = vpop.f32.mrf.mxu0
      %v7433 = vadd.f32 0.0, %v7432
      %v7434 = vpop.f32.mrf.mxu0
      %v7435 = vadd.f32 0.0, %v7434
      %7436 = vmatmul.bf16.gmra.mxu0 %v7360
      %v7437 = vpop.f32.mrf.mxu0
      %v7438 = vadd.f32 0.0, %v7437
      %v7439 = vpop.f32.mrf.mxu0
      %v7440 = vadd.f32 0.0, %v7439
      %7441 = vmatmul.bf16.gmra.mxu0 %v7361
      %v7442 = vpop.f32.mrf.mxu0
      %v7443 = vadd.f32 0.0, %v7442
      %v7444 = vpop.f32.mrf.mxu0
      %v7445 = vadd.f32 0.0, %v7444
      %7446 = vmatmul.bf16.gmra.mxu0 %v7362
      %v7447 = vpop.f32.mrf.mxu0
      %v7448 = vadd.f32 0.0, %v7447
      %v7449 = vpop.f32.mrf.mxu0
      %v7450 = vadd.f32 0.0, %v7449
      %7451 = vmatmul.bf16.gmra.mxu0 %v7363
      %v7452 = vpop.f32.mrf.mxu0
      %v7453 = vadd.f32 0.0, %v7452
      %v7454 = vpop.f32.mrf.mxu0
      %v7455 = vadd.f32 0.0, %v7454
      %7456 = vmatmul.bf16.gmra.mxu0 %v7364
      %v7457 = vpop.f32.mrf.mxu0
      %v7458 = vadd.f32 0.0, %v7457
      %v7459 = vpop.f32.mrf.mxu0
      %v7460 = vadd.f32 0.0, %v7459
      %7461 = vmatmul.bf16.gmra.mxu0 %v7365
      %v7462 = vpop.f32.mrf.mxu0
      %v7463 = vadd.f32 0.0, %v7462
      %v7464 = vpop.f32.mrf.mxu0
      %v7465 = vadd.f32 0.0, %v7464
      %7466 = vmatmul.bf16.gmra.mxu0 %v7366
      %v7467 = vpop.f32.mrf.mxu0
      %v7468 = vadd.f32 0.0, %v7467
      %v7469 = vpop.f32.mrf.mxu0
      %v7470 = vadd.f32 0.0, %v7469
      %7471 = vdwg.mxu0
      %v7472 = vadd.f32 %v7277, %v7433
      %v7473 = vadd.f32 %v7278, %v7435
      %v7474 = vadd.f32 %v7279, %v7438
      %v7475 = vadd.f32 %v7280, %v7440
      %v7476 = vadd.f32 %v7281, %v7443
      %v7477 = vadd.f32 %v7282, %v7445
      %v7478 = vadd.f32 %v7283, %v7448
      %v7479 = vadd.f32 %v7284, %v7450
      %v7480 = vadd.f32 %v7285, %v7453
      %v7481 = vadd.f32 %v7286, %v7455
      %v7482 = vadd.f32 %v7287, %v7458
      %v7483 = vadd.f32 %v7288, %v7460
      %v7484 = vadd.f32 %v7289, %v7463
      %v7485 = vadd.f32 %v7290, %v7465
      %v7486 = vadd.f32 %v7291, %v7468
      %v7487 = vadd.f32 %v7292, %v7470
      %v7488 = vld [vmem:[%s7293] sm:$0xf]
      %v7489 = vld [vmem:[%s7293 + $0x4] sm:$0xf]
      %v7490 = vld [vmem:[%s7293 + $0x8] sm:$0x1]
      %v7491 = vld [vmem:[%s7293 + $0xc] sm:$0xf]
      %v7492 = vld [vmem:[%s7293 + $0x10] sm:$0xf]
      %v7493 = vld [vmem:[%s7293 + $0x14] sm:$0x1]
      %v7494 = vld [vmem:[%s7293 + $0x18] sm:$0xf]
      %v7495 = vld [vmem:[%s7293 + $0x1c] sm:$0xf]
      %v7496 = vld [vmem:[%s7293 + $0x20] sm:$0x1]
      %v7497 = vld [vmem:[%s7293 + $0x24] sm:$0xf]
      %v7498 = vld [vmem:[%s7293 + $0x28] sm:$0xf]
      %v7499 = vld [vmem:[%s7293 + $0x2c] sm:$0x1]
      %v7500 = vld [vmem:[%s7293 + $0x30] sm:$0xf]
      %v7501 = vld [vmem:[%s7293 + $0x34] sm:$0xf]
      %v7502 = vld [vmem:[%s7293 + $0x38] sm:$0x1]
      %v7503 = vld [vmem:[%s7293 + $0x3c] sm:$0xf]
      %v7504 = vld [vmem:[%s7293 + $0x40] sm:$0xf]
      %v7505 = vld [vmem:[%s7293 + $0x44] sm:$0x1]
      %v7506 = vld [vmem:[%s7293 + $0x48] sm:$0xf]
      %v7507 = vld [vmem:[%s7293 + $0x4c] sm:$0xf]
      %v7508 = vld [vmem:[%s7293 + $0x50] sm:$0x1]
      %v7509 = vld [vmem:[%s7293 + $0x54] sm:$0xf]
      %v7510 = vld [vmem:[%s7293 + $0x58] sm:$0xf]
      %v7511 = vld [vmem:[%s7293 + $0x5c] sm:$0x1]
      %v7513 = vshrl.u32 %v7488, 16
      %v7515 = vrot.slane %v7513, 4
      %v7516 = vshll.u32 %v7488, 16
      %v7518 = vrot.slane %v7516, 5
      %v7519 = vor.u32 %v7515, %v7518
      %v7520 = vrot.slane %v7519, 4
      %v7522 = vshll.u32 %v7489, 16
      %v7524 = vrot.slane %v7522, 5
      %v7525 = vsel %vm390, %v7520, %v7524
      %v7526 = vshrl.u32 %v7489, 16
      %v7528 = vrot.slane %v7526, 4
      %v7529 = vor.u32 %v7528, %v7524
      %v7530 = vrot.slane %v7529, 4
      %v7532 = vshll.u32 %v7490, 16
      %v7534 = vrot.slane %v7532, 5
      %v7535 = vsel %vm390, %v7530, %v7534
      %v7537 = vshrl.u32 %v7491, 16
      %v7539 = vrot.slane %v7537, 4
      %v7540 = vshll.u32 %v7491, 16
      %v7542 = vrot.slane %v7540, 5
      %v7543 = vor.u32 %v7539, %v7542
      %v7544 = vrot.slane %v7543, 4
      %v7546 = vshll.u32 %v7492, 16
      %v7548 = vrot.slane %v7546, 5
      %v7549 = vsel %vm390, %v7544, %v7548
      %v7550 = vshrl.u32 %v7492, 16
      %v7552 = vrot.slane %v7550, 4
      %v7553 = vor.u32 %v7552, %v7548
      %v7554 = vrot.slane %v7553, 4
      %v7556 = vshll.u32 %v7493, 16
      %v7558 = vrot.slane %v7556, 5
      %v7559 = vsel %vm390, %v7554, %v7558
      %v7561 = vshrl.u32 %v7494, 16
      %v7563 = vrot.slane %v7561, 4
      %v7564 = vshll.u32 %v7494, 16
      %v7566 = vrot.slane %v7564, 5
      %v7567 = vor.u32 %v7563, %v7566
      %v7568 = vrot.slane %v7567, 4
      %v7570 = vshll.u32 %v7495, 16
      %v7572 = vrot.slane %v7570, 5
      %v7573 = vsel %vm390, %v7568, %v7572
      %v7574 = vshrl.u32 %v7495, 16
      %v7576 = vrot.slane %v7574, 4
      %v7577 = vor.u32 %v7576, %v7572
      %v7578 = vrot.slane %v7577, 4
      %v7580 = vshll.u32 %v7496, 16
      %v7582 = vrot.slane %v7580, 5
      %v7583 = vsel %vm390, %v7578, %v7582
      %v7585 = vshrl.u32 %v7497, 16
      %v7587 = vrot.slane %v7585, 4
      %v7588 = vshll.u32 %v7497, 16
      %v7590 = vrot.slane %v7588, 5
      %v7591 = vor.u32 %v7587, %v7590
      %v7592 = vrot.slane %v7591, 4
      %v7594 = vshll.u32 %v7498, 16
      %v7596 = vrot.slane %v7594, 5
      %v7597 = vsel %vm390, %v7592, %v7596
      %v7598 = vshrl.u32 %v7498, 16
      %v7600 = vrot.slane %v7598, 4
      %v7601 = vor.u32 %v7600, %v7596
      %v7602 = vrot.slane %v7601, 4
      %v7604 = vshll.u32 %v7499, 16
      %v7606 = vrot.slane %v7604, 5
      %v7607 = vsel %vm390, %v7602, %v7606
      %v7609 = vshrl.u32 %v7500, 16
      %v7611 = vrot.slane %v7609, 4
      %v7612 = vshll.u32 %v7500, 16
      %v7614 = vrot.slane %v7612, 5
      %v7615 = vor.u32 %v7611, %v7614
      %v7616 = vrot.slane %v7615, 4
      %v7618 = vshll.u32 %v7501, 16
      %v7620 = vrot.slane %v7618, 5
      %v7621 = vsel %vm390, %v7616, %v7620
      %v7622 = vshrl.u32 %v7501, 16
      %v7624 = vrot.slane %v7622, 4
      %v7625 = vor.u32 %v7624, %v7620
      %v7626 = vrot.slane %v7625, 4
      %v7628 = vshll.u32 %v7502, 16
      %v7630 = vrot.slane %v7628, 5
      %v7631 = vsel %vm390, %v7626, %v7630
      %v7633 = vshrl.u32 %v7503, 16
      %v7635 = vrot.slane %v7633, 4
      %v7636 = vshll.u32 %v7503, 16
      %v7638 = vrot.slane %v7636, 5
      %v7639 = vor.u32 %v7635, %v7638
      %v7640 = vrot.slane %v7639, 4
      %v7642 = vshll.u32 %v7504, 16
      %v7644 = vrot.slane %v7642, 5
      %v7645 = vsel %vm390, %v7640, %v7644
      %v7646 = vshrl.u32 %v7504, 16
      %v7648 = vrot.slane %v7646, 4
      %v7649 = vor.u32 %v7648, %v7644
      %v7650 = vrot.slane %v7649, 4
      %v7652 = vshll.u32 %v7505, 16
      %v7654 = vrot.slane %v7652, 5
      %v7655 = vsel %vm390, %v7650, %v7654
      %v7657 = vshrl.u32 %v7506, 16
      %v7659 = vrot.slane %v7657, 4
      %v7660 = vshll.u32 %v7506, 16
      %v7662 = vrot.slane %v7660, 5
      %v7663 = vor.u32 %v7659, %v7662
      %v7664 = vrot.slane %v7663, 4
      %v7666 = vshll.u32 %v7507, 16
      %v7668 = vrot.slane %v7666, 5
      %v7669 = vsel %vm390, %v7664, %v7668
      %v7670 = vshrl.u32 %v7507, 16
      %v7672 = vrot.slane %v7670, 4
      %v7673 = vor.u32 %v7672, %v7668
      %v7674 = vrot.slane %v7673, 4
      %v7676 = vshll.u32 %v7508, 16
      %v7678 = vrot.slane %v7676, 5
      %v7679 = vsel %vm390, %v7674, %v7678
      %v7681 = vshrl.u32 %v7509, 16
      %v7683 = vrot.slane %v7681, 4
      %v7684 = vshll.u32 %v7509, 16
      %v7686 = vrot.slane %v7684, 5
      %v7687 = vor.u32 %v7683, %v7686
      %v7688 = vrot.slane %v7687, 4
      %v7690 = vshll.u32 %v7510, 16
      %v7692 = vrot.slane %v7690, 5
      %v7693 = vsel %vm390, %v7688, %v7692
      %v7694 = vshrl.u32 %v7510, 16
      %v7696 = vrot.slane %v7694, 4
      %v7697 = vor.u32 %v7696, %v7692
      %v7698 = vrot.slane %v7697, 4
      %v7700 = vshll.u32 %v7511, 16
      %v7702 = vrot.slane %v7700, 5
      %v7703 = vsel %vm390, %v7698, %v7702
      %s7704 = scalar_lea.vmem %s2, 448
      %v7705 = vld [vmem:[%s7704] sm:$0xf]
      %v7706 = vld [vmem:[%s7704 + $0x4] sm:$0xf]
      %v7707 = vld [vmem:[%s7704 + $0x8] sm:$0xf]
      %v7708 = vld [vmem:[%s7704 + $0xc] sm:$0xf]
      %v7709 = vld [vmem:[%s7704 + $0x10] sm:$0xf]
      %v7710 = vld [vmem:[%s7704 + $0x14] sm:$0xf]
      %v7711 = vld [vmem:[%s7704 + $0x18] sm:$0xf]
      %v7712 = vld [vmem:[%s7704 + $0x1c] sm:$0xf]
      %v7713 = vld [vmem:[%s7704 + $0x20] sm:$0xf]
      %v7714 = vld [vmem:[%s7704 + $0x24] sm:$0xf]
      %v7715 = vld [vmem:[%s7704 + $0x28] sm:$0xf]
      %v7716 = vld [vmem:[%s7704 + $0x2c] sm:$0xf]
      %v7717 = vld [vmem:[%s7704 + $0x30] sm:$0xf]
      %v7718 = vld [vmem:[%s7704 + $0x34] sm:$0xf]
      %v7719 = vld [vmem:[%s7704 + $0x38] sm:$0xf]
      %v7720 = vld [vmem:[%s7704 + $0x3c] sm:$0xf]
      %v7721 = vunpack.c.l.b16 %v7525
      %v7722 = vunpack.c.l.b16 %v7535
      %v7723 = vunpack.c.l.b16 %v7549
      %v7724 = vunpack.c.l.b16 %v7559
      %v7725 = vunpack.c.l.b16 %v7573
      %v7726 = vunpack.c.l.b16 %v7583
      %v7727 = vunpack.c.l.b16 %v7597
      %v7728 = vunpack.c.l.b16 %v7607
      %v7729 = vunpack.c.l.b16 %v7621
      %v7730 = vunpack.c.l.b16 %v7631
      %v7731 = vunpack.c.l.b16 %v7645
      %v7732 = vunpack.c.l.b16 %v7655
      %v7733 = vunpack.c.l.b16 %v7669
      %v7734 = vunpack.c.l.b16 %v7679
      %v7735 = vunpack.c.l.b16 %v7693
      %v7736 = vunpack.c.l.b16 %v7703
      %v7737 = vpack.c.b16 %v7722, %v7721
      %v7738 = vpack.c.b16 %v7724, %v7723
      %v7739 = vpack.c.b16 %v7726, %v7725
      %v7740 = vpack.c.b16 %v7728, %v7727
      %v7741 = vpack.c.b16 %v7730, %v7729
      %v7742 = vpack.c.b16 %v7732, %v7731
      %v7743 = vpack.c.b16 %v7734, %v7733
      %v7744 = vpack.c.b16 %v7736, %v7735
      %v7769 = vunpack.c.l.b16 %v7705
      %v7770 = vunpack.c.l.b16 %v7706
      %v7771 = vunpack.c.l.b16 %v7707
      %v7772 = vunpack.c.l.b16 %v7708
      %v7773 = vunpack.c.l.b16 %v7709
      %v7774 = vunpack.c.l.b16 %v7710
      %v7775 = vunpack.c.l.b16 %v7711
      %v7776 = vunpack.c.l.b16 %v7712
      %v7777 = vunpack.c.l.b16 %v7713
      %v7778 = vunpack.c.l.b16 %v7714
      %v7779 = vunpack.c.l.b16 %v7715
      %v7780 = vunpack.c.l.b16 %v7716
      %v7781 = vunpack.c.l.b16 %v7717
      %v7782 = vunpack.c.l.b16 %v7718
      %v7783 = vunpack.c.l.b16 %v7719
      %v7784 = vunpack.c.l.b16 %v7720
      %v7785 = vpack.c.b16 %v7770, %v7769
      %v7786 = vpack.c.b16 %v7772, %v7771
      %v7787 = vpack.c.b16 %v7774, %v7773
      %v7788 = vpack.c.b16 %v7776, %v7775
      %v7789 = vpack.c.b16 %v7778, %v7777
      %v7790 = vpack.c.b16 %v7780, %v7779
      %v7791 = vpack.c.b16 %v7782, %v7781
      %v7792 = vpack.c.b16 %v7784, %v7783
      %7801 = vmatpush.bf16.msra.mxu0 %v7792
      %7802 = vmatpush.bf16.msra.mxu0 %v7791
      %7803 = vmatpush.bf16.msra.mxu0 %v7790
      %7804 = vmatpush.bf16.msra.mxu0 %v7789
      %7805 = vmatpush.bf16.msra.mxu0 %v7788
      %7806 = vmatpush.bf16.msra.mxu0 %v7787
      %7807 = vmatpush.bf16.msra.mxu0 %v7786
      %7808 = vmatpush.bf16.msra.mxu0 %v7785
      %7809 = vmatmul.bf16.gmra.mxu0 %v7737
      %v7810 = vpop.f32.mrf.mxu0
      %v7811 = vadd.f32 0.0, %v7810
      %v7812 = vpop.f32.mrf.mxu0
      %v7813 = vadd.f32 0.0, %v7812
      %7814 = vmatmul.bf16.gmra.mxu0 %v7738
      %v7815 = vpop.f32.mrf.mxu0
      %v7816 = vadd.f32 0.0, %v7815
      %v7817 = vpop.f32.mrf.mxu0
      %v7818 = vadd.f32 0.0, %v7817
      %7819 = vmatmul.bf16.gmra.mxu0 %v7739
      %v7820 = vpop.f32.mrf.mxu0
      %v7821 = vadd.f32 0.0, %v7820
      %v7822 = vpop.f32.mrf.mxu0
      %v7823 = vadd.f32 0.0, %v7822
      %7824 = vmatmul.bf16.gmra.mxu0 %v7740
      %v7825 = vpop.f32.mrf.mxu0
      %v7826 = vadd.f32 0.0, %v7825
      %v7827 = vpop.f32.mrf.mxu0
      %v7828 = vadd.f32 0.0, %v7827
      %7829 = vmatmul.bf16.gmra.mxu0 %v7741
      %v7830 = vpop.f32.mrf.mxu0
      %v7831 = vadd.f32 0.0, %v7830
      %v7832 = vpop.f32.mrf.mxu0
      %v7833 = vadd.f32 0.0, %v7832
      %7834 = vmatmul.bf16.gmra.mxu0 %v7742
      %v7835 = vpop.f32.mrf.mxu0
      %v7836 = vadd.f32 0.0, %v7835
      %v7837 = vpop.f32.mrf.mxu0
      %v7838 = vadd.f32 0.0, %v7837
      %7839 = vmatmul.bf16.gmra.mxu0 %v7743
      %v7840 = vpop.f32.mrf.mxu0
      %v7841 = vadd.f32 0.0, %v7840
      %v7842 = vpop.f32.mrf.mxu0
      %v7843 = vadd.f32 0.0, %v7842
      %7844 = vmatmul.bf16.gmra.mxu0 %v7744
      %v7845 = vpop.f32.mrf.mxu0
      %v7846 = vadd.f32 0.0, %v7845
      %v7847 = vpop.f32.mrf.mxu0
      %v7848 = vadd.f32 0.0, %v7847
      %7849 = vdwg.mxu0
      %v7850 = vadd.f32 %v7472, %v7811
      %v7851 = vadd.f32 %v7473, %v7813
      %v7852 = vadd.f32 %v7474, %v7816
      %v7853 = vadd.f32 %v7475, %v7818
      %v7854 = vadd.f32 %v7476, %v7821
      %v7855 = vadd.f32 %v7477, %v7823
      %v7856 = vadd.f32 %v7478, %v7826
      %v7857 = vadd.f32 %v7479, %v7828
      %v7858 = vadd.f32 %v7480, %v7831
      %v7859 = vadd.f32 %v7481, %v7833
      %v7860 = vadd.f32 %v7482, %v7836
      %v7861 = vadd.f32 %v7483, %v7838
      %v7862 = vadd.f32 %v7484, %v7841
      %v7863 = vadd.f32 %v7485, %v7843
      %v7864 = vadd.f32 %v7486, %v7846
      %v7865 = vadd.f32 %v7487, %v7848
      %v7866 = vld [vmem:[%s7293] sm:$0xe]
      %v7867 = vld [vmem:[%s7293 + $0xc] sm:$0xe]
      %v7868 = vld [vmem:[%s7293 + $0x18] sm:$0xe]
      %v7869 = vld [vmem:[%s7293 + $0x24] sm:$0xe]
      %v7870 = vld [vmem:[%s7293 + $0x30] sm:$0xe]
      %v7871 = vld [vmem:[%s7293 + $0x3c] sm:$0xe]
      %v7872 = vld [vmem:[%s7293 + $0x48] sm:$0xe]
      %v7873 = vld [vmem:[%s7293 + $0x54] sm:$0xe]
      %v7898 = vrot.slane %v7866, 5
      %v7899 = vrot.slane %v7898, 4
      %v7900 = vrot.slane %v7489, 5
      %v7901 = vsel %vm900, %v7899, %v7900
      %v7902 = vrot.slane %v7900, 4
      %v7903 = vrot.slane %v7490, 5
      %v7904 = vsel %vm900, %v7902, %v7903
      %v7905 = vrot.slane %v7867, 5
      %v7906 = vrot.slane %v7905, 4
      %v7907 = vrot.slane %v7492, 5
      %v7908 = vsel %vm900, %v7906, %v7907
      %v7909 = vrot.slane %v7907, 4
      %v7910 = vrot.slane %v7493, 5
      %v7911 = vsel %vm900, %v7909, %v7910
      %v7912 = vrot.slane %v7868, 5
      %v7913 = vrot.slane %v7912, 4
      %v7914 = vrot.slane %v7495, 5
      %v7915 = vsel %vm900, %v7913, %v7914
      %v7916 = vrot.slane %v7914, 4
      %v7917 = vrot.slane %v7496, 5
      %v7918 = vsel %vm900, %v7916, %v7917
      %v7919 = vrot.slane %v7869, 5
      %v7920 = vrot.slane %v7919, 4
      %v7921 = vrot.slane %v7498, 5
      %v7922 = vsel %vm900, %v7920, %v7921
      %v7923 = vrot.slane %v7921, 4
      %v7924 = vrot.slane %v7499, 5
      %v7925 = vsel %vm900, %v7923, %v7924
      %v7926 = vrot.slane %v7870, 5
      %v7927 = vrot.slane %v7926, 4
      %v7928 = vrot.slane %v7501, 5
      %v7929 = vsel %vm900, %v7927, %v7928
      %v7930 = vrot.slane %v7928, 4
      %v7931 = vrot.slane %v7502, 5
      %v7932 = vsel %vm900, %v7930, %v7931
      %v7933 = vrot.slane %v7871, 5
      %v7934 = vrot.slane %v7933, 4
      %v7935 = vrot.slane %v7504, 5
      %v7936 = vsel %vm900, %v7934, %v7935
      %v7937 = vrot.slane %v7935, 4
      %v7938 = vrot.slane %v7505, 5
      %v7939 = vsel %vm900, %v7937, %v7938
      %v7940 = vrot.slane %v7872, 5
      %v7941 = vrot.slane %v7940, 4
      %v7942 = vrot.slane %v7507, 5
      %v7943 = vsel %vm900, %v7941, %v7942
      %v7944 = vrot.slane %v7942, 4
      %v7945 = vrot.slane %v7508, 5
      %v7946 = vsel %vm900, %v7944, %v7945
      %v7947 = vrot.slane %v7873, 5
      %v7948 = vrot.slane %v7947, 4
      %v7949 = vrot.slane %v7510, 5
      %v7950 = vsel %vm900, %v7948, %v7949
      %v7951 = vrot.slane %v7949, 4
      %v7952 = vrot.slane %v7511, 5
      %v7953 = vsel %vm900, %v7951, %v7952
      %s7954 = scalar_lea.vmem %s2, 512
      %v7955 = vld [vmem:[%s7954] sm:$0xf]
      %v7956 = vld [vmem:[%s7954 + $0x4] sm:$0xf]
      %v7957 = vld [vmem:[%s7954 + $0x8] sm:$0xf]
      %v7958 = vld [vmem:[%s7954 + $0xc] sm:$0xf]
      %v7959 = vld [vmem:[%s7954 + $0x10] sm:$0xf]
      %v7960 = vld [vmem:[%s7954 + $0x14] sm:$0xf]
      %v7961 = vld [vmem:[%s7954 + $0x18] sm:$0xf]
      %v7962 = vld [vmem:[%s7954 + $0x1c] sm:$0xf]
      %v7963 = vld [vmem:[%s7954 + $0x20] sm:$0xf]
      %v7964 = vld [vmem:[%s7954 + $0x24] sm:$0xf]
      %v7965 = vld [vmem:[%s7954 + $0x28] sm:$0xf]
      %v7966 = vld [vmem:[%s7954 + $0x2c] sm:$0xf]
      %v7967 = vld [vmem:[%s7954 + $0x30] sm:$0xf]
      %v7968 = vld [vmem:[%s7954 + $0x34] sm:$0xf]
      %v7969 = vld [vmem:[%s7954 + $0x38] sm:$0xf]
      %v7970 = vld [vmem:[%s7954 + $0x3c] sm:$0xf]
      %v7971 = vunpack.c.l.b16 %v7901
      %v7972 = vunpack.c.l.b16 %v7904
      %v7973 = vunpack.c.l.b16 %v7908
      %v7974 = vunpack.c.l.b16 %v7911
      %v7975 = vunpack.c.l.b16 %v7915
      %v7976 = vunpack.c.l.b16 %v7918
      %v7977 = vunpack.c.l.b16 %v7922
      %v7978 = vunpack.c.l.b16 %v7925
      %v7979 = vunpack.c.l.b16 %v7929
      %v7980 = vunpack.c.l.b16 %v7932
      %v7981 = vunpack.c.l.b16 %v7936
      %v7982 = vunpack.c.l.b16 %v7939
      %v7983 = vunpack.c.l.b16 %v7943
      %v7984 = vunpack.c.l.b16 %v7946
      %v7985 = vunpack.c.l.b16 %v7950
      %v7986 = vunpack.c.l.b16 %v7953
      %v7987 = vpack.c.b16 %v7972, %v7971
      %v7988 = vpack.c.b16 %v7974, %v7973
      %v7989 = vpack.c.b16 %v7976, %v7975
      %v7990 = vpack.c.b16 %v7978, %v7977
      %v7991 = vpack.c.b16 %v7980, %v7979
      %v7992 = vpack.c.b16 %v7982, %v7981
      %v7993 = vpack.c.b16 %v7984, %v7983
      %v7994 = vpack.c.b16 %v7986, %v7985
      %v8019 = vunpack.c.l.b16 %v7955
      %v8020 = vunpack.c.l.b16 %v7956
      %v8021 = vunpack.c.l.b16 %v7957
      %v8022 = vunpack.c.l.b16 %v7958
      %v8023 = vunpack.c.l.b16 %v7959
      %v8024 = vunpack.c.l.b16 %v7960
      %v8025 = vunpack.c.l.b16 %v7961
      %v8026 = vunpack.c.l.b16 %v7962
      %v8027 = vunpack.c.l.b16 %v7963
      %v8028 = vunpack.c.l.b16 %v7964
      %v8029 = vunpack.c.l.b16 %v7965
      %v8030 = vunpack.c.l.b16 %v7966
      %v8031 = vunpack.c.l.b16 %v7967
      %v8032 = vunpack.c.l.b16 %v7968
      %v8033 = vunpack.c.l.b16 %v7969
      %v8034 = vunpack.c.l.b16 %v7970
      %v8035 = vpack.c.b16 %v8020, %v8019
      %v8036 = vpack.c.b16 %v8022, %v8021
      %v8037 = vpack.c.b16 %v8024, %v8023
      %v8038 = vpack.c.b16 %v8026, %v8025
      %v8039 = vpack.c.b16 %v8028, %v8027
      %v8040 = vpack.c.b16 %v8030, %v8029
      %v8041 = vpack.c.b16 %v8032, %v8031
      %v8042 = vpack.c.b16 %v8034, %v8033
      %8051 = vmatpush.bf16.msra.mxu0 %v8042
      %8052 = vmatpush.bf16.msra.mxu0 %v8041
      %8053 = vmatpush.bf16.msra.mxu0 %v8040
      %8054 = vmatpush.bf16.msra.mxu0 %v8039
      %8055 = vmatpush.bf16.msra.mxu0 %v8038
      %8056 = vmatpush.bf16.msra.mxu0 %v8037
      %8057 = vmatpush.bf16.msra.mxu0 %v8036
      %8058 = vmatpush.bf16.msra.mxu0 %v8035
      %8059 = vmatmul.bf16.gmra.mxu0 %v7987
      %v8060 = vpop.f32.mrf.mxu0
      %v8061 = vadd.f32 0.0, %v8060
      %v8062 = vpop.f32.mrf.mxu0
      %v8063 = vadd.f32 0.0, %v8062
      %8064 = vmatmul.bf16.gmra.mxu0 %v7988
      %v8065 = vpop.f32.mrf.mxu0
      %v8066 = vadd.f32 0.0, %v8065
      %v8067 = vpop.f32.mrf.mxu0
      %v8068 = vadd.f32 0.0, %v8067
      %8069 = vmatmul.bf16.gmra.mxu0 %v7989
      %v8070 = vpop.f32.mrf.mxu0
      %v8071 = vadd.f32 0.0, %v8070
      %v8072 = vpop.f32.mrf.mxu0
      %v8073 = vadd.f32 0.0, %v8072
      %8074 = vmatmul.bf16.gmra.mxu0 %v7990
      %v8075 = vpop.f32.mrf.mxu0
      %v8076 = vadd.f32 0.0, %v8075
      %v8077 = vpop.f32.mrf.mxu0
      %v8078 = vadd.f32 0.0, %v8077
      %8079 = vmatmul.bf16.gmra.mxu0 %v7991
      %v8080 = vpop.f32.mrf.mxu0
      %v8081 = vadd.f32 0.0, %v8080
      %v8082 = vpop.f32.mrf.mxu0
      %v8083 = vadd.f32 0.0, %v8082
      %8084 = vmatmul.bf16.gmra.mxu0 %v7992
      %v8085 = vpop.f32.mrf.mxu0
      %v8086 = vadd.f32 0.0, %v8085
      %v8087 = vpop.f32.mrf.mxu0
      %v8088 = vadd.f32 0.0, %v8087
      %8089 = vmatmul.bf16.gmra.mxu0 %v7993
      %v8090 = vpop.f32.mrf.mxu0
      %v8091 = vadd.f32 0.0, %v8090
      %v8092 = vpop.f32.mrf.mxu0
      %v8093 = vadd.f32 0.0, %v8092
      %8094 = vmatmul.bf16.gmra.mxu0 %v7994
      %v8095 = vpop.f32.mrf.mxu0
      %v8096 = vadd.f32 0.0, %v8095
      %v8097 = vpop.f32.mrf.mxu0
      %v8098 = vadd.f32 0.0, %v8097
      %8099 = vdwg.mxu0
      %v8100 = vadd.f32 %v7850, %v8061
      %v8101 = vadd.f32 %v7851, %v8063
      %v8102 = vadd.f32 %v7852, %v8066
      %v8103 = vadd.f32 %v7853, %v8068
      %v8104 = vadd.f32 %v7854, %v8071
      %v8105 = vadd.f32 %v7855, %v8073
      %v8106 = vadd.f32 %v7856, %v8076
      %v8107 = vadd.f32 %v7857, %v8078
      %v8108 = vadd.f32 %v7858, %v8081
      %v8109 = vadd.f32 %v7859, %v8083
      %v8110 = vadd.f32 %v7860, %v8086
      %v8111 = vadd.f32 %v7861, %v8088
      %v8112 = vadd.f32 %v7862, %v8091
      %v8113 = vadd.f32 %v7863, %v8093
      %v8114 = vadd.f32 %v7864, %v8096
      %v8115 = vadd.f32 %v7865, %v8098
      %v8116 = vld [vmem:[%s1119] sm:$0xf]
      %v8117 = vld [vmem:[%s1119 + $0x4] sm:$0xf]
      %v8118 = vld [vmem:[%s1119 + $0x8] sm:$0x1]
      %v8119 = vld [vmem:[%s1119 + $0xc] sm:$0xf]
      %v8120 = vld [vmem:[%s1119 + $0x10] sm:$0xf]
      %v8121 = vld [vmem:[%s1119 + $0x14] sm:$0x1]
      %v8122 = vld [vmem:[%s1119 + $0x18] sm:$0xf]
      %v8123 = vld [vmem:[%s1119 + $0x1c] sm:$0xf]
      %v8124 = vld [vmem:[%s1119 + $0x20] sm:$0x1]
      %v8125 = vld [vmem:[%s1119 + $0x24] sm:$0xf]
      %v8126 = vld [vmem:[%s1119 + $0x28] sm:$0xf]
      %v8127 = vld [vmem:[%s1119 + $0x2c] sm:$0x1]
      %v8128 = vld [vmem:[%s1119 + $0x30] sm:$0xf]
      %v8129 = vld [vmem:[%s1119 + $0x34] sm:$0xf]
      %v8130 = vld [vmem:[%s1119 + $0x38] sm:$0x1]
      %v8131 = vld [vmem:[%s1119 + $0x3c] sm:$0xf]
      %v8132 = vld [vmem:[%s1119 + $0x40] sm:$0xf]
      %v8133 = vld [vmem:[%s1119 + $0x44] sm:$0x1]
      %v8134 = vld [vmem:[%s1119 + $0x48] sm:$0xf]
      %v8135 = vld [vmem:[%s1119 + $0x4c] sm:$0xf]
      %v8136 = vld [vmem:[%s1119 + $0x50] sm:$0x1]
      %v8137 = vld [vmem:[%s1119 + $0x54] sm:$0xf]
      %v8138 = vld [vmem:[%s1119 + $0x58] sm:$0xf]
      %v8139 = vld [vmem:[%s1119 + $0x5c] sm:$0x1]
      %v8141 = vperm.slane %v347, 0
      %v8143 = vadd.f32 %v8100, %v8141
      %v8144 = vadd.f32 %v8101, %v8141
      %v8145 = vadd.f32 %v8102, %v8141
      %v8146 = vadd.f32 %v8103, %v8141
      %v8147 = vadd.f32 %v8104, %v8141
      %v8148 = vadd.f32 %v8105, %v8141
      %v8149 = vadd.f32 %v8106, %v8141
      %v8150 = vadd.f32 %v8107, %v8141
      %v8151 = vadd.f32 %v8108, %v8141
      %v8152 = vadd.f32 %v8109, %v8141
      %v8153 = vadd.f32 %v8110, %v8141
      %v8154 = vadd.f32 %v8111, %v8141
      %v8155 = vadd.f32 %v8112, %v8141
      %v8156 = vadd.f32 %v8113, %v8141
      %v8157 = vadd.f32 %v8114, %v8141
      %v8158 = vadd.f32 %v8115, %v8141
      %v8160 = vshrl.u32 %v8116, 16
      %v8162 = vrot.slane %v8160, 4
      %v8163 = vshll.u32 %v8116, 16
      %v8165 = vrot.slane %v8163, 5
      %v8166 = vor.u32 %v8162, %v8165
      %v8167 = vrot.slane %v8166, 4
      %v8169 = vshll.u32 %v8117, 16
      %v8171 = vrot.slane %v8169, 5
      %v8172 = vsel %vm390, %v8167, %v8171
      %v8173 = vshrl.u32 %v8117, 16
      %v8175 = vrot.slane %v8173, 4
      %v8176 = vor.u32 %v8175, %v8171
      %v8177 = vrot.slane %v8176, 4
      %v8179 = vshll.u32 %v8118, 16
      %v8181 = vrot.slane %v8179, 5
      %v8182 = vsel %vm390, %v8177, %v8181
      %v8184 = vshrl.u32 %v8119, 16
      %v8186 = vrot.slane %v8184, 4
      %v8187 = vshll.u32 %v8119, 16
      %v8189 = vrot.slane %v8187, 5
      %v8190 = vor.u32 %v8186, %v8189
      %v8191 = vrot.slane %v8190, 4
      %v8193 = vshll.u32 %v8120, 16
      %v8195 = vrot.slane %v8193, 5
      %v8196 = vsel %vm390, %v8191, %v8195
      %v8197 = vshrl.u32 %v8120, 16
      %v8199 = vrot.slane %v8197, 4
      %v8200 = vor.u32 %v8199, %v8195
      %v8201 = vrot.slane %v8200, 4
      %v8203 = vshll.u32 %v8121, 16
      %v8205 = vrot.slane %v8203, 5
      %v8206 = vsel %vm390, %v8201, %v8205
      %v8208 = vshrl.u32 %v8122, 16
      %v8210 = vrot.slane %v8208, 4
      %v8211 = vshll.u32 %v8122, 16
      %v8213 = vrot.slane %v8211, 5
      %v8214 = vor.u32 %v8210, %v8213
      %v8215 = vrot.slane %v8214, 4
      %v8217 = vshll.u32 %v8123, 16
      %v8219 = vrot.slane %v8217, 5
      %v8220 = vsel %vm390, %v8215, %v8219
      %v8221 = vshrl.u32 %v8123, 16
      %v8223 = vrot.slane %v8221, 4
      %v8224 = vor.u32 %v8223, %v8219
      %v8225 = vrot.slane %v8224, 4
      %v8227 = vshll.u32 %v8124, 16
      %v8229 = vrot.slane %v8227, 5
      %v8230 = vsel %vm390, %v8225, %v8229
      %v8232 = vshrl.u32 %v8125, 16
      %v8234 = vrot.slane %v8232, 4
      %v8235 = vshll.u32 %v8125, 16
      %v8237 = vrot.slane %v8235, 5
      %v8238 = vor.u32 %v8234, %v8237
      %v8239 = vrot.slane %v8238, 4
      %v8241 = vshll.u32 %v8126, 16
      %v8243 = vrot.slane %v8241, 5
      %v8244 = vsel %vm390, %v8239, %v8243
      %v8245 = vshrl.u32 %v8126, 16
      %v8247 = vrot.slane %v8245, 4
      %v8248 = vor.u32 %v8247, %v8243
      %v8249 = vrot.slane %v8248, 4
      %v8251 = vshll.u32 %v8127, 16
      %v8253 = vrot.slane %v8251, 5
      %v8254 = vsel %vm390, %v8249, %v8253
      %v8256 = vshrl.u32 %v8128, 16
      %v8258 = vrot.slane %v8256, 4
      %v8259 = vshll.u32 %v8128, 16
      %v8261 = vrot.slane %v8259, 5
      %v8262 = vor.u32 %v8258, %v8261
      %v8263 = vrot.slane %v8262, 4
      %v8265 = vshll.u32 %v8129, 16
      %v8267 = vrot.slane %v8265, 5
      %v8268 = vsel %vm390, %v8263, %v8267
      %v8269 = vshrl.u32 %v8129, 16
      %v8271 = vrot.slane %v8269, 4
      %v8272 = vor.u32 %v8271, %v8267
      %v8273 = vrot.slane %v8272, 4
      %v8275 = vshll.u32 %v8130, 16
      %v8277 = vrot.slane %v8275, 5
      %v8278 = vsel %vm390, %v8273, %v8277
      %v8280 = vshrl.u32 %v8131, 16
      %v8282 = vrot.slane %v8280, 4
      %v8283 = vshll.u32 %v8131, 16
      %v8285 = vrot.slane %v8283, 5
      %v8286 = vor.u32 %v8282, %v8285
      %v8287 = vrot.slane %v8286, 4
      %v8289 = vshll.u32 %v8132, 16
      %v8291 = vrot.slane %v8289, 5
      %v8292 = vsel %vm390, %v8287, %v8291
      %v8293 = vshrl.u32 %v8132, 16
      %v8295 = vrot.slane %v8293, 4
      %v8296 = vor.u32 %v8295, %v8291
      %v8297 = vrot.slane %v8296, 4
      %v8299 = vshll.u32 %v8133, 16
      %v8301 = vrot.slane %v8299, 5
      %v8302 = vsel %vm390, %v8297, %v8301
      %v8304 = vshrl.u32 %v8134, 16
      %v8306 = vrot.slane %v8304, 4
      %v8307 = vshll.u32 %v8134, 16
      %v8309 = vrot.slane %v8307, 5
      %v8310 = vor.u32 %v8306, %v8309
      %v8311 = vrot.slane %v8310, 4
      %v8313 = vshll.u32 %v8135, 16
      %v8315 = vrot.slane %v8313, 5
      %v8316 = vsel %vm390, %v8311, %v8315
      %v8317 = vshrl.u32 %v8135, 16
      %v8319 = vrot.slane %v8317, 4
      %v8320 = vor.u32 %v8319, %v8315
      %v8321 = vrot.slane %v8320, 4
      %v8323 = vshll.u32 %v8136, 16
      %v8325 = vrot.slane %v8323, 5
      %v8326 = vsel %vm390, %v8321, %v8325
      %v8328 = vshrl.u32 %v8137, 16
      %v8330 = vrot.slane %v8328, 4
      %v8331 = vshll.u32 %v8137, 16
      %v8333 = vrot.slane %v8331, 5
      %v8334 = vor.u32 %v8330, %v8333
      %v8335 = vrot.slane %v8334, 4
      %v8337 = vshll.u32 %v8138, 16
      %v8339 = vrot.slane %v8337, 5
      %v8340 = vsel %vm390, %v8335, %v8339
      %v8341 = vshrl.u32 %v8138, 16
      %v8343 = vrot.slane %v8341, 4
      %v8344 = vor.u32 %v8343, %v8339
      %v8345 = vrot.slane %v8344, 4
      %v8347 = vshll.u32 %v8139, 16
      %v8349 = vrot.slane %v8347, 5
      %v8350 = vsel %vm390, %v8345, %v8349
      %v8367 = vunpack.c.l.bf16 %v8172
      %v8368 = vunpack.c.l.bf16 %v8182
      %v8369 = vunpack.c.l.bf16 %v8196
      %v8370 = vunpack.c.l.bf16 %v8206
      %v8371 = vunpack.c.l.bf16 %v8220
      %v8372 = vunpack.c.l.bf16 %v8230
      %v8373 = vunpack.c.l.bf16 %v8244
      %v8374 = vunpack.c.l.bf16 %v8254
      %v8375 = vunpack.c.l.bf16 %v8268
      %v8376 = vunpack.c.l.bf16 %v8278
      %v8377 = vunpack.c.l.bf16 %v8292
      %v8378 = vunpack.c.l.bf16 %v8302
      %v8379 = vunpack.c.l.bf16 %v8316
      %v8380 = vunpack.c.l.bf16 %v8326
      %v8381 = vunpack.c.l.bf16 %v8340
      %v8382 = vunpack.c.l.bf16 %v8350
      %v8383 = vadd.f32 %v8143, %v8367
      %v8384 = vadd.f32 %v8144, %v8368
      %v8385 = vadd.f32 %v8145, %v8369
      %v8386 = vadd.f32 %v8146, %v8370
      %v8387 = vadd.f32 %v8147, %v8371
      %v8388 = vadd.f32 %v8148, %v8372
      %v8389 = vadd.f32 %v8149, %v8373
      %v8390 = vadd.f32 %v8150, %v8374
      %v8391 = vadd.f32 %v8151, %v8375
      %v8392 = vadd.f32 %v8152, %v8376
      %v8393 = vadd.f32 %v8153, %v8377
      %v8394 = vadd.f32 %v8154, %v8378
      %v8395 = vadd.f32 %v8155, %v8379
      %v8396 = vadd.f32 %v8156, %v8380
      %v8397 = vadd.f32 %v8157, %v8381
      %v8398 = vadd.f32 %v8158, %v8382
      %v8399 = vmax.f32 %v8383, 0.0
      %v8400 = vmax.f32 %v8384, 0.0
      %v8401 = vmax.f32 %v8385, 0.0
      %v8402 = vmax.f32 %v8386, 0.0
      %v8403 = vmax.f32 %v8387, 0.0
      %v8404 = vmax.f32 %v8388, 0.0
      %v8405 = vmax.f32 %v8389, 0.0
      %v8406 = vmax.f32 %v8390, 0.0
      %v8407 = vmax.f32 %v8391, 0.0
      %v8408 = vmax.f32 %v8392, 0.0
      %v8409 = vmax.f32 %v8393, 0.0
      %v8410 = vmax.f32 %v8394, 0.0
      %v8411 = vmax.f32 %v8395, 0.0
      %v8412 = vmax.f32 %v8396, 0.0
      %v8413 = vmax.f32 %v8397, 0.0
      %v8414 = vmax.f32 %v8398, 0.0
      %8415 = vst [vmem:[%s224] sm:$0xff] %v8399
      %8416 = vst [vmem:[%s224 + $0x8] sm:$0xff] %v8400
      %8417 = vst [vmem:[%s224 + $0x10] sm:$0xff] %v8401
      %8418 = vst [vmem:[%s224 + $0x18] sm:$0xff] %v8402
      %8419 = vst [vmem:[%s224 + $0x20] sm:$0xff] %v8403
      %8420 = vst [vmem:[%s224 + $0x28] sm:$0xff] %v8404
      %8421 = vst [vmem:[%s224 + $0x30] sm:$0xff] %v8405
      %8422 = vst [vmem:[%s224 + $0x38] sm:$0xff] %v8406
      %8423 = vst [vmem:[%s224 + $0x40] sm:$0xff] %v8407
      %8424 = vst [vmem:[%s224 + $0x48] sm:$0xff] %v8408
      %8425 = vst [vmem:[%s224 + $0x50] sm:$0xff] %v8409
      %8426 = vst [vmem:[%s224 + $0x58] sm:$0xff] %v8410
      %8427 = vst [vmem:[%s224 + $0x60] sm:$0xff] %v8411
      %8428 = vst [vmem:[%s224 + $0x68] sm:$0xff] %v8412
      %8429 = vst [vmem:[%s224 + $0x70] sm:$0xff] %v8413
      %8430 = vst [vmem:[%s224 + $0x78] sm:$0xff] %v8414
      %s8431 = scalar_lea.vmem [#allocation2], 96
      %v8432 = vld [vmem:[%s8431] sm:$0xf]
      %v8433 = vld [vmem:[%s8431 + $0x4] sm:$0xf]
      %v8434 = vld [vmem:[%s8431 + $0xc] sm:$0xf]
      %v8435 = vld [vmem:[%s8431 + $0x10] sm:$0xf]
      %v8436 = vld [vmem:[%s8431 + $0x18] sm:$0xf]
      %v8437 = vld [vmem:[%s8431 + $0x1c] sm:$0xf]
      %v8438 = vld [vmem:[%s8431 + $0x24] sm:$0xf]
      %v8439 = vld [vmem:[%s8431 + $0x28] sm:$0xf]
      %v8440 = vld [vmem:[%s8431 + $0x30] sm:$0xf]
      %v8441 = vld [vmem:[%s8431 + $0x34] sm:$0xf]
      %v8442 = vld [vmem:[%s8431 + $0x3c] sm:$0xf]
      %v8443 = vld [vmem:[%s8431 + $0x40] sm:$0xf]
      %v8444 = vld [vmem:[%s8431 + $0x48] sm:$0xf]
      %v8445 = vld [vmem:[%s8431 + $0x4c] sm:$0xf]
      %v8446 = vld [vmem:[%s8431 + $0x54] sm:$0xf]
      %v8447 = vld [vmem:[%s8431 + $0x58] sm:$0xf]
      %v8448 = vld [vmem:[%s2] sm:$0xf]
      %v8449 = vld [vmem:[%s2 + $0x4] sm:$0xf]
      %v8450 = vld [vmem:[%s2 + $0x8] sm:$0xf]
      %v8451 = vld [vmem:[%s2 + $0xc] sm:$0xf]
      %v8452 = vld [vmem:[%s2 + $0x10] sm:$0xf]
      %v8453 = vld [vmem:[%s2 + $0x14] sm:$0xf]
      %v8454 = vld [vmem:[%s2 + $0x18] sm:$0xf]
      %v8455 = vld [vmem:[%s2 + $0x1c] sm:$0xf]
      %v8456 = vld [vmem:[%s2 + $0x20] sm:$0xf]
      %v8457 = vld [vmem:[%s2 + $0x24] sm:$0xf]
      %v8458 = vld [vmem:[%s2 + $0x28] sm:$0xf]
      %v8459 = vld [vmem:[%s2 + $0x2c] sm:$0xf]
      %v8460 = vld [vmem:[%s2 + $0x30] sm:$0xf]
      %v8461 = vld [vmem:[%s2 + $0x34] sm:$0xf]
      %v8462 = vld [vmem:[%s2 + $0x38] sm:$0xf]
      %v8463 = vld [vmem:[%s2 + $0x3c] sm:$0xf]
      %v8464 = vld [vmem:[%s8431 + $0x8] sm:$0x1]
      %v8465 = vld [vmem:[%s8431 + $0x14] sm:$0x1]
      %v8466 = vld [vmem:[%s8431 + $0x20] sm:$0x1]
      %v8467 = vld [vmem:[%s8431 + $0x2c] sm:$0x1]
      %v8468 = vld [vmem:[%s8431 + $0x38] sm:$0x1]
      %v8469 = vld [vmem:[%s8431 + $0x44] sm:$0x1]
      %v8470 = vld [vmem:[%s8431 + $0x50] sm:$0x1]
      %v8471 = vld [vmem:[%s8431 + $0x5c] sm:$0x1]
      %v8473 = vshrl.u32 %v8432, 16
      %v8475 = vrot.slane %v8473, 4
      %v8476 = vshll.u32 %v8432, 16
      %v8478 = vrot.slane %v8476, 5
      %v8479 = vor.u32 %v8475, %v8478
      %v8480 = vrot.slane %v8479, 4
      %v8482 = vshll.u32 %v8433, 16
      %v8484 = vrot.slane %v8482, 5
      %v8485 = vsel %vm390, %v8480, %v8484
      %v8486 = vshrl.u32 %v8433, 16
      %v8488 = vrot.slane %v8486, 4
      %v8489 = vor.u32 %v8488, %v8484
      %v8490 = vrot.slane %v8489, 4
      %v8492 = vshll.u32 %v8464, 16
      %v8494 = vrot.slane %v8492, 5
      %v8495 = vsel %vm390, %v8490, %v8494
      %v8497 = vshrl.u32 %v8434, 16
      %v8499 = vrot.slane %v8497, 4
      %v8500 = vshll.u32 %v8434, 16
      %v8502 = vrot.slane %v8500, 5
      %v8503 = vor.u32 %v8499, %v8502
      %v8504 = vrot.slane %v8503, 4
      %v8506 = vshll.u32 %v8435, 16
      %v8508 = vrot.slane %v8506, 5
      %v8509 = vsel %vm390, %v8504, %v8508
      %v8510 = vshrl.u32 %v8435, 16
      %v8512 = vrot.slane %v8510, 4
      %v8513 = vor.u32 %v8512, %v8508
      %v8514 = vrot.slane %v8513, 4
      %v8516 = vshll.u32 %v8465, 16
      %v8518 = vrot.slane %v8516, 5
      %v8519 = vsel %vm390, %v8514, %v8518
      %v8521 = vshrl.u32 %v8436, 16
      %v8523 = vrot.slane %v8521, 4
      %v8524 = vshll.u32 %v8436, 16
      %v8526 = vrot.slane %v8524, 5
      %v8527 = vor.u32 %v8523, %v8526
      %v8528 = vrot.slane %v8527, 4
      %v8530 = vshll.u32 %v8437, 16
      %v8532 = vrot.slane %v8530, 5
      %v8533 = vsel %vm390, %v8528, %v8532
      %v8534 = vshrl.u32 %v8437, 16
      %v8536 = vrot.slane %v8534, 4
      %v8537 = vor.u32 %v8536, %v8532
      %v8538 = vrot.slane %v8537, 4
      %v8540 = vshll.u32 %v8466, 16
      %v8542 = vrot.slane %v8540, 5
      %v8543 = vsel %vm390, %v8538, %v8542
      %v8545 = vshrl.u32 %v8438, 16
      %v8547 = vrot.slane %v8545, 4
      %v8548 = vshll.u32 %v8438, 16
      %v8550 = vrot.slane %v8548, 5
      %v8551 = vor.u32 %v8547, %v8550
      %v8552 = vrot.slane %v8551, 4
      %v8554 = vshll.u32 %v8439, 16
      %v8556 = vrot.slane %v8554, 5
      %v8557 = vsel %vm390, %v8552, %v8556
      %v8558 = vshrl.u32 %v8439, 16
      %v8560 = vrot.slane %v8558, 4
      %v8561 = vor.u32 %v8560, %v8556
      %v8562 = vrot.slane %v8561, 4
      %v8564 = vshll.u32 %v8467, 16
      %v8566 = vrot.slane %v8564, 5
      %v8567 = vsel %vm390, %v8562, %v8566
      %v8569 = vshrl.u32 %v8440, 16
      %v8571 = vrot.slane %v8569, 4
      %v8572 = vshll.u32 %v8440, 16
      %v8574 = vrot.slane %v8572, 5
      %v8575 = vor.u32 %v8571, %v8574
      %v8576 = vrot.slane %v8575, 4
      %v8578 = vshll.u32 %v8441, 16
      %v8580 = vrot.slane %v8578, 5
      %v8581 = vsel %vm390, %v8576, %v8580
      %v8582 = vshrl.u32 %v8441, 16
      %v8584 = vrot.slane %v8582, 4
      %v8585 = vor.u32 %v8584, %v8580
      %v8586 = vrot.slane %v8585, 4
      %v8588 = vshll.u32 %v8468, 16
      %v8590 = vrot.slane %v8588, 5
      %v8591 = vsel %vm390, %v8586, %v8590
      %v8593 = vshrl.u32 %v8442, 16
      %v8595 = vrot.slane %v8593, 4
      %v8596 = vshll.u32 %v8442, 16
      %v8598 = vrot.slane %v8596, 5
      %v8599 = vor.u32 %v8595, %v8598
      %v8600 = vrot.slane %v8599, 4
      %v8602 = vshll.u32 %v8443, 16
      %v8604 = vrot.slane %v8602, 5
      %v8605 = vsel %vm390, %v8600, %v8604
      %v8606 = vshrl.u32 %v8443, 16
      %v8608 = vrot.slane %v8606, 4
      %v8609 = vor.u32 %v8608, %v8604
      %v8610 = vrot.slane %v8609, 4
      %v8612 = vshll.u32 %v8469, 16
      %v8614 = vrot.slane %v8612, 5
      %v8615 = vsel %vm390, %v8610, %v8614
      %v8617 = vshrl.u32 %v8444, 16
      %v8619 = vrot.slane %v8617, 4
      %v8620 = vshll.u32 %v8444, 16
      %v8622 = vrot.slane %v8620, 5
      %v8623 = vor.u32 %v8619, %v8622
      %v8624 = vrot.slane %v8623, 4
      %v8626 = vshll.u32 %v8445, 16
      %v8628 = vrot.slane %v8626, 5
      %v8629 = vsel %vm390, %v8624, %v8628
      %v8630 = vshrl.u32 %v8445, 16
      %v8632 = vrot.slane %v8630, 4
      %v8633 = vor.u32 %v8632, %v8628
      %v8634 = vrot.slane %v8633, 4
      %v8636 = vshll.u32 %v8470, 16
      %v8638 = vrot.slane %v8636, 5
      %v8639 = vsel %vm390, %v8634, %v8638
      %v8641 = vshrl.u32 %v8446, 16
      %v8643 = vrot.slane %v8641, 4
      %v8644 = vshll.u32 %v8446, 16
      %v8646 = vrot.slane %v8644, 5
      %v8647 = vor.u32 %v8643, %v8646
      %v8648 = vrot.slane %v8647, 4
      %v8650 = vshll.u32 %v8447, 16
      %v8652 = vrot.slane %v8650, 5
      %v8653 = vsel %vm390, %v8648, %v8652
      %v8654 = vshrl.u32 %v8447, 16
      %v8656 = vrot.slane %v8654, 4
      %v8657 = vor.u32 %v8656, %v8652
      %v8658 = vrot.slane %v8657, 4
      %v8660 = vshll.u32 %v8471, 16
      %v8662 = vrot.slane %v8660, 5
      %v8663 = vsel %vm390, %v8658, %v8662
      %v8664 = vld [vmem:[%s5938] sm:$0xf]
      %v8665 = vld [vmem:[%s5938 + $0x4] sm:$0xf]
      %v8666 = vld [vmem:[%s5938 + $0x8] sm:$0xf]
      %v8667 = vld [vmem:[%s5938 + $0xc] sm:$0xf]
      %v8668 = vld [vmem:[%s5938 + $0x10] sm:$0xf]
      %v8669 = vld [vmem:[%s5938 + $0x14] sm:$0xf]
      %v8670 = vld [vmem:[%s5938 + $0x18] sm:$0xf]
      %v8671 = vld [vmem:[%s5938 + $0x1c] sm:$0xf]
      %v8672 = vld [vmem:[%s5938 + $0x20] sm:$0xf]
      %v8673 = vld [vmem:[%s5938 + $0x24] sm:$0xf]
      %v8674 = vld [vmem:[%s5938 + $0x28] sm:$0xf]
      %v8675 = vld [vmem:[%s5938 + $0x2c] sm:$0xf]
      %v8676 = vld [vmem:[%s5938 + $0x30] sm:$0xf]
      %v8677 = vld [vmem:[%s5938 + $0x34] sm:$0xf]
      %v8678 = vld [vmem:[%s5938 + $0x38] sm:$0xf]
      %v8679 = vld [vmem:[%s5938 + $0x3c] sm:$0xf]
      %v8680 = vunpack.c.l.b16 %v8485
      %v8681 = vunpack.c.l.b16 %v8495
      %v8682 = vunpack.c.l.b16 %v8509
      %v8683 = vunpack.c.l.b16 %v8519
      %v8684 = vunpack.c.l.b16 %v8533
      %v8685 = vunpack.c.l.b16 %v8543
      %v8686 = vunpack.c.l.b16 %v8557
      %v8687 = vunpack.c.l.b16 %v8567
      %v8688 = vunpack.c.l.b16 %v8581
      %v8689 = vunpack.c.l.b16 %v8591
      %v8690 = vunpack.c.l.b16 %v8605
      %v8691 = vunpack.c.l.b16 %v8615
      %v8692 = vunpack.c.l.b16 %v8629
      %v8693 = vunpack.c.l.b16 %v8639
      %v8694 = vunpack.c.l.b16 %v8653
      %v8695 = vunpack.c.l.b16 %v8663
      %v8696 = vpack.c.b16 %v8681, %v8680
      %v8697 = vpack.c.b16 %v8683, %v8682
      %v8698 = vpack.c.b16 %v8685, %v8684
      %v8699 = vpack.c.b16 %v8687, %v8686
      %v8700 = vpack.c.b16 %v8689, %v8688
      %v8701 = vpack.c.b16 %v8691, %v8690
      %v8702 = vpack.c.b16 %v8693, %v8692
      %v8703 = vpack.c.b16 %v8695, %v8694
      %v8728 = vunpack.c.l.b16 %v8664
      %v8729 = vunpack.c.l.b16 %v8665
      %v8730 = vunpack.c.l.b16 %v8666
      %v8731 = vunpack.c.l.b16 %v8667
      %v8732 = vunpack.c.l.b16 %v8668
      %v8733 = vunpack.c.l.b16 %v8669
      %v8734 = vunpack.c.l.b16 %v8670
      %v8735 = vunpack.c.l.b16 %v8671
      %v8736 = vunpack.c.l.b16 %v8672
      %v8737 = vunpack.c.l.b16 %v8673
      %v8738 = vunpack.c.l.b16 %v8674
      %v8739 = vunpack.c.l.b16 %v8675
      %v8740 = vunpack.c.l.b16 %v8676
      %v8741 = vunpack.c.l.b16 %v8677
      %v8742 = vunpack.c.l.b16 %v8678
      %v8743 = vunpack.c.l.b16 %v8679
      %v8744 = vpack.c.b16 %v8729, %v8728
      %v8745 = vpack.c.b16 %v8731, %v8730
      %v8746 = vpack.c.b16 %v8733, %v8732
      %v8747 = vpack.c.b16 %v8735, %v8734
      %v8748 = vpack.c.b16 %v8737, %v8736
      %v8749 = vpack.c.b16 %v8739, %v8738
      %v8750 = vpack.c.b16 %v8741, %v8740
      %v8751 = vpack.c.b16 %v8743, %v8742
      %8760 = vmatpush.bf16.msra.mxu0 %v8751
      %8761 = vmatpush.bf16.msra.mxu0 %v8750
      %8762 = vmatpush.bf16.msra.mxu0 %v8749
      %8763 = vmatpush.bf16.msra.mxu0 %v8748
      %8764 = vmatpush.bf16.msra.mxu0 %v8747
      %8765 = vmatpush.bf16.msra.mxu0 %v8746
      %8766 = vmatpush.bf16.msra.mxu0 %v8745
      %8767 = vmatpush.bf16.msra.mxu0 %v8744
      %8768 = vmatmul.bf16.gmra.mxu0 %v8696
      %v8769 = vpop.f32.mrf.mxu0
      %v8770 = vadd.f32 0.0, %v8769
      %v8771 = vpop.f32.mrf.mxu0
      %v8772 = vadd.f32 0.0, %v8771
      %8773 = vmatmul.bf16.gmra.mxu0 %v8697
      %v8774 = vpop.f32.mrf.mxu0
      %v8775 = vadd.f32 0.0, %v8774
      %v8776 = vpop.f32.mrf.mxu0
      %v8777 = vadd.f32 0.0, %v8776
      %8778 = vmatmul.bf16.gmra.mxu0 %v8698
      %v8779 = vpop.f32.mrf.mxu0
      %v8780 = vadd.f32 0.0, %v8779
      %v8781 = vpop.f32.mrf.mxu0
      %v8782 = vadd.f32 0.0, %v8781
      %8783 = vmatmul.bf16.gmra.mxu0 %v8699
      %v8784 = vpop.f32.mrf.mxu0
      %v8785 = vadd.f32 0.0, %v8784
      %v8786 = vpop.f32.mrf.mxu0
      %v8787 = vadd.f32 0.0, %v8786
      %8788 = vmatmul.bf16.gmra.mxu0 %v8700
      %v8789 = vpop.f32.mrf.mxu0
      %v8790 = vadd.f32 0.0, %v8789
      %v8791 = vpop.f32.mrf.mxu0
      %v8792 = vadd.f32 0.0, %v8791
      %8793 = vmatmul.bf16.gmra.mxu0 %v8701
      %v8794 = vpop.f32.mrf.mxu0
      %v8795 = vadd.f32 0.0, %v8794
      %v8796 = vpop.f32.mrf.mxu0
      %v8797 = vadd.f32 0.0, %v8796
      %8798 = vmatmul.bf16.gmra.mxu0 %v8702
      %v8799 = vpop.f32.mrf.mxu0
      %v8800 = vadd.f32 0.0, %v8799
      %v8801 = vpop.f32.mrf.mxu0
      %v8802 = vadd.f32 0.0, %v8801
      %8803 = vmatmul.bf16.gmra.mxu0 %v8703
      %v8804 = vpop.f32.mrf.mxu0
      %v8805 = vadd.f32 0.0, %v8804
      %v8806 = vpop.f32.mrf.mxu0
      %v8807 = vadd.f32 0.0, %v8806
      %8808 = vdwg.mxu0
      %v8825 = vunpack.c.l.b16 %v8432
      %v8826 = vunpack.c.l.b16 %v8433
      %v8827 = vunpack.c.l.b16 %v8434
      %v8828 = vunpack.c.l.b16 %v8435
      %v8829 = vunpack.c.l.b16 %v8436
      %v8830 = vunpack.c.l.b16 %v8437
      %v8831 = vunpack.c.l.b16 %v8438
      %v8832 = vunpack.c.l.b16 %v8439
      %v8833 = vunpack.c.l.b16 %v8440
      %v8834 = vunpack.c.l.b16 %v8441
      %v8835 = vunpack.c.l.b16 %v8442
      %v8836 = vunpack.c.l.b16 %v8443
      %v8837 = vunpack.c.l.b16 %v8444
      %v8838 = vunpack.c.l.b16 %v8445
      %v8839 = vunpack.c.l.b16 %v8446
      %v8840 = vunpack.c.l.b16 %v8447
      %v8841 = vpack.c.b16 %v8826, %v8825
      %v8842 = vpack.c.b16 %v8828, %v8827
      %v8843 = vpack.c.b16 %v8830, %v8829
      %v8844 = vpack.c.b16 %v8832, %v8831
      %v8845 = vpack.c.b16 %v8834, %v8833
      %v8846 = vpack.c.b16 %v8836, %v8835
      %v8847 = vpack.c.b16 %v8838, %v8837
      %v8848 = vpack.c.b16 %v8840, %v8839
      %v8873 = vunpack.c.l.b16 %v8448
      %v8874 = vunpack.c.l.b16 %v8449
      %v8875 = vunpack.c.l.b16 %v8450
      %v8876 = vunpack.c.l.b16 %v8451
      %v8877 = vunpack.c.l.b16 %v8452
      %v8878 = vunpack.c.l.b16 %v8453
      %v8879 = vunpack.c.l.b16 %v8454
      %v8880 = vunpack.c.l.b16 %v8455
      %v8881 = vunpack.c.l.b16 %v8456
      %v8882 = vunpack.c.l.b16 %v8457
      %v8883 = vunpack.c.l.b16 %v8458
      %v8884 = vunpack.c.l.b16 %v8459
      %v8885 = vunpack.c.l.b16 %v8460
      %v8886 = vunpack.c.l.b16 %v8461
      %v8887 = vunpack.c.l.b16 %v8462
      %v8888 = vunpack.c.l.b16 %v8463
      %v8889 = vpack.c.b16 %v8874, %v8873
      %v8890 = vpack.c.b16 %v8876, %v8875
      %v8891 = vpack.c.b16 %v8878, %v8877
      %v8892 = vpack.c.b16 %v8880, %v8879
      %v8893 = vpack.c.b16 %v8882, %v8881
      %v8894 = vpack.c.b16 %v8884, %v8883
      %v8895 = vpack.c.b16 %v8886, %v8885
      %v8896 = vpack.c.b16 %v8888, %v8887
      %8905 = vmatpush.bf16.msra.mxu0 %v8896
      %8906 = vmatpush.bf16.msra.mxu0 %v8895
      %8907 = vmatpush.bf16.msra.mxu0 %v8894
      %8908 = vmatpush.bf16.msra.mxu0 %v8893
      %8909 = vmatpush.bf16.msra.mxu0 %v8892
      %8910 = vmatpush.bf16.msra.mxu0 %v8891
      %8911 = vmatpush.bf16.msra.mxu0 %v8890
      %8912 = vmatpush.bf16.msra.mxu0 %v8889
      %8913 = vmatmul.bf16.gmra.mxu0 %v8841
      %v8914 = vpop.f32.mrf.mxu0
      %v8915 = vadd.f32 %v8770, %v8914
      %v8916 = vpop.f32.mrf.mxu0
      %v8917 = vadd.f32 %v8772, %v8916
      %8918 = vmatmul.bf16.gmra.mxu0 %v8842
      %v8919 = vpop.f32.mrf.mxu0
      %v8920 = vadd.f32 %v8775, %v8919
      %v8921 = vpop.f32.mrf.mxu0
      %v8922 = vadd.f32 %v8777, %v8921
      %8923 = vmatmul.bf16.gmra.mxu0 %v8843
      %v8924 = vpop.f32.mrf.mxu0
      %v8925 = vadd.f32 %v8780, %v8924
      %v8926 = vpop.f32.mrf.mxu0
      %v8927 = vadd.f32 %v8782, %v8926
      %8928 = vmatmul.bf16.gmra.mxu0 %v8844
      %v8929 = vpop.f32.mrf.mxu0
      %v8930 = vadd.f32 %v8785, %v8929
      %v8931 = vpop.f32.mrf.mxu0
      %v8932 = vadd.f32 %v8787, %v8931
      %8933 = vmatmul.bf16.gmra.mxu0 %v8845
      %v8934 = vpop.f32.mrf.mxu0
      %v8935 = vadd.f32 %v8790, %v8934
      %v8936 = vpop.f32.mrf.mxu0
      %v8937 = vadd.f32 %v8792, %v8936
      %8938 = vmatmul.bf16.gmra.mxu0 %v8846
      %v8939 = vpop.f32.mrf.mxu0
      %v8940 = vadd.f32 %v8795, %v8939
      %v8941 = vpop.f32.mrf.mxu0
      %v8942 = vadd.f32 %v8797, %v8941
      %8943 = vmatmul.bf16.gmra.mxu0 %v8847
      %v8944 = vpop.f32.mrf.mxu0
      %v8945 = vadd.f32 %v8800, %v8944
      %v8946 = vpop.f32.mrf.mxu0
      %v8947 = vadd.f32 %v8802, %v8946
      %8948 = vmatmul.bf16.gmra.mxu0 %v8848
      %v8949 = vpop.f32.mrf.mxu0
      %v8950 = vadd.f32 %v8805, %v8949
      %v8951 = vpop.f32.mrf.mxu0
      %v8952 = vadd.f32 %v8807, %v8951
      %8953 = vdwg.mxu0
      %v8954 = vld [vmem:[%s8431] sm:$0xe]
      %v8955 = vld [vmem:[%s8431 + $0xc] sm:$0xe]
      %v8956 = vld [vmem:[%s8431 + $0x18] sm:$0xe]
      %v8957 = vld [vmem:[%s8431 + $0x24] sm:$0xe]
      %v8958 = vld [vmem:[%s8431 + $0x30] sm:$0xe]
      %v8959 = vld [vmem:[%s8431 + $0x3c] sm:$0xe]
      %v8960 = vld [vmem:[%s8431 + $0x48] sm:$0xe]
      %v8961 = vld [vmem:[%s8431 + $0x54] sm:$0xe]
      %v8978 = vrot.slane %v8954, 5
      %v8979 = vrot.slane %v8978, 4
      %v8980 = vrot.slane %v8433, 5
      %v8981 = vsel %vm900, %v8979, %v8980
      %v8982 = vrot.slane %v8980, 4
      %v8983 = vrot.slane %v8464, 5
      %v8984 = vsel %vm900, %v8982, %v8983
      %v8985 = vrot.slane %v8955, 5
      %v8986 = vrot.slane %v8985, 4
      %v8987 = vrot.slane %v8435, 5
      %v8988 = vsel %vm900, %v8986, %v8987
      %v8989 = vrot.slane %v8987, 4
      %v8990 = vrot.slane %v8465, 5
      %v8991 = vsel %vm900, %v8989, %v8990
      %v8992 = vrot.slane %v8956, 5
      %v8993 = vrot.slane %v8992, 4
      %v8994 = vrot.slane %v8437, 5
      %v8995 = vsel %vm900, %v8993, %v8994
      %v8996 = vrot.slane %v8994, 4
      %v8997 = vrot.slane %v8466, 5
      %v8998 = vsel %vm900, %v8996, %v8997
      %v8999 = vrot.slane %v8957, 5
      %v9000 = vrot.slane %v8999, 4
      %v9001 = vrot.slane %v8439, 5
      %v9002 = vsel %vm900, %v9000, %v9001
      %v9003 = vrot.slane %v9001, 4
      %v9004 = vrot.slane %v8467, 5
      %v9005 = vsel %vm900, %v9003, %v9004
      %v9006 = vrot.slane %v8958, 5
      %v9007 = vrot.slane %v9006, 4
      %v9008 = vrot.slane %v8441, 5
      %v9009 = vsel %vm900, %v9007, %v9008
      %v9010 = vrot.slane %v9008, 4
      %v9011 = vrot.slane %v8468, 5
      %v9012 = vsel %vm900, %v9010, %v9011
      %v9013 = vrot.slane %v8959, 5
      %v9014 = vrot.slane %v9013, 4
      %v9015 = vrot.slane %v8443, 5
      %v9016 = vsel %vm900, %v9014, %v9015
      %v9017 = vrot.slane %v9015, 4
      %v9018 = vrot.slane %v8469, 5
      %v9019 = vsel %vm900, %v9017, %v9018
      %v9020 = vrot.slane %v8960, 5
      %v9021 = vrot.slane %v9020, 4
      %v9022 = vrot.slane %v8445, 5
      %v9023 = vsel %vm900, %v9021, %v9022
      %v9024 = vrot.slane %v9022, 4
      %v9025 = vrot.slane %v8470, 5
      %v9026 = vsel %vm900, %v9024, %v9025
      %v9027 = vrot.slane %v8961, 5
      %v9028 = vrot.slane %v9027, 4
      %v9029 = vrot.slane %v8447, 5
      %v9030 = vsel %vm900, %v9028, %v9029
      %v9031 = vrot.slane %v9029, 4
      %v9032 = vrot.slane %v8471, 5
      %v9033 = vsel %vm900, %v9031, %v9032
      %v9034 = vld [vmem:[%s6309] sm:$0xf]
      %v9035 = vld [vmem:[%s6309 + $0x4] sm:$0xf]
      %v9036 = vld [vmem:[%s6309 + $0x8] sm:$0xf]
      %v9037 = vld [vmem:[%s6309 + $0xc] sm:$0xf]
      %v9038 = vld [vmem:[%s6309 + $0x10] sm:$0xf]
      %v9039 = vld [vmem:[%s6309 + $0x14] sm:$0xf]
      %v9040 = vld [vmem:[%s6309 + $0x18] sm:$0xf]
      %v9041 = vld [vmem:[%s6309 + $0x1c] sm:$0xf]
      %v9042 = vld [vmem:[%s6309 + $0x20] sm:$0xf]
      %v9043 = vld [vmem:[%s6309 + $0x24] sm:$0xf]
      %v9044 = vld [vmem:[%s6309 + $0x28] sm:$0xf]
      %v9045 = vld [vmem:[%s6309 + $0x2c] sm:$0xf]
      %v9046 = vld [vmem:[%s6309 + $0x30] sm:$0xf]
      %v9047 = vld [vmem:[%s6309 + $0x34] sm:$0xf]
      %v9048 = vld [vmem:[%s6309 + $0x38] sm:$0xf]
      %v9049 = vld [vmem:[%s6309 + $0x3c] sm:$0xf]
      %v9050 = vunpack.c.l.b16 %v8981
      %v9051 = vunpack.c.l.b16 %v8984
      %v9052 = vunpack.c.l.b16 %v8988
      %v9053 = vunpack.c.l.b16 %v8991
      %v9054 = vunpack.c.l.b16 %v8995
      %v9055 = vunpack.c.l.b16 %v8998
      %v9056 = vunpack.c.l.b16 %v9002
      %v9057 = vunpack.c.l.b16 %v9005
      %v9058 = vunpack.c.l.b16 %v9009
      %v9059 = vunpack.c.l.b16 %v9012
      %v9060 = vunpack.c.l.b16 %v9016
      %v9061 = vunpack.c.l.b16 %v9019
      %v9062 = vunpack.c.l.b16 %v9023
      %v9063 = vunpack.c.l.b16 %v9026
      %v9064 = vunpack.c.l.b16 %v9030
      %v9065 = vunpack.c.l.b16 %v9033
      %v9066 = vpack.c.b16 %v9051, %v9050
      %v9067 = vpack.c.b16 %v9053, %v9052
      %v9068 = vpack.c.b16 %v9055, %v9054
      %v9069 = vpack.c.b16 %v9057, %v9056
      %v9070 = vpack.c.b16 %v9059, %v9058
      %v9071 = vpack.c.b16 %v9061, %v9060
      %v9072 = vpack.c.b16 %v9063, %v9062
      %v9073 = vpack.c.b16 %v9065, %v9064
      %v9098 = vunpack.c.l.b16 %v9034
      %v9099 = vunpack.c.l.b16 %v9035
      %v9100 = vunpack.c.l.b16 %v9036
      %v9101 = vunpack.c.l.b16 %v9037
      %v9102 = vunpack.c.l.b16 %v9038
      %v9103 = vunpack.c.l.b16 %v9039
      %v9104 = vunpack.c.l.b16 %v9040
      %v9105 = vunpack.c.l.b16 %v9041
      %v9106 = vunpack.c.l.b16 %v9042
      %v9107 = vunpack.c.l.b16 %v9043
      %v9108 = vunpack.c.l.b16 %v9044
      %v9109 = vunpack.c.l.b16 %v9045
      %v9110 = vunpack.c.l.b16 %v9046
      %v9111 = vunpack.c.l.b16 %v9047
      %v9112 = vunpack.c.l.b16 %v9048
      %v9113 = vunpack.c.l.b16 %v9049
      %v9114 = vpack.c.b16 %v9099, %v9098
      %v9115 = vpack.c.b16 %v9101, %v9100
      %v9116 = vpack.c.b16 %v9103, %v9102
      %v9117 = vpack.c.b16 %v9105, %v9104
      %v9118 = vpack.c.b16 %v9107, %v9106
      %v9119 = vpack.c.b16 %v9109, %v9108
      %v9120 = vpack.c.b16 %v9111, %v9110
      %v9121 = vpack.c.b16 %v9113, %v9112
      %9130 = vmatpush.bf16.msra.mxu0 %v9121
      %9131 = vmatpush.bf16.msra.mxu0 %v9120
      %9132 = vmatpush.bf16.msra.mxu0 %v9119
      %9133 = vmatpush.bf16.msra.mxu0 %v9118
      %9134 = vmatpush.bf16.msra.mxu0 %v9117
      %9135 = vmatpush.bf16.msra.mxu0 %v9116
      %9136 = vmatpush.bf16.msra.mxu0 %v9115
      %9137 = vmatpush.bf16.msra.mxu0 %v9114
      %9138 = vmatmul.bf16.gmra.mxu0 %v9066
      %v9139 = vpop.f32.mrf.mxu0
      %v9140 = vadd.f32 0.0, %v9139
      %v9141 = vpop.f32.mrf.mxu0
      %v9142 = vadd.f32 0.0, %v9141
      %9143 = vmatmul.bf16.gmra.mxu0 %v9067
      %v9144 = vpop.f32.mrf.mxu0
      %v9145 = vadd.f32 0.0, %v9144
      %v9146 = vpop.f32.mrf.mxu0
      %v9147 = vadd.f32 0.0, %v9146
      %9148 = vmatmul.bf16.gmra.mxu0 %v9068
      %v9149 = vpop.f32.mrf.mxu0
      %v9150 = vadd.f32 0.0, %v9149
      %v9151 = vpop.f32.mrf.mxu0
      %v9152 = vadd.f32 0.0, %v9151
      %9153 = vmatmul.bf16.gmra.mxu0 %v9069
      %v9154 = vpop.f32.mrf.mxu0
      %v9155 = vadd.f32 0.0, %v9154
      %v9156 = vpop.f32.mrf.mxu0
      %v9157 = vadd.f32 0.0, %v9156
      %9158 = vmatmul.bf16.gmra.mxu0 %v9070
      %v9159 = vpop.f32.mrf.mxu0
      %v9160 = vadd.f32 0.0, %v9159
      %v9161 = vpop.f32.mrf.mxu0
      %v9162 = vadd.f32 0.0, %v9161
      %9163 = vmatmul.bf16.gmra.mxu0 %v9071
      %v9164 = vpop.f32.mrf.mxu0
      %v9165 = vadd.f32 0.0, %v9164
      %v9166 = vpop.f32.mrf.mxu0
      %v9167 = vadd.f32 0.0, %v9166
      %9168 = vmatmul.bf16.gmra.mxu0 %v9072
      %v9169 = vpop.f32.mrf.mxu0
      %v9170 = vadd.f32 0.0, %v9169
      %v9171 = vpop.f32.mrf.mxu0
      %v9172 = vadd.f32 0.0, %v9171
      %9173 = vmatmul.bf16.gmra.mxu0 %v9073
      %v9174 = vpop.f32.mrf.mxu0
      %v9175 = vadd.f32 0.0, %v9174
      %v9176 = vpop.f32.mrf.mxu0
      %v9177 = vadd.f32 0.0, %v9176
      %9178 = vdwg.mxu0
      %v9179 = vadd.f32 %v8915, %v9140
      %v9180 = vadd.f32 %v8917, %v9142
      %v9181 = vadd.f32 %v8920, %v9145
      %v9182 = vadd.f32 %v8922, %v9147
      %v9183 = vadd.f32 %v8925, %v9150
      %v9184 = vadd.f32 %v8927, %v9152
      %v9185 = vadd.f32 %v8930, %v9155
      %v9186 = vadd.f32 %v8932, %v9157
      %v9187 = vadd.f32 %v8935, %v9160
      %v9188 = vadd.f32 %v8937, %v9162
      %v9189 = vadd.f32 %v8940, %v9165
      %v9190 = vadd.f32 %v8942, %v9167
      %v9191 = vadd.f32 %v8945, %v9170
      %v9192 = vadd.f32 %v8947, %v9172
      %v9193 = vadd.f32 %v8950, %v9175
      %v9194 = vadd.f32 %v8952, %v9177
      %v9195 = vld [vmem:[%s5649] sm:$0xf]
      %v9196 = vld [vmem:[%s5649 + $0x4] sm:$0xf]
      %v9197 = vld [vmem:[%s5649 + $0xc] sm:$0xf]
      %v9198 = vld [vmem:[%s5649 + $0x10] sm:$0xf]
      %v9199 = vld [vmem:[%s5649 + $0x18] sm:$0xf]
      %v9200 = vld [vmem:[%s5649 + $0x1c] sm:$0xf]
      %v9201 = vld [vmem:[%s5649 + $0x24] sm:$0xf]
      %v9202 = vld [vmem:[%s5649 + $0x28] sm:$0xf]
      %v9203 = vld [vmem:[%s5649 + $0x30] sm:$0xf]
      %v9204 = vld [vmem:[%s5649 + $0x34] sm:$0xf]
      %v9205 = vld [vmem:[%s5649 + $0x3c] sm:$0xf]
      %v9206 = vld [vmem:[%s5649 + $0x40] sm:$0xf]
      %v9207 = vld [vmem:[%s5649 + $0x48] sm:$0xf]
      %v9208 = vld [vmem:[%s5649 + $0x4c] sm:$0xf]
      %v9209 = vld [vmem:[%s5649 + $0x54] sm:$0xf]
      %v9210 = vld [vmem:[%s5649 + $0x58] sm:$0xf]
      %v9211 = vld [vmem:[%s6487] sm:$0xf]
      %v9212 = vld [vmem:[%s6487 + $0x4] sm:$0xf]
      %v9213 = vld [vmem:[%s6487 + $0x8] sm:$0xf]
      %v9214 = vld [vmem:[%s6487 + $0xc] sm:$0xf]
      %v9215 = vld [vmem:[%s6487 + $0x10] sm:$0xf]
      %v9216 = vld [vmem:[%s6487 + $0x14] sm:$0xf]
      %v9217 = vld [vmem:[%s6487 + $0x18] sm:$0xf]
      %v9218 = vld [vmem:[%s6487 + $0x1c] sm:$0xf]
      %v9219 = vld [vmem:[%s6487 + $0x20] sm:$0xf]
      %v9220 = vld [vmem:[%s6487 + $0x24] sm:$0xf]
      %v9221 = vld [vmem:[%s6487 + $0x28] sm:$0xf]
      %v9222 = vld [vmem:[%s6487 + $0x2c] sm:$0xf]
      %v9223 = vld [vmem:[%s6487 + $0x30] sm:$0xf]
      %v9224 = vld [vmem:[%s6487 + $0x34] sm:$0xf]
      %v9225 = vld [vmem:[%s6487 + $0x38] sm:$0xf]
      %v9226 = vld [vmem:[%s6487 + $0x3c] sm:$0xf]
      %v9243 = vunpack.c.l.b16 %v9195
      %v9244 = vunpack.c.l.b16 %v9196
      %v9245 = vunpack.c.l.b16 %v9197
      %v9246 = vunpack.c.l.b16 %v9198
      %v9247 = vunpack.c.l.b16 %v9199
      %v9248 = vunpack.c.l.b16 %v9200
      %v9249 = vunpack.c.l.b16 %v9201
      %v9250 = vunpack.c.l.b16 %v9202
      %v9251 = vunpack.c.l.b16 %v9203
      %v9252 = vunpack.c.l.b16 %v9204
      %v9253 = vunpack.c.l.b16 %v9205
      %v9254 = vunpack.c.l.b16 %v9206
      %v9255 = vunpack.c.l.b16 %v9207
      %v9256 = vunpack.c.l.b16 %v9208
      %v9257 = vunpack.c.l.b16 %v9209
      %v9258 = vunpack.c.l.b16 %v9210
      %v9259 = vpack.c.b16 %v9244, %v9243
      %v9260 = vpack.c.b16 %v9246, %v9245
      %v9261 = vpack.c.b16 %v9248, %v9247
      %v9262 = vpack.c.b16 %v9250, %v9249
      %v9263 = vpack.c.b16 %v9252, %v9251
      %v9264 = vpack.c.b16 %v9254, %v9253
      %v9265 = vpack.c.b16 %v9256, %v9255
      %v9266 = vpack.c.b16 %v9258, %v9257
      %v9291 = vunpack.c.l.b16 %v9211
      %v9292 = vunpack.c.l.b16 %v9212
      %v9293 = vunpack.c.l.b16 %v9213
      %v9294 = vunpack.c.l.b16 %v9214
      %v9295 = vunpack.c.l.b16 %v9215
      %v9296 = vunpack.c.l.b16 %v9216
      %v9297 = vunpack.c.l.b16 %v9217
      %v9298 = vunpack.c.l.b16 %v9218
      %v9299 = vunpack.c.l.b16 %v9219
      %v9300 = vunpack.c.l.b16 %v9220
      %v9301 = vunpack.c.l.b16 %v9221
      %v9302 = vunpack.c.l.b16 %v9222
      %v9303 = vunpack.c.l.b16 %v9223
      %v9304 = vunpack.c.l.b16 %v9224
      %v9305 = vunpack.c.l.b16 %v9225
      %v9306 = vunpack.c.l.b16 %v9226
      %v9307 = vpack.c.b16 %v9292, %v9291
      %v9308 = vpack.c.b16 %v9294, %v9293
      %v9309 = vpack.c.b16 %v9296, %v9295
      %v9310 = vpack.c.b16 %v9298, %v9297
      %v9311 = vpack.c.b16 %v9300, %v9299
      %v9312 = vpack.c.b16 %v9302, %v9301
      %v9313 = vpack.c.b16 %v9304, %v9303
      %v9314 = vpack.c.b16 %v9306, %v9305
      %9323 = vmatpush.bf16.msra.mxu0 %v9314
      %9324 = vmatpush.bf16.msra.mxu0 %v9313
      %9325 = vmatpush.bf16.msra.mxu0 %v9312
      %9326 = vmatpush.bf16.msra.mxu0 %v9311
      %9327 = vmatpush.bf16.msra.mxu0 %v9310
      %9328 = vmatpush.bf16.msra.mxu0 %v9309
      %9329 = vmatpush.bf16.msra.mxu0 %v9308
      %9330 = vmatpush.bf16.msra.mxu0 %v9307
      %9331 = vmatmul.bf16.gmra.mxu0 %v9259
      %v9332 = vpop.f32.mrf.mxu0
      %v9333 = vadd.f32 0.0, %v9332
      %v9334 = vpop.f32.mrf.mxu0
      %v9335 = vadd.f32 0.0, %v9334
      %9336 = vmatmul.bf16.gmra.mxu0 %v9260
      %v9337 = vpop.f32.mrf.mxu0
      %v9338 = vadd.f32 0.0, %v9337
      %v9339 = vpop.f32.mrf.mxu0
      %v9340 = vadd.f32 0.0, %v9339
      %9341 = vmatmul.bf16.gmra.mxu0 %v9261
      %v9342 = vpop.f32.mrf.mxu0
      %v9343 = vadd.f32 0.0, %v9342
      %v9344 = vpop.f32.mrf.mxu0
      %v9345 = vadd.f32 0.0, %v9344
      %9346 = vmatmul.bf16.gmra.mxu0 %v9262
      %v9347 = vpop.f32.mrf.mxu0
      %v9348 = vadd.f32 0.0, %v9347
      %v9349 = vpop.f32.mrf.mxu0
      %v9350 = vadd.f32 0.0, %v9349
      %9351 = vmatmul.bf16.gmra.mxu0 %v9263
      %v9352 = vpop.f32.mrf.mxu0
      %v9353 = vadd.f32 0.0, %v9352
      %v9354 = vpop.f32.mrf.mxu0
      %v9355 = vadd.f32 0.0, %v9354
      %9356 = vmatmul.bf16.gmra.mxu0 %v9264
      %v9357 = vpop.f32.mrf.mxu0
      %v9358 = vadd.f32 0.0, %v9357
      %v9359 = vpop.f32.mrf.mxu0
      %v9360 = vadd.f32 0.0, %v9359
      %9361 = vmatmul.bf16.gmra.mxu0 %v9265
      %v9362 = vpop.f32.mrf.mxu0
      %v9363 = vadd.f32 0.0, %v9362
      %v9364 = vpop.f32.mrf.mxu0
      %v9365 = vadd.f32 0.0, %v9364
      %9366 = vmatmul.bf16.gmra.mxu0 %v9266
      %v9367 = vpop.f32.mrf.mxu0
      %v9368 = vadd.f32 0.0, %v9367
      %v9369 = vpop.f32.mrf.mxu0
      %v9370 = vadd.f32 0.0, %v9369
      %9371 = vdwg.mxu0
      %v9372 = vadd.f32 %v9179, %v9333
      %v9373 = vadd.f32 %v9180, %v9335
      %v9374 = vadd.f32 %v9181, %v9338
      %v9375 = vadd.f32 %v9182, %v9340
      %v9376 = vadd.f32 %v9183, %v9343
      %v9377 = vadd.f32 %v9184, %v9345
      %v9378 = vadd.f32 %v9185, %v9348
      %v9379 = vadd.f32 %v9186, %v9350
      %v9380 = vadd.f32 %v9187, %v9353
      %v9381 = vadd.f32 %v9188, %v9355
      %v9382 = vadd.f32 %v9189, %v9358
      %v9383 = vadd.f32 %v9190, %v9360
      %v9384 = vadd.f32 %v9191, %v9363
      %v9385 = vadd.f32 %v9192, %v9365
      %v9386 = vadd.f32 %v9193, %v9368
      %v9387 = vadd.f32 %v9194, %v9370
      %v9388 = vld [vmem:[%s5649] sm:$0xf]
      %v9389 = vld [vmem:[%s5649 + $0x4] sm:$0xf]
      %v9390 = vld [vmem:[%s5649 + $0x8] sm:$0x1]
      %v9391 = vld [vmem:[%s5649 + $0xc] sm:$0xf]
      %v9392 = vld [vmem:[%s5649 + $0x10] sm:$0xf]
      %v9393 = vld [vmem:[%s5649 + $0x14] sm:$0x1]
      %v9394 = vld [vmem:[%s5649 + $0x18] sm:$0xf]
      %v9395 = vld [vmem:[%s5649 + $0x1c] sm:$0xf]
      %v9396 = vld [vmem:[%s5649 + $0x20] sm:$0x1]
      %v9397 = vld [vmem:[%s5649 + $0x24] sm:$0xf]
      %v9398 = vld [vmem:[%s5649 + $0x28] sm:$0xf]
      %v9399 = vld [vmem:[%s5649 + $0x2c] sm:$0x1]
      %v9400 = vld [vmem:[%s5649 + $0x30] sm:$0xf]
      %v9401 = vld [vmem:[%s5649 + $0x34] sm:$0xf]
      %v9402 = vld [vmem:[%s5649 + $0x38] sm:$0x1]
      %v9403 = vld [vmem:[%s5649 + $0x3c] sm:$0xf]
      %v9404 = vld [vmem:[%s5649 + $0x40] sm:$0xf]
      %v9405 = vld [vmem:[%s5649 + $0x44] sm:$0x1]
      %v9406 = vld [vmem:[%s5649 + $0x48] sm:$0xf]
      %v9407 = vld [vmem:[%s5649 + $0x4c] sm:$0xf]
      %v9408 = vld [vmem:[%s5649 + $0x50] sm:$0x1]
      %v9409 = vld [vmem:[%s5649 + $0x54] sm:$0xf]
      %v9410 = vld [vmem:[%s5649 + $0x58] sm:$0xf]
      %v9411 = vld [vmem:[%s5649 + $0x5c] sm:$0x1]
      %v9413 = vshrl.u32 %v9388, 16
      %v9415 = vrot.slane %v9413, 4
      %v9416 = vshll.u32 %v9388, 16
      %v9418 = vrot.slane %v9416, 5
      %v9419 = vor.u32 %v9415, %v9418
      %v9420 = vrot.slane %v9419, 4
      %v9422 = vshll.u32 %v9389, 16
      %v9424 = vrot.slane %v9422, 5
      %v9425 = vsel %vm390, %v9420, %v9424
      %v9426 = vshrl.u32 %v9389, 16
      %v9428 = vrot.slane %v9426, 4
      %v9429 = vor.u32 %v9428, %v9424
      %v9430 = vrot.slane %v9429, 4
      %v9432 = vshll.u32 %v9390, 16
      %v9434 = vrot.slane %v9432, 5
      %v9435 = vsel %vm390, %v9430, %v9434
      %v9437 = vshrl.u32 %v9391, 16
      %v9439 = vrot.slane %v9437, 4
      %v9440 = vshll.u32 %v9391, 16
      %v9442 = vrot.slane %v9440, 5
      %v9443 = vor.u32 %v9439, %v9442
      %v9444 = vrot.slane %v9443, 4
      %v9446 = vshll.u32 %v9392, 16
      %v9448 = vrot.slane %v9446, 5
      %v9449 = vsel %vm390, %v9444, %v9448
      %v9450 = vshrl.u32 %v9392, 16
      %v9452 = vrot.slane %v9450, 4
      %v9453 = vor.u32 %v9452, %v9448
      %v9454 = vrot.slane %v9453, 4
      %v9456 = vshll.u32 %v9393, 16
      %v9458 = vrot.slane %v9456, 5
      %v9459 = vsel %vm390, %v9454, %v9458
      %v9461 = vshrl.u32 %v9394, 16
      %v9463 = vrot.slane %v9461, 4
      %v9464 = vshll.u32 %v9394, 16
      %v9466 = vrot.slane %v9464, 5
      %v9467 = vor.u32 %v9463, %v9466
      %v9468 = vrot.slane %v9467, 4
      %v9470 = vshll.u32 %v9395, 16
      %v9472 = vrot.slane %v9470, 5
      %v9473 = vsel %vm390, %v9468, %v9472
      %v9474 = vshrl.u32 %v9395, 16
      %v9476 = vrot.slane %v9474, 4
      %v9477 = vor.u32 %v9476, %v9472
      %v9478 = vrot.slane %v9477, 4
      %v9480 = vshll.u32 %v9396, 16
      %v9482 = vrot.slane %v9480, 5
      %v9483 = vsel %vm390, %v9478, %v9482
      %v9485 = vshrl.u32 %v9397, 16
      %v9487 = vrot.slane %v9485, 4
      %v9488 = vshll.u32 %v9397, 16
      %v9490 = vrot.slane %v9488, 5
      %v9491 = vor.u32 %v9487, %v9490
      %v9492 = vrot.slane %v9491, 4
      %v9494 = vshll.u32 %v9398, 16
      %v9496 = vrot.slane %v9494, 5
      %v9497 = vsel %vm390, %v9492, %v9496
      %v9498 = vshrl.u32 %v9398, 16
      %v9500 = vrot.slane %v9498, 4
      %v9501 = vor.u32 %v9500, %v9496
      %v9502 = vrot.slane %v9501, 4
      %v9504 = vshll.u32 %v9399, 16
      %v9506 = vrot.slane %v9504, 5
      %v9507 = vsel %vm390, %v9502, %v9506
      %v9509 = vshrl.u32 %v9400, 16
      %v9511 = vrot.slane %v9509, 4
      %v9512 = vshll.u32 %v9400, 16
      %v9514 = vrot.slane %v9512, 5
      %v9515 = vor.u32 %v9511, %v9514
      %v9516 = vrot.slane %v9515, 4
      %v9518 = vshll.u32 %v9401, 16
      %v9520 = vrot.slane %v9518, 5
      %v9521 = vsel %vm390, %v9516, %v9520
      %v9522 = vshrl.u32 %v9401, 16
      %v9524 = vrot.slane %v9522, 4
      %v9525 = vor.u32 %v9524, %v9520
      %v9526 = vrot.slane %v9525, 4
      %v9528 = vshll.u32 %v9402, 16
      %v9530 = vrot.slane %v9528, 5
      %v9531 = vsel %vm390, %v9526, %v9530
      %v9533 = vshrl.u32 %v9403, 16
      %v9535 = vrot.slane %v9533, 4
      %v9536 = vshll.u32 %v9403, 16
      %v9538 = vrot.slane %v9536, 5
      %v9539 = vor.u32 %v9535, %v9538
      %v9540 = vrot.slane %v9539, 4
      %v9542 = vshll.u32 %v9404, 16
      %v9544 = vrot.slane %v9542, 5
      %v9545 = vsel %vm390, %v9540, %v9544
      %v9546 = vshrl.u32 %v9404, 16
      %v9548 = vrot.slane %v9546, 4
      %v9549 = vor.u32 %v9548, %v9544
      %v9550 = vrot.slane %v9549, 4
      %v9552 = vshll.u32 %v9405, 16
      %v9554 = vrot.slane %v9552, 5
      %v9555 = vsel %vm390, %v9550, %v9554
      %v9557 = vshrl.u32 %v9406, 16
      %v9559 = vrot.slane %v9557, 4
      %v9560 = vshll.u32 %v9406, 16
      %v9562 = vrot.slane %v9560, 5
      %v9563 = vor.u32 %v9559, %v9562
      %v9564 = vrot.slane %v9563, 4
      %v9566 = vshll.u32 %v9407, 16
      %v9568 = vrot.slane %v9566, 5
      %v9569 = vsel %vm390, %v9564, %v9568
      %v9570 = vshrl.u32 %v9407, 16
      %v9572 = vrot.slane %v9570, 4
      %v9573 = vor.u32 %v9572, %v9568
      %v9574 = vrot.slane %v9573, 4
      %v9576 = vshll.u32 %v9408, 16
      %v9578 = vrot.slane %v9576, 5
      %v9579 = vsel %vm390, %v9574, %v9578
      %v9581 = vshrl.u32 %v9409, 16
      %v9583 = vrot.slane %v9581, 4
      %v9584 = vshll.u32 %v9409, 16
      %v9586 = vrot.slane %v9584, 5
      %v9587 = vor.u32 %v9583, %v9586
      %v9588 = vrot.slane %v9587, 4
      %v9590 = vshll.u32 %v9410, 16
      %v9592 = vrot.slane %v9590, 5
      %v9593 = vsel %vm390, %v9588, %v9592
      %v9594 = vshrl.u32 %v9410, 16
      %v9596 = vrot.slane %v9594, 4
      %v9597 = vor.u32 %v9596, %v9592
      %v9598 = vrot.slane %v9597, 4
      %v9600 = vshll.u32 %v9411, 16
      %v9602 = vrot.slane %v9600, 5
      %v9603 = vsel %vm390, %v9598, %v9602
      %v9604 = vld [vmem:[%s6881] sm:$0xf]
      %v9605 = vld [vmem:[%s6881 + $0x4] sm:$0xf]
      %v9606 = vld [vmem:[%s6881 + $0x8] sm:$0xf]
      %v9607 = vld [vmem:[%s6881 + $0xc] sm:$0xf]
      %v9608 = vld [vmem:[%s6881 + $0x10] sm:$0xf]
      %v9609 = vld [vmem:[%s6881 + $0x14] sm:$0xf]
      %v9610 = vld [vmem:[%s6881 + $0x18] sm:$0xf]
      %v9611 = vld [vmem:[%s6881 + $0x1c] sm:$0xf]
      %v9612 = vld [vmem:[%s6881 + $0x20] sm:$0xf]
      %v9613 = vld [vmem:[%s6881 + $0x24] sm:$0xf]
      %v9614 = vld [vmem:[%s6881 + $0x28] sm:$0xf]
      %v9615 = vld [vmem:[%s6881 + $0x2c] sm:$0xf]
      %v9616 = vld [vmem:[%s6881 + $0x30] sm:$0xf]
      %v9617 = vld [vmem:[%s6881 + $0x34] sm:$0xf]
      %v9618 = vld [vmem:[%s6881 + $0x38] sm:$0xf]
      %v9619 = vld [vmem:[%s6881 + $0x3c] sm:$0xf]
      %v9620 = vunpack.c.l.b16 %v9425
      %v9621 = vunpack.c.l.b16 %v9435
      %v9622 = vunpack.c.l.b16 %v9449
      %v9623 = vunpack.c.l.b16 %v9459
      %v9624 = vunpack.c.l.b16 %v9473
      %v9625 = vunpack.c.l.b16 %v9483
      %v9626 = vunpack.c.l.b16 %v9497
      %v9627 = vunpack.c.l.b16 %v9507
      %v9628 = vunpack.c.l.b16 %v9521
      %v9629 = vunpack.c.l.b16 %v9531
      %v9630 = vunpack.c.l.b16 %v9545
      %v9631 = vunpack.c.l.b16 %v9555
      %v9632 = vunpack.c.l.b16 %v9569
      %v9633 = vunpack.c.l.b16 %v9579
      %v9634 = vunpack.c.l.b16 %v9593
      %v9635 = vunpack.c.l.b16 %v9603
      %v9636 = vpack.c.b16 %v9621, %v9620
      %v9637 = vpack.c.b16 %v9623, %v9622
      %v9638 = vpack.c.b16 %v9625, %v9624
      %v9639 = vpack.c.b16 %v9627, %v9626
      %v9640 = vpack.c.b16 %v9629, %v9628
      %v9641 = vpack.c.b16 %v9631, %v9630
      %v9642 = vpack.c.b16 %v9633, %v9632
      %v9643 = vpack.c.b16 %v9635, %v9634
      %v9668 = vunpack.c.l.b16 %v9604
      %v9669 = vunpack.c.l.b16 %v9605
      %v9670 = vunpack.c.l.b16 %v9606
      %v9671 = vunpack.c.l.b16 %v9607
      %v9672 = vunpack.c.l.b16 %v9608
      %v9673 = vunpack.c.l.b16 %v9609
      %v9674 = vunpack.c.l.b16 %v9610
      %v9675 = vunpack.c.l.b16 %v9611
      %v9676 = vunpack.c.l.b16 %v9612
      %v9677 = vunpack.c.l.b16 %v9613
      %v9678 = vunpack.c.l.b16 %v9614
      %v9679 = vunpack.c.l.b16 %v9615
      %v9680 = vunpack.c.l.b16 %v9616
      %v9681 = vunpack.c.l.b16 %v9617
      %v9682 = vunpack.c.l.b16 %v9618
      %v9683 = vunpack.c.l.b16 %v9619
      %v9684 = vpack.c.b16 %v9669, %v9668
      %v9685 = vpack.c.b16 %v9671, %v9670
      %v9686 = vpack.c.b16 %v9673, %v9672
      %v9687 = vpack.c.b16 %v9675, %v9674
      %v9688 = vpack.c.b16 %v9677, %v9676
      %v9689 = vpack.c.b16 %v9679, %v9678
      %v9690 = vpack.c.b16 %v9681, %v9680
      %v9691 = vpack.c.b16 %v9683, %v9682
      %9700 = vmatpush.bf16.msra.mxu0 %v9691
      %9701 = vmatpush.bf16.msra.mxu0 %v9690
      %9702 = vmatpush.bf16.msra.mxu0 %v9689
      %9703 = vmatpush.bf16.msra.mxu0 %v9688
      %9704 = vmatpush.bf16.msra.mxu0 %v9687
      %9705 = vmatpush.bf16.msra.mxu0 %v9686
      %9706 = vmatpush.bf16.msra.mxu0 %v9685
      %9707 = vmatpush.bf16.msra.mxu0 %v9684
      %9708 = vmatmul.bf16.gmra.mxu0 %v9636
      %v9709 = vpop.f32.mrf.mxu0
      %v9710 = vadd.f32 0.0, %v9709
      %v9711 = vpop.f32.mrf.mxu0
      %v9712 = vadd.f32 0.0, %v9711
      %9713 = vmatmul.bf16.gmra.mxu0 %v9637
      %v9714 = vpop.f32.mrf.mxu0
      %v9715 = vadd.f32 0.0, %v9714
      %v9716 = vpop.f32.mrf.mxu0
      %v9717 = vadd.f32 0.0, %v9716
      %9718 = vmatmul.bf16.gmra.mxu0 %v9638
      %v9719 = vpop.f32.mrf.mxu0
      %v9720 = vadd.f32 0.0, %v9719
      %v9721 = vpop.f32.mrf.mxu0
      %v9722 = vadd.f32 0.0, %v9721
      %9723 = vmatmul.bf16.gmra.mxu0 %v9639
      %v9724 = vpop.f32.mrf.mxu0
      %v9725 = vadd.f32 0.0, %v9724
      %v9726 = vpop.f32.mrf.mxu0
      %v9727 = vadd.f32 0.0, %v9726
      %9728 = vmatmul.bf16.gmra.mxu0 %v9640
      %v9729 = vpop.f32.mrf.mxu0
      %v9730 = vadd.f32 0.0, %v9729
      %v9731 = vpop.f32.mrf.mxu0
      %v9732 = vadd.f32 0.0, %v9731
      %9733 = vmatmul.bf16.gmra.mxu0 %v9641
      %v9734 = vpop.f32.mrf.mxu0
      %v9735 = vadd.f32 0.0, %v9734
      %v9736 = vpop.f32.mrf.mxu0
      %v9737 = vadd.f32 0.0, %v9736
      %9738 = vmatmul.bf16.gmra.mxu0 %v9642
      %v9739 = vpop.f32.mrf.mxu0
      %v9740 = vadd.f32 0.0, %v9739
      %v9741 = vpop.f32.mrf.mxu0
      %v9742 = vadd.f32 0.0, %v9741
      %9743 = vmatmul.bf16.gmra.mxu0 %v9643
      %v9744 = vpop.f32.mrf.mxu0
      %v9745 = vadd.f32 0.0, %v9744
      %v9746 = vpop.f32.mrf.mxu0
      %v9747 = vadd.f32 0.0, %v9746
      %9748 = vdwg.mxu0
      %v9749 = vadd.f32 %v9372, %v9710
      %v9750 = vadd.f32 %v9373, %v9712
      %v9751 = vadd.f32 %v9374, %v9715
      %v9752 = vadd.f32 %v9375, %v9717
      %v9753 = vadd.f32 %v9376, %v9720
      %v9754 = vadd.f32 %v9377, %v9722
      %v9755 = vadd.f32 %v9378, %v9725
      %v9756 = vadd.f32 %v9379, %v9727
      %v9757 = vadd.f32 %v9380, %v9730
      %v9758 = vadd.f32 %v9381, %v9732
      %v9759 = vadd.f32 %v9382, %v9735
      %v9760 = vadd.f32 %v9383, %v9737
      %v9761 = vadd.f32 %v9384, %v9740
      %v9762 = vadd.f32 %v9385, %v9742
      %v9763 = vadd.f32 %v9386, %v9745
      %v9764 = vadd.f32 %v9387, %v9747
      %v9765 = vld [vmem:[%s5649] sm:$0xe]
      %v9766 = vld [vmem:[%s5649 + $0xc] sm:$0xe]
      %v9767 = vld [vmem:[%s5649 + $0x18] sm:$0xe]
      %v9768 = vld [vmem:[%s5649 + $0x24] sm:$0xe]
      %v9769 = vld [vmem:[%s5649 + $0x30] sm:$0xe]
      %v9770 = vld [vmem:[%s5649 + $0x3c] sm:$0xe]
      %v9771 = vld [vmem:[%s5649 + $0x48] sm:$0xe]
      %v9772 = vld [vmem:[%s5649 + $0x54] sm:$0xe]
      %v9797 = vrot.slane %v9765, 5
      %v9798 = vrot.slane %v9797, 4
      %v9799 = vrot.slane %v9389, 5
      %v9800 = vsel %vm900, %v9798, %v9799
      %v9801 = vrot.slane %v9799, 4
      %v9802 = vrot.slane %v9390, 5
      %v9803 = vsel %vm900, %v9801, %v9802
      %v9804 = vrot.slane %v9766, 5
      %v9805 = vrot.slane %v9804, 4
      %v9806 = vrot.slane %v9392, 5
      %v9807 = vsel %vm900, %v9805, %v9806
      %v9808 = vrot.slane %v9806, 4
      %v9809 = vrot.slane %v9393, 5
      %v9810 = vsel %vm900, %v9808, %v9809
      %v9811 = vrot.slane %v9767, 5
      %v9812 = vrot.slane %v9811, 4
      %v9813 = vrot.slane %v9395, 5
      %v9814 = vsel %vm900, %v9812, %v9813
      %v9815 = vrot.slane %v9813, 4
      %v9816 = vrot.slane %v9396, 5
      %v9817 = vsel %vm900, %v9815, %v9816
      %v9818 = vrot.slane %v9768, 5
      %v9819 = vrot.slane %v9818, 4
      %v9820 = vrot.slane %v9398, 5
      %v9821 = vsel %vm900, %v9819, %v9820
      %v9822 = vrot.slane %v9820, 4
      %v9823 = vrot.slane %v9399, 5
      %v9824 = vsel %vm900, %v9822, %v9823
      %v9825 = vrot.slane %v9769, 5
      %v9826 = vrot.slane %v9825, 4
      %v9827 = vrot.slane %v9401, 5
      %v9828 = vsel %vm900, %v9826, %v9827
      %v9829 = vrot.slane %v9827, 4
      %v9830 = vrot.slane %v9402, 5
      %v9831 = vsel %vm900, %v9829, %v9830
      %v9832 = vrot.slane %v9770, 5
      %v9833 = vrot.slane %v9832, 4
      %v9834 = vrot.slane %v9404, 5
      %v9835 = vsel %vm900, %v9833, %v9834
      %v9836 = vrot.slane %v9834, 4
      %v9837 = vrot.slane %v9405, 5
      %v9838 = vsel %vm900, %v9836, %v9837
      %v9839 = vrot.slane %v9771, 5
      %v9840 = vrot.slane %v9839, 4
      %v9841 = vrot.slane %v9407, 5
      %v9842 = vsel %vm900, %v9840, %v9841
      %v9843 = vrot.slane %v9841, 4
      %v9844 = vrot.slane %v9408, 5
      %v9845 = vsel %vm900, %v9843, %v9844
      %v9846 = vrot.slane %v9772, 5
      %v9847 = vrot.slane %v9846, 4
      %v9848 = vrot.slane %v9410, 5
      %v9849 = vsel %vm900, %v9847, %v9848
      %v9850 = vrot.slane %v9848, 4
      %v9851 = vrot.slane %v9411, 5
      %v9852 = vsel %vm900, %v9850, %v9851
      %v9853 = vld [vmem:[%s7131] sm:$0xf]
      %v9854 = vld [vmem:[%s7131 + $0x4] sm:$0xf]
      %v9855 = vld [vmem:[%s7131 + $0x8] sm:$0xf]
      %v9856 = vld [vmem:[%s7131 + $0xc] sm:$0xf]
      %v9857 = vld [vmem:[%s7131 + $0x10] sm:$0xf]
      %v9858 = vld [vmem:[%s7131 + $0x14] sm:$0xf]
      %v9859 = vld [vmem:[%s7131 + $0x18] sm:$0xf]
      %v9860 = vld [vmem:[%s7131 + $0x1c] sm:$0xf]
      %v9861 = vld [vmem:[%s7131 + $0x20] sm:$0xf]
      %v9862 = vld [vmem:[%s7131 + $0x24] sm:$0xf]
      %v9863 = vld [vmem:[%s7131 + $0x28] sm:$0xf]
      %v9864 = vld [vmem:[%s7131 + $0x2c] sm:$0xf]
      %v9865 = vld [vmem:[%s7131 + $0x30] sm:$0xf]
      %v9866 = vld [vmem:[%s7131 + $0x34] sm:$0xf]
      %v9867 = vld [vmem:[%s7131 + $0x38] sm:$0xf]
      %v9868 = vld [vmem:[%s7131 + $0x3c] sm:$0xf]
      %v9869 = vunpack.c.l.b16 %v9800
      %v9870 = vunpack.c.l.b16 %v9803
      %v9871 = vunpack.c.l.b16 %v9807
      %v9872 = vunpack.c.l.b16 %v9810
      %v9873 = vunpack.c.l.b16 %v9814
      %v9874 = vunpack.c.l.b16 %v9817
      %v9875 = vunpack.c.l.b16 %v9821
      %v9876 = vunpack.c.l.b16 %v9824
      %v9877 = vunpack.c.l.b16 %v9828
      %v9878 = vunpack.c.l.b16 %v9831
      %v9879 = vunpack.c.l.b16 %v9835
      %v9880 = vunpack.c.l.b16 %v9838
      %v9881 = vunpack.c.l.b16 %v9842
      %v9882 = vunpack.c.l.b16 %v9845
      %v9883 = vunpack.c.l.b16 %v9849
      %v9884 = vunpack.c.l.b16 %v9852
      %v9885 = vpack.c.b16 %v9870, %v9869
      %v9886 = vpack.c.b16 %v9872, %v9871
      %v9887 = vpack.c.b16 %v9874, %v9873
      %v9888 = vpack.c.b16 %v9876, %v9875
      %v9889 = vpack.c.b16 %v9878, %v9877
      %v9890 = vpack.c.b16 %v9880, %v9879
      %v9891 = vpack.c.b16 %v9882, %v9881
      %v9892 = vpack.c.b16 %v9884, %v9883
      %v9917 = vunpack.c.l.b16 %v9853
      %v9918 = vunpack.c.l.b16 %v9854
      %v9919 = vunpack.c.l.b16 %v9855
      %v9920 = vunpack.c.l.b16 %v9856
      %v9921 = vunpack.c.l.b16 %v9857
      %v9922 = vunpack.c.l.b16 %v9858
      %v9923 = vunpack.c.l.b16 %v9859
      %v9924 = vunpack.c.l.b16 %v9860
      %v9925 = vunpack.c.l.b16 %v9861
      %v9926 = vunpack.c.l.b16 %v9862
      %v9927 = vunpack.c.l.b16 %v9863
      %v9928 = vunpack.c.l.b16 %v9864
      %v9929 = vunpack.c.l.b16 %v9865
      %v9930 = vunpack.c.l.b16 %v9866
      %v9931 = vunpack.c.l.b16 %v9867
      %v9932 = vunpack.c.l.b16 %v9868
      %v9933 = vpack.c.b16 %v9918, %v9917
      %v9934 = vpack.c.b16 %v9920, %v9919
      %v9935 = vpack.c.b16 %v9922, %v9921
      %v9936 = vpack.c.b16 %v9924, %v9923
      %v9937 = vpack.c.b16 %v9926, %v9925
      %v9938 = vpack.c.b16 %v9928, %v9927
      %v9939 = vpack.c.b16 %v9930, %v9929
      %v9940 = vpack.c.b16 %v9932, %v9931
      %9949 = vmatpush.bf16.msra.mxu0 %v9940
      %9950 = vmatpush.bf16.msra.mxu0 %v9939
      %9951 = vmatpush.bf16.msra.mxu0 %v9938
      %9952 = vmatpush.bf16.msra.mxu0 %v9937
      %9953 = vmatpush.bf16.msra.mxu0 %v9936
      %9954 = vmatpush.bf16.msra.mxu0 %v9935
      %9955 = vmatpush.bf16.msra.mxu0 %v9934
      %9956 = vmatpush.bf16.msra.mxu0 %v9933
      %9957 = vmatmul.bf16.gmra.mxu0 %v9885
      %v9958 = vpop.f32.mrf.mxu0
      %v9959 = vadd.f32 0.0, %v9958
      %v9960 = vpop.f32.mrf.mxu0
      %v9961 = vadd.f32 0.0, %v9960
      %9962 = vmatmul.bf16.gmra.mxu0 %v9886
      %v9963 = vpop.f32.mrf.mxu0
      %v9964 = vadd.f32 0.0, %v9963
      %v9965 = vpop.f32.mrf.mxu0
      %v9966 = vadd.f32 0.0, %v9965
      %9967 = vmatmul.bf16.gmra.mxu0 %v9887
      %v9968 = vpop.f32.mrf.mxu0
      %v9969 = vadd.f32 0.0, %v9968
      %v9970 = vpop.f32.mrf.mxu0
      %v9971 = vadd.f32 0.0, %v9970
      %9972 = vmatmul.bf16.gmra.mxu0 %v9888
      %v9973 = vpop.f32.mrf.mxu0
      %v9974 = vadd.f32 0.0, %v9973
      %v9975 = vpop.f32.mrf.mxu0
      %v9976 = vadd.f32 0.0, %v9975
      %9977 = vmatmul.bf16.gmra.mxu0 %v9889
      %v9978 = vpop.f32.mrf.mxu0
      %v9979 = vadd.f32 0.0, %v9978
      %v9980 = vpop.f32.mrf.mxu0
      %v9981 = vadd.f32 0.0, %v9980
      %9982 = vmatmul.bf16.gmra.mxu0 %v9890
      %v9983 = vpop.f32.mrf.mxu0
      %v9984 = vadd.f32 0.0, %v9983
      %v9985 = vpop.f32.mrf.mxu0
      %v9986 = vadd.f32 0.0, %v9985
      %9987 = vmatmul.bf16.gmra.mxu0 %v9891
      %v9988 = vpop.f32.mrf.mxu0
      %v9989 = vadd.f32 0.0, %v9988
      %v9990 = vpop.f32.mrf.mxu0
      %v9991 = vadd.f32 0.0, %v9990
      %9992 = vmatmul.bf16.gmra.mxu0 %v9892
      %v9993 = vpop.f32.mrf.mxu0
      %v9994 = vadd.f32 0.0, %v9993
      %v9995 = vpop.f32.mrf.mxu0
      %v9996 = vadd.f32 0.0, %v9995
      %9997 = vdwg.mxu0
      %v9998 = vadd.f32 %v9749, %v9959
      %v9999 = vadd.f32 %v9750, %v9961
      %v10000 = vadd.f32 %v9751, %v9964
      %v10001 = vadd.f32 %v9752, %v9966
      %v10002 = vadd.f32 %v9753, %v9969
      %v10003 = vadd.f32 %v9754, %v9971
      %v10004 = vadd.f32 %v9755, %v9974
      %v10005 = vadd.f32 %v9756, %v9976
      %v10006 = vadd.f32 %v9757, %v9979
      %v10007 = vadd.f32 %v9758, %v9981
      %v10008 = vadd.f32 %v9759, %v9984
      %v10009 = vadd.f32 %v9760, %v9986
      %v10010 = vadd.f32 %v9761, %v9989
      %v10011 = vadd.f32 %v9762, %v9991
      %v10012 = vadd.f32 %v9763, %v9994
      %v10013 = vadd.f32 %v9764, %v9996
      %s10014 = scalar_lea.vmem [#allocation2], 120
      %v10015 = vld [vmem:[%s10014] sm:$0xf]
      %v10016 = vld [vmem:[%s10014 + $0x4] sm:$0xf]
      %v10017 = vld [vmem:[%s10014 + $0xc] sm:$0xf]
      %v10018 = vld [vmem:[%s10014 + $0x10] sm:$0xf]
      %v10019 = vld [vmem:[%s10014 + $0x18] sm:$0xf]
      %v10020 = vld [vmem:[%s10014 + $0x1c] sm:$0xf]
      %v10021 = vld [vmem:[%s10014 + $0x24] sm:$0xf]
      %v10022 = vld [vmem:[%s10014 + $0x28] sm:$0xf]
      %v10023 = vld [vmem:[%s10014 + $0x30] sm:$0xf]
      %v10024 = vld [vmem:[%s10014 + $0x34] sm:$0xf]
      %v10025 = vld [vmem:[%s10014 + $0x3c] sm:$0xf]
      %v10026 = vld [vmem:[%s10014 + $0x40] sm:$0xf]
      %v10027 = vld [vmem:[%s10014 + $0x48] sm:$0xf]
      %v10028 = vld [vmem:[%s10014 + $0x4c] sm:$0xf]
      %v10029 = vld [vmem:[%s10014 + $0x54] sm:$0xf]
      %v10030 = vld [vmem:[%s10014 + $0x58] sm:$0xf]
      %v10031 = vld [vmem:[%s7310] sm:$0xf]
      %v10032 = vld [vmem:[%s7310 + $0x4] sm:$0xf]
      %v10033 = vld [vmem:[%s7310 + $0x8] sm:$0xf]
      %v10034 = vld [vmem:[%s7310 + $0xc] sm:$0xf]
      %v10035 = vld [vmem:[%s7310 + $0x10] sm:$0xf]
      %v10036 = vld [vmem:[%s7310 + $0x14] sm:$0xf]
      %v10037 = vld [vmem:[%s7310 + $0x18] sm:$0xf]
      %v10038 = vld [vmem:[%s7310 + $0x1c] sm:$0xf]
      %v10039 = vld [vmem:[%s7310 + $0x20] sm:$0xf]
      %v10040 = vld [vmem:[%s7310 + $0x24] sm:$0xf]
      %v10041 = vld [vmem:[%s7310 + $0x28] sm:$0xf]
      %v10042 = vld [vmem:[%s7310 + $0x2c] sm:$0xf]
      %v10043 = vld [vmem:[%s7310 + $0x30] sm:$0xf]
      %v10044 = vld [vmem:[%s7310 + $0x34] sm:$0xf]
      %v10045 = vld [vmem:[%s7310 + $0x38] sm:$0xf]
      %v10046 = vld [vmem:[%s7310 + $0x3c] sm:$0xf]
      %v10063 = vunpack.c.l.b16 %v10015
      %v10064 = vunpack.c.l.b16 %v10016
      %v10065 = vunpack.c.l.b16 %v10017
      %v10066 = vunpack.c.l.b16 %v10018
      %v10067 = vunpack.c.l.b16 %v10019
      %v10068 = vunpack.c.l.b16 %v10020
      %v10069 = vunpack.c.l.b16 %v10021
      %v10070 = vunpack.c.l.b16 %v10022
      %v10071 = vunpack.c.l.b16 %v10023
      %v10072 = vunpack.c.l.b16 %v10024
      %v10073 = vunpack.c.l.b16 %v10025
      %v10074 = vunpack.c.l.b16 %v10026
      %v10075 = vunpack.c.l.b16 %v10027
      %v10076 = vunpack.c.l.b16 %v10028
      %v10077 = vunpack.c.l.b16 %v10029
      %v10078 = vunpack.c.l.b16 %v10030
      %v10079 = vpack.c.b16 %v10064, %v10063
      %v10080 = vpack.c.b16 %v10066, %v10065
      %v10081 = vpack.c.b16 %v10068, %v10067
      %v10082 = vpack.c.b16 %v10070, %v10069
      %v10083 = vpack.c.b16 %v10072, %v10071
      %v10084 = vpack.c.b16 %v10074, %v10073
      %v10085 = vpack.c.b16 %v10076, %v10075
      %v10086 = vpack.c.b16 %v10078, %v10077
      %v10111 = vunpack.c.l.b16 %v10031
      %v10112 = vunpack.c.l.b16 %v10032
      %v10113 = vunpack.c.l.b16 %v10033
      %v10114 = vunpack.c.l.b16 %v10034
      %v10115 = vunpack.c.l.b16 %v10035
      %v10116 = vunpack.c.l.b16 %v10036
      %v10117 = vunpack.c.l.b16 %v10037
      %v10118 = vunpack.c.l.b16 %v10038
      %v10119 = vunpack.c.l.b16 %v10039
      %v10120 = vunpack.c.l.b16 %v10040
      %v10121 = vunpack.c.l.b16 %v10041
      %v10122 = vunpack.c.l.b16 %v10042
      %v10123 = vunpack.c.l.b16 %v10043
      %v10124 = vunpack.c.l.b16 %v10044
      %v10125 = vunpack.c.l.b16 %v10045
      %v10126 = vunpack.c.l.b16 %v10046
      %v10127 = vpack.c.b16 %v10112, %v10111
      %v10128 = vpack.c.b16 %v10114, %v10113
      %v10129 = vpack.c.b16 %v10116, %v10115
      %v10130 = vpack.c.b16 %v10118, %v10117
      %v10131 = vpack.c.b16 %v10120, %v10119
      %v10132 = vpack.c.b16 %v10122, %v10121
      %v10133 = vpack.c.b16 %v10124, %v10123
      %v10134 = vpack.c.b16 %v10126, %v10125
      %10143 = vmatpush.bf16.msra.mxu0 %v10134
      %10144 = vmatpush.bf16.msra.mxu0 %v10133
      %10145 = vmatpush.bf16.msra.mxu0 %v10132
      %10146 = vmatpush.bf16.msra.mxu0 %v10131
      %10147 = vmatpush.bf16.msra.mxu0 %v10130
      %10148 = vmatpush.bf16.msra.mxu0 %v10129
      %10149 = vmatpush.bf16.msra.mxu0 %v10128
      %10150 = vmatpush.bf16.msra.mxu0 %v10127
      %10151 = vmatmul.bf16.gmra.mxu0 %v10079
      %v10152 = vpop.f32.mrf.mxu0
      %v10153 = vadd.f32 0.0, %v10152
      %v10154 = vpop.f32.mrf.mxu0
      %v10155 = vadd.f32 0.0, %v10154
      %10156 = vmatmul.bf16.gmra.mxu0 %v10080
      %v10157 = vpop.f32.mrf.mxu0
      %v10158 = vadd.f32 0.0, %v10157
      %v10159 = vpop.f32.mrf.mxu0
      %v10160 = vadd.f32 0.0, %v10159
      %10161 = vmatmul.bf16.gmra.mxu0 %v10081
      %v10162 = vpop.f32.mrf.mxu0
      %v10163 = vadd.f32 0.0, %v10162
      %v10164 = vpop.f32.mrf.mxu0
      %v10165 = vadd.f32 0.0, %v10164
      %10166 = vmatmul.bf16.gmra.mxu0 %v10082
      %v10167 = vpop.f32.mrf.mxu0
      %v10168 = vadd.f32 0.0, %v10167
      %v10169 = vpop.f32.mrf.mxu0
      %v10170 = vadd.f32 0.0, %v10169
      %10171 = vmatmul.bf16.gmra.mxu0 %v10083
      %v10172 = vpop.f32.mrf.mxu0
      %v10173 = vadd.f32 0.0, %v10172
      %v10174 = vpop.f32.mrf.mxu0
      %v10175 = vadd.f32 0.0, %v10174
      %10176 = vmatmul.bf16.gmra.mxu0 %v10084
      %v10177 = vpop.f32.mrf.mxu0
      %v10178 = vadd.f32 0.0, %v10177
      %v10179 = vpop.f32.mrf.mxu0
      %v10180 = vadd.f32 0.0, %v10179
      %10181 = vmatmul.bf16.gmra.mxu0 %v10085
      %v10182 = vpop.f32.mrf.mxu0
      %v10183 = vadd.f32 0.0, %v10182
      %v10184 = vpop.f32.mrf.mxu0
      %v10185 = vadd.f32 0.0, %v10184
      %10186 = vmatmul.bf16.gmra.mxu0 %v10086
      %v10187 = vpop.f32.mrf.mxu0
      %v10188 = vadd.f32 0.0, %v10187
      %v10189 = vpop.f32.mrf.mxu0
      %v10190 = vadd.f32 0.0, %v10189
      %10191 = vdwg.mxu0
      %v10192 = vadd.f32 %v9998, %v10153
      %v10193 = vadd.f32 %v9999, %v10155
      %v10194 = vadd.f32 %v10000, %v10158
      %v10195 = vadd.f32 %v10001, %v10160
      %v10196 = vadd.f32 %v10002, %v10163
      %v10197 = vadd.f32 %v10003, %v10165
      %v10198 = vadd.f32 %v10004, %v10168
      %v10199 = vadd.f32 %v10005, %v10170
      %v10200 = vadd.f32 %v10006, %v10173
      %v10201 = vadd.f32 %v10007, %v10175
      %v10202 = vadd.f32 %v10008, %v10178
      %v10203 = vadd.f32 %v10009, %v10180
      %v10204 = vadd.f32 %v10010, %v10183
      %v10205 = vadd.f32 %v10011, %v10185
      %v10206 = vadd.f32 %v10012, %v10188
      %v10207 = vadd.f32 %v10013, %v10190
      %v10208 = vld [vmem:[%s10014] sm:$0xf]
      %v10209 = vld [vmem:[%s10014 + $0x4] sm:$0xf]
      %v10210 = vld [vmem:[%s10014 + $0x8] sm:$0x1]
      %v10211 = vld [vmem:[%s10014 + $0xc] sm:$0xf]
      %v10212 = vld [vmem:[%s10014 + $0x10] sm:$0xf]
      %v10213 = vld [vmem:[%s10014 + $0x14] sm:$0x1]
      %v10214 = vld [vmem:[%s10014 + $0x18] sm:$0xf]
      %v10215 = vld [vmem:[%s10014 + $0x1c] sm:$0xf]
      %v10216 = vld [vmem:[%s10014 + $0x20] sm:$0x1]
      %v10217 = vld [vmem:[%s10014 + $0x24] sm:$0xf]
      %v10218 = vld [vmem:[%s10014 + $0x28] sm:$0xf]
      %v10219 = vld [vmem:[%s10014 + $0x2c] sm:$0x1]
      %v10220 = vld [vmem:[%s10014 + $0x30] sm:$0xf]
      %v10221 = vld [vmem:[%s10014 + $0x34] sm:$0xf]
      %v10222 = vld [vmem:[%s10014 + $0x38] sm:$0x1]
      %v10223 = vld [vmem:[%s10014 + $0x3c] sm:$0xf]
      %v10224 = vld [vmem:[%s10014 + $0x40] sm:$0xf]
      %v10225 = vld [vmem:[%s10014 + $0x44] sm:$0x1]
      %v10226 = vld [vmem:[%s10014 + $0x48] sm:$0xf]
      %v10227 = vld [vmem:[%s10014 + $0x4c] sm:$0xf]
      %v10228 = vld [vmem:[%s10014 + $0x50] sm:$0x1]
      %v10229 = vld [vmem:[%s10014 + $0x54] sm:$0xf]
      %v10230 = vld [vmem:[%s10014 + $0x58] sm:$0xf]
      %v10231 = vld [vmem:[%s10014 + $0x5c] sm:$0x1]
      %v10233 = vshrl.u32 %v10208, 16
      %v10235 = vrot.slane %v10233, 4
      %v10236 = vshll.u32 %v10208, 16
      %v10238 = vrot.slane %v10236, 5
      %v10239 = vor.u32 %v10235, %v10238
      %v10240 = vrot.slane %v10239, 4
      %v10242 = vshll.u32 %v10209, 16
      %v10244 = vrot.slane %v10242, 5
      %v10245 = vsel %vm390, %v10240, %v10244
      %v10246 = vshrl.u32 %v10209, 16
      %v10248 = vrot.slane %v10246, 4
      %v10249 = vor.u32 %v10248, %v10244
      %v10250 = vrot.slane %v10249, 4
      %v10252 = vshll.u32 %v10210, 16
      %v10254 = vrot.slane %v10252, 5
      %v10255 = vsel %vm390, %v10250, %v10254
      %v10257 = vshrl.u32 %v10211, 16
      %v10259 = vrot.slane %v10257, 4
      %v10260 = vshll.u32 %v10211, 16
      %v10262 = vrot.slane %v10260, 5
      %v10263 = vor.u32 %v10259, %v10262
      %v10264 = vrot.slane %v10263, 4
      %v10266 = vshll.u32 %v10212, 16
      %v10268 = vrot.slane %v10266, 5
      %v10269 = vsel %vm390, %v10264, %v10268
      %v10270 = vshrl.u32 %v10212, 16
      %v10272 = vrot.slane %v10270, 4
      %v10273 = vor.u32 %v10272, %v10268
      %v10274 = vrot.slane %v10273, 4
      %v10276 = vshll.u32 %v10213, 16
      %v10278 = vrot.slane %v10276, 5
      %v10279 = vsel %vm390, %v10274, %v10278
      %v10281 = vshrl.u32 %v10214, 16
      %v10283 = vrot.slane %v10281, 4
      %v10284 = vshll.u32 %v10214, 16
      %v10286 = vrot.slane %v10284, 5
      %v10287 = vor.u32 %v10283, %v10286
      %v10288 = vrot.slane %v10287, 4
      %v10290 = vshll.u32 %v10215, 16
      %v10292 = vrot.slane %v10290, 5
      %v10293 = vsel %vm390, %v10288, %v10292
      %v10294 = vshrl.u32 %v10215, 16
      %v10296 = vrot.slane %v10294, 4
      %v10297 = vor.u32 %v10296, %v10292
      %v10298 = vrot.slane %v10297, 4
      %v10300 = vshll.u32 %v10216, 16
      %v10302 = vrot.slane %v10300, 5
      %v10303 = vsel %vm390, %v10298, %v10302
      %v10305 = vshrl.u32 %v10217, 16
      %v10307 = vrot.slane %v10305, 4
      %v10308 = vshll.u32 %v10217, 16
      %v10310 = vrot.slane %v10308, 5
      %v10311 = vor.u32 %v10307, %v10310
      %v10312 = vrot.slane %v10311, 4
      %v10314 = vshll.u32 %v10218, 16
      %v10316 = vrot.slane %v10314, 5
      %v10317 = vsel %vm390, %v10312, %v10316
      %v10318 = vshrl.u32 %v10218, 16
      %v10320 = vrot.slane %v10318, 4
      %v10321 = vor.u32 %v10320, %v10316
      %v10322 = vrot.slane %v10321, 4
      %v10324 = vshll.u32 %v10219, 16
      %v10326 = vrot.slane %v10324, 5
      %v10327 = vsel %vm390, %v10322, %v10326
      %v10329 = vshrl.u32 %v10220, 16
      %v10331 = vrot.slane %v10329, 4
      %v10332 = vshll.u32 %v10220, 16
      %v10334 = vrot.slane %v10332, 5
      %v10335 = vor.u32 %v10331, %v10334
      %v10336 = vrot.slane %v10335, 4
      %v10338 = vshll.u32 %v10221, 16
      %v10340 = vrot.slane %v10338, 5
      %v10341 = vsel %vm390, %v10336, %v10340
      %v10342 = vshrl.u32 %v10221, 16
      %v10344 = vrot.slane %v10342, 4
      %v10345 = vor.u32 %v10344, %v10340
      %v10346 = vrot.slane %v10345, 4
      %v10348 = vshll.u32 %v10222, 16
      %v10350 = vrot.slane %v10348, 5
      %v10351 = vsel %vm390, %v10346, %v10350
      %v10353 = vshrl.u32 %v10223, 16
      %v10355 = vrot.slane %v10353, 4
      %v10356 = vshll.u32 %v10223, 16
      %v10358 = vrot.slane %v10356, 5
      %v10359 = vor.u32 %v10355, %v10358
      %v10360 = vrot.slane %v10359, 4
      %v10362 = vshll.u32 %v10224, 16
      %v10364 = vrot.slane %v10362, 5
      %v10365 = vsel %vm390, %v10360, %v10364
      %v10366 = vshrl.u32 %v10224, 16
      %v10368 = vrot.slane %v10366, 4
      %v10369 = vor.u32 %v10368, %v10364
      %v10370 = vrot.slane %v10369, 4
      %v10372 = vshll.u32 %v10225, 16
      %v10374 = vrot.slane %v10372, 5
      %v10375 = vsel %vm390, %v10370, %v10374
      %v10377 = vshrl.u32 %v10226, 16
      %v10379 = vrot.slane %v10377, 4
      %v10380 = vshll.u32 %v10226, 16
      %v10382 = vrot.slane %v10380, 5
      %v10383 = vor.u32 %v10379, %v10382
      %v10384 = vrot.slane %v10383, 4
      %v10386 = vshll.u32 %v10227, 16
      %v10388 = vrot.slane %v10386, 5
      %v10389 = vsel %vm390, %v10384, %v10388
      %v10390 = vshrl.u32 %v10227, 16
      %v10392 = vrot.slane %v10390, 4
      %v10393 = vor.u32 %v10392, %v10388
      %v10394 = vrot.slane %v10393, 4
      %v10396 = vshll.u32 %v10228, 16
      %v10398 = vrot.slane %v10396, 5
      %v10399 = vsel %vm390, %v10394, %v10398
      %v10401 = vshrl.u32 %v10229, 16
      %v10403 = vrot.slane %v10401, 4
      %v10404 = vshll.u32 %v10229, 16
      %v10406 = vrot.slane %v10404, 5
      %v10407 = vor.u32 %v10403, %v10406
      %v10408 = vrot.slane %v10407, 4
      %v10410 = vshll.u32 %v10230, 16
      %v10412 = vrot.slane %v10410, 5
      %v10413 = vsel %vm390, %v10408, %v10412
      %v10414 = vshrl.u32 %v10230, 16
      %v10416 = vrot.slane %v10414, 4
      %v10417 = vor.u32 %v10416, %v10412
      %v10418 = vrot.slane %v10417, 4
      %v10420 = vshll.u32 %v10231, 16
      %v10422 = vrot.slane %v10420, 5
      %v10423 = vsel %vm390, %v10418, %v10422
      %v10424 = vld [vmem:[%s7704] sm:$0xf]
      %v10425 = vld [vmem:[%s7704 + $0x4] sm:$0xf]
      %v10426 = vld [vmem:[%s7704 + $0x8] sm:$0xf]
      %v10427 = vld [vmem:[%s7704 + $0xc] sm:$0xf]
      %v10428 = vld [vmem:[%s7704 + $0x10] sm:$0xf]
      %v10429 = vld [vmem:[%s7704 + $0x14] sm:$0xf]
      %v10430 = vld [vmem:[%s7704 + $0x18] sm:$0xf]
      %v10431 = vld [vmem:[%s7704 + $0x1c] sm:$0xf]
      %v10432 = vld [vmem:[%s7704 + $0x20] sm:$0xf]
      %v10433 = vld [vmem:[%s7704 + $0x24] sm:$0xf]
      %v10434 = vld [vmem:[%s7704 + $0x28] sm:$0xf]
      %v10435 = vld [vmem:[%s7704 + $0x2c] sm:$0xf]
      %v10436 = vld [vmem:[%s7704 + $0x30] sm:$0xf]
      %v10437 = vld [vmem:[%s7704 + $0x34] sm:$0xf]
      %v10438 = vld [vmem:[%s7704 + $0x38] sm:$0xf]
      %v10439 = vld [vmem:[%s7704 + $0x3c] sm:$0xf]
      %v10440 = vunpack.c.l.b16 %v10245
      %v10441 = vunpack.c.l.b16 %v10255
      %v10442 = vunpack.c.l.b16 %v10269
      %v10443 = vunpack.c.l.b16 %v10279
      %v10444 = vunpack.c.l.b16 %v10293
      %v10445 = vunpack.c.l.b16 %v10303
      %v10446 = vunpack.c.l.b16 %v10317
      %v10447 = vunpack.c.l.b16 %v10327
      %v10448 = vunpack.c.l.b16 %v10341
      %v10449 = vunpack.c.l.b16 %v10351
      %v10450 = vunpack.c.l.b16 %v10365
      %v10451 = vunpack.c.l.b16 %v10375
      %v10452 = vunpack.c.l.b16 %v10389
      %v10453 = vunpack.c.l.b16 %v10399
      %v10454 = vunpack.c.l.b16 %v10413
      %v10455 = vunpack.c.l.b16 %v10423
      %v10456 = vpack.c.b16 %v10441, %v10440
      %v10457 = vpack.c.b16 %v10443, %v10442
      %v10458 = vpack.c.b16 %v10445, %v10444
      %v10459 = vpack.c.b16 %v10447, %v10446
      %v10460 = vpack.c.b16 %v10449, %v10448
      %v10461 = vpack.c.b16 %v10451, %v10450
      %v10462 = vpack.c.b16 %v10453, %v10452
      %v10463 = vpack.c.b16 %v10455, %v10454
      %v10488 = vunpack.c.l.b16 %v10424
      %v10489 = vunpack.c.l.b16 %v10425
      %v10490 = vunpack.c.l.b16 %v10426
      %v10491 = vunpack.c.l.b16 %v10427
      %v10492 = vunpack.c.l.b16 %v10428
      %v10493 = vunpack.c.l.b16 %v10429
      %v10494 = vunpack.c.l.b16 %v10430
      %v10495 = vunpack.c.l.b16 %v10431
      %v10496 = vunpack.c.l.b16 %v10432
      %v10497 = vunpack.c.l.b16 %v10433
      %v10498 = vunpack.c.l.b16 %v10434
      %v10499 = vunpack.c.l.b16 %v10435
      %v10500 = vunpack.c.l.b16 %v10436
      %v10501 = vunpack.c.l.b16 %v10437
      %v10502 = vunpack.c.l.b16 %v10438
      %v10503 = vunpack.c.l.b16 %v10439
      %v10504 = vpack.c.b16 %v10489, %v10488
      %v10505 = vpack.c.b16 %v10491, %v10490
      %v10506 = vpack.c.b16 %v10493, %v10492
      %v10507 = vpack.c.b16 %v10495, %v10494
      %v10508 = vpack.c.b16 %v10497, %v10496
      %v10509 = vpack.c.b16 %v10499, %v10498
      %v10510 = vpack.c.b16 %v10501, %v10500
      %v10511 = vpack.c.b16 %v10503, %v10502
      %10520 = vmatpush.bf16.msra.mxu0 %v10511
      %10521 = vmatpush.bf16.msra.mxu0 %v10510
      %10522 = vmatpush.bf16.msra.mxu0 %v10509
      %10523 = vmatpush.bf16.msra.mxu0 %v10508
      %10524 = vmatpush.bf16.msra.mxu0 %v10507
      %10525 = vmatpush.bf16.msra.mxu0 %v10506
      %10526 = vmatpush.bf16.msra.mxu0 %v10505
      %10527 = vmatpush.bf16.msra.mxu0 %v10504
      %10528 = vmatmul.bf16.gmra.mxu0 %v10456
      %v10529 = vpop.f32.mrf.mxu0
      %v10530 = vadd.f32 0.0, %v10529
      %v10531 = vpop.f32.mrf.mxu0
      %v10532 = vadd.f32 0.0, %v10531
      %10533 = vmatmul.bf16.gmra.mxu0 %v10457
      %v10534 = vpop.f32.mrf.mxu0
      %v10535 = vadd.f32 0.0, %v10534
      %v10536 = vpop.f32.mrf.mxu0
      %v10537 = vadd.f32 0.0, %v10536
      %10538 = vmatmul.bf16.gmra.mxu0 %v10458
      %v10539 = vpop.f32.mrf.mxu0
      %v10540 = vadd.f32 0.0, %v10539
      %v10541 = vpop.f32.mrf.mxu0
      %v10542 = vadd.f32 0.0, %v10541
      %10543 = vmatmul.bf16.gmra.mxu0 %v10459
      %v10544 = vpop.f32.mrf.mxu0
      %v10545 = vadd.f32 0.0, %v10544
      %v10546 = vpop.f32.mrf.mxu0
      %v10547 = vadd.f32 0.0, %v10546
      %10548 = vmatmul.bf16.gmra.mxu0 %v10460
      %v10549 = vpop.f32.mrf.mxu0
      %v10550 = vadd.f32 0.0, %v10549
      %v10551 = vpop.f32.mrf.mxu0
      %v10552 = vadd.f32 0.0, %v10551
      %10553 = vmatmul.bf16.gmra.mxu0 %v10461
      %v10554 = vpop.f32.mrf.mxu0
      %v10555 = vadd.f32 0.0, %v10554
      %v10556 = vpop.f32.mrf.mxu0
      %v10557 = vadd.f32 0.0, %v10556
      %10558 = vmatmul.bf16.gmra.mxu0 %v10462
      %v10559 = vpop.f32.mrf.mxu0
      %v10560 = vadd.f32 0.0, %v10559
      %v10561 = vpop.f32.mrf.mxu0
      %v10562 = vadd.f32 0.0, %v10561
      %10563 = vmatmul.bf16.gmra.mxu0 %v10463
      %v10564 = vpop.f32.mrf.mxu0
      %v10565 = vadd.f32 0.0, %v10564
      %v10566 = vpop.f32.mrf.mxu0
      %v10567 = vadd.f32 0.0, %v10566
      %10568 = vdwg.mxu0
      %v10569 = vadd.f32 %v10192, %v10530
      %v10570 = vadd.f32 %v10193, %v10532
      %v10571 = vadd.f32 %v10194, %v10535
      %v10572 = vadd.f32 %v10195, %v10537
      %v10573 = vadd.f32 %v10196, %v10540
      %v10574 = vadd.f32 %v10197, %v10542
      %v10575 = vadd.f32 %v10198, %v10545
      %v10576 = vadd.f32 %v10199, %v10547
      %v10577 = vadd.f32 %v10200, %v10550
      %v10578 = vadd.f32 %v10201, %v10552
      %v10579 = vadd.f32 %v10202, %v10555
      %v10580 = vadd.f32 %v10203, %v10557
      %v10581 = vadd.f32 %v10204, %v10560
      %v10582 = vadd.f32 %v10205, %v10562
      %v10583 = vadd.f32 %v10206, %v10565
      %v10584 = vadd.f32 %v10207, %v10567
      %v10585 = vld [vmem:[%s10014] sm:$0xe]
      %v10586 = vld [vmem:[%s10014 + $0xc] sm:$0xe]
      %v10587 = vld [vmem:[%s10014 + $0x18] sm:$0xe]
      %v10588 = vld [vmem:[%s10014 + $0x24] sm:$0xe]
      %v10589 = vld [vmem:[%s10014 + $0x30] sm:$0xe]
      %v10590 = vld [vmem:[%s10014 + $0x3c] sm:$0xe]
      %v10591 = vld [vmem:[%s10014 + $0x48] sm:$0xe]
      %v10592 = vld [vmem:[%s10014 + $0x54] sm:$0xe]
      %v10617 = vrot.slane %v10585, 5
      %v10618 = vrot.slane %v10617, 4
      %v10619 = vrot.slane %v10209, 5
      %v10620 = vsel %vm900, %v10618, %v10619
      %v10621 = vrot.slane %v10619, 4
      %v10622 = vrot.slane %v10210, 5
      %v10623 = vsel %vm900, %v10621, %v10622
      %v10624 = vrot.slane %v10586, 5
      %v10625 = vrot.slane %v10624, 4
      %v10626 = vrot.slane %v10212, 5
      %v10627 = vsel %vm900, %v10625, %v10626
      %v10628 = vrot.slane %v10626, 4
      %v10629 = vrot.slane %v10213, 5
      %v10630 = vsel %vm900, %v10628, %v10629
      %v10631 = vrot.slane %v10587, 5
      %v10632 = vrot.slane %v10631, 4
      %v10633 = vrot.slane %v10215, 5
      %v10634 = vsel %vm900, %v10632, %v10633
      %v10635 = vrot.slane %v10633, 4
      %v10636 = vrot.slane %v10216, 5
      %v10637 = vsel %vm900, %v10635, %v10636
      %v10638 = vrot.slane %v10588, 5
      %v10639 = vrot.slane %v10638, 4
      %v10640 = vrot.slane %v10218, 5
      %v10641 = vsel %vm900, %v10639, %v10640
      %v10642 = vrot.slane %v10640, 4
      %v10643 = vrot.slane %v10219, 5
      %v10644 = vsel %vm900, %v10642, %v10643
      %v10645 = vrot.slane %v10589, 5
      %v10646 = vrot.slane %v10645, 4
      %v10647 = vrot.slane %v10221, 5
      %v10648 = vsel %vm900, %v10646, %v10647
      %v10649 = vrot.slane %v10647, 4
      %v10650 = vrot.slane %v10222, 5
      %v10651 = vsel %vm900, %v10649, %v10650
      %v10652 = vrot.slane %v10590, 5
      %v10653 = vrot.slane %v10652, 4
      %v10654 = vrot.slane %v10224, 5
      %v10655 = vsel %vm900, %v10653, %v10654
      %v10656 = vrot.slane %v10654, 4
      %v10657 = vrot.slane %v10225, 5
      %v10658 = vsel %vm900, %v10656, %v10657
      %v10659 = vrot.slane %v10591, 5
      %v10660 = vrot.slane %v10659, 4
      %v10661 = vrot.slane %v10227, 5
      %v10662 = vsel %vm900, %v10660, %v10661
      %v10663 = vrot.slane %v10661, 4
      %v10664 = vrot.slane %v10228, 5
      %v10665 = vsel %vm900, %v10663, %v10664
      %v10666 = vrot.slane %v10592, 5
      %v10667 = vrot.slane %v10666, 4
      %v10668 = vrot.slane %v10230, 5
      %v10669 = vsel %vm900, %v10667, %v10668
      %v10670 = vrot.slane %v10668, 4
      %v10671 = vrot.slane %v10231, 5
      %v10672 = vsel %vm900, %v10670, %v10671
      %v10673 = vld [vmem:[%s7954] sm:$0xf]
      %v10674 = vld [vmem:[%s7954 + $0x4] sm:$0xf]
      %v10675 = vld [vmem:[%s7954 + $0x8] sm:$0xf]
      %v10676 = vld [vmem:[%s7954 + $0xc] sm:$0xf]
      %v10677 = vld [vmem:[%s7954 + $0x10] sm:$0xf]
      %v10678 = vld [vmem:[%s7954 + $0x14] sm:$0xf]
      %v10679 = vld [vmem:[%s7954 + $0x18] sm:$0xf]
      %v10680 = vld [vmem:[%s7954 + $0x1c] sm:$0xf]
      %v10681 = vld [vmem:[%s7954 + $0x20] sm:$0xf]
      %v10682 = vld [vmem:[%s7954 + $0x24] sm:$0xf]
      %v10683 = vld [vmem:[%s7954 + $0x28] sm:$0xf]
      %v10684 = vld [vmem:[%s7954 + $0x2c] sm:$0xf]
      %v10685 = vld [vmem:[%s7954 + $0x30] sm:$0xf]
      %v10686 = vld [vmem:[%s7954 + $0x34] sm:$0xf]
      %v10687 = vld [vmem:[%s7954 + $0x38] sm:$0xf]
      %v10688 = vld [vmem:[%s7954 + $0x3c] sm:$0xf]
      %v10689 = vunpack.c.l.b16 %v10620
      %v10690 = vunpack.c.l.b16 %v10623
      %v10691 = vunpack.c.l.b16 %v10627
      %v10692 = vunpack.c.l.b16 %v10630
      %v10693 = vunpack.c.l.b16 %v10634
      %v10694 = vunpack.c.l.b16 %v10637
      %v10695 = vunpack.c.l.b16 %v10641
      %v10696 = vunpack.c.l.b16 %v10644
      %v10697 = vunpack.c.l.b16 %v10648
      %v10698 = vunpack.c.l.b16 %v10651
      %v10699 = vunpack.c.l.b16 %v10655
      %v10700 = vunpack.c.l.b16 %v10658
      %v10701 = vunpack.c.l.b16 %v10662
      %v10702 = vunpack.c.l.b16 %v10665
      %v10703 = vunpack.c.l.b16 %v10669
      %v10704 = vunpack.c.l.b16 %v10672
      %v10705 = vpack.c.b16 %v10690, %v10689
      %v10706 = vpack.c.b16 %v10692, %v10691
      %v10707 = vpack.c.b16 %v10694, %v10693
      %v10708 = vpack.c.b16 %v10696, %v10695
      %v10709 = vpack.c.b16 %v10698, %v10697
      %v10710 = vpack.c.b16 %v10700, %v10699
      %v10711 = vpack.c.b16 %v10702, %v10701
      %v10712 = vpack.c.b16 %v10704, %v10703
      %v10737 = vunpack.c.l.b16 %v10673
      %v10738 = vunpack.c.l.b16 %v10674
      %v10739 = vunpack.c.l.b16 %v10675
      %v10740 = vunpack.c.l.b16 %v10676
      %v10741 = vunpack.c.l.b16 %v10677
      %v10742 = vunpack.c.l.b16 %v10678
      %v10743 = vunpack.c.l.b16 %v10679
      %v10744 = vunpack.c.l.b16 %v10680
      %v10745 = vunpack.c.l.b16 %v10681
      %v10746 = vunpack.c.l.b16 %v10682
      %v10747 = vunpack.c.l.b16 %v10683
      %v10748 = vunpack.c.l.b16 %v10684
      %v10749 = vunpack.c.l.b16 %v10685
      %v10750 = vunpack.c.l.b16 %v10686
      %v10751 = vunpack.c.l.b16 %v10687
      %v10752 = vunpack.c.l.b16 %v10688
      %v10753 = vpack.c.b16 %v10738, %v10737
      %v10754 = vpack.c.b16 %v10740, %v10739
      %v10755 = vpack.c.b16 %v10742, %v10741
      %v10756 = vpack.c.b16 %v10744, %v10743
      %v10757 = vpack.c.b16 %v10746, %v10745
      %v10758 = vpack.c.b16 %v10748, %v10747
      %v10759 = vpack.c.b16 %v10750, %v10749
      %v10760 = vpack.c.b16 %v10752, %v10751
      %10769 = vmatpush.bf16.msra.mxu0 %v10760
      %10770 = vmatpush.bf16.msra.mxu0 %v10759
      %10771 = vmatpush.bf16.msra.mxu0 %v10758
      %10772 = vmatpush.bf16.msra.mxu0 %v10757
      %10773 = vmatpush.bf16.msra.mxu0 %v10756
      %10774 = vmatpush.bf16.msra.mxu0 %v10755
      %10775 = vmatpush.bf16.msra.mxu0 %v10754
      %10776 = vmatpush.bf16.msra.mxu0 %v10753
      %10777 = vmatmul.bf16.gmra.mxu0 %v10705
      %v10778 = vpop.f32.mrf.mxu0
      %v10779 = vadd.f32 0.0, %v10778
      %v10780 = vpop.f32.mrf.mxu0
      %v10781 = vadd.f32 0.0, %v10780
      %10782 = vmatmul.bf16.gmra.mxu0 %v10706
      %v10783 = vpop.f32.mrf.mxu0
      %v10784 = vadd.f32 0.0, %v10783
      %v10785 = vpop.f32.mrf.mxu0
      %v10786 = vadd.f32 0.0, %v10785
      %10787 = vmatmul.bf16.gmra.mxu0 %v10707
      %v10788 = vpop.f32.mrf.mxu0
      %v10789 = vadd.f32 0.0, %v10788
      %v10790 = vpop.f32.mrf.mxu0
      %v10791 = vadd.f32 0.0, %v10790
      %10792 = vmatmul.bf16.gmra.mxu0 %v10708
      %v10793 = vpop.f32.mrf.mxu0
      %v10794 = vadd.f32 0.0, %v10793
      %v10795 = vpop.f32.mrf.mxu0
      %v10796 = vadd.f32 0.0, %v10795
      %10797 = vmatmul.bf16.gmra.mxu0 %v10709
      %v10798 = vpop.f32.mrf.mxu0
      %v10799 = vadd.f32 0.0, %v10798
      %v10800 = vpop.f32.mrf.mxu0
      %v10801 = vadd.f32 0.0, %v10800
      %10802 = vmatmul.bf16.gmra.mxu0 %v10710
      %v10803 = vpop.f32.mrf.mxu0
      %v10804 = vadd.f32 0.0, %v10803
      %v10805 = vpop.f32.mrf.mxu0
      %v10806 = vadd.f32 0.0, %v10805
      %10807 = vmatmul.bf16.gmra.mxu0 %v10711
      %v10808 = vpop.f32.mrf.mxu0
      %v10809 = vadd.f32 0.0, %v10808
      %v10810 = vpop.f32.mrf.mxu0
      %v10811 = vadd.f32 0.0, %v10810
      %10812 = vmatmul.bf16.gmra.mxu0 %v10712
      %v10813 = vpop.f32.mrf.mxu0
      %v10814 = vadd.f32 0.0, %v10813
      %v10815 = vpop.f32.mrf.mxu0
      %v10816 = vadd.f32 0.0, %v10815
      %10817 = vdwg.mxu0
      %v10818 = vadd.f32 %v10569, %v10779
      %v10819 = vadd.f32 %v10570, %v10781
      %v10820 = vadd.f32 %v10571, %v10784
      %v10821 = vadd.f32 %v10572, %v10786
      %v10822 = vadd.f32 %v10573, %v10789
      %v10823 = vadd.f32 %v10574, %v10791
      %v10824 = vadd.f32 %v10575, %v10794
      %v10825 = vadd.f32 %v10576, %v10796
      %v10826 = vadd.f32 %v10577, %v10799
      %v10827 = vadd.f32 %v10578, %v10801
      %v10828 = vadd.f32 %v10579, %v10804
      %v10829 = vadd.f32 %v10580, %v10806
      %v10830 = vadd.f32 %v10581, %v10809
      %v10831 = vadd.f32 %v10582, %v10811
      %v10832 = vadd.f32 %v10583, %v10814
      %v10833 = vadd.f32 %v10584, %v10816
      %v10834 = vld [vmem:[%s3801] sm:$0xf]
      %v10835 = vld [vmem:[%s3801 + $0x4] sm:$0xf]
      %v10836 = vld [vmem:[%s3801 + $0x8] sm:$0x1]
      %v10837 = vld [vmem:[%s3801 + $0xc] sm:$0xf]
      %v10838 = vld [vmem:[%s3801 + $0x10] sm:$0xf]
      %v10839 = vld [vmem:[%s3801 + $0x14] sm:$0x1]
      %v10840 = vld [vmem:[%s3801 + $0x18] sm:$0xf]
      %v10841 = vld [vmem:[%s3801 + $0x1c] sm:$0xf]
      %v10842 = vld [vmem:[%s3801 + $0x20] sm:$0x1]
      %v10843 = vld [vmem:[%s3801 + $0x24] sm:$0xf]
      %v10844 = vld [vmem:[%s3801 + $0x28] sm:$0xf]
      %v10845 = vld [vmem:[%s3801 + $0x2c] sm:$0x1]
      %v10846 = vld [vmem:[%s3801 + $0x30] sm:$0xf]
      %v10847 = vld [vmem:[%s3801 + $0x34] sm:$0xf]
      %v10848 = vld [vmem:[%s3801 + $0x38] sm:$0x1]
      %v10849 = vld [vmem:[%s3801 + $0x3c] sm:$0xf]
      %v10850 = vld [vmem:[%s3801 + $0x40] sm:$0xf]
      %v10851 = vld [vmem:[%s3801 + $0x44] sm:$0x1]
      %v10852 = vld [vmem:[%s3801 + $0x48] sm:$0xf]
      %v10853 = vld [vmem:[%s3801 + $0x4c] sm:$0xf]
      %v10854 = vld [vmem:[%s3801 + $0x50] sm:$0x1]
      %v10855 = vld [vmem:[%s3801 + $0x54] sm:$0xf]
      %v10856 = vld [vmem:[%s3801 + $0x58] sm:$0xf]
      %v10857 = vld [vmem:[%s3801 + $0x5c] sm:$0x1]
      %v10858 = vadd.f32 %v10818, %v8141
      %v10859 = vadd.f32 %v10819, %v8141
      %v10860 = vadd.f32 %v10820, %v8141
      %v10861 = vadd.f32 %v10821, %v8141
      %v10862 = vadd.f32 %v10822, %v8141
      %v10863 = vadd.f32 %v10823, %v8141
      %v10864 = vadd.f32 %v10824, %v8141
      %v10865 = vadd.f32 %v10825, %v8141
      %v10866 = vadd.f32 %v10826, %v8141
      %v10867 = vadd.f32 %v10827, %v8141
      %v10868 = vadd.f32 %v10828, %v8141
      %v10869 = vadd.f32 %v10829, %v8141
      %v10870 = vadd.f32 %v10830, %v8141
      %v10871 = vadd.f32 %v10831, %v8141
      %v10872 = vadd.f32 %v10832, %v8141
      %v10873 = vadd.f32 %v10833, %v8141
      %v10875 = vshrl.u32 %v10834, 16
      %v10877 = vrot.slane %v10875, 4
      %v10878 = vshll.u32 %v10834, 16
      %v10880 = vrot.slane %v10878, 5
      %v10881 = vor.u32 %v10877, %v10880
      %v10882 = vrot.slane %v10881, 4
      %v10884 = vshll.u32 %v10835, 16
      %v10886 = vrot.slane %v10884, 5
      %v10887 = vsel %vm390, %v10882, %v10886
      %v10888 = vshrl.u32 %v10835, 16
      %v10890 = vrot.slane %v10888, 4
      %v10891 = vor.u32 %v10890, %v10886
      %v10892 = vrot.slane %v10891, 4
      %v10894 = vshll.u32 %v10836, 16
      %v10896 = vrot.slane %v10894, 5
      %v10897 = vsel %vm390, %v10892, %v10896
      %v10899 = vshrl.u32 %v10837, 16
      %v10901 = vrot.slane %v10899, 4
      %v10902 = vshll.u32 %v10837, 16
      %v10904 = vrot.slane %v10902, 5
      %v10905 = vor.u32 %v10901, %v10904
      %v10906 = vrot.slane %v10905, 4
      %v10908 = vshll.u32 %v10838, 16
      %v10910 = vrot.slane %v10908, 5
      %v10911 = vsel %vm390, %v10906, %v10910
      %v10912 = vshrl.u32 %v10838, 16
      %v10914 = vrot.slane %v10912, 4
      %v10915 = vor.u32 %v10914, %v10910
      %v10916 = vrot.slane %v10915, 4
      %v10918 = vshll.u32 %v10839, 16
      %v10920 = vrot.slane %v10918, 5
      %v10921 = vsel %vm390, %v10916, %v10920
      %v10923 = vshrl.u32 %v10840, 16
      %v10925 = vrot.slane %v10923, 4
      %v10926 = vshll.u32 %v10840, 16
      %v10928 = vrot.slane %v10926, 5
      %v10929 = vor.u32 %v10925, %v10928
      %v10930 = vrot.slane %v10929, 4
      %v10932 = vshll.u32 %v10841, 16
      %v10934 = vrot.slane %v10932, 5
      %v10935 = vsel %vm390, %v10930, %v10934
      %v10936 = vshrl.u32 %v10841, 16
      %v10938 = vrot.slane %v10936, 4
      %v10939 = vor.u32 %v10938, %v10934
      %v10940 = vrot.slane %v10939, 4
      %v10942 = vshll.u32 %v10842, 16
      %v10944 = vrot.slane %v10942, 5
      %v10945 = vsel %vm390, %v10940, %v10944
      %v10947 = vshrl.u32 %v10843, 16
      %v10949 = vrot.slane %v10947, 4
      %v10950 = vshll.u32 %v10843, 16
      %v10952 = vrot.slane %v10950, 5
      %v10953 = vor.u32 %v10949, %v10952
      %v10954 = vrot.slane %v10953, 4
      %v10956 = vshll.u32 %v10844, 16
      %v10958 = vrot.slane %v10956, 5
      %v10959 = vsel %vm390, %v10954, %v10958
      %v10960 = vshrl.u32 %v10844, 16
      %v10962 = vrot.slane %v10960, 4
      %v10963 = vor.u32 %v10962, %v10958
      %v10964 = vrot.slane %v10963, 4
      %v10966 = vshll.u32 %v10845, 16
      %v10968 = vrot.slane %v10966, 5
      %v10969 = vsel %vm390, %v10964, %v10968
      %v10971 = vshrl.u32 %v10846, 16
      %v10973 = vrot.slane %v10971, 4
      %v10974 = vshll.u32 %v10846, 16
      %v10976 = vrot.slane %v10974, 5
      %v10977 = vor.u32 %v10973, %v10976
      %v10978 = vrot.slane %v10977, 4
      %v10980 = vshll.u32 %v10847, 16
      %v10982 = vrot.slane %v10980, 5
      %v10983 = vsel %vm390, %v10978, %v10982
      %v10984 = vshrl.u32 %v10847, 16
      %v10986 = vrot.slane %v10984, 4
      %v10987 = vor.u32 %v10986, %v10982
      %v10988 = vrot.slane %v10987, 4
      %v10990 = vshll.u32 %v10848, 16
      %v10992 = vrot.slane %v10990, 5
      %v10993 = vsel %vm390, %v10988, %v10992
      %v10995 = vshrl.u32 %v10849, 16
      %v10997 = vrot.slane %v10995, 4
      %v10998 = vshll.u32 %v10849, 16
      %v11000 = vrot.slane %v10998, 5
      %v11001 = vor.u32 %v10997, %v11000
      %v11002 = vrot.slane %v11001, 4
      %v11004 = vshll.u32 %v10850, 16
      %v11006 = vrot.slane %v11004, 5
      %v11007 = vsel %vm390, %v11002, %v11006
      %v11008 = vshrl.u32 %v10850, 16
      %v11010 = vrot.slane %v11008, 4
      %v11011 = vor.u32 %v11010, %v11006
      %v11012 = vrot.slane %v11011, 4
      %v11014 = vshll.u32 %v10851, 16
      %v11016 = vrot.slane %v11014, 5
      %v11017 = vsel %vm390, %v11012, %v11016
      %v11019 = vshrl.u32 %v10852, 16
      %v11021 = vrot.slane %v11019, 4
      %v11022 = vshll.u32 %v10852, 16
      %v11024 = vrot.slane %v11022, 5
      %v11025 = vor.u32 %v11021, %v11024
      %v11026 = vrot.slane %v11025, 4
      %v11028 = vshll.u32 %v10853, 16
      %v11030 = vrot.slane %v11028, 5
      %v11031 = vsel %vm390, %v11026, %v11030
      %v11032 = vshrl.u32 %v10853, 16
      %v11034 = vrot.slane %v11032, 4
      %v11035 = vor.u32 %v11034, %v11030
      %v11036 = vrot.slane %v11035, 4
      %v11038 = vshll.u32 %v10854, 16
      %v11040 = vrot.slane %v11038, 5
      %v11041 = vsel %vm390, %v11036, %v11040
      %v11043 = vshrl.u32 %v10855, 16
      %v11045 = vrot.slane %v11043, 4
      %v11046 = vshll.u32 %v10855, 16
      %v11048 = vrot.slane %v11046, 5
      %v11049 = vor.u32 %v11045, %v11048
      %v11050 = vrot.slane %v11049, 4
      %v11052 = vshll.u32 %v10856, 16
      %v11054 = vrot.slane %v11052, 5
      %v11055 = vsel %vm390, %v11050, %v11054
      %v11056 = vshrl.u32 %v10856, 16
      %v11058 = vrot.slane %v11056, 4
      %v11059 = vor.u32 %v11058, %v11054
      %v11060 = vrot.slane %v11059, 4
      %v11062 = vshll.u32 %v10857, 16
      %v11064 = vrot.slane %v11062, 5
      %v11065 = vsel %vm390, %v11060, %v11064
      %v11082 = vunpack.c.l.bf16 %v10887
      %v11083 = vunpack.c.l.bf16 %v10897
      %v11084 = vunpack.c.l.bf16 %v10911
      %v11085 = vunpack.c.l.bf16 %v10921
      %v11086 = vunpack.c.l.bf16 %v10935
      %v11087 = vunpack.c.l.bf16 %v10945
      %v11088 = vunpack.c.l.bf16 %v10959
      %v11089 = vunpack.c.l.bf16 %v10969
      %v11090 = vunpack.c.l.bf16 %v10983
      %v11091 = vunpack.c.l.bf16 %v10993
      %v11092 = vunpack.c.l.bf16 %v11007
      %v11093 = vunpack.c.l.bf16 %v11017
      %v11094 = vunpack.c.l.bf16 %v11031
      %v11095 = vunpack.c.l.bf16 %v11041
      %v11096 = vunpack.c.l.bf16 %v11055
      %v11097 = vunpack.c.l.bf16 %v11065
      %v11098 = vadd.f32 %v10858, %v11082
      %v11099 = vadd.f32 %v10859, %v11083
      %v11100 = vadd.f32 %v10860, %v11084
      %v11101 = vadd.f32 %v10861, %v11085
      %v11102 = vadd.f32 %v10862, %v11086
      %v11103 = vadd.f32 %v10863, %v11087
      %v11104 = vadd.f32 %v10864, %v11088
      %v11105 = vadd.f32 %v10865, %v11089
      %v11106 = vadd.f32 %v10866, %v11090
      %v11107 = vadd.f32 %v10867, %v11091
      %v11108 = vadd.f32 %v10868, %v11092
      %v11109 = vadd.f32 %v10869, %v11093
      %v11110 = vadd.f32 %v10870, %v11094
      %v11111 = vadd.f32 %v10871, %v11095
      %v11112 = vadd.f32 %v10872, %v11096
      %v11113 = vadd.f32 %v10873, %v11097
      %v11114 = vmax.f32 %v11098, 0.0
      %v11115 = vmax.f32 %v11099, 0.0
      %v11116 = vmax.f32 %v11100, 0.0
      %v11117 = vmax.f32 %v11101, 0.0
      %v11118 = vmax.f32 %v11102, 0.0
      %v11119 = vmax.f32 %v11103, 0.0
      %v11120 = vmax.f32 %v11104, 0.0
      %v11121 = vmax.f32 %v11105, 0.0
      %v11122 = vmax.f32 %v11106, 0.0
      %v11123 = vmax.f32 %v11107, 0.0
      %v11124 = vmax.f32 %v11108, 0.0
      %v11125 = vmax.f32 %v11109, 0.0
      %v11126 = vmax.f32 %v11110, 0.0
      %v11127 = vmax.f32 %v11111, 0.0
      %v11128 = vmax.f32 %v11112, 0.0
      %v11129 = vmax.f32 %v11113, 0.0
      %s11130 = scalar_lea.vmem %s224, 128
      %11131 = vst [vmem:[%s11130] sm:$0xff] %v11114
      %11132 = vst [vmem:[%s11130 + $0x8] sm:$0xff] %v11115
      %11133 = vst [vmem:[%s11130 + $0x10] sm:$0xff] %v11116
      %11134 = vst [vmem:[%s11130 + $0x18] sm:$0xff] %v11117
      %11135 = vst [vmem:[%s11130 + $0x20] sm:$0xff] %v11118
      %11136 = vst [vmem:[%s11130 + $0x28] sm:$0xff] %v11119
      %11137 = vst [vmem:[%s11130 + $0x30] sm:$0xff] %v11120
      %11138 = vst [vmem:[%s11130 + $0x38] sm:$0xff] %v11121
      %11139 = vst [vmem:[%s11130 + $0x40] sm:$0xff] %v11122
      %11140 = vst [vmem:[%s11130 + $0x48] sm:$0xff] %v11123
      %11141 = vst [vmem:[%s11130 + $0x50] sm:$0xff] %v11124
      %11142 = vst [vmem:[%s11130 + $0x58] sm:$0xff] %v11125
      %11143 = vst [vmem:[%s11130 + $0x60] sm:$0xff] %v11126
      %11144 = vst [vmem:[%s11130 + $0x68] sm:$0xff] %v11127
      %11145 = vst [vmem:[%s11130 + $0x70] sm:$0xff] %v11128
      %11146 = vst [vmem:[%s11130 + $0x78] sm:$0xff] %v11129
      %p11147 = scmp.lt.s32.totalorder %s16, 1
      %s11148 = scalar_select %p11147, %s16, 1
      %s11149 = smul.addr %s11148, 32
      %s11150 = smul.addr %s11149, 8
      %s11151 = scalar_lea.vmem %s5, %s11150
      // Predicated region
      $region41: #{basic_block_pallas.1} parent=39 // pred_check
        %p11152 = pneg %p144
      $region42: #{basic_block_pallas.1} parent=39 // pred_check_branch
        %11154 = sbr.rel (%p11152) target = $region44
      $region43: #{basic_block_pallas.1} parent=39 // pred_region
        _
      $region44: #{basic_block_pallas.1} parent=39 // pred_fallthru
        _
    $region40: #{basic_block_pallas.1} parent=5 // pred_fallthru
      _
    %p11155 = scmp.le.s32.totalorder 2, %s11
    // Predicated region
    $region45: #{basic_block_pallas.1} parent=5 // pred_check
      %p11156 = pneg %p11155
    $region46: #{basic_block_pallas.1} parent=5 // pred_check_branch
      %11158 = sbr.rel (%p11156) target = $region48
    $region47: #{basic_block_pallas.1} parent=5 // pred_region
      %s11159 = ssub.s32 %s11, 2
      // Predicated region
      $region49: #{basic_block_pallas.1} parent=47 // pred_check
        %p11160 = pneg %p150
      $region50: #{basic_block_pallas.1} parent=47 // pred_check_branch
        %11162 = sbr.rel (%p11160) target = $region52
      $region51: #{basic_block_pallas.1} parent=47 // pred_region
        %p11163 = scmp.lt.s32.totalorder %s17, 1
        %s11164 = scalar_select %p11163, %s17, 1
        %s11165 = smul.addr %s11164, 32
        %s11166 = smul.addr %s11165, 8
        %s11167 = scalar_lea.vmem %s5, %s11166
      $region52: #{basic_block_pallas.1} parent=47 // pred_fallthru
        _
    $region48: #{basic_block_pallas.1} parent=5 // pred_fallthru
      _
  $region6: #{basic_block_pallas.1} parent=0 // loop_footer
    %s15 = sadd.s32 1, %s11
  $region7: #{basic_block_pallas.1} parent=0 // loop_footer_branch
    %10 = sbr.rel target = $region3
  $region8: #{basic_block_pallas.1} parent=0 // loop_exit
    _

</llo_original>
